<compile_context>
chip_gen: v6e
topology: v6e:2x2x1
jax: 0.10.0
libtpu: 0.0.40
codegen_flags: <defaults>
</compile_context>

<pallas_src>
import jax
import jax.numpy as jnp
import numpy as np
from jax.experimental import pallas as pl
from jax.experimental.pallas import tpu as pltpu

EPS = 1e-5
LANE = 128


def _round_up(x, m):
    return ((x + m - 1) // m) * m


def double_conv_kernel(xp_ref, w1_ref, g1_ref, be1_ref, w2_ref, g2_ref, be2_ref,
                       out_ref, pad_ref, col_ref):
    N, Hp, Wp, Cip = xp_ref.shape
    H, W = Hp - 2, Wp - 2
    Cop = out_ref.shape[-1]
    M = N * H * W
    inv_m = 1.0 / float(M)

    def im2col(src_ref, c):
        # Build the (M, 9*c) im2col tile once in the reused VMEM scratch:
        # one aligned 128-wide column block per tap; taps are gathered by
        # static ref-slicing (row shift dh, col shift dw) — no whole-array
        # materialization followed by value re-slicing.
        taps = [(dh, dw) for dh in range(3) for dw in range(3)]
        for t, (dh, dw) in enumerate(taps):
            col_ref[:, t * c:(t + 1) * c] = (
                src_ref[:, dh:dh + H, dw:dw + W, :].reshape(M, c))
        return col_ref[:, :9 * c]

    def bn_relu(acc, g_ref, be_ref):
        # One-pass training-mode batch stats in f32 (biased variance,
        # matching PyTorch's normalization of the current batch).
        s = jnp.sum(acc, axis=0, keepdims=True)
        sq = jnp.sum(acc * acc, axis=0, keepdims=True)
        mean = s * inv_m
        var = jnp.maximum(sq * inv_m - mean * mean, 0.0)
        scale = g_ref[...] * jax.lax.rsqrt(var + EPS)        # EUP rsqrt
        shift = be_ref[...] - mean * scale
        return jnp.maximum(acc * scale + shift, 0.0)

    # ---- conv1: a single (M, 9*Cip) x (9*Cip, Cop) MXU matmul ----
    # (conv bias omitted: exactly cancelled by the BN mean subtraction below)
    acc1 = jnp.dot(im2col(xp_ref, Cip), w1_ref[...],
                   preferred_element_type=jnp.float32)
    y = bn_relu(acc1, g1_ref, be1_ref)

    # ---- stage intermediate into padded scratch (halo-only zeroing) ----
    pad_ref[:, 1:1 + H, 1:1 + W, :] = y.reshape(N, H, W, Cop).astype(pad_ref.dtype)
    zrow = jnp.zeros((N, 1, Wp, Cop), pad_ref.dtype)
    pad_ref[:, 0:1, :, :] = zrow
    pad_ref[:, Hp - 1:Hp, :, :] = zrow
    zcol = jnp.zeros((N, Hp, 1, Cop), pad_ref.dtype)
    pad_ref[:, :, 0:1, :] = zcol
    pad_ref[:, :, Wp - 1:Wp, :] = zcol

    # ---- conv2: a single (M, 9*Cop) x (9*Cop, Cop) MXU matmul ----
    acc2 = jnp.dot(im2col(pad_ref, Cop), w2_ref[...],
                   preferred_element_type=jnp.float32)
    z = bn_relu(acc2, g2_ref, be2_ref)

    out_ref[...] = z.reshape(N, H, W, Cop).astype(out_ref.dtype)


def double_conv(x_nchw, params, compute_dtype=jnp.bfloat16):
    """params = (w1, b1, gamma1, beta1, w2, b2, gamma2, beta2) in PyTorch layout.

    compute_dtype: dtype of the MXU matmul operands (bf16 = fast path on
    v5e/v6e/v7x). Accumulation and all BN/ReLU math are f32 regardless.
    """
    N, Cin, H, W = x_nchw.shape
    w1, b1, g1, be1, w2, b2, g2, be2 = params
    del b1, b2  # conv biases are a no-op under training-mode BN (mean-cancelled)
    Cout = w1.shape[0]
    Cip = _round_up(Cin, LANE)
    Cop = _round_up(Cout, LANE)

    # NCHW -> NHWC with channels padded to a full 128-lane group, plus a
    # 1-pixel spatial halo for the first conv.
    x = jnp.transpose(x_nchw, (0, 2, 3, 1))
    xp = jnp.pad(x, ((0, 0), (1, 1), (1, 1), (0, Cip - Cin))).astype(compute_dtype)

    # Conv weights as a single lane-aligned 2D im2col matrix:
    # PyTorch (Cout, Cin, 3, 3) -> (3, 3, Cin_pad, Cout_pad) -> (9*Cin_pad, Cout_pad)
    def prep_w(w, ci, cip):
        wk = jnp.transpose(w, (2, 3, 1, 0))
        wk = jnp.pad(wk, ((0, 0), (0, 0), (0, cip - ci), (0, Cop - Cout)))
        return wk.reshape(9 * cip, Cop).astype(compute_dtype)

    w1k = prep_w(w1, Cin, Cip)
    w2k = prep_w(w2, Cout, Cop)

    def prep_v(v):
        return jnp.pad(v, (0, Cop - Cout)).reshape(1, Cop).astype(jnp.float32)

    g1r, be1r, g2r, be2r = prep_v(g1), prep_v(be1), prep_v(g2), prep_v(be2)

    args = (xp, w1k, g1r, be1r, w2k, g2r, be2r)

    def full_spec(a):
        nd = a.ndim
        return pl.BlockSpec(a.shape, lambda i, n=nd: (0,) * n)

    out_nhwc = pl.pallas_call(
        double_conv_kernel,
        out_shape=jax.ShapeDtypeStruct((N, H, W, Cop), jnp.float32),
        grid=(1,),
        in_specs=[full_spec(a) for a in args],
        out_specs=pl.BlockSpec((N, H, W, Cop), lambda i: (0, 0, 0, 0)),
        scratch_shapes=[
            pltpu.VMEM((N, H + 2, W + 2, Cop), compute_dtype),           # padded y
            pltpu.VMEM((N * H * W, 9 * max(Cip, Cop)), compute_dtype),   # im2col
        ],
        compiler_params=pltpu.CompilerParams(
            dimension_semantics=("arbitrary",),
            vmem_limit_bytes=32 * 1024 * 1024),
    )(*args)

    # Back to NCHW, dropping the lane-padding channels.
    return jnp.transpose(out_nhwc[..., :Cout], (0, 3, 1, 2)).astype(x_nchw.dtype)


def reference(x_nchw, params, compute_dtype=jnp.float32):
    """Pure-JAX reference matching PyTorch DoubleConv forward (training-mode BN).

    compute_dtype casts the conv operands (activations & weights) so the bf16
    kernel can be checked against a bf16-operand reference; accumulation and
    BN math stay f32, exactly as in the kernel.
    """
    w1, b1, g1, be1, w2, b2, g2, be2 = params

    def conv(x, w, b):
        y = jax.lax.conv_general_dilated(
            x.astype(compute_dtype), w.astype(compute_dtype),
            window_strides=(1, 1), padding=((1, 1), (1, 1)),
            dimension_numbers=("NCHW", "OIHW", "NCHW"),
            preferred_element_type=jnp.float32)
        return y + b[None, :, None, None]

    def bn(x, g, be):
        mean = jnp.mean(x, axis=(0, 2, 3), keepdims=True)
        var = jnp.mean((x - mean) ** 2, axis=(0, 2, 3), keepdims=True)
        xhat = (x - mean) * jax.lax.rsqrt(var + EPS)
        return xhat * g[None, :, None, None] + be[None, :, None, None]

    y = jax.nn.relu(bn(conv(x_nchw, w1, b1), g1, be1))
    return jax.nn.relu(bn(conv(y, w2, b2), g2, be2))


if __name__ == "__main__":
    N, Cin, Cout, H, W = 2, 4, 8, 16, 16
    key = jax.random.PRNGKey(0)
    ks = jax.random.split(key, 5)

    x = jax.random.normal(ks[0], (N, Cin, H, W), jnp.float32)
    # Deterministic synthetic parameters (shapes from DoubleConv.__init__):
    w1 = jax.random.normal(ks[1], (Cout, Cin, 3, 3), jnp.float32) * 0.1
    b1 = jax.random.normal(ks[2], (Cout,), jnp.float32) * 0.1
    w2 = jax.random.normal(ks[3], (Cout, Cout, 3, 3), jnp.float32) * 0.1
    b2 = jax.random.normal(ks[4], (Cout,), jnp.float32) * 0.1
    g1 = jnp.ones((Cout,), jnp.float32)    # BatchNorm default weight
    be1 = jnp.zeros((Cout,), jnp.float32)  # BatchNorm default bias
    g2 = jnp.ones((Cout,), jnp.float32)
    be2 = jnp.zeros((Cout,), jnp.float32)
    params = (w1, b1, g1, be1, w2, b2, g2, be2)

    # 1) Exact-semantics check: f32 kernel vs the f32 PyTorch-equivalent reference.
    out_f32 = jax.block_until_ready(double_conv(x, params, compute_dtype=jnp.float32))
    assert out_f32.shape == (N, Cout, H, W)
    ref_f32 = jax.block_until_ready(reference(x, params, compute_dtype=jnp.float32))
    np.testing.assert_allclose(np.asarray(out_f32), np.asarray(ref_f32),
                               rtol=1e-3, atol=1e-3)

    # 2) Default bf16-MXU fast path vs a bf16-operand reference (f32 accumulation
    #    in both; slightly looser tolerance covers rounding-point differences).
    out_bf16 = jax.block_until_ready(double_conv(x, params))
    ref_bf16 = jax.block_until_ready(reference(x, params, compute_dtype=jnp.bfloat16))
    np.testing.assert_allclose(np.asarray(out_bf16), np.asarray(ref_bf16),
                               rtol=1e-2, atol=1e-2)

    print("KERNEL_OK")
</pallas_src>

<mosaic_0001>
module attributes {stable_mosaic.version = 11 : i64} {
  func.func @double_conv_kernel(%arg0: i32, %arg1: memref<2x18x18x128xf32, #tpu.memory_space<vmem>>, %arg2: memref<1152x128xf32, #tpu.memory_space<vmem>>, %arg3: memref<1x128xf32, #tpu.memory_space<vmem>>, %arg4: memref<1x128xf32, #tpu.memory_space<vmem>>, %arg5: memref<1152x128xf32, #tpu.memory_space<vmem>>, %arg6: memref<1x128xf32, #tpu.memory_space<vmem>>, %arg7: memref<1x128xf32, #tpu.memory_space<vmem>>, %arg8: memref<2x16x16x128xf32, #tpu.memory_space<vmem>>, %arg9: memref<2x18x18x128xf32, #tpu.memory_space<vmem>>, %arg10: memref<512x1152xf32, #tpu.memory_space<vmem>>) attributes {dimension_semantics = [#tpu.dimension_semantics<arbitrary>], iteration_bounds = array<i64: 1>, scalar_prefetch = 0 : i64, scratch_operands = 2 : i64, tpu.core_type = #tpu.core_type<tc>, window_params = [{pipeline_mode = #tpu.pipeline_mode<synchronous>, transform_indices = @transform_0, window_bounds = array<i64: 2, 18, 18, 128>}, {pipeline_mode = #tpu.pipeline_mode<synchronous>, transform_indices = @transform_1, window_bounds = array<i64: 1152, 128>}, {pipeline_mode = #tpu.pipeline_mode<synchronous>, transform_indices = @transform_2, window_bounds = array<i64: 1, 128>}, {pipeline_mode = #tpu.pipeline_mode<synchronous>, transform_indices = @transform_3, window_bounds = array<i64: 1, 128>}, {pipeline_mode = #tpu.pipeline_mode<synchronous>, transform_indices = @transform_4, window_bounds = array<i64: 1152, 128>}, {pipeline_mode = #tpu.pipeline_mode<synchronous>, transform_indices = @transform_5, window_bounds = array<i64: 1, 128>}, {pipeline_mode = #tpu.pipeline_mode<synchronous>, transform_indices = @transform_6, window_bounds = array<i64: 1, 128>}, {pipeline_mode = #tpu.pipeline_mode<synchronous>, transform_indices = @transform_7, window_bounds = array<i64: 2, 16, 16, 128>}]} {
    %c0 = arith.constant 0 : index
    %c0_0 = arith.constant 0 : index
    %c0_1 = arith.constant 0 : index
    %c0_2 = arith.constant 0 : index
    %0 = vector.load %arg1[%c0, %c0_0, %c0_1, %c0_2] : memref<2x18x18x128xf32, #tpu.memory_space<vmem>>, vector<2x16x16x128xf32>
    %1 = vector.shape_cast %0 : vector<2x16x16x128xf32> to vector<512x128xf32>
    %c0_3 = arith.constant 0 : index
    %c0_4 = arith.constant 0 : index
    %2 = vector.load %arg10[%c0_3, %c0_4] : memref<512x1152xf32, #tpu.memory_space<vmem>>, vector<512x128xf32>
    tpu.vector_store %arg10[%c0_3, %c0_4], %1 {strides = array<i32>} : memref<512x1152xf32, #tpu.memory_space<vmem>>, vector<512x128xf32>,
    %c0_5 = arith.constant 0 : index
    %c0_6 = arith.constant 0 : index
    %c1 = arith.constant 1 : index
    %c0_7 = arith.constant 0 : index
    %3 = vector.load %arg1[%c0_5, %c0_6, %c1, %c0_7] : memref<2x18x18x128xf32, #tpu.memory_space<vmem>>, vector<2x16x16x128xf32>
    %4 = vector.shape_cast %3 : vector<2x16x16x128xf32> to vector<512x128xf32>
    %c0_8 = arith.constant 0 : index
    %c128 = arith.constant 128 : index
    %5 = vector.load %arg10[%c0_8, %c128] : memref<512x1152xf32, #tpu.memory_space<vmem>>, vector<512x128xf32>
    tpu.vector_store %arg10[%c0_8, %c128], %4 {strides = array<i32>} : memref<512x1152xf32, #tpu.memory_space<vmem>>, vector<512x128xf32>,
    %c0_9 = arith.constant 0 : index
    %c0_10 = arith.constant 0 : index
    %c2 = arith.constant 2 : index
    %c0_11 = arith.constant 0 : index
    %6 = vector.load %arg1[%c0_9, %c0_10, %c2, %c0_11] : memref<2x18x18x128xf32, #tpu.memory_space<vmem>>, vector<2x16x16x128xf32>
    %7 = vector.shape_cast %6 : vector<2x16x16x128xf32> to vector<512x128xf32>
    %c0_12 = arith.constant 0 : index
    %c256 = arith.constant 256 : index
    %8 = vector.load %arg10[%c0_12, %c256] : memref<512x1152xf32, #tpu.memory_space<vmem>>, vector<512x128xf32>
    tpu.vector_store %arg10[%c0_12, %c256], %7 {strides = array<i32>} : memref<512x1152xf32, #tpu.memory_space<vmem>>, vector<512x128xf32>,
    %c0_13 = arith.constant 0 : index
    %c1_14 = arith.constant 1 : index
    %c0_15 = arith.constant 0 : index
    %c0_16 = arith.constant 0 : index
    %9 = vector.load %arg1[%c0_13, %c1_14, %c0_15, %c0_16] : memref<2x18x18x128xf32, #tpu.memory_space<vmem>>, vector<2x16x16x128xf32>
    %10 = vector.shape_cast %9 : vector<2x16x16x128xf32> to vector<512x128xf32>
    %c0_17 = arith.constant 0 : index
    %c384 = arith.constant 384 : index
    %11 = vector.load %arg10[%c0_17, %c384] : memref<512x1152xf32, #tpu.memory_space<vmem>>, vector<512x128xf32>
    tpu.vector_store %arg10[%c0_17, %c384], %10 {strides = array<i32>} : memref<512x1152xf32, #tpu.memory_space<vmem>>, vector<512x128xf32>,
    %c0_18 = arith.constant 0 : index
    %c1_19 = arith.constant 1 : index
    %c1_20 = arith.constant 1 : index
    %c0_21 = arith.constant 0 : index
    %12 = vector.load %arg1[%c0_18, %c1_19, %c1_20, %c0_21] : memref<2x18x18x128xf32, #tpu.memory_space<vmem>>, vector<2x16x16x128xf32>
    %13 = vector.shape_cast %12 : vector<2x16x16x128xf32> to vector<512x128xf32>
    %c0_22 = arith.constant 0 : index
    %c512 = arith.constant 512 : index
    %14 = vector.load %arg10[%c0_22, %c512] : memref<512x1152xf32, #tpu.memory_space<vmem>>, vector<512x128xf32>
    tpu.vector_store %arg10[%c0_22, %c512], %13 {strides = array<i32>} : memref<512x1152xf32, #tpu.memory_space<vmem>>, vector<512x128xf32>,
    %c0_23 = arith.constant 0 : index
    %c1_24 = arith.constant 1 : index
    %c2_25 = arith.constant 2 : index
    %c0_26 = arith.constant 0 : index
    %15 = vector.load %arg1[%c0_23, %c1_24, %c2_25, %c0_26] : memref<2x18x18x128xf32, #tpu.memory_space<vmem>>, vector<2x16x16x128xf32>
    %16 = vector.shape_cast %15 : vector<2x16x16x128xf32> to vector<512x128xf32>
    %c0_27 = arith.constant 0 : index
    %c640 = arith.constant 640 : index
    %17 = vector.load %arg10[%c0_27, %c640] : memref<512x1152xf32, #tpu.memory_space<vmem>>, vector<512x128xf32>
    tpu.vector_store %arg10[%c0_27, %c640], %16 {strides = array<i32>} : memref<512x1152xf32, #tpu.memory_space<vmem>>, vector<512x128xf32>,
    %c0_28 = arith.constant 0 : index
    %c2_29 = arith.constant 2 : index
    %c0_30 = arith.constant 0 : index
    %c0_31 = arith.constant 0 : index
    %18 = vector.load %arg1[%c0_28, %c2_29, %c0_30, %c0_31] : memref<2x18x18x128xf32, #tpu.memory_space<vmem>>, vector<2x16x16x128xf32>
    %19 = vector.shape_cast %18 : vector<2x16x16x128xf32> to vector<512x128xf32>
    %c0_32 = arith.constant 0 : index
    %c768 = arith.constant 768 : index
    %20 = vector.load %arg10[%c0_32, %c768] : memref<512x1152xf32, #tpu.memory_space<vmem>>, vector<512x128xf32>
    tpu.vector_store %arg10[%c0_32, %c768], %19 {strides = array<i32>} : memref<512x1152xf32, #tpu.memory_space<vmem>>, vector<512x128xf32>,
    %c0_33 = arith.constant 0 : index
    %c2_34 = arith.constant 2 : index
    %c1_35 = arith.constant 1 : index
    %c0_36 = arith.constant 0 : index
    %21 = vector.load %arg1[%c0_33, %c2_34, %c1_35, %c0_36] : memref<2x18x18x128xf32, #tpu.memory_space<vmem>>, vector<2x16x16x128xf32>
    %22 = vector.shape_cast %21 : vector<2x16x16x128xf32> to vector<512x128xf32>
    %c0_37 = arith.constant 0 : index
    %c896 = arith.constant 896 : index
    %23 = vector.load %arg10[%c0_37, %c896] : memref<512x1152xf32, #tpu.memory_space<vmem>>, vector<512x128xf32>
    tpu.vector_store %arg10[%c0_37, %c896], %22 {strides = array<i32>} : memref<512x1152xf32, #tpu.memory_space<vmem>>, vector<512x128xf32>,
    %c0_38 = arith.constant 0 : index
    %c2_39 = arith.constant 2 : index
    %c2_40 = arith.constant 2 : index
    %c0_41 = arith.constant 0 : index
    %24 = vector.load %arg1[%c0_38, %c2_39, %c2_40, %c0_41] : memref<2x18x18x128xf32, #tpu.memory_space<vmem>>, vector<2x16x16x128xf32>
    %25 = vector.shape_cast %24 : vector<2x16x16x128xf32> to vector<512x128xf32>
    %c0_42 = arith.constant 0 : index
    %c1024 = arith.constant 1024 : index
    %26 = vector.load %arg10[%c0_42, %c1024] : memref<512x1152xf32, #tpu.memory_space<vmem>>, vector<512x128xf32>
    tpu.vector_store %arg10[%c0_42, %c1024], %25 {strides = array<i32>} : memref<512x1152xf32, #tpu.memory_space<vmem>>, vector<512x128xf32>,
    %c0_43 = arith.constant 0 : index
    %c0_44 = arith.constant 0 : index
    %27 = vector.load %arg10[%c0_43, %c0_44] : memref<512x1152xf32, #tpu.memory_space<vmem>>, vector<512x1152xf32>
    %c0_45 = arith.constant 0 : index
    %c0_46 = arith.constant 0 : index
    %28 = vector.load %arg2[%c0_45, %c0_46] : memref<1152x128xf32, #tpu.memory_space<vmem>>, vector<1152x128xf32>
    %cst = arith.constant dense<0.000000e+00> : vector<512x128xf32>
    %29 = tpu.matmul %27, %28, %cst {dimension_numbers = #tpu.dot_dimension_numbers<[1], [0], [0], [1], [0, 0, 1, 1], [], []>} : vector<512x1152xf32>, vector<1152x128xf32>, vector<512x128xf32> -> vector<512x128xf32>
    %cst_47 = arith.constant dense<0.000000e+00> : vector<128xf32>
    %30 = vector.multi_reduction <add>, %29, %cst_47 [0] : vector<512x128xf32> to vector<128xf32>
    %31 = vector.shape_cast %30 : vector<128xf32> to vector<1x128xf32>
    %32 = arith.mulf %29, %29 : vector<512x128xf32>
    %cst_48 = arith.constant dense<0.000000e+00> : vector<128xf32>
    %33 = vector.multi_reduction <add>, %32, %cst_48 [0] : vector<512x128xf32> to vector<128xf32>
    %34 = vector.shape_cast %33 : vector<128xf32> to vector<1x128xf32>
    %cst_49 = arith.constant 0.001953125 : f32
    %35 = vector.broadcast %cst_49 : f32 to vector<1x128xf32>
    %36 = arith.mulf %31, %35 : vector<1x128xf32>
    %cst_50 = arith.constant 0.001953125 : f32
    %37 = vector.broadcast %cst_50 : f32 to vector<1x128xf32>
    %38 = arith.mulf %34, %37 : vector<1x128xf32>
    %39 = arith.mulf %36, %36 : vector<1x128xf32>
    %40 = arith.subf %38, %39 : vector<1x128xf32>
    %cst_51 = arith.constant 0.000000e+00 : f32
    %41 = vector.broadcast %cst_51 : f32 to vector<1x128xf32>
    %42 = arith.maximumf %40, %41 : vector<1x128xf32>
    %c0_52 = arith.constant 0 : index
    %c0_53 = arith.constant 0 : index
    %43 = vector.load %arg3[%c0_52, %c0_53] : memref<1x128xf32, #tpu.memory_space<vmem>>, vector<1x128xf32>
    %cst_54 = arith.constant 9.99999974E-6 : f32
    %44 = vector.broadcast %cst_54 : f32 to vector<1x128xf32>
    %45 = arith.addf %42, %44 : vector<1x128xf32>
    %46 = math.rsqrt %45 : vector<1x128xf32>
    %47 = arith.mulf %43, %46 : vector<1x128xf32>
    %c0_55 = arith.constant 0 : index
    %c0_56 = arith.constant 0 : index
    %48 = vector.load %arg4[%c0_55, %c0_56] : memref<1x128xf32, #tpu.memory_space<vmem>>, vector<1x128xf32>
    %49 = arith.mulf %36, %47 : vector<1x128xf32>
    %50 = arith.subf %48, %49 : vector<1x128xf32>
    %51 = vector.broadcast %47 : vector<1x128xf32> to vector<512x128xf32>
    %52 = arith.mulf %29, %51 : vector<512x128xf32>
    %53 = vector.broadcast %50 : vector<1x128xf32> to vector<512x128xf32>
    %54 = arith.addf %52, %53 : vector<512x128xf32>
    %cst_57 = arith.constant 0.000000e+00 : f32
    %55 = vector.broadcast %cst_57 : f32 to vector<512x128xf32>
    %56 = arith.maximumf %54, %55 : vector<512x128xf32>
    %57 = vector.shape_cast %56 : vector<512x128xf32> to vector<2x16x16x128xf32>
    %c0_58 = arith.constant 0 : index
    %c1_59 = arith.constant 1 : index
    %c1_60 = arith.constant 1 : index
    %c0_61 = arith.constant 0 : index
    %58 = vector.load %arg9[%c0_58, %c1_59, %c1_60, %c0_61] : memref<2x18x18x128xf32, #tpu.memory_space<vmem>>, vector<2x16x16x128xf32>
    tpu.vector_store %arg9[%c0_58, %c1_59, %c1_60, %c0_61], %57 {strides = array<i32>} : memref<2x18x18x128xf32, #tpu.memory_space<vmem>>, vector<2x16x16x128xf32>,
    %cst_62 = arith.constant 0.000000e+00 : f32
    %59 = vector.broadcast %cst_62 : f32 to vector<2x1x18x128xf32>
    %c0_63 = arith.constant 0 : index
    %c0_64 = arith.constant 0 : index
    %c0_65 = arith.constant 0 : index
    %c0_66 = arith.constant 0 : index
    %60 = vector.load %arg9[%c0_63, %c0_64, %c0_65, %c0_66] : memref<2x18x18x128xf32, #tpu.memory_space<vmem>>, vector<2x1x18x128xf32>
    tpu.vector_store %arg9[%c0_63, %c0_64, %c0_65, %c0_66], %59 {strides = array<i32>} : memref<2x18x18x128xf32, #tpu.memory_space<vmem>>, vector<2x1x18x128xf32>,
    %c0_67 = arith.constant 0 : index
    %c17 = arith.constant 17 : index
    %c0_68 = arith.constant 0 : index
    %c0_69 = arith.constant 0 : index
    %61 = vector.load %arg9[%c0_67, %c17, %c0_68, %c0_69] : memref<2x18x18x128xf32, #tpu.memory_space<vmem>>, vector<2x1x18x128xf32>
    tpu.vector_store %arg9[%c0_67, %c17, %c0_68, %c0_69], %59 {strides = array<i32>} : memref<2x18x18x128xf32, #tpu.memory_space<vmem>>, vector<2x1x18x128xf32>,
    %cst_70 = arith.constant 0.000000e+00 : f32
    %62 = vector.broadcast %cst_70 : f32 to vector<2x18x1x128xf32>
    %c0_71 = arith.constant 0 : index
    %c0_72 = arith.constant 0 : index
    %c0_73 = arith.constant 0 : index
    %c0_74 = arith.constant 0 : index
    %63 = vector.load %arg9[%c0_71, %c0_72, %c0_73, %c0_74] : memref<2x18x18x128xf32, #tpu.memory_space<vmem>>, vector<2x18x1x128xf32>
    tpu.vector_store %arg9[%c0_71, %c0_72, %c0_73, %c0_74], %62 {strides = array<i32>} : memref<2x18x18x128xf32, #tpu.memory_space<vmem>>, vector<2x18x1x128xf32>,
    %c0_75 = arith.constant 0 : index
    %c0_76 = arith.constant 0 : index
    %c17_77 = arith.constant 17 : index
    %c0_78 = arith.constant 0 : index
    %64 = vector.load %arg9[%c0_75, %c0_76, %c17_77, %c0_78] : memref<2x18x18x128xf32, #tpu.memory_space<vmem>>, vector<2x18x1x128xf32>
    tpu.vector_store %arg9[%c0_75, %c0_76, %c17_77, %c0_78], %62 {strides = array<i32>} : memref<2x18x18x128xf32, #tpu.memory_space<vmem>>, vector<2x18x1x128xf32>,
    %c0_79 = arith.constant 0 : index
    %c0_80 = arith.constant 0 : index
    %c0_81 = arith.constant 0 : index
    %c0_82 = arith.constant 0 : index
    %65 = vector.load %arg9[%c0_79, %c0_80, %c0_81, %c0_82] : memref<2x18x18x128xf32, #tpu.memory_space<vmem>>, vector<2x16x16x128xf32>
    %66 = vector.shape_cast %65 : vector<2x16x16x128xf32> to vector<512x128xf32>
    %c0_83 = arith.constant 0 : index
    %c0_84 = arith.constant 0 : index
    %67 = vector.load %arg10[%c0_83, %c0_84] : memref<512x1152xf32, #tpu.memory_space<vmem>>, vector<512x128xf32>
    tpu.vector_store %arg10[%c0_83, %c0_84], %66 {strides = array<i32>} : memref<512x1152xf32, #tpu.memory_space<vmem>>, vector<512x128xf32>,
    %c0_85 = arith.constant 0 : index
    %c0_86 = arith.constant 0 : index
    %c1_87 = arith.constant 1 : index
    %c0_88 = arith.constant 0 : index
    %68 = vector.load %arg9[%c0_85, %c0_86, %c1_87, %c0_88] : memref<2x18x18x128xf32, #tpu.memory_space<vmem>>, vector<2x16x16x128xf32>
    %69 = vector.shape_cast %68 : vector<2x16x16x128xf32> to vector<512x128xf32>
    %c0_89 = arith.constant 0 : index
    %c128_90 = arith.constant 128 : index
    %70 = vector.load %arg10[%c0_89, %c128_90] : memref<512x1152xf32, #tpu.memory_space<vmem>>, vector<512x128xf32>
    tpu.vector_store %arg10[%c0_89, %c128_90], %69 {strides = array<i32>} : memref<512x1152xf32, #tpu.memory_space<vmem>>, vector<512x128xf32>,
    %c0_91 = arith.constant 0 : index
    %c0_92 = arith.constant 0 : index
    %c2_93 = arith.constant 2 : index
    %c0_94 = arith.constant 0 : index
    %71 = vector.load %arg9[%c0_91, %c0_92, %c2_93, %c0_94] : memref<2x18x18x128xf32, #tpu.memory_space<vmem>>, vector<2x16x16x128xf32>
    %72 = vector.shape_cast %71 : vector<2x16x16x128xf32> to vector<512x128xf32>
    %c0_95 = arith.constant 0 : index
    %c256_96 = arith.constant 256 : index
    %73 = vector.load %arg10[%c0_95, %c256_96] : memref<512x1152xf32, #tpu.memory_space<vmem>>, vector<512x128xf32>
    tpu.vector_store %arg10[%c0_95, %c256_96], %72 {strides = array<i32>} : memref<512x1152xf32, #tpu.memory_space<vmem>>, vector<512x128xf32>,
    %c0_97 = arith.constant 0 : index
    %c1_98 = arith.constant 1 : index
    %c0_99 = arith.constant 0 : index
    %c0_100 = arith.constant 0 : index
    %74 = vector.load %arg9[%c0_97, %c1_98, %c0_99, %c0_100] : memref<2x18x18x128xf32, #tpu.memory_space<vmem>>, vector<2x16x16x128xf32>
    %75 = vector.shape_cast %74 : vector<2x16x16x128xf32> to vector<512x128xf32>
    %c0_101 = arith.constant 0 : index
    %c384_102 = arith.constant 384 : index
    %76 = vector.load %arg10[%c0_101, %c384_102] : memref<512x1152xf32, #tpu.memory_space<vmem>>, vector<512x128xf32>
    tpu.vector_store %arg10[%c0_101, %c384_102], %75 {strides = array<i32>} : memref<512x1152xf32, #tpu.memory_space<vmem>>, vector<512x128xf32>,
    %c0_103 = arith.constant 0 : index
    %c1_104 = arith.constant 1 : index
    %c1_105 = arith.constant 1 : index
    %c0_106 = arith.constant 0 : index
    %77 = vector.load %arg9[%c0_103, %c1_104, %c1_105, %c0_106] : memref<2x18x18x128xf32, #tpu.memory_space<vmem>>, vector<2x16x16x128xf32>
    %78 = vector.shape_cast %77 : vector<2x16x16x128xf32> to vector<512x128xf32>
    %c0_107 = arith.constant 0 : index
    %c512_108 = arith.constant 512 : index
    %79 = vector.load %arg10[%c0_107, %c512_108] : memref<512x1152xf32, #tpu.memory_space<vmem>>, vector<512x128xf32>
    tpu.vector_store %arg10[%c0_107, %c512_108], %78 {strides = array<i32>} : memref<512x1152xf32, #tpu.memory_space<vmem>>, vector<512x128xf32>,
    %c0_109 = arith.constant 0 : index
    %c1_110 = arith.constant 1 : index
    %c2_111 = arith.constant 2 : index
    %c0_112 = arith.constant 0 : index
    %80 = vector.load %arg9[%c0_109, %c1_110, %c2_111, %c0_112] : memref<2x18x18x128xf32, #tpu.memory_space<vmem>>, vector<2x16x16x128xf32>
    %81 = vector.shape_cast %80 : vector<2x16x16x128xf32> to vector<512x128xf32>
    %c0_113 = arith.constant 0 : index
    %c640_114 = arith.constant 640 : index
    %82 = vector.load %arg10[%c0_113, %c640_114] : memref<512x1152xf32, #tpu.memory_space<vmem>>, vector<512x128xf32>
    tpu.vector_store %arg10[%c0_113, %c640_114], %81 {strides = array<i32>} : memref<512x1152xf32, #tpu.memory_space<vmem>>, vector<512x128xf32>,
    %c0_115 = arith.constant 0 : index
    %c2_116 = arith.constant 2 : index
    %c0_117 = arith.constant 0 : index
    %c0_118 = arith.constant 0 : index
    %83 = vector.load %arg9[%c0_115, %c2_116, %c0_117, %c0_118] : memref<2x18x18x128xf32, #tpu.memory_space<vmem>>, vector<2x16x16x128xf32>
    %84 = vector.shape_cast %83 : vector<2x16x16x128xf32> to vector<512x128xf32>
    %c0_119 = arith.constant 0 : index
    %c768_120 = arith.constant 768 : index
    %85 = vector.load %arg10[%c0_119, %c768_120] : memref<512x1152xf32, #tpu.memory_space<vmem>>, vector<512x128xf32>
    tpu.vector_store %arg10[%c0_119, %c768_120], %84 {strides = array<i32>} : memref<512x1152xf32, #tpu.memory_space<vmem>>, vector<512x128xf32>,
    %c0_121 = arith.constant 0 : index
    %c2_122 = arith.constant 2 : index
    %c1_123 = arith.constant 1 : index
    %c0_124 = arith.constant 0 : index
    %86 = vector.load %arg9[%c0_121, %c2_122, %c1_123, %c0_124] : memref<2x18x18x128xf32, #tpu.memory_space<vmem>>, vector<2x16x16x128xf32>
    %87 = vector.shape_cast %86 : vector<2x16x16x128xf32> to vector<512x128xf32>
    %c0_125 = arith.constant 0 : index
    %c896_126 = arith.constant 896 : index
    %88 = vector.load %arg10[%c0_125, %c896_126] : memref<512x1152xf32, #tpu.memory_space<vmem>>, vector<512x128xf32>
    tpu.vector_store %arg10[%c0_125, %c896_126], %87 {strides = array<i32>} : memref<512x1152xf32, #tpu.memory_space<vmem>>, vector<512x128xf32>,
    %c0_127 = arith.constant 0 : index
    %c2_128 = arith.constant 2 : index
    %c2_129 = arith.constant 2 : index
    %c0_130 = arith.constant 0 : index
    %89 = vector.load %arg9[%c0_127, %c2_128, %c2_129, %c0_130] : memref<2x18x18x128xf32, #tpu.memory_space<vmem>>, vector<2x16x16x128xf32>
    %90 = vector.shape_cast %89 : vector<2x16x16x128xf32> to vector<512x128xf32>
    %c0_131 = arith.constant 0 : index
    %c1024_132 = arith.constant 1024 : index
    %91 = vector.load %arg10[%c0_131, %c1024_132] : memref<512x1152xf32, #tpu.memory_space<vmem>>, vector<512x128xf32>
    tpu.vector_store %arg10[%c0_131, %c1024_132], %90 {strides = array<i32>} : memref<512x1152xf32, #tpu.memory_space<vmem>>, vector<512x128xf32>,
    %c0_133 = arith.constant 0 : index
    %c0_134 = arith.constant 0 : index
    %92 = vector.load %arg10[%c0_133, %c0_134] : memref<512x1152xf32, #tpu.memory_space<vmem>>, vector<512x1152xf32>
    %c0_135 = arith.constant 0 : index
    %c0_136 = arith.constant 0 : index
    %93 = vector.load %arg5[%c0_135, %c0_136] : memref<1152x128xf32, #tpu.memory_space<vmem>>, vector<1152x128xf32>
    %cst_137 = arith.constant dense<0.000000e+00> : vector<512x128xf32>
    %94 = tpu.matmul %92, %93, %cst_137 {dimension_numbers = #tpu.dot_dimension_numbers<[1], [0], [0], [1], [0, 0, 1, 1], [], []>} : vector<512x1152xf32>, vector<1152x128xf32>, vector<512x128xf32> -> vector<512x128xf32>
    %cst_138 = arith.constant dense<0.000000e+00> : vector<128xf32>
    %95 = vector.multi_reduction <add>, %94, %cst_138 [0] : vector<512x128xf32> to vector<128xf32>
    %96 = vector.shape_cast %95 : vector<128xf32> to vector<1x128xf32>
    %97 = arith.mulf %94, %94 : vector<512x128xf32>
    %cst_139 = arith.constant dense<0.000000e+00> : vector<128xf32>
    %98 = vector.multi_reduction <add>, %97, %cst_139 [0] : vector<512x128xf32> to vector<128xf32>
    %99 = vector.shape_cast %98 : vector<128xf32> to vector<1x128xf32>
    %cst_140 = arith.constant 0.001953125 : f32
    %100 = vector.broadcast %cst_140 : f32 to vector<1x128xf32>
    %101 = arith.mulf %96, %100 : vector<1x128xf32>
    %cst_141 = arith.constant 0.001953125 : f32
    %102 = vector.broadcast %cst_141 : f32 to vector<1x128xf32>
    %103 = arith.mulf %99, %102 : vector<1x128xf32>
    %104 = arith.mulf %101, %101 : vector<1x128xf32>
    %105 = arith.subf %103, %104 : vector<1x128xf32>
    %cst_142 = arith.constant 0.000000e+00 : f32
    %106 = vector.broadcast %cst_142 : f32 to vector<1x128xf32>
    %107 = arith.maximumf %105, %106 : vector<1x128xf32>
    %c0_143 = arith.constant 0 : index
    %c0_144 = arith.constant 0 : index
    %108 = vector.load %arg6[%c0_143, %c0_144] : memref<1x128xf32, #tpu.memory_space<vmem>>, vector<1x128xf32>
    %cst_145 = arith.constant 9.99999974E-6 : f32
    %109 = vector.broadcast %cst_145 : f32 to vector<1x128xf32>
    %110 = arith.addf %107, %109 : vector<1x128xf32>
    %111 = math.rsqrt %110 : vector<1x128xf32>
    %112 = arith.mulf %108, %111 : vector<1x128xf32>
    %c0_146 = arith.constant 0 : index
    %c0_147 = arith.constant 0 : index
    %113 = vector.load %arg7[%c0_146, %c0_147] : memref<1x128xf32, #tpu.memory_space<vmem>>, vector<1x128xf32>
    %114 = arith.mulf %101, %112 : vector<1x128xf32>
    %115 = arith.subf %113, %114 : vector<1x128xf32>
    %116 = vector.broadcast %112 : vector<1x128xf32> to vector<512x128xf32>
    %117 = arith.mulf %94, %116 : vector<512x128xf32>
    %118 = vector.broadcast %115 : vector<1x128xf32> to vector<512x128xf32>
    %119 = arith.addf %117, %118 : vector<512x128xf32>
    %cst_148 = arith.constant 0.000000e+00 : f32
    %120 = vector.broadcast %cst_148 : f32 to vector<512x128xf32>
    %121 = arith.maximumf %119, %120 : vector<512x128xf32>
    %122 = vector.shape_cast %121 : vector<512x128xf32> to vector<2x16x16x128xf32>
    %c0_149 = arith.constant 0 : index
    %c0_150 = arith.constant 0 : index
    %c0_151 = arith.constant 0 : index
    %c0_152 = arith.constant 0 : index
    %123 = vector.load %arg8[%c0_149, %c0_150, %c0_151, %c0_152] : memref<2x16x16x128xf32, #tpu.memory_space<vmem>>, vector<2x16x16x128xf32>
    tpu.vector_store %arg8[%c0_149, %c0_150, %c0_151, %c0_152], %122 {strides = array<i32>} : memref<2x16x16x128xf32, #tpu.memory_space<vmem>>, vector<2x16x16x128xf32>,
    return
  }
  func.func @transform_0(%arg0: i32) -> (i32, i32, i32, i32) {
    %c0_i32 = arith.constant 0 : i32
    %c0_i32_0 = arith.constant 0 : i32
    %c0_i32_1 = arith.constant 0 : i32
    %c0_i32_2 = arith.constant 0 : i32
    %c0_i32_3 = arith.constant 0 : i32
    return %c0_i32, %c0_i32_0, %c0_i32_1, %c0_i32_2 : i32, i32, i32, i32
  }
  func.func @transform_1(%arg0: i32) -> (i32, i32) {
    %c0_i32 = arith.constant 0 : i32
    %c0_i32_0 = arith.constant 0 : i32
    %c0_i32_1 = arith.constant 0 : i32
    return %c0_i32, %c0_i32_0 : i32, i32
  }
  func.func @transform_2(%arg0: i32) -> (i32, i32) {
    %c0_i32 = arith.constant 0 : i32
    %c0_i32_0 = arith.constant 0 : i32
    %c0_i32_1 = arith.constant 0 : i32
    return %c0_i32, %c0_i32_0 : i32, i32
  }
  func.func @transform_3(%arg0: i32) -> (i32, i32) {
    %c0_i32 = arith.constant 0 : i32
    %c0_i32_0 = arith.constant 0 : i32
    %c0_i32_1 = arith.constant 0 : i32
    return %c0_i32, %c0_i32_0 : i32, i32
  }
  func.func @transform_4(%arg0: i32) -> (i32, i32) {
    %c0_i32 = arith.constant 0 : i32
    %c0_i32_0 = arith.constant 0 : i32
    %c0_i32_1 = arith.constant 0 : i32
    return %c0_i32, %c0_i32_0 : i32, i32
  }
  func.func @transform_5(%arg0: i32) -> (i32, i32) {
    %c0_i32 = arith.constant 0 : i32
    %c0_i32_0 = arith.constant 0 : i32
    %c0_i32_1 = arith.constant 0 : i32
    return %c0_i32, %c0_i32_0 : i32, i32
  }
  func.func @transform_6(%arg0: i32) -> (i32, i32) {
    %c0_i32 = arith.constant 0 : i32
    %c0_i32_0 = arith.constant 0 : i32
    %c0_i32_1 = arith.constant 0 : i32
    return %c0_i32, %c0_i32_0 : i32, i32
  }
  func.func @transform_7(%arg0: i32) -> (i32, i32, i32, i32) {
    %c0_i32 = arith.constant 0 : i32
    %c0_i32_0 = arith.constant 0 : i32
    %c0_i32_1 = arith.constant 0 : i32
    %c0_i32_2 = arith.constant 0 : i32
    %c0_i32_3 = arith.constant 0 : i32
    return %c0_i32, %c0_i32_0, %c0_i32_1, %c0_i32_2 : i32, i32, i32, i32
  }
}

</mosaic_0001>

<llo_original>
// kernel: tpu_custom_call.1
$region0: #{tpu_custom_call.1}
  #allocation0 [shape = 'u32[]', space=smem, size = 0x4, offset = 0x4, fixed_abs, tag = 'smem constant byte address 0x4 - core index']
  #allocation1 [shape = 'u32[144,128]{1,0:T(1,128)}', space=vmem, size = 0x12000, scoped, tag = 'internal scratch']
  #allocation2 [shape = 'f32[2,18,18,128]{3,2,1,0:T(8,128)}', space=vmem, size = 0x6c000, scoped, tag = 'scratch operand']
  #allocation3 [shape = 'f32[512,1152]{1,0:T(8,128)}', space=vmem, size = 0x240000, scoped, tag = 'scratch operand']
  %s0 = inlined_call_operand.vmem [shape: f32[2,18,18,128], index: 0, kind: input, shape index: {}]
  %s1 = inlined_call_operand.vmem [shape: f32[1152,128], index: 1, kind: input, shape index: {}]
  %s2 = inlined_call_operand.vmem [shape: f32[1,128], index: 2, kind: input, shape index: {}]
  %s3 = inlined_call_operand.vmem [shape: f32[1,128], index: 3, kind: input, shape index: {}]
  %s4 = inlined_call_operand.hbm [shape: f32[1152,128], index: 4, kind: input, shape index: {}]
  %s5 = inlined_call_operand.vmem [shape: f32[1,128], index: 5, kind: input, shape index: {}]
  %s6 = inlined_call_operand.vmem [shape: f32[1,128], index: 6, kind: input, shape index: {}]
  %s7 = inlined_call_operand.hbm [shape: f32[2,16,16,128], index: 7, kind: output, shape index: {}]
  %s8 = sld [smem:[#allocation0]]
  $region42: #{tpu_custom_call.1} parent=0
    _
  %s10 = ssub.s32 1, %s8
  %s11 = scalar_select 0, %s10, %s8
  $region1: #{tpu_custom_call.1} parent=0
    #allocation4 [shape = 'u8[589824]{0}', space=vmem, size = 0x90000, scoped, tag = 'input window, operand 4, single buffered']
    #allocation5 [shape = 's32[1]{0}', space=sflag, size = 0x4, scoped, tag = 'scoped memory for tpu_custom_call.1']
    #allocation6 [shape = 's32[1]{0}', space=sflag, size = 0x4, scoped, tag = 'scoped memory for tpu_custom_call.1']
    #allocation7 [shape = 'u8[262144]{0}', space=vmem, size = 0x40000, scoped, tag = 'output window, operand 0, single buffered']
    %12 = vsyncpa [#allocation5], 0
    %13 = vsyncpa [#allocation6], 0
    // Predicated region
    $region2: #{tpu_custom_call.1} parent=1 // pred_check
      _
    $region3: #{tpu_custom_call.1} parent=1 // pred_check_branch
      %15 = sbr.rel (0) target = $region5
    $region4: #{tpu_custom_call.1} parent=1 // pred_region
      _
    $region5: #{tpu_custom_call.1} parent=1 // pred_fallthru
      _
    // Predicated region
    $region6: #{tpu_custom_call.1} parent=1 // pred_check
      _
    $region7: #{tpu_custom_call.1} parent=1 // pred_check_branch
      %17 = sbr.rel (0) target = $region9
    $region8: #{tpu_custom_call.1} parent=1 // pred_region
      _
    $region9: #{tpu_custom_call.1} parent=1 // pred_fallthru
      _
    // Predicated region
    $region10: #{tpu_custom_call.1} parent=1 // pred_check
      _
    $region11: #{tpu_custom_call.1} parent=1 // pred_check_branch
      %19 = sbr.rel (0) target = $region13
    $region12: #{tpu_custom_call.1} parent=1 // pred_region
      _
    $region13: #{tpu_custom_call.1} parent=1 // pred_fallthru
      _
    // Predicated region
    $region14: #{tpu_custom_call.1} parent=1 // pred_check
      _
    $region15: #{tpu_custom_call.1} parent=1 // pred_check_branch
      %21 = sbr.rel (0) target = $region17
    $region16: #{tpu_custom_call.1} parent=1 // pred_region
      _
    $region17: #{tpu_custom_call.1} parent=1 // pred_fallthru
      _
    // Predicated region
    $region18: #{tpu_custom_call.1} parent=1 // pred_check
      _
    $region19: #{tpu_custom_call.1} parent=1 // pred_check_branch
      %23 = sbr.rel (0) target = $region21
    $region20: #{tpu_custom_call.1} parent=1 // pred_region
      %s25 = ssub.s32 18432, 18432
      %26 = vsyncadd [#allocation5], %s25
      %s27 = sshll.u32 [#allocation4], 4
      %s28 = int_to_ptr.vmem [resolvable:$true] %s27
      %33 = dma.hbm_to_vmem [thread:$0]  %s4, 18432, %s28, [#allocation5], 128, 128, 8
    $region21: #{tpu_custom_call.1} parent=1 // pred_fallthru
      _
    // Predicated region
    $region22: #{tpu_custom_call.1} parent=1 // pred_check
      _
    $region23: #{tpu_custom_call.1} parent=1 // pred_check_branch
      %35 = sbr.rel (0) target = $region25
    $region24: #{tpu_custom_call.1} parent=1 // pred_region
      _
    $region25: #{tpu_custom_call.1} parent=1 // pred_fallthru
      _
    // Predicated region
    $region26: #{tpu_custom_call.1} parent=1 // pred_check
      _
    $region27: #{tpu_custom_call.1} parent=1 // pred_check_branch
      %37 = sbr.rel (0) target = $region29
    $region28: #{tpu_custom_call.1} parent=1 // pred_region
      _
    $region29: #{tpu_custom_call.1} parent=1 // pred_fallthru
      _
    // Predicated region
    $region30: #{tpu_custom_call.1} parent=1 // pred_check
      _
    $region31: #{tpu_custom_call.1} parent=1 // pred_check_branch
      %39 = sbr.rel (0) target = $region33
    $region32: #{tpu_custom_call.1} parent=1 // pred_region
      %40 = dma.done [#allocation5], 18432
    $region33: #{tpu_custom_call.1} parent=1 // pred_fallthru
      _
    %v41 = vld [vmem:[%s0] sm:$0xff]
    %v42 = vld [vmem:[%s0 + $0x8] sm:$0xff]
    %v43 = vld [vmem:[%s0 + $0x18] sm:$0xff]
    %v44 = vld [vmem:[%s0 + $0x20] sm:$0xff]
    %v45 = vld [vmem:[%s0 + $0x30] sm:$0xff]
    %v46 = vld [vmem:[%s0 + $0x38] sm:$0xff]
    %v47 = vld [vmem:[%s0 + $0x48] sm:$0xff]
    %v48 = vld [vmem:[%s0 + $0x50] sm:$0xff]
    %v49 = vld [vmem:[%s0 + $0x60] sm:$0xff]
    %v50 = vld [vmem:[%s0 + $0x68] sm:$0xff]
    %v51 = vld [vmem:[%s0 + $0x78] sm:$0xff]
    %v52 = vld [vmem:[%s0 + $0x80] sm:$0xff]
    %v53 = vld [vmem:[%s0 + $0x90] sm:$0xff]
    %v54 = vld [vmem:[%s0 + $0x98] sm:$0xff]
    %v55 = vld [vmem:[%s0 + $0xa8] sm:$0xff]
    %v56 = vld [vmem:[%s0 + $0xb0] sm:$0xff]
    %v57 = vld [vmem:[%s0 + $0xc0] sm:$0xff]
    %v58 = vld [vmem:[%s0 + $0xc8] sm:$0xff]
    %v59 = vld [vmem:[%s0 + $0xd8] sm:$0xff]
    %v60 = vld [vmem:[%s0 + $0xe0] sm:$0xff]
    %v61 = vld [vmem:[%s0 + $0xf0] sm:$0xff]
    %v62 = vld [vmem:[%s0 + $0xf8] sm:$0xff]
    %v63 = vld [vmem:[%s0 + $0x108] sm:$0xff]
    %v64 = vld [vmem:[%s0 + $0x110] sm:$0xff]
    %v65 = vld [vmem:[%s0 + $0x120] sm:$0xff]
    %v66 = vld [vmem:[%s0 + $0x128] sm:$0xff]
    %v67 = vld [vmem:[%s0 + $0x138] sm:$0xff]
    %v68 = vld [vmem:[%s0 + $0x140] sm:$0xff]
    %v69 = vld [vmem:[%s0 + $0x150] sm:$0xff]
    %v70 = vld [vmem:[%s0 + $0x158] sm:$0xff]
    %v71 = vld [vmem:[%s0 + $0x168] sm:$0xff]
    %v72 = vld [vmem:[%s0 + $0x170] sm:$0xff]
    %v73 = vld [vmem:[%s0 + $0x1b0] sm:$0xff]
    %v74 = vld [vmem:[%s0 + $0x1b8] sm:$0xff]
    %v75 = vld [vmem:[%s0 + $0x1c8] sm:$0xff]
    %v76 = vld [vmem:[%s0 + $0x1d0] sm:$0xff]
    %v77 = vld [vmem:[%s0 + $0x1e0] sm:$0xff]
    %v78 = vld [vmem:[%s0 + $0x1e8] sm:$0xff]
    %v79 = vld [vmem:[%s0 + $0x1f8] sm:$0xff]
    %v80 = vld [vmem:[%s0 + $0x200] sm:$0xff]
    %v81 = vld [vmem:[%s0 + $0x210] sm:$0xff]
    %v82 = vld [vmem:[%s0 + $0x218] sm:$0xff]
    %v83 = vld [vmem:[%s0 + $0x228] sm:$0xff]
    %v84 = vld [vmem:[%s0 + $0x230] sm:$0xff]
    %v85 = vld [vmem:[%s0 + $0x240] sm:$0xff]
    %v86 = vld [vmem:[%s0 + $0x248] sm:$0xff]
    %v87 = vld [vmem:[%s0 + $0x258] sm:$0xff]
    %v88 = vld [vmem:[%s0 + $0x260] sm:$0xff]
    %v89 = vld [vmem:[%s0 + $0x270] sm:$0xff]
    %v90 = vld [vmem:[%s0 + $0x278] sm:$0xff]
    %v91 = vld [vmem:[%s0 + $0x288] sm:$0xff]
    %v92 = vld [vmem:[%s0 + $0x290] sm:$0xff]
    %v93 = vld [vmem:[%s0 + $0x2a0] sm:$0xff]
    %v94 = vld [vmem:[%s0 + $0x2a8] sm:$0xff]
    %v95 = vld [vmem:[%s0 + $0x2b8] sm:$0xff]
    %v96 = vld [vmem:[%s0 + $0x2c0] sm:$0xff]
    %v97 = vld [vmem:[%s0 + $0x2d0] sm:$0xff]
    %v98 = vld [vmem:[%s0 + $0x2d8] sm:$0xff]
    %v99 = vld [vmem:[%s0 + $0x2e8] sm:$0xff]
    %v100 = vld [vmem:[%s0 + $0x2f0] sm:$0xff]
    %v101 = vld [vmem:[%s0 + $0x300] sm:$0xff]
    %v102 = vld [vmem:[%s0 + $0x308] sm:$0xff]
    %v103 = vld [vmem:[%s0 + $0x318] sm:$0xff]
    %v104 = vld [vmem:[%s0 + $0x320] sm:$0xff]
    %105 = vst [vmem:[#allocation3] sm:$0xff] %v41
    %106 = vst [vmem:[#allocation3 + $0x48] sm:$0xff] %v42
    %107 = vst [vmem:[#allocation3 + $0x90] sm:$0xff] %v43
    %108 = vst [vmem:[#allocation3 + $0xd8] sm:$0xff] %v44
    %109 = vst [vmem:[#allocation3 + $0x120] sm:$0xff] %v45
    %110 = vst [vmem:[#allocation3 + $0x168] sm:$0xff] %v46
    %111 = vst [vmem:[#allocation3 + $0x1b0] sm:$0xff] %v47
    %112 = vst [vmem:[#allocation3 + $0x1f8] sm:$0xff] %v48
    %113 = vst [vmem:[#allocation3 + $0x240] sm:$0xff] %v49
    %114 = vst [vmem:[#allocation3 + $0x288] sm:$0xff] %v50
    %115 = vst [vmem:[#allocation3 + $0x2d0] sm:$0xff] %v51
    %116 = vst [vmem:[#allocation3 + $0x318] sm:$0xff] %v52
    %117 = vst [vmem:[#allocation3 + $0x360] sm:$0xff] %v53
    %118 = vst [vmem:[#allocation3 + $0x3a8] sm:$0xff] %v54
    %119 = vst [vmem:[#allocation3 + $0x3f0] sm:$0xff] %v55
    %120 = vst [vmem:[#allocation3 + $0x438] sm:$0xff] %v56
    %121 = vst [vmem:[#allocation3 + $0x480] sm:$0xff] %v57
    %122 = vst [vmem:[#allocation3 + $0x4c8] sm:$0xff] %v58
    %123 = vst [vmem:[#allocation3 + $0x510] sm:$0xff] %v59
    %124 = vst [vmem:[#allocation3 + $0x558] sm:$0xff] %v60
    %125 = vst [vmem:[#allocation3 + $0x5a0] sm:$0xff] %v61
    %126 = vst [vmem:[#allocation3 + $0x5e8] sm:$0xff] %v62
    %127 = vst [vmem:[#allocation3 + $0x630] sm:$0xff] %v63
    %128 = vst [vmem:[#allocation3 + $0x678] sm:$0xff] %v64
    %129 = vst [vmem:[#allocation3 + $0x6c0] sm:$0xff] %v65
    %130 = vst [vmem:[#allocation3 + $0x708] sm:$0xff] %v66
    %131 = vst [vmem:[#allocation3 + $0x750] sm:$0xff] %v67
    %132 = vst [vmem:[#allocation3 + $0x798] sm:$0xff] %v68
    %133 = vst [vmem:[#allocation3 + $0x7e0] sm:$0xff] %v69
    %134 = vst [vmem:[#allocation3 + $0x828] sm:$0xff] %v70
    %135 = vst [vmem:[#allocation3 + $0x870] sm:$0xff] %v71
    %136 = vst [vmem:[#allocation3 + $0x8b8] sm:$0xff] %v72
    %137 = vst [vmem:[#allocation3 + $0x900] sm:$0xff] %v73
    %138 = vst [vmem:[#allocation3 + $0x948] sm:$0xff] %v74
    %139 = vst [vmem:[#allocation3 + $0x990] sm:$0xff] %v75
    %140 = vst [vmem:[#allocation3 + $0x9d8] sm:$0xff] %v76
    %141 = vst [vmem:[#allocation3 + $0xa20] sm:$0xff] %v77
    %142 = vst [vmem:[#allocation3 + $0xa68] sm:$0xff] %v78
    %143 = vst [vmem:[#allocation3 + $0xab0] sm:$0xff] %v79
    %144 = vst [vmem:[#allocation3 + $0xaf8] sm:$0xff] %v80
    %145 = vst [vmem:[#allocation3 + $0xb40] sm:$0xff] %v81
    %146 = vst [vmem:[#allocation3 + $0xb88] sm:$0xff] %v82
    %147 = vst [vmem:[#allocation3 + $0xbd0] sm:$0xff] %v83
    %148 = vst [vmem:[#allocation3 + $0xc18] sm:$0xff] %v84
    %149 = vst [vmem:[#allocation3 + $0xc60] sm:$0xff] %v85
    %150 = vst [vmem:[#allocation3 + $0xca8] sm:$0xff] %v86
    %151 = vst [vmem:[#allocation3 + $0xcf0] sm:$0xff] %v87
    %152 = vst [vmem:[#allocation3 + $0xd38] sm:$0xff] %v88
    %153 = vst [vmem:[#allocation3 + $0xd80] sm:$0xff] %v89
    %154 = vst [vmem:[#allocation3 + $0xdc8] sm:$0xff] %v90
    %155 = vst [vmem:[#allocation3 + $0xe10] sm:$0xff] %v91
    %156 = vst [vmem:[#allocation3 + $0xe58] sm:$0xff] %v92
    %157 = vst [vmem:[#allocation3 + $0xea0] sm:$0xff] %v93
    %158 = vst [vmem:[#allocation3 + $0xee8] sm:$0xff] %v94
    %159 = vst [vmem:[#allocation3 + $0xf30] sm:$0xff] %v95
    %160 = vst [vmem:[#allocation3 + $0xf78] sm:$0xff] %v96
    %161 = vst [vmem:[#allocation3 + $0xfc0] sm:$0xff] %v97
    %162 = vst [vmem:[#allocation3 + $0x1008] sm:$0xff] %v98
    %163 = vst [vmem:[#allocation3 + $0x1050] sm:$0xff] %v99
    %164 = vst [vmem:[#allocation3 + $0x1098] sm:$0xff] %v100
    %165 = vst [vmem:[#allocation3 + $0x10e0] sm:$0xff] %v101
    %166 = vst [vmem:[#allocation3 + $0x1128] sm:$0xff] %v102
    %167 = vst [vmem:[#allocation3 + $0x1170] sm:$0xff] %v103
    %168 = vst [vmem:[#allocation3 + $0x11b8] sm:$0xff] %v104
    %v169 = vld [vmem:[%s0 + $0x1] sm:$0xff]
    %v170 = vld [vmem:[%s0 + $0x9] sm:$0xff]
    %v171 = vld [vmem:[%s0 + $0x19] sm:$0xff]
    %v172 = vld [vmem:[%s0 + $0x21] sm:$0xff]
    %v173 = vld [vmem:[%s0 + $0x31] sm:$0xff]
    %v174 = vld [vmem:[%s0 + $0x39] sm:$0xff]
    %v175 = vld [vmem:[%s0 + $0x49] sm:$0xff]
    %v176 = vld [vmem:[%s0 + $0x51] sm:$0xff]
    %v177 = vld [vmem:[%s0 + $0x61] sm:$0xff]
    %v178 = vld [vmem:[%s0 + $0x69] sm:$0xff]
    %v179 = vld [vmem:[%s0 + $0x79] sm:$0xff]
    %v180 = vld [vmem:[%s0 + $0x81] sm:$0xff]
    %v181 = vld [vmem:[%s0 + $0x91] sm:$0xff]
    %v182 = vld [vmem:[%s0 + $0x99] sm:$0xff]
    %v183 = vld [vmem:[%s0 + $0xa9] sm:$0xff]
    %v184 = vld [vmem:[%s0 + $0xb1] sm:$0xff]
    %v185 = vld [vmem:[%s0 + $0xc1] sm:$0xff]
    %v186 = vld [vmem:[%s0 + $0xc9] sm:$0xff]
    %v187 = vld [vmem:[%s0 + $0xd9] sm:$0xff]
    %v188 = vld [vmem:[%s0 + $0xe1] sm:$0xff]
    %v189 = vld [vmem:[%s0 + $0xf1] sm:$0xff]
    %v190 = vld [vmem:[%s0 + $0xf9] sm:$0xff]
    %v191 = vld [vmem:[%s0 + $0x109] sm:$0xff]
    %v192 = vld [vmem:[%s0 + $0x111] sm:$0xff]
    %v193 = vld [vmem:[%s0 + $0x121] sm:$0xff]
    %v194 = vld [vmem:[%s0 + $0x129] sm:$0xff]
    %v195 = vld [vmem:[%s0 + $0x139] sm:$0xff]
    %v196 = vld [vmem:[%s0 + $0x141] sm:$0xff]
    %v197 = vld [vmem:[%s0 + $0x151] sm:$0xff]
    %v198 = vld [vmem:[%s0 + $0x159] sm:$0xff]
    %v199 = vld [vmem:[%s0 + $0x169] sm:$0xff]
    %v200 = vld [vmem:[%s0 + $0x171] sm:$0xff]
    %v201 = vld [vmem:[%s0 + $0x1b1] sm:$0xff]
    %v202 = vld [vmem:[%s0 + $0x1b9] sm:$0xff]
    %v203 = vld [vmem:[%s0 + $0x1c9] sm:$0xff]
    %v204 = vld [vmem:[%s0 + $0x1d1] sm:$0xff]
    %v205 = vld [vmem:[%s0 + $0x1e1] sm:$0xff]
    %v206 = vld [vmem:[%s0 + $0x1e9] sm:$0xff]
    %v207 = vld [vmem:[%s0 + $0x1f9] sm:$0xff]
    %v208 = vld [vmem:[%s0 + $0x201] sm:$0xff]
    %v209 = vld [vmem:[%s0 + $0x211] sm:$0xff]
    %v210 = vld [vmem:[%s0 + $0x219] sm:$0xff]
    %v211 = vld [vmem:[%s0 + $0x229] sm:$0xff]
    %v212 = vld [vmem:[%s0 + $0x231] sm:$0xff]
    %v213 = vld [vmem:[%s0 + $0x241] sm:$0xff]
    %v214 = vld [vmem:[%s0 + $0x249] sm:$0xff]
    %v215 = vld [vmem:[%s0 + $0x259] sm:$0xff]
    %v216 = vld [vmem:[%s0 + $0x261] sm:$0xff]
    %v217 = vld [vmem:[%s0 + $0x271] sm:$0xff]
    %v218 = vld [vmem:[%s0 + $0x279] sm:$0xff]
    %v219 = vld [vmem:[%s0 + $0x289] sm:$0xff]
    %v220 = vld [vmem:[%s0 + $0x291] sm:$0xff]
    %v221 = vld [vmem:[%s0 + $0x2a1] sm:$0xff]
    %v222 = vld [vmem:[%s0 + $0x2a9] sm:$0xff]
    %v223 = vld [vmem:[%s0 + $0x2b9] sm:$0xff]
    %v224 = vld [vmem:[%s0 + $0x2c1] sm:$0xff]
    %v225 = vld [vmem:[%s0 + $0x2d1] sm:$0xff]
    %v226 = vld [vmem:[%s0 + $0x2d9] sm:$0xff]
    %v227 = vld [vmem:[%s0 + $0x2e9] sm:$0xff]
    %v228 = vld [vmem:[%s0 + $0x2f1] sm:$0xff]
    %v229 = vld [vmem:[%s0 + $0x301] sm:$0xff]
    %v230 = vld [vmem:[%s0 + $0x309] sm:$0xff]
    %v231 = vld [vmem:[%s0 + $0x319] sm:$0xff]
    %v232 = vld [vmem:[%s0 + $0x321] sm:$0xff]
    %233 = vst [vmem:[#allocation3 + $0x8] sm:$0xff] %v169
    %234 = vst [vmem:[#allocation3 + $0x50] sm:$0xff] %v170
    %235 = vst [vmem:[#allocation3 + $0x98] sm:$0xff] %v171
    %236 = vst [vmem:[#allocation3 + $0xe0] sm:$0xff] %v172
    %237 = vst [vmem:[#allocation3 + $0x128] sm:$0xff] %v173
    %238 = vst [vmem:[#allocation3 + $0x170] sm:$0xff] %v174
    %239 = vst [vmem:[#allocation3 + $0x1b8] sm:$0xff] %v175
    %240 = vst [vmem:[#allocation3 + $0x200] sm:$0xff] %v176
    %241 = vst [vmem:[#allocation3 + $0x248] sm:$0xff] %v177
    %242 = vst [vmem:[#allocation3 + $0x290] sm:$0xff] %v178
    %243 = vst [vmem:[#allocation3 + $0x2d8] sm:$0xff] %v179
    %244 = vst [vmem:[#allocation3 + $0x320] sm:$0xff] %v180
    %245 = vst [vmem:[#allocation3 + $0x368] sm:$0xff] %v181
    %246 = vst [vmem:[#allocation3 + $0x3b0] sm:$0xff] %v182
    %247 = vst [vmem:[#allocation3 + $0x3f8] sm:$0xff] %v183
    %248 = vst [vmem:[#allocation3 + $0x440] sm:$0xff] %v184
    %249 = vst [vmem:[#allocation3 + $0x488] sm:$0xff] %v185
    %250 = vst [vmem:[#allocation3 + $0x4d0] sm:$0xff] %v186
    %251 = vst [vmem:[#allocation3 + $0x518] sm:$0xff] %v187
    %252 = vst [vmem:[#allocation3 + $0x560] sm:$0xff] %v188
    %253 = vst [vmem:[#allocation3 + $0x5a8] sm:$0xff] %v189
    %254 = vst [vmem:[#allocation3 + $0x5f0] sm:$0xff] %v190
    %255 = vst [vmem:[#allocation3 + $0x638] sm:$0xff] %v191
    %256 = vst [vmem:[#allocation3 + $0x680] sm:$0xff] %v192
    %257 = vst [vmem:[#allocation3 + $0x6c8] sm:$0xff] %v193
    %258 = vst [vmem:[#allocation3 + $0x710] sm:$0xff] %v194
    %259 = vst [vmem:[#allocation3 + $0x758] sm:$0xff] %v195
    %260 = vst [vmem:[#allocation3 + $0x7a0] sm:$0xff] %v196
    %261 = vst [vmem:[#allocation3 + $0x7e8] sm:$0xff] %v197
    %262 = vst [vmem:[#allocation3 + $0x830] sm:$0xff] %v198
    %263 = vst [vmem:[#allocation3 + $0x878] sm:$0xff] %v199
    %264 = vst [vmem:[#allocation3 + $0x8c0] sm:$0xff] %v200
    %265 = vst [vmem:[#allocation3 + $0x908] sm:$0xff] %v201
    %266 = vst [vmem:[#allocation3 + $0x950] sm:$0xff] %v202
    %267 = vst [vmem:[#allocation3 + $0x998] sm:$0xff] %v203
    %268 = vst [vmem:[#allocation3 + $0x9e0] sm:$0xff] %v204
    %269 = vst [vmem:[#allocation3 + $0xa28] sm:$0xff] %v205
    %270 = vst [vmem:[#allocation3 + $0xa70] sm:$0xff] %v206
    %271 = vst [vmem:[#allocation3 + $0xab8] sm:$0xff] %v207
    %272 = vst [vmem:[#allocation3 + $0xb00] sm:$0xff] %v208
    %273 = vst [vmem:[#allocation3 + $0xb48] sm:$0xff] %v209
    %274 = vst [vmem:[#allocation3 + $0xb90] sm:$0xff] %v210
    %275 = vst [vmem:[#allocation3 + $0xbd8] sm:$0xff] %v211
    %276 = vst [vmem:[#allocation3 + $0xc20] sm:$0xff] %v212
    %277 = vst [vmem:[#allocation3 + $0xc68] sm:$0xff] %v213
    %278 = vst [vmem:[#allocation3 + $0xcb0] sm:$0xff] %v214
    %279 = vst [vmem:[#allocation3 + $0xcf8] sm:$0xff] %v215
    %280 = vst [vmem:[#allocation3 + $0xd40] sm:$0xff] %v216
    %281 = vst [vmem:[#allocation3 + $0xd88] sm:$0xff] %v217
    %282 = vst [vmem:[#allocation3 + $0xdd0] sm:$0xff] %v218
    %283 = vst [vmem:[#allocation3 + $0xe18] sm:$0xff] %v219
    %284 = vst [vmem:[#allocation3 + $0xe60] sm:$0xff] %v220
    %285 = vst [vmem:[#allocation3 + $0xea8] sm:$0xff] %v221
    %286 = vst [vmem:[#allocation3 + $0xef0] sm:$0xff] %v222
    %287 = vst [vmem:[#allocation3 + $0xf38] sm:$0xff] %v223
    %288 = vst [vmem:[#allocation3 + $0xf80] sm:$0xff] %v224
    %289 = vst [vmem:[#allocation3 + $0xfc8] sm:$0xff] %v225
    %290 = vst [vmem:[#allocation3 + $0x1010] sm:$0xff] %v226
    %291 = vst [vmem:[#allocation3 + $0x1058] sm:$0xff] %v227
    %292 = vst [vmem:[#allocation3 + $0x10a0] sm:$0xff] %v228
    %293 = vst [vmem:[#allocation3 + $0x10e8] sm:$0xff] %v229
    %294 = vst [vmem:[#allocation3 + $0x1130] sm:$0xff] %v230
    %295 = vst [vmem:[#allocation3 + $0x1178] sm:$0xff] %v231
    %296 = vst [vmem:[#allocation3 + $0x11c0] sm:$0xff] %v232
    %v297 = vld [vmem:[%s0 + $0x2] sm:$0xff]
    %v298 = vld [vmem:[%s0 + $0xa] sm:$0xff]
    %v299 = vld [vmem:[%s0 + $0x1a] sm:$0xff]
    %v300 = vld [vmem:[%s0 + $0x22] sm:$0xff]
    %v301 = vld [vmem:[%s0 + $0x32] sm:$0xff]
    %v302 = vld [vmem:[%s0 + $0x3a] sm:$0xff]
    %v303 = vld [vmem:[%s0 + $0x4a] sm:$0xff]
    %v304 = vld [vmem:[%s0 + $0x52] sm:$0xff]
    %v305 = vld [vmem:[%s0 + $0x62] sm:$0xff]
    %v306 = vld [vmem:[%s0 + $0x6a] sm:$0xff]
    %v307 = vld [vmem:[%s0 + $0x7a] sm:$0xff]
    %v308 = vld [vmem:[%s0 + $0x82] sm:$0xff]
    %v309 = vld [vmem:[%s0 + $0x92] sm:$0xff]
    %v310 = vld [vmem:[%s0 + $0x9a] sm:$0xff]
    %v311 = vld [vmem:[%s0 + $0xaa] sm:$0xff]
    %v312 = vld [vmem:[%s0 + $0xb2] sm:$0xff]
    %v313 = vld [vmem:[%s0 + $0xc2] sm:$0xff]
    %v314 = vld [vmem:[%s0 + $0xca] sm:$0xff]
    %v315 = vld [vmem:[%s0 + $0xda] sm:$0xff]
    %v316 = vld [vmem:[%s0 + $0xe2] sm:$0xff]
    %v317 = vld [vmem:[%s0 + $0xf2] sm:$0xff]
    %v318 = vld [vmem:[%s0 + $0xfa] sm:$0xff]
    %v319 = vld [vmem:[%s0 + $0x10a] sm:$0xff]
    %v320 = vld [vmem:[%s0 + $0x112] sm:$0xff]
    %v321 = vld [vmem:[%s0 + $0x122] sm:$0xff]
    %v322 = vld [vmem:[%s0 + $0x12a] sm:$0xff]
    %v323 = vld [vmem:[%s0 + $0x13a] sm:$0xff]
    %v324 = vld [vmem:[%s0 + $0x142] sm:$0xff]
    %v325 = vld [vmem:[%s0 + $0x152] sm:$0xff]
    %v326 = vld [vmem:[%s0 + $0x15a] sm:$0xff]
    %v327 = vld [vmem:[%s0 + $0x16a] sm:$0xff]
    %v328 = vld [vmem:[%s0 + $0x172] sm:$0xff]
    %v329 = vld [vmem:[%s0 + $0x1b2] sm:$0xff]
    %v330 = vld [vmem:[%s0 + $0x1ba] sm:$0xff]
    %v331 = vld [vmem:[%s0 + $0x1ca] sm:$0xff]
    %v332 = vld [vmem:[%s0 + $0x1d2] sm:$0xff]
    %v333 = vld [vmem:[%s0 + $0x1e2] sm:$0xff]
    %v334 = vld [vmem:[%s0 + $0x1ea] sm:$0xff]
    %v335 = vld [vmem:[%s0 + $0x1fa] sm:$0xff]
    %v336 = vld [vmem:[%s0 + $0x202] sm:$0xff]
    %v337 = vld [vmem:[%s0 + $0x212] sm:$0xff]
    %v338 = vld [vmem:[%s0 + $0x21a] sm:$0xff]
    %v339 = vld [vmem:[%s0 + $0x22a] sm:$0xff]
    %v340 = vld [vmem:[%s0 + $0x232] sm:$0xff]
    %v341 = vld [vmem:[%s0 + $0x242] sm:$0xff]
    %v342 = vld [vmem:[%s0 + $0x24a] sm:$0xff]
    %v343 = vld [vmem:[%s0 + $0x25a] sm:$0xff]
    %v344 = vld [vmem:[%s0 + $0x262] sm:$0xff]
    %v345 = vld [vmem:[%s0 + $0x272] sm:$0xff]
    %v346 = vld [vmem:[%s0 + $0x27a] sm:$0xff]
    %v347 = vld [vmem:[%s0 + $0x28a] sm:$0xff]
    %v348 = vld [vmem:[%s0 + $0x292] sm:$0xff]
    %v349 = vld [vmem:[%s0 + $0x2a2] sm:$0xff]
    %v350 = vld [vmem:[%s0 + $0x2aa] sm:$0xff]
    %v351 = vld [vmem:[%s0 + $0x2ba] sm:$0xff]
    %v352 = vld [vmem:[%s0 + $0x2c2] sm:$0xff]
    %v353 = vld [vmem:[%s0 + $0x2d2] sm:$0xff]
    %v354 = vld [vmem:[%s0 + $0x2da] sm:$0xff]
    %v355 = vld [vmem:[%s0 + $0x2ea] sm:$0xff]
    %v356 = vld [vmem:[%s0 + $0x2f2] sm:$0xff]
    %v357 = vld [vmem:[%s0 + $0x302] sm:$0xff]
    %v358 = vld [vmem:[%s0 + $0x30a] sm:$0xff]
    %v359 = vld [vmem:[%s0 + $0x31a] sm:$0xff]
    %v360 = vld [vmem:[%s0 + $0x322] sm:$0xff]
    %361 = vst [vmem:[#allocation3 + $0x10] sm:$0xff] %v297
    %362 = vst [vmem:[#allocation3 + $0x58] sm:$0xff] %v298
    %363 = vst [vmem:[#allocation3 + $0xa0] sm:$0xff] %v299
    %364 = vst [vmem:[#allocation3 + $0xe8] sm:$0xff] %v300
    %365 = vst [vmem:[#allocation3 + $0x130] sm:$0xff] %v301
    %366 = vst [vmem:[#allocation3 + $0x178] sm:$0xff] %v302
    %367 = vst [vmem:[#allocation3 + $0x1c0] sm:$0xff] %v303
    %368 = vst [vmem:[#allocation3 + $0x208] sm:$0xff] %v304
    %369 = vst [vmem:[#allocation3 + $0x250] sm:$0xff] %v305
    %370 = vst [vmem:[#allocation3 + $0x298] sm:$0xff] %v306
    %371 = vst [vmem:[#allocation3 + $0x2e0] sm:$0xff] %v307
    %372 = vst [vmem:[#allocation3 + $0x328] sm:$0xff] %v308
    %373 = vst [vmem:[#allocation3 + $0x370] sm:$0xff] %v309
    %374 = vst [vmem:[#allocation3 + $0x3b8] sm:$0xff] %v310
    %375 = vst [vmem:[#allocation3 + $0x400] sm:$0xff] %v311
    %376 = vst [vmem:[#allocation3 + $0x448] sm:$0xff] %v312
    %377 = vst [vmem:[#allocation3 + $0x490] sm:$0xff] %v313
    %378 = vst [vmem:[#allocation3 + $0x4d8] sm:$0xff] %v314
    %379 = vst [vmem:[#allocation3 + $0x520] sm:$0xff] %v315
    %380 = vst [vmem:[#allocation3 + $0x568] sm:$0xff] %v316
    %381 = vst [vmem:[#allocation3 + $0x5b0] sm:$0xff] %v317
    %382 = vst [vmem:[#allocation3 + $0x5f8] sm:$0xff] %v318
    %383 = vst [vmem:[#allocation3 + $0x640] sm:$0xff] %v319
    %384 = vst [vmem:[#allocation3 + $0x688] sm:$0xff] %v320
    %385 = vst [vmem:[#allocation3 + $0x6d0] sm:$0xff] %v321
    %386 = vst [vmem:[#allocation3 + $0x718] sm:$0xff] %v322
    %387 = vst [vmem:[#allocation3 + $0x760] sm:$0xff] %v323
    %388 = vst [vmem:[#allocation3 + $0x7a8] sm:$0xff] %v324
    %389 = vst [vmem:[#allocation3 + $0x7f0] sm:$0xff] %v325
    %390 = vst [vmem:[#allocation3 + $0x838] sm:$0xff] %v326
    %391 = vst [vmem:[#allocation3 + $0x880] sm:$0xff] %v327
    %392 = vst [vmem:[#allocation3 + $0x8c8] sm:$0xff] %v328
    %393 = vst [vmem:[#allocation3 + $0x910] sm:$0xff] %v329
    %394 = vst [vmem:[#allocation3 + $0x958] sm:$0xff] %v330
    %395 = vst [vmem:[#allocation3 + $0x9a0] sm:$0xff] %v331
    %396 = vst [vmem:[#allocation3 + $0x9e8] sm:$0xff] %v332
    %397 = vst [vmem:[#allocation3 + $0xa30] sm:$0xff] %v333
    %398 = vst [vmem:[#allocation3 + $0xa78] sm:$0xff] %v334
    %399 = vst [vmem:[#allocation3 + $0xac0] sm:$0xff] %v335
    %400 = vst [vmem:[#allocation3 + $0xb08] sm:$0xff] %v336
    %401 = vst [vmem:[#allocation3 + $0xb50] sm:$0xff] %v337
    %402 = vst [vmem:[#allocation3 + $0xb98] sm:$0xff] %v338
    %403 = vst [vmem:[#allocation3 + $0xbe0] sm:$0xff] %v339
    %404 = vst [vmem:[#allocation3 + $0xc28] sm:$0xff] %v340
    %405 = vst [vmem:[#allocation3 + $0xc70] sm:$0xff] %v341
    %406 = vst [vmem:[#allocation3 + $0xcb8] sm:$0xff] %v342
    %407 = vst [vmem:[#allocation3 + $0xd00] sm:$0xff] %v343
    %408 = vst [vmem:[#allocation3 + $0xd48] sm:$0xff] %v344
    %409 = vst [vmem:[#allocation3 + $0xd90] sm:$0xff] %v345
    %410 = vst [vmem:[#allocation3 + $0xdd8] sm:$0xff] %v346
    %411 = vst [vmem:[#allocation3 + $0xe20] sm:$0xff] %v347
    %412 = vst [vmem:[#allocation3 + $0xe68] sm:$0xff] %v348
    %413 = vst [vmem:[#allocation3 + $0xeb0] sm:$0xff] %v349
    %414 = vst [vmem:[#allocation3 + $0xef8] sm:$0xff] %v350
    %415 = vst [vmem:[#allocation3 + $0xf40] sm:$0xff] %v351
    %416 = vst [vmem:[#allocation3 + $0xf88] sm:$0xff] %v352
    %417 = vst [vmem:[#allocation3 + $0xfd0] sm:$0xff] %v353
    %418 = vst [vmem:[#allocation3 + $0x1018] sm:$0xff] %v354
    %419 = vst [vmem:[#allocation3 + $0x1060] sm:$0xff] %v355
    %420 = vst [vmem:[#allocation3 + $0x10a8] sm:$0xff] %v356
    %421 = vst [vmem:[#allocation3 + $0x10f0] sm:$0xff] %v357
    %422 = vst [vmem:[#allocation3 + $0x1138] sm:$0xff] %v358
    %423 = vst [vmem:[#allocation3 + $0x1180] sm:$0xff] %v359
    %424 = vst [vmem:[#allocation3 + $0x11c8] sm:$0xff] %v360
    %s425 = scalar_lea.vmem %s0, 24
    %v426 = vld [vmem:[%s425] sm:$0xff]
    %v427 = vld [vmem:[%s425 + $0x8] sm:$0xff]
    %v428 = vld [vmem:[%s425 + $0x18] sm:$0xff]
    %v429 = vld [vmem:[%s425 + $0x20] sm:$0xff]
    %v430 = vld [vmem:[%s425 + $0x30] sm:$0xff]
    %v431 = vld [vmem:[%s425 + $0x38] sm:$0xff]
    %v432 = vld [vmem:[%s425 + $0x48] sm:$0xff]
    %v433 = vld [vmem:[%s425 + $0x50] sm:$0xff]
    %v434 = vld [vmem:[%s425 + $0x60] sm:$0xff]
    %v435 = vld [vmem:[%s425 + $0x68] sm:$0xff]
    %v436 = vld [vmem:[%s425 + $0x78] sm:$0xff]
    %v437 = vld [vmem:[%s425 + $0x80] sm:$0xff]
    %v438 = vld [vmem:[%s425 + $0x90] sm:$0xff]
    %v439 = vld [vmem:[%s425 + $0x98] sm:$0xff]
    %v440 = vld [vmem:[%s425 + $0xa8] sm:$0xff]
    %v441 = vld [vmem:[%s425 + $0xb0] sm:$0xff]
    %v442 = vld [vmem:[%s425 + $0xc0] sm:$0xff]
    %v443 = vld [vmem:[%s425 + $0xc8] sm:$0xff]
    %v444 = vld [vmem:[%s425 + $0xd8] sm:$0xff]
    %v445 = vld [vmem:[%s425 + $0xe0] sm:$0xff]
    %v446 = vld [vmem:[%s425 + $0xf0] sm:$0xff]
    %v447 = vld [vmem:[%s425 + $0xf8] sm:$0xff]
    %v448 = vld [vmem:[%s425 + $0x108] sm:$0xff]
    %v449 = vld [vmem:[%s425 + $0x110] sm:$0xff]
    %v450 = vld [vmem:[%s425 + $0x120] sm:$0xff]
    %v451 = vld [vmem:[%s425 + $0x128] sm:$0xff]
    %v452 = vld [vmem:[%s425 + $0x138] sm:$0xff]
    %v453 = vld [vmem:[%s425 + $0x140] sm:$0xff]
    %v454 = vld [vmem:[%s425 + $0x150] sm:$0xff]
    %v455 = vld [vmem:[%s425 + $0x158] sm:$0xff]
    %v456 = vld [vmem:[%s425 + $0x168] sm:$0xff]
    %v457 = vld [vmem:[%s425 + $0x170] sm:$0xff]
    %v458 = vld [vmem:[%s425 + $0x1b0] sm:$0xff]
    %v459 = vld [vmem:[%s425 + $0x1b8] sm:$0xff]
    %v460 = vld [vmem:[%s425 + $0x1c8] sm:$0xff]
    %v461 = vld [vmem:[%s425 + $0x1d0] sm:$0xff]
    %v462 = vld [vmem:[%s425 + $0x1e0] sm:$0xff]
    %v463 = vld [vmem:[%s425 + $0x1e8] sm:$0xff]
    %v464 = vld [vmem:[%s425 + $0x1f8] sm:$0xff]
    %v465 = vld [vmem:[%s425 + $0x200] sm:$0xff]
    %v466 = vld [vmem:[%s425 + $0x210] sm:$0xff]
    %v467 = vld [vmem:[%s425 + $0x218] sm:$0xff]
    %v468 = vld [vmem:[%s425 + $0x228] sm:$0xff]
    %v469 = vld [vmem:[%s425 + $0x230] sm:$0xff]
    %v470 = vld [vmem:[%s425 + $0x240] sm:$0xff]
    %v471 = vld [vmem:[%s425 + $0x248] sm:$0xff]
    %v472 = vld [vmem:[%s425 + $0x258] sm:$0xff]
    %v473 = vld [vmem:[%s425 + $0x260] sm:$0xff]
    %v474 = vld [vmem:[%s425 + $0x270] sm:$0xff]
    %v475 = vld [vmem:[%s425 + $0x278] sm:$0xff]
    %v476 = vld [vmem:[%s425 + $0x288] sm:$0xff]
    %v477 = vld [vmem:[%s425 + $0x290] sm:$0xff]
    %v478 = vld [vmem:[%s425 + $0x2a0] sm:$0xff]
    %v479 = vld [vmem:[%s425 + $0x2a8] sm:$0xff]
    %v480 = vld [vmem:[%s425 + $0x2b8] sm:$0xff]
    %v481 = vld [vmem:[%s425 + $0x2c0] sm:$0xff]
    %v482 = vld [vmem:[%s425 + $0x2d0] sm:$0xff]
    %v483 = vld [vmem:[%s425 + $0x2d8] sm:$0xff]
    %v484 = vld [vmem:[%s425 + $0x2e8] sm:$0xff]
    %v485 = vld [vmem:[%s425 + $0x2f0] sm:$0xff]
    %v486 = vld [vmem:[%s425 + $0x300] sm:$0xff]
    %v487 = vld [vmem:[%s425 + $0x308] sm:$0xff]
    %v488 = vld [vmem:[%s425 + $0x318] sm:$0xff]
    %v489 = vld [vmem:[%s425 + $0x320] sm:$0xff]
    %490 = vst [vmem:[#allocation3 + $0x18] sm:$0xff] %v426
    %491 = vst [vmem:[#allocation3 + $0x60] sm:$0xff] %v427
    %492 = vst [vmem:[#allocation3 + $0xa8] sm:$0xff] %v428
    %493 = vst [vmem:[#allocation3 + $0xf0] sm:$0xff] %v429
    %494 = vst [vmem:[#allocation3 + $0x138] sm:$0xff] %v430
    %495 = vst [vmem:[#allocation3 + $0x180] sm:$0xff] %v431
    %496 = vst [vmem:[#allocation3 + $0x1c8] sm:$0xff] %v432
    %497 = vst [vmem:[#allocation3 + $0x210] sm:$0xff] %v433
    %498 = vst [vmem:[#allocation3 + $0x258] sm:$0xff] %v434
    %499 = vst [vmem:[#allocation3 + $0x2a0] sm:$0xff] %v435
    %500 = vst [vmem:[#allocation3 + $0x2e8] sm:$0xff] %v436
    %501 = vst [vmem:[#allocation3 + $0x330] sm:$0xff] %v437
    %502 = vst [vmem:[#allocation3 + $0x378] sm:$0xff] %v438
    %503 = vst [vmem:[#allocation3 + $0x3c0] sm:$0xff] %v439
    %504 = vst [vmem:[#allocation3 + $0x408] sm:$0xff] %v440
    %505 = vst [vmem:[#allocation3 + $0x450] sm:$0xff] %v441
    %506 = vst [vmem:[#allocation3 + $0x498] sm:$0xff] %v442
    %507 = vst [vmem:[#allocation3 + $0x4e0] sm:$0xff] %v443
    %508 = vst [vmem:[#allocation3 + $0x528] sm:$0xff] %v444
    %509 = vst [vmem:[#allocation3 + $0x570] sm:$0xff] %v445
    %510 = vst [vmem:[#allocation3 + $0x5b8] sm:$0xff] %v446
    %511 = vst [vmem:[#allocation3 + $0x600] sm:$0xff] %v447
    %512 = vst [vmem:[#allocation3 + $0x648] sm:$0xff] %v448
    %513 = vst [vmem:[#allocation3 + $0x690] sm:$0xff] %v449
    %514 = vst [vmem:[#allocation3 + $0x6d8] sm:$0xff] %v450
    %515 = vst [vmem:[#allocation3 + $0x720] sm:$0xff] %v451
    %516 = vst [vmem:[#allocation3 + $0x768] sm:$0xff] %v452
    %517 = vst [vmem:[#allocation3 + $0x7b0] sm:$0xff] %v453
    %518 = vst [vmem:[#allocation3 + $0x7f8] sm:$0xff] %v454
    %519 = vst [vmem:[#allocation3 + $0x840] sm:$0xff] %v455
    %520 = vst [vmem:[#allocation3 + $0x888] sm:$0xff] %v456
    %521 = vst [vmem:[#allocation3 + $0x8d0] sm:$0xff] %v457
    %522 = vst [vmem:[#allocation3 + $0x918] sm:$0xff] %v458
    %523 = vst [vmem:[#allocation3 + $0x960] sm:$0xff] %v459
    %524 = vst [vmem:[#allocation3 + $0x9a8] sm:$0xff] %v460
    %525 = vst [vmem:[#allocation3 + $0x9f0] sm:$0xff] %v461
    %526 = vst [vmem:[#allocation3 + $0xa38] sm:$0xff] %v462
    %527 = vst [vmem:[#allocation3 + $0xa80] sm:$0xff] %v463
    %528 = vst [vmem:[#allocation3 + $0xac8] sm:$0xff] %v464
    %529 = vst [vmem:[#allocation3 + $0xb10] sm:$0xff] %v465
    %530 = vst [vmem:[#allocation3 + $0xb58] sm:$0xff] %v466
    %531 = vst [vmem:[#allocation3 + $0xba0] sm:$0xff] %v467
    %532 = vst [vmem:[#allocation3 + $0xbe8] sm:$0xff] %v468
    %533 = vst [vmem:[#allocation3 + $0xc30] sm:$0xff] %v469
    %534 = vst [vmem:[#allocation3 + $0xc78] sm:$0xff] %v470
    %535 = vst [vmem:[#allocation3 + $0xcc0] sm:$0xff] %v471
    %536 = vst [vmem:[#allocation3 + $0xd08] sm:$0xff] %v472
    %537 = vst [vmem:[#allocation3 + $0xd50] sm:$0xff] %v473
    %538 = vst [vmem:[#allocation3 + $0xd98] sm:$0xff] %v474
    %539 = vst [vmem:[#allocation3 + $0xde0] sm:$0xff] %v475
    %540 = vst [vmem:[#allocation3 + $0xe28] sm:$0xff] %v476
    %541 = vst [vmem:[#allocation3 + $0xe70] sm:$0xff] %v477
    %542 = vst [vmem:[#allocation3 + $0xeb8] sm:$0xff] %v478
    %543 = vst [vmem:[#allocation3 + $0xf00] sm:$0xff] %v479
    %544 = vst [vmem:[#allocation3 + $0xf48] sm:$0xff] %v480
    %545 = vst [vmem:[#allocation3 + $0xf90] sm:$0xff] %v481
    %546 = vst [vmem:[#allocation3 + $0xfd8] sm:$0xff] %v482
    %547 = vst [vmem:[#allocation3 + $0x1020] sm:$0xff] %v483
    %548 = vst [vmem:[#allocation3 + $0x1068] sm:$0xff] %v484
    %549 = vst [vmem:[#allocation3 + $0x10b0] sm:$0xff] %v485
    %550 = vst [vmem:[#allocation3 + $0x10f8] sm:$0xff] %v486
    %551 = vst [vmem:[#allocation3 + $0x1140] sm:$0xff] %v487
    %552 = vst [vmem:[#allocation3 + $0x1188] sm:$0xff] %v488
    %553 = vst [vmem:[#allocation3 + $0x11d0] sm:$0xff] %v489
    %v554 = vld [vmem:[%s425 + $0x1] sm:$0xff]
    %v555 = vld [vmem:[%s425 + $0x9] sm:$0xff]
    %v556 = vld [vmem:[%s425 + $0x19] sm:$0xff]
    %v557 = vld [vmem:[%s425 + $0x21] sm:$0xff]
    %v558 = vld [vmem:[%s425 + $0x31] sm:$0xff]
    %v559 = vld [vmem:[%s425 + $0x39] sm:$0xff]
    %v560 = vld [vmem:[%s425 + $0x49] sm:$0xff]
    %v561 = vld [vmem:[%s425 + $0x51] sm:$0xff]
    %v562 = vld [vmem:[%s425 + $0x61] sm:$0xff]
    %v563 = vld [vmem:[%s425 + $0x69] sm:$0xff]
    %v564 = vld [vmem:[%s425 + $0x79] sm:$0xff]
    %v565 = vld [vmem:[%s425 + $0x81] sm:$0xff]
    %v566 = vld [vmem:[%s425 + $0x91] sm:$0xff]
    %v567 = vld [vmem:[%s425 + $0x99] sm:$0xff]
    %v568 = vld [vmem:[%s425 + $0xa9] sm:$0xff]
    %v569 = vld [vmem:[%s425 + $0xb1] sm:$0xff]
    %v570 = vld [vmem:[%s425 + $0xc1] sm:$0xff]
    %v571 = vld [vmem:[%s425 + $0xc9] sm:$0xff]
    %v572 = vld [vmem:[%s425 + $0xd9] sm:$0xff]
    %v573 = vld [vmem:[%s425 + $0xe1] sm:$0xff]
    %v574 = vld [vmem:[%s425 + $0xf1] sm:$0xff]
    %v575 = vld [vmem:[%s425 + $0xf9] sm:$0xff]
    %v576 = vld [vmem:[%s425 + $0x109] sm:$0xff]
    %v577 = vld [vmem:[%s425 + $0x111] sm:$0xff]
    %v578 = vld [vmem:[%s425 + $0x121] sm:$0xff]
    %v579 = vld [vmem:[%s425 + $0x129] sm:$0xff]
    %v580 = vld [vmem:[%s425 + $0x139] sm:$0xff]
    %v581 = vld [vmem:[%s425 + $0x141] sm:$0xff]
    %v582 = vld [vmem:[%s425 + $0x151] sm:$0xff]
    %v583 = vld [vmem:[%s425 + $0x159] sm:$0xff]
    %v584 = vld [vmem:[%s425 + $0x169] sm:$0xff]
    %v585 = vld [vmem:[%s425 + $0x171] sm:$0xff]
    %v586 = vld [vmem:[%s425 + $0x1b1] sm:$0xff]
    %v587 = vld [vmem:[%s425 + $0x1b9] sm:$0xff]
    %v588 = vld [vmem:[%s425 + $0x1c9] sm:$0xff]
    %v589 = vld [vmem:[%s425 + $0x1d1] sm:$0xff]
    %v590 = vld [vmem:[%s425 + $0x1e1] sm:$0xff]
    %v591 = vld [vmem:[%s425 + $0x1e9] sm:$0xff]
    %v592 = vld [vmem:[%s425 + $0x1f9] sm:$0xff]
    %v593 = vld [vmem:[%s425 + $0x201] sm:$0xff]
    %v594 = vld [vmem:[%s425 + $0x211] sm:$0xff]
    %v595 = vld [vmem:[%s425 + $0x219] sm:$0xff]
    %v596 = vld [vmem:[%s425 + $0x229] sm:$0xff]
    %v597 = vld [vmem:[%s425 + $0x231] sm:$0xff]
    %v598 = vld [vmem:[%s425 + $0x241] sm:$0xff]
    %v599 = vld [vmem:[%s425 + $0x249] sm:$0xff]
    %v600 = vld [vmem:[%s425 + $0x259] sm:$0xff]
    %v601 = vld [vmem:[%s425 + $0x261] sm:$0xff]
    %v602 = vld [vmem:[%s425 + $0x271] sm:$0xff]
    %v603 = vld [vmem:[%s425 + $0x279] sm:$0xff]
    %v604 = vld [vmem:[%s425 + $0x289] sm:$0xff]
    %v605 = vld [vmem:[%s425 + $0x291] sm:$0xff]
    %v606 = vld [vmem:[%s425 + $0x2a1] sm:$0xff]
    %v607 = vld [vmem:[%s425 + $0x2a9] sm:$0xff]
    %v608 = vld [vmem:[%s425 + $0x2b9] sm:$0xff]
    %v609 = vld [vmem:[%s425 + $0x2c1] sm:$0xff]
    %v610 = vld [vmem:[%s425 + $0x2d1] sm:$0xff]
    %v611 = vld [vmem:[%s425 + $0x2d9] sm:$0xff]
    %v612 = vld [vmem:[%s425 + $0x2e9] sm:$0xff]
    %v613 = vld [vmem:[%s425 + $0x2f1] sm:$0xff]
    %v614 = vld [vmem:[%s425 + $0x301] sm:$0xff]
    %v615 = vld [vmem:[%s425 + $0x309] sm:$0xff]
    %v616 = vld [vmem:[%s425 + $0x319] sm:$0xff]
    %v617 = vld [vmem:[%s425 + $0x321] sm:$0xff]
    %618 = vst [vmem:[#allocation3 + $0x20] sm:$0xff] %v554
    %619 = vst [vmem:[#allocation3 + $0x68] sm:$0xff] %v555
    %620 = vst [vmem:[#allocation3 + $0xb0] sm:$0xff] %v556
    %621 = vst [vmem:[#allocation3 + $0xf8] sm:$0xff] %v557
    %622 = vst [vmem:[#allocation3 + $0x140] sm:$0xff] %v558
    %623 = vst [vmem:[#allocation3 + $0x188] sm:$0xff] %v559
    %624 = vst [vmem:[#allocation3 + $0x1d0] sm:$0xff] %v560
    %625 = vst [vmem:[#allocation3 + $0x218] sm:$0xff] %v561
    %626 = vst [vmem:[#allocation3 + $0x260] sm:$0xff] %v562
    %627 = vst [vmem:[#allocation3 + $0x2a8] sm:$0xff] %v563
    %628 = vst [vmem:[#allocation3 + $0x2f0] sm:$0xff] %v564
    %629 = vst [vmem:[#allocation3 + $0x338] sm:$0xff] %v565
    %630 = vst [vmem:[#allocation3 + $0x380] sm:$0xff] %v566
    %631 = vst [vmem:[#allocation3 + $0x3c8] sm:$0xff] %v567
    %632 = vst [vmem:[#allocation3 + $0x410] sm:$0xff] %v568
    %633 = vst [vmem:[#allocation3 + $0x458] sm:$0xff] %v569
    %634 = vst [vmem:[#allocation3 + $0x4a0] sm:$0xff] %v570
    %635 = vst [vmem:[#allocation3 + $0x4e8] sm:$0xff] %v571
    %636 = vst [vmem:[#allocation3 + $0x530] sm:$0xff] %v572
    %637 = vst [vmem:[#allocation3 + $0x578] sm:$0xff] %v573
    %638 = vst [vmem:[#allocation3 + $0x5c0] sm:$0xff] %v574
    %639 = vst [vmem:[#allocation3 + $0x608] sm:$0xff] %v575
    %640 = vst [vmem:[#allocation3 + $0x650] sm:$0xff] %v576
    %641 = vst [vmem:[#allocation3 + $0x698] sm:$0xff] %v577
    %642 = vst [vmem:[#allocation3 + $0x6e0] sm:$0xff] %v578
    %643 = vst [vmem:[#allocation3 + $0x728] sm:$0xff] %v579
    %644 = vst [vmem:[#allocation3 + $0x770] sm:$0xff] %v580
    %645 = vst [vmem:[#allocation3 + $0x7b8] sm:$0xff] %v581
    %646 = vst [vmem:[#allocation3 + $0x800] sm:$0xff] %v582
    %647 = vst [vmem:[#allocation3 + $0x848] sm:$0xff] %v583
    %648 = vst [vmem:[#allocation3 + $0x890] sm:$0xff] %v584
    %649 = vst [vmem:[#allocation3 + $0x8d8] sm:$0xff] %v585
    %650 = vst [vmem:[#allocation3 + $0x920] sm:$0xff] %v586
    %651 = vst [vmem:[#allocation3 + $0x968] sm:$0xff] %v587
    %652 = vst [vmem:[#allocation3 + $0x9b0] sm:$0xff] %v588
    %653 = vst [vmem:[#allocation3 + $0x9f8] sm:$0xff] %v589
    %654 = vst [vmem:[#allocation3 + $0xa40] sm:$0xff] %v590
    %655 = vst [vmem:[#allocation3 + $0xa88] sm:$0xff] %v591
    %656 = vst [vmem:[#allocation3 + $0xad0] sm:$0xff] %v592
    %657 = vst [vmem:[#allocation3 + $0xb18] sm:$0xff] %v593
    %658 = vst [vmem:[#allocation3 + $0xb60] sm:$0xff] %v594
    %659 = vst [vmem:[#allocation3 + $0xba8] sm:$0xff] %v595
    %660 = vst [vmem:[#allocation3 + $0xbf0] sm:$0xff] %v596
    %661 = vst [vmem:[#allocation3 + $0xc38] sm:$0xff] %v597
    %662 = vst [vmem:[#allocation3 + $0xc80] sm:$0xff] %v598
    %663 = vst [vmem:[#allocation3 + $0xcc8] sm:$0xff] %v599
    %664 = vst [vmem:[#allocation3 + $0xd10] sm:$0xff] %v600
    %665 = vst [vmem:[#allocation3 + $0xd58] sm:$0xff] %v601
    %666 = vst [vmem:[#allocation3 + $0xda0] sm:$0xff] %v602
    %667 = vst [vmem:[#allocation3 + $0xde8] sm:$0xff] %v603
    %668 = vst [vmem:[#allocation3 + $0xe30] sm:$0xff] %v604
    %669 = vst [vmem:[#allocation3 + $0xe78] sm:$0xff] %v605
    %670 = vst [vmem:[#allocation3 + $0xec0] sm:$0xff] %v606
    %671 = vst [vmem:[#allocation3 + $0xf08] sm:$0xff] %v607
    %672 = vst [vmem:[#allocation3 + $0xf50] sm:$0xff] %v608
    %673 = vst [vmem:[#allocation3 + $0xf98] sm:$0xff] %v609
    %674 = vst [vmem:[#allocation3 + $0xfe0] sm:$0xff] %v610
    %675 = vst [vmem:[#allocation3 + $0x1028] sm:$0xff] %v611
    %676 = vst [vmem:[#allocation3 + $0x1070] sm:$0xff] %v612
    %677 = vst [vmem:[#allocation3 + $0x10b8] sm:$0xff] %v613
    %678 = vst [vmem:[#allocation3 + $0x1100] sm:$0xff] %v614
    %679 = vst [vmem:[#allocation3 + $0x1148] sm:$0xff] %v615
    %680 = vst [vmem:[#allocation3 + $0x1190] sm:$0xff] %v616
    %681 = vst [vmem:[#allocation3 + $0x11d8] sm:$0xff] %v617
    %v682 = vld [vmem:[%s425 + $0x2] sm:$0xff]
    %v683 = vld [vmem:[%s425 + $0xa] sm:$0xff]
    %v684 = vld [vmem:[%s425 + $0x1a] sm:$0xff]
    %v685 = vld [vmem:[%s425 + $0x22] sm:$0xff]
    %v686 = vld [vmem:[%s425 + $0x32] sm:$0xff]
    %v687 = vld [vmem:[%s425 + $0x3a] sm:$0xff]
    %v688 = vld [vmem:[%s425 + $0x4a] sm:$0xff]
    %v689 = vld [vmem:[%s425 + $0x52] sm:$0xff]
    %v690 = vld [vmem:[%s425 + $0x62] sm:$0xff]
    %v691 = vld [vmem:[%s425 + $0x6a] sm:$0xff]
    %v692 = vld [vmem:[%s425 + $0x7a] sm:$0xff]
    %v693 = vld [vmem:[%s425 + $0x82] sm:$0xff]
    %v694 = vld [vmem:[%s425 + $0x92] sm:$0xff]
    %v695 = vld [vmem:[%s425 + $0x9a] sm:$0xff]
    %v696 = vld [vmem:[%s425 + $0xaa] sm:$0xff]
    %v697 = vld [vmem:[%s425 + $0xb2] sm:$0xff]
    %v698 = vld [vmem:[%s425 + $0xc2] sm:$0xff]
    %v699 = vld [vmem:[%s425 + $0xca] sm:$0xff]
    %v700 = vld [vmem:[%s425 + $0xda] sm:$0xff]
    %v701 = vld [vmem:[%s425 + $0xe2] sm:$0xff]
    %v702 = vld [vmem:[%s425 + $0xf2] sm:$0xff]
    %v703 = vld [vmem:[%s425 + $0xfa] sm:$0xff]
    %v704 = vld [vmem:[%s425 + $0x10a] sm:$0xff]
    %v705 = vld [vmem:[%s425 + $0x112] sm:$0xff]
    %v706 = vld [vmem:[%s425 + $0x122] sm:$0xff]
    %v707 = vld [vmem:[%s425 + $0x12a] sm:$0xff]
    %v708 = vld [vmem:[%s425 + $0x13a] sm:$0xff]
    %v709 = vld [vmem:[%s425 + $0x142] sm:$0xff]
    %v710 = vld [vmem:[%s425 + $0x152] sm:$0xff]
    %v711 = vld [vmem:[%s425 + $0x15a] sm:$0xff]
    %v712 = vld [vmem:[%s425 + $0x16a] sm:$0xff]
    %v713 = vld [vmem:[%s425 + $0x172] sm:$0xff]
    %v714 = vld [vmem:[%s425 + $0x1b2] sm:$0xff]
    %v715 = vld [vmem:[%s425 + $0x1ba] sm:$0xff]
    %v716 = vld [vmem:[%s425 + $0x1ca] sm:$0xff]
    %v717 = vld [vmem:[%s425 + $0x1d2] sm:$0xff]
    %v718 = vld [vmem:[%s425 + $0x1e2] sm:$0xff]
    %v719 = vld [vmem:[%s425 + $0x1ea] sm:$0xff]
    %v720 = vld [vmem:[%s425 + $0x1fa] sm:$0xff]
    %v721 = vld [vmem:[%s425 + $0x202] sm:$0xff]
    %v722 = vld [vmem:[%s425 + $0x212] sm:$0xff]
    %v723 = vld [vmem:[%s425 + $0x21a] sm:$0xff]
    %v724 = vld [vmem:[%s425 + $0x22a] sm:$0xff]
    %v725 = vld [vmem:[%s425 + $0x232] sm:$0xff]
    %v726 = vld [vmem:[%s425 + $0x242] sm:$0xff]
    %v727 = vld [vmem:[%s425 + $0x24a] sm:$0xff]
    %v728 = vld [vmem:[%s425 + $0x25a] sm:$0xff]
    %v729 = vld [vmem:[%s425 + $0x262] sm:$0xff]
    %v730 = vld [vmem:[%s425 + $0x272] sm:$0xff]
    %v731 = vld [vmem:[%s425 + $0x27a] sm:$0xff]
    %v732 = vld [vmem:[%s425 + $0x28a] sm:$0xff]
    %v733 = vld [vmem:[%s425 + $0x292] sm:$0xff]
    %v734 = vld [vmem:[%s425 + $0x2a2] sm:$0xff]
    %v735 = vld [vmem:[%s425 + $0x2aa] sm:$0xff]
    %v736 = vld [vmem:[%s425 + $0x2ba] sm:$0xff]
    %v737 = vld [vmem:[%s425 + $0x2c2] sm:$0xff]
    %v738 = vld [vmem:[%s425 + $0x2d2] sm:$0xff]
    %v739 = vld [vmem:[%s425 + $0x2da] sm:$0xff]
    %v740 = vld [vmem:[%s425 + $0x2ea] sm:$0xff]
    %v741 = vld [vmem:[%s425 + $0x2f2] sm:$0xff]
    %v742 = vld [vmem:[%s425 + $0x302] sm:$0xff]
    %v743 = vld [vmem:[%s425 + $0x30a] sm:$0xff]
    %v744 = vld [vmem:[%s425 + $0x31a] sm:$0xff]
    %v745 = vld [vmem:[%s425 + $0x322] sm:$0xff]
    %746 = vst [vmem:[#allocation3 + $0x28] sm:$0xff] %v682
    %747 = vst [vmem:[#allocation3 + $0x70] sm:$0xff] %v683
    %748 = vst [vmem:[#allocation3 + $0xb8] sm:$0xff] %v684
    %749 = vst [vmem:[#allocation3 + $0x100] sm:$0xff] %v685
    %750 = vst [vmem:[#allocation3 + $0x148] sm:$0xff] %v686
    %751 = vst [vmem:[#allocation3 + $0x190] sm:$0xff] %v687
    %752 = vst [vmem:[#allocation3 + $0x1d8] sm:$0xff] %v688
    %753 = vst [vmem:[#allocation3 + $0x220] sm:$0xff] %v689
    %754 = vst [vmem:[#allocation3 + $0x268] sm:$0xff] %v690
    %755 = vst [vmem:[#allocation3 + $0x2b0] sm:$0xff] %v691
    %756 = vst [vmem:[#allocation3 + $0x2f8] sm:$0xff] %v692
    %757 = vst [vmem:[#allocation3 + $0x340] sm:$0xff] %v693
    %758 = vst [vmem:[#allocation3 + $0x388] sm:$0xff] %v694
    %759 = vst [vmem:[#allocation3 + $0x3d0] sm:$0xff] %v695
    %760 = vst [vmem:[#allocation3 + $0x418] sm:$0xff] %v696
    %761 = vst [vmem:[#allocation3 + $0x460] sm:$0xff] %v697
    %762 = vst [vmem:[#allocation3 + $0x4a8] sm:$0xff] %v698
    %763 = vst [vmem:[#allocation3 + $0x4f0] sm:$0xff] %v699
    %764 = vst [vmem:[#allocation3 + $0x538] sm:$0xff] %v700
    %765 = vst [vmem:[#allocation3 + $0x580] sm:$0xff] %v701
    %766 = vst [vmem:[#allocation3 + $0x5c8] sm:$0xff] %v702
    %767 = vst [vmem:[#allocation3 + $0x610] sm:$0xff] %v703
    %768 = vst [vmem:[#allocation3 + $0x658] sm:$0xff] %v704
    %769 = vst [vmem:[#allocation3 + $0x6a0] sm:$0xff] %v705
    %770 = vst [vmem:[#allocation3 + $0x6e8] sm:$0xff] %v706
    %771 = vst [vmem:[#allocation3 + $0x730] sm:$0xff] %v707
    %772 = vst [vmem:[#allocation3 + $0x778] sm:$0xff] %v708
    %773 = vst [vmem:[#allocation3 + $0x7c0] sm:$0xff] %v709
    %774 = vst [vmem:[#allocation3 + $0x808] sm:$0xff] %v710
    %775 = vst [vmem:[#allocation3 + $0x850] sm:$0xff] %v711
    %776 = vst [vmem:[#allocation3 + $0x898] sm:$0xff] %v712
    %777 = vst [vmem:[#allocation3 + $0x8e0] sm:$0xff] %v713
    %778 = vst [vmem:[#allocation3 + $0x928] sm:$0xff] %v714
    %779 = vst [vmem:[#allocation3 + $0x970] sm:$0xff] %v715
    %780 = vst [vmem:[#allocation3 + $0x9b8] sm:$0xff] %v716
    %781 = vst [vmem:[#allocation3 + $0xa00] sm:$0xff] %v717
    %782 = vst [vmem:[#allocation3 + $0xa48] sm:$0xff] %v718
    %783 = vst [vmem:[#allocation3 + $0xa90] sm:$0xff] %v719
    %784 = vst [vmem:[#allocation3 + $0xad8] sm:$0xff] %v720
    %785 = vst [vmem:[#allocation3 + $0xb20] sm:$0xff] %v721
    %786 = vst [vmem:[#allocation3 + $0xb68] sm:$0xff] %v722
    %787 = vst [vmem:[#allocation3 + $0xbb0] sm:$0xff] %v723
    %788 = vst [vmem:[#allocation3 + $0xbf8] sm:$0xff] %v724
    %789 = vst [vmem:[#allocation3 + $0xc40] sm:$0xff] %v725
    %790 = vst [vmem:[#allocation3 + $0xc88] sm:$0xff] %v726
    %791 = vst [vmem:[#allocation3 + $0xcd0] sm:$0xff] %v727
    %792 = vst [vmem:[#allocation3 + $0xd18] sm:$0xff] %v728
    %793 = vst [vmem:[#allocation3 + $0xd60] sm:$0xff] %v729
    %794 = vst [vmem:[#allocation3 + $0xda8] sm:$0xff] %v730
    %795 = vst [vmem:[#allocation3 + $0xdf0] sm:$0xff] %v731
    %796 = vst [vmem:[#allocation3 + $0xe38] sm:$0xff] %v732
    %797 = vst [vmem:[#allocation3 + $0xe80] sm:$0xff] %v733
    %798 = vst [vmem:[#allocation3 + $0xec8] sm:$0xff] %v734
    %799 = vst [vmem:[#allocation3 + $0xf10] sm:$0xff] %v735
    %800 = vst [vmem:[#allocation3 + $0xf58] sm:$0xff] %v736
    %801 = vst [vmem:[#allocation3 + $0xfa0] sm:$0xff] %v737
    %802 = vst [vmem:[#allocation3 + $0xfe8] sm:$0xff] %v738
    %803 = vst [vmem:[#allocation3 + $0x1030] sm:$0xff] %v739
    %804 = vst [vmem:[#allocation3 + $0x1078] sm:$0xff] %v740
    %805 = vst [vmem:[#allocation3 + $0x10c0] sm:$0xff] %v741
    %806 = vst [vmem:[#allocation3 + $0x1108] sm:$0xff] %v742
    %807 = vst [vmem:[#allocation3 + $0x1150] sm:$0xff] %v743
    %808 = vst [vmem:[#allocation3 + $0x1198] sm:$0xff] %v744
    %809 = vst [vmem:[#allocation3 + $0x11e0] sm:$0xff] %v745
    %s810 = scalar_lea.vmem %s0, 48
    %v811 = vld [vmem:[%s810] sm:$0xff]
    %v812 = vld [vmem:[%s810 + $0x8] sm:$0xff]
    %v813 = vld [vmem:[%s810 + $0x18] sm:$0xff]
    %v814 = vld [vmem:[%s810 + $0x20] sm:$0xff]
    %v815 = vld [vmem:[%s810 + $0x30] sm:$0xff]
    %v816 = vld [vmem:[%s810 + $0x38] sm:$0xff]
    %v817 = vld [vmem:[%s810 + $0x48] sm:$0xff]
    %v818 = vld [vmem:[%s810 + $0x50] sm:$0xff]
    %v819 = vld [vmem:[%s810 + $0x60] sm:$0xff]
    %v820 = vld [vmem:[%s810 + $0x68] sm:$0xff]
    %v821 = vld [vmem:[%s810 + $0x78] sm:$0xff]
    %v822 = vld [vmem:[%s810 + $0x80] sm:$0xff]
    %v823 = vld [vmem:[%s810 + $0x90] sm:$0xff]
    %v824 = vld [vmem:[%s810 + $0x98] sm:$0xff]
    %v825 = vld [vmem:[%s810 + $0xa8] sm:$0xff]
    %v826 = vld [vmem:[%s810 + $0xb0] sm:$0xff]
    %v827 = vld [vmem:[%s810 + $0xc0] sm:$0xff]
    %v828 = vld [vmem:[%s810 + $0xc8] sm:$0xff]
    %v829 = vld [vmem:[%s810 + $0xd8] sm:$0xff]
    %v830 = vld [vmem:[%s810 + $0xe0] sm:$0xff]
    %v831 = vld [vmem:[%s810 + $0xf0] sm:$0xff]
    %v832 = vld [vmem:[%s810 + $0xf8] sm:$0xff]
    %v833 = vld [vmem:[%s810 + $0x108] sm:$0xff]
    %v834 = vld [vmem:[%s810 + $0x110] sm:$0xff]
    %v835 = vld [vmem:[%s810 + $0x120] sm:$0xff]
    %v836 = vld [vmem:[%s810 + $0x128] sm:$0xff]
    %v837 = vld [vmem:[%s810 + $0x138] sm:$0xff]
    %v838 = vld [vmem:[%s810 + $0x140] sm:$0xff]
    %v839 = vld [vmem:[%s810 + $0x150] sm:$0xff]
    %v840 = vld [vmem:[%s810 + $0x158] sm:$0xff]
    %v841 = vld [vmem:[%s810 + $0x168] sm:$0xff]
    %v842 = vld [vmem:[%s810 + $0x170] sm:$0xff]
    %v843 = vld [vmem:[%s810 + $0x1b0] sm:$0xff]
    %v844 = vld [vmem:[%s810 + $0x1b8] sm:$0xff]
    %v845 = vld [vmem:[%s810 + $0x1c8] sm:$0xff]
    %v846 = vld [vmem:[%s810 + $0x1d0] sm:$0xff]
    %v847 = vld [vmem:[%s810 + $0x1e0] sm:$0xff]
    %v848 = vld [vmem:[%s810 + $0x1e8] sm:$0xff]
    %v849 = vld [vmem:[%s810 + $0x1f8] sm:$0xff]
    %v850 = vld [vmem:[%s810 + $0x200] sm:$0xff]
    %v851 = vld [vmem:[%s810 + $0x210] sm:$0xff]
    %v852 = vld [vmem:[%s810 + $0x218] sm:$0xff]
    %v853 = vld [vmem:[%s810 + $0x228] sm:$0xff]
    %v854 = vld [vmem:[%s810 + $0x230] sm:$0xff]
    %v855 = vld [vmem:[%s810 + $0x240] sm:$0xff]
    %v856 = vld [vmem:[%s810 + $0x248] sm:$0xff]
    %v857 = vld [vmem:[%s810 + $0x258] sm:$0xff]
    %v858 = vld [vmem:[%s810 + $0x260] sm:$0xff]
    %v859 = vld [vmem:[%s810 + $0x270] sm:$0xff]
    %v860 = vld [vmem:[%s810 + $0x278] sm:$0xff]
    %v861 = vld [vmem:[%s810 + $0x288] sm:$0xff]
    %v862 = vld [vmem:[%s810 + $0x290] sm:$0xff]
    %v863 = vld [vmem:[%s810 + $0x2a0] sm:$0xff]
    %v864 = vld [vmem:[%s810 + $0x2a8] sm:$0xff]
    %v865 = vld [vmem:[%s810 + $0x2b8] sm:$0xff]
    %v866 = vld [vmem:[%s810 + $0x2c0] sm:$0xff]
    %v867 = vld [vmem:[%s810 + $0x2d0] sm:$0xff]
    %v868 = vld [vmem:[%s810 + $0x2d8] sm:$0xff]
    %v869 = vld [vmem:[%s810 + $0x2e8] sm:$0xff]
    %v870 = vld [vmem:[%s810 + $0x2f0] sm:$0xff]
    %v871 = vld [vmem:[%s810 + $0x300] sm:$0xff]
    %v872 = vld [vmem:[%s810 + $0x308] sm:$0xff]
    %v873 = vld [vmem:[%s810 + $0x318] sm:$0xff]
    %v874 = vld [vmem:[%s810 + $0x320] sm:$0xff]
    %875 = vst [vmem:[#allocation3 + $0x30] sm:$0xff] %v811
    %876 = vst [vmem:[#allocation3 + $0x78] sm:$0xff] %v812
    %877 = vst [vmem:[#allocation3 + $0xc0] sm:$0xff] %v813
    %878 = vst [vmem:[#allocation3 + $0x108] sm:$0xff] %v814
    %879 = vst [vmem:[#allocation3 + $0x150] sm:$0xff] %v815
    %880 = vst [vmem:[#allocation3 + $0x198] sm:$0xff] %v816
    %881 = vst [vmem:[#allocation3 + $0x1e0] sm:$0xff] %v817
    %882 = vst [vmem:[#allocation3 + $0x228] sm:$0xff] %v818
    %883 = vst [vmem:[#allocation3 + $0x270] sm:$0xff] %v819
    %884 = vst [vmem:[#allocation3 + $0x2b8] sm:$0xff] %v820
    %885 = vst [vmem:[#allocation3 + $0x300] sm:$0xff] %v821
    %886 = vst [vmem:[#allocation3 + $0x348] sm:$0xff] %v822
    %887 = vst [vmem:[#allocation3 + $0x390] sm:$0xff] %v823
    %888 = vst [vmem:[#allocation3 + $0x3d8] sm:$0xff] %v824
    %889 = vst [vmem:[#allocation3 + $0x420] sm:$0xff] %v825
    %890 = vst [vmem:[#allocation3 + $0x468] sm:$0xff] %v826
    %891 = vst [vmem:[#allocation3 + $0x4b0] sm:$0xff] %v827
    %892 = vst [vmem:[#allocation3 + $0x4f8] sm:$0xff] %v828
    %893 = vst [vmem:[#allocation3 + $0x540] sm:$0xff] %v829
    %894 = vst [vmem:[#allocation3 + $0x588] sm:$0xff] %v830
    %895 = vst [vmem:[#allocation3 + $0x5d0] sm:$0xff] %v831
    %896 = vst [vmem:[#allocation3 + $0x618] sm:$0xff] %v832
    %897 = vst [vmem:[#allocation3 + $0x660] sm:$0xff] %v833
    %898 = vst [vmem:[#allocation3 + $0x6a8] sm:$0xff] %v834
    %899 = vst [vmem:[#allocation3 + $0x6f0] sm:$0xff] %v835
    %900 = vst [vmem:[#allocation3 + $0x738] sm:$0xff] %v836
    %901 = vst [vmem:[#allocation3 + $0x780] sm:$0xff] %v837
    %902 = vst [vmem:[#allocation3 + $0x7c8] sm:$0xff] %v838
    %903 = vst [vmem:[#allocation3 + $0x810] sm:$0xff] %v839
    %904 = vst [vmem:[#allocation3 + $0x858] sm:$0xff] %v840
    %905 = vst [vmem:[#allocation3 + $0x8a0] sm:$0xff] %v841
    %906 = vst [vmem:[#allocation3 + $0x8e8] sm:$0xff] %v842
    %907 = vst [vmem:[#allocation3 + $0x930] sm:$0xff] %v843
    %908 = vst [vmem:[#allocation3 + $0x978] sm:$0xff] %v844
    %909 = vst [vmem:[#allocation3 + $0x9c0] sm:$0xff] %v845
    %910 = vst [vmem:[#allocation3 + $0xa08] sm:$0xff] %v846
    %911 = vst [vmem:[#allocation3 + $0xa50] sm:$0xff] %v847
    %912 = vst [vmem:[#allocation3 + $0xa98] sm:$0xff] %v848
    %913 = vst [vmem:[#allocation3 + $0xae0] sm:$0xff] %v849
    %914 = vst [vmem:[#allocation3 + $0xb28] sm:$0xff] %v850
    %915 = vst [vmem:[#allocation3 + $0xb70] sm:$0xff] %v851
    %916 = vst [vmem:[#allocation3 + $0xbb8] sm:$0xff] %v852
    %917 = vst [vmem:[#allocation3 + $0xc00] sm:$0xff] %v853
    %918 = vst [vmem:[#allocation3 + $0xc48] sm:$0xff] %v854
    %919 = vst [vmem:[#allocation3 + $0xc90] sm:$0xff] %v855
    %920 = vst [vmem:[#allocation3 + $0xcd8] sm:$0xff] %v856
    %921 = vst [vmem:[#allocation3 + $0xd20] sm:$0xff] %v857
    %922 = vst [vmem:[#allocation3 + $0xd68] sm:$0xff] %v858
    %923 = vst [vmem:[#allocation3 + $0xdb0] sm:$0xff] %v859
    %924 = vst [vmem:[#allocation3 + $0xdf8] sm:$0xff] %v860
    %925 = vst [vmem:[#allocation3 + $0xe40] sm:$0xff] %v861
    %926 = vst [vmem:[#allocation3 + $0xe88] sm:$0xff] %v862
    %927 = vst [vmem:[#allocation3 + $0xed0] sm:$0xff] %v863
    %928 = vst [vmem:[#allocation3 + $0xf18] sm:$0xff] %v864
    %929 = vst [vmem:[#allocation3 + $0xf60] sm:$0xff] %v865
    %930 = vst [vmem:[#allocation3 + $0xfa8] sm:$0xff] %v866
    %931 = vst [vmem:[#allocation3 + $0xff0] sm:$0xff] %v867
    %932 = vst [vmem:[#allocation3 + $0x1038] sm:$0xff] %v868
    %933 = vst [vmem:[#allocation3 + $0x1080] sm:$0xff] %v869
    %934 = vst [vmem:[#allocation3 + $0x10c8] sm:$0xff] %v870
    %935 = vst [vmem:[#allocation3 + $0x1110] sm:$0xff] %v871
    %936 = vst [vmem:[#allocation3 + $0x1158] sm:$0xff] %v872
    %937 = vst [vmem:[#allocation3 + $0x11a0] sm:$0xff] %v873
    %938 = vst [vmem:[#allocation3 + $0x11e8] sm:$0xff] %v874
    %v939 = vld [vmem:[%s810 + $0x1] sm:$0xff]
    %v940 = vld [vmem:[%s810 + $0x9] sm:$0xff]
    %v941 = vld [vmem:[%s810 + $0x19] sm:$0xff]
    %v942 = vld [vmem:[%s810 + $0x21] sm:$0xff]
    %v943 = vld [vmem:[%s810 + $0x31] sm:$0xff]
    %v944 = vld [vmem:[%s810 + $0x39] sm:$0xff]
    %v945 = vld [vmem:[%s810 + $0x49] sm:$0xff]
    %v946 = vld [vmem:[%s810 + $0x51] sm:$0xff]
    %v947 = vld [vmem:[%s810 + $0x61] sm:$0xff]
    %v948 = vld [vmem:[%s810 + $0x69] sm:$0xff]
    %v949 = vld [vmem:[%s810 + $0x79] sm:$0xff]
    %v950 = vld [vmem:[%s810 + $0x81] sm:$0xff]
    %v951 = vld [vmem:[%s810 + $0x91] sm:$0xff]
    %v952 = vld [vmem:[%s810 + $0x99] sm:$0xff]
    %v953 = vld [vmem:[%s810 + $0xa9] sm:$0xff]
    %v954 = vld [vmem:[%s810 + $0xb1] sm:$0xff]
    %v955 = vld [vmem:[%s810 + $0xc1] sm:$0xff]
    %v956 = vld [vmem:[%s810 + $0xc9] sm:$0xff]
    %v957 = vld [vmem:[%s810 + $0xd9] sm:$0xff]
    %v958 = vld [vmem:[%s810 + $0xe1] sm:$0xff]
    %v959 = vld [vmem:[%s810 + $0xf1] sm:$0xff]
    %v960 = vld [vmem:[%s810 + $0xf9] sm:$0xff]
    %v961 = vld [vmem:[%s810 + $0x109] sm:$0xff]
    %v962 = vld [vmem:[%s810 + $0x111] sm:$0xff]
    %v963 = vld [vmem:[%s810 + $0x121] sm:$0xff]
    %v964 = vld [vmem:[%s810 + $0x129] sm:$0xff]
    %v965 = vld [vmem:[%s810 + $0x139] sm:$0xff]
    %v966 = vld [vmem:[%s810 + $0x141] sm:$0xff]
    %v967 = vld [vmem:[%s810 + $0x151] sm:$0xff]
    %v968 = vld [vmem:[%s810 + $0x159] sm:$0xff]
    %v969 = vld [vmem:[%s810 + $0x169] sm:$0xff]
    %v970 = vld [vmem:[%s810 + $0x171] sm:$0xff]
    %v971 = vld [vmem:[%s810 + $0x1b1] sm:$0xff]
    %v972 = vld [vmem:[%s810 + $0x1b9] sm:$0xff]
    %v973 = vld [vmem:[%s810 + $0x1c9] sm:$0xff]
    %v974 = vld [vmem:[%s810 + $0x1d1] sm:$0xff]
    %v975 = vld [vmem:[%s810 + $0x1e1] sm:$0xff]
    %v976 = vld [vmem:[%s810 + $0x1e9] sm:$0xff]
    %v977 = vld [vmem:[%s810 + $0x1f9] sm:$0xff]
    %v978 = vld [vmem:[%s810 + $0x201] sm:$0xff]
    %v979 = vld [vmem:[%s810 + $0x211] sm:$0xff]
    %v980 = vld [vmem:[%s810 + $0x219] sm:$0xff]
    %v981 = vld [vmem:[%s810 + $0x229] sm:$0xff]
    %v982 = vld [vmem:[%s810 + $0x231] sm:$0xff]
    %v983 = vld [vmem:[%s810 + $0x241] sm:$0xff]
    %v984 = vld [vmem:[%s810 + $0x249] sm:$0xff]
    %v985 = vld [vmem:[%s810 + $0x259] sm:$0xff]
    %v986 = vld [vmem:[%s810 + $0x261] sm:$0xff]
    %v987 = vld [vmem:[%s810 + $0x271] sm:$0xff]
    %v988 = vld [vmem:[%s810 + $0x279] sm:$0xff]
    %v989 = vld [vmem:[%s810 + $0x289] sm:$0xff]
    %v990 = vld [vmem:[%s810 + $0x291] sm:$0xff]
    %v991 = vld [vmem:[%s810 + $0x2a1] sm:$0xff]
    %v992 = vld [vmem:[%s810 + $0x2a9] sm:$0xff]
    %v993 = vld [vmem:[%s810 + $0x2b9] sm:$0xff]
    %v994 = vld [vmem:[%s810 + $0x2c1] sm:$0xff]
    %v995 = vld [vmem:[%s810 + $0x2d1] sm:$0xff]
    %v996 = vld [vmem:[%s810 + $0x2d9] sm:$0xff]
    %v997 = vld [vmem:[%s810 + $0x2e9] sm:$0xff]
    %v998 = vld [vmem:[%s810 + $0x2f1] sm:$0xff]
    %v999 = vld [vmem:[%s810 + $0x301] sm:$0xff]
    %v1000 = vld [vmem:[%s810 + $0x309] sm:$0xff]
    %v1001 = vld [vmem:[%s810 + $0x319] sm:$0xff]
    %v1002 = vld [vmem:[%s810 + $0x321] sm:$0xff]
    %1003 = vst [vmem:[#allocation3 + $0x38] sm:$0xff] %v939
    %1004 = vst [vmem:[#allocation3 + $0x80] sm:$0xff] %v940
    %1005 = vst [vmem:[#allocation3 + $0xc8] sm:$0xff] %v941
    %1006 = vst [vmem:[#allocation3 + $0x110] sm:$0xff] %v942
    %1007 = vst [vmem:[#allocation3 + $0x158] sm:$0xff] %v943
    %1008 = vst [vmem:[#allocation3 + $0x1a0] sm:$0xff] %v944
    %1009 = vst [vmem:[#allocation3 + $0x1e8] sm:$0xff] %v945
    %1010 = vst [vmem:[#allocation3 + $0x230] sm:$0xff] %v946
    %1011 = vst [vmem:[#allocation3 + $0x278] sm:$0xff] %v947
    %1012 = vst [vmem:[#allocation3 + $0x2c0] sm:$0xff] %v948
    %1013 = vst [vmem:[#allocation3 + $0x308] sm:$0xff] %v949
    %1014 = vst [vmem:[#allocation3 + $0x350] sm:$0xff] %v950
    %1015 = vst [vmem:[#allocation3 + $0x398] sm:$0xff] %v951
    %1016 = vst [vmem:[#allocation3 + $0x3e0] sm:$0xff] %v952
    %1017 = vst [vmem:[#allocation3 + $0x428] sm:$0xff] %v953
    %1018 = vst [vmem:[#allocation3 + $0x470] sm:$0xff] %v954
    %1019 = vst [vmem:[#allocation3 + $0x4b8] sm:$0xff] %v955
    %1020 = vst [vmem:[#allocation3 + $0x500] sm:$0xff] %v956
    %1021 = vst [vmem:[#allocation3 + $0x548] sm:$0xff] %v957
    %1022 = vst [vmem:[#allocation3 + $0x590] sm:$0xff] %v958
    %1023 = vst [vmem:[#allocation3 + $0x5d8] sm:$0xff] %v959
    %1024 = vst [vmem:[#allocation3 + $0x620] sm:$0xff] %v960
    %1025 = vst [vmem:[#allocation3 + $0x668] sm:$0xff] %v961
    %1026 = vst [vmem:[#allocation3 + $0x6b0] sm:$0xff] %v962
    %1027 = vst [vmem:[#allocation3 + $0x6f8] sm:$0xff] %v963
    %1028 = vst [vmem:[#allocation3 + $0x740] sm:$0xff] %v964
    %1029 = vst [vmem:[#allocation3 + $0x788] sm:$0xff] %v965
    %1030 = vst [vmem:[#allocation3 + $0x7d0] sm:$0xff] %v966
    %1031 = vst [vmem:[#allocation3 + $0x818] sm:$0xff] %v967
    %1032 = vst [vmem:[#allocation3 + $0x860] sm:$0xff] %v968
    %1033 = vst [vmem:[#allocation3 + $0x8a8] sm:$0xff] %v969
    %1034 = vst [vmem:[#allocation3 + $0x8f0] sm:$0xff] %v970
    %1035 = vst [vmem:[#allocation3 + $0x938] sm:$0xff] %v971
    %1036 = vst [vmem:[#allocation3 + $0x980] sm:$0xff] %v972
    %1037 = vst [vmem:[#allocation3 + $0x9c8] sm:$0xff] %v973
    %1038 = vst [vmem:[#allocation3 + $0xa10] sm:$0xff] %v974
    %1039 = vst [vmem:[#allocation3 + $0xa58] sm:$0xff] %v975
    %1040 = vst [vmem:[#allocation3 + $0xaa0] sm:$0xff] %v976
    %1041 = vst [vmem:[#allocation3 + $0xae8] sm:$0xff] %v977
    %1042 = vst [vmem:[#allocation3 + $0xb30] sm:$0xff] %v978
    %1043 = vst [vmem:[#allocation3 + $0xb78] sm:$0xff] %v979
    %1044 = vst [vmem:[#allocation3 + $0xbc0] sm:$0xff] %v980
    %1045 = vst [vmem:[#allocation3 + $0xc08] sm:$0xff] %v981
    %1046 = vst [vmem:[#allocation3 + $0xc50] sm:$0xff] %v982
    %1047 = vst [vmem:[#allocation3 + $0xc98] sm:$0xff] %v983
    %1048 = vst [vmem:[#allocation3 + $0xce0] sm:$0xff] %v984
    %1049 = vst [vmem:[#allocation3 + $0xd28] sm:$0xff] %v985
    %1050 = vst [vmem:[#allocation3 + $0xd70] sm:$0xff] %v986
    %1051 = vst [vmem:[#allocation3 + $0xdb8] sm:$0xff] %v987
    %1052 = vst [vmem:[#allocation3 + $0xe00] sm:$0xff] %v988
    %1053 = vst [vmem:[#allocation3 + $0xe48] sm:$0xff] %v989
    %1054 = vst [vmem:[#allocation3 + $0xe90] sm:$0xff] %v990
    %1055 = vst [vmem:[#allocation3 + $0xed8] sm:$0xff] %v991
    %1056 = vst [vmem:[#allocation3 + $0xf20] sm:$0xff] %v992
    %1057 = vst [vmem:[#allocation3 + $0xf68] sm:$0xff] %v993
    %1058 = vst [vmem:[#allocation3 + $0xfb0] sm:$0xff] %v994
    %1059 = vst [vmem:[#allocation3 + $0xff8] sm:$0xff] %v995
    %1060 = vst [vmem:[#allocation3 + $0x1040] sm:$0xff] %v996
    %1061 = vst [vmem:[#allocation3 + $0x1088] sm:$0xff] %v997
    %1062 = vst [vmem:[#allocation3 + $0x10d0] sm:$0xff] %v998
    %1063 = vst [vmem:[#allocation3 + $0x1118] sm:$0xff] %v999
    %1064 = vst [vmem:[#allocation3 + $0x1160] sm:$0xff] %v1000
    %1065 = vst [vmem:[#allocation3 + $0x11a8] sm:$0xff] %v1001
    %1066 = vst [vmem:[#allocation3 + $0x11f0] sm:$0xff] %v1002
    %v1067 = vld [vmem:[%s810 + $0x2] sm:$0xff]
    %v1068 = vld [vmem:[%s810 + $0xa] sm:$0xff]
    %v1069 = vld [vmem:[%s810 + $0x1a] sm:$0xff]
    %v1070 = vld [vmem:[%s810 + $0x22] sm:$0xff]
    %v1071 = vld [vmem:[%s810 + $0x32] sm:$0xff]
    %v1072 = vld [vmem:[%s810 + $0x3a] sm:$0xff]
    %v1073 = vld [vmem:[%s810 + $0x4a] sm:$0xff]
    %v1074 = vld [vmem:[%s810 + $0x52] sm:$0xff]
    %v1075 = vld [vmem:[%s810 + $0x62] sm:$0xff]
    %v1076 = vld [vmem:[%s810 + $0x6a] sm:$0xff]
    %v1077 = vld [vmem:[%s810 + $0x7a] sm:$0xff]
    %v1078 = vld [vmem:[%s810 + $0x82] sm:$0xff]
    %v1079 = vld [vmem:[%s810 + $0x92] sm:$0xff]
    %v1080 = vld [vmem:[%s810 + $0x9a] sm:$0xff]
    %v1081 = vld [vmem:[%s810 + $0xaa] sm:$0xff]
    %v1082 = vld [vmem:[%s810 + $0xb2] sm:$0xff]
    %v1083 = vld [vmem:[%s810 + $0xc2] sm:$0xff]
    %v1084 = vld [vmem:[%s810 + $0xca] sm:$0xff]
    %v1085 = vld [vmem:[%s810 + $0xda] sm:$0xff]
    %v1086 = vld [vmem:[%s810 + $0xe2] sm:$0xff]
    %v1087 = vld [vmem:[%s810 + $0xf2] sm:$0xff]
    %v1088 = vld [vmem:[%s810 + $0xfa] sm:$0xff]
    %v1089 = vld [vmem:[%s810 + $0x10a] sm:$0xff]
    %v1090 = vld [vmem:[%s810 + $0x112] sm:$0xff]
    %v1091 = vld [vmem:[%s810 + $0x122] sm:$0xff]
    %v1092 = vld [vmem:[%s810 + $0x12a] sm:$0xff]
    %v1093 = vld [vmem:[%s810 + $0x13a] sm:$0xff]
    %v1094 = vld [vmem:[%s810 + $0x142] sm:$0xff]
    %v1095 = vld [vmem:[%s810 + $0x152] sm:$0xff]
    %v1096 = vld [vmem:[%s810 + $0x15a] sm:$0xff]
    %v1097 = vld [vmem:[%s810 + $0x16a] sm:$0xff]
    %v1098 = vld [vmem:[%s810 + $0x172] sm:$0xff]
    %v1099 = vld [vmem:[%s810 + $0x1b2] sm:$0xff]
    %v1100 = vld [vmem:[%s810 + $0x1ba] sm:$0xff]
    %v1101 = vld [vmem:[%s810 + $0x1ca] sm:$0xff]
    %v1102 = vld [vmem:[%s810 + $0x1d2] sm:$0xff]
    %v1103 = vld [vmem:[%s810 + $0x1e2] sm:$0xff]
    %v1104 = vld [vmem:[%s810 + $0x1ea] sm:$0xff]
    %v1105 = vld [vmem:[%s810 + $0x1fa] sm:$0xff]
    %v1106 = vld [vmem:[%s810 + $0x202] sm:$0xff]
    %v1107 = vld [vmem:[%s810 + $0x212] sm:$0xff]
    %v1108 = vld [vmem:[%s810 + $0x21a] sm:$0xff]
    %v1109 = vld [vmem:[%s810 + $0x22a] sm:$0xff]
    %v1110 = vld [vmem:[%s810 + $0x232] sm:$0xff]
    %v1111 = vld [vmem:[%s810 + $0x242] sm:$0xff]
    %v1112 = vld [vmem:[%s810 + $0x24a] sm:$0xff]
    %v1113 = vld [vmem:[%s810 + $0x25a] sm:$0xff]
    %v1114 = vld [vmem:[%s810 + $0x262] sm:$0xff]
    %v1115 = vld [vmem:[%s810 + $0x272] sm:$0xff]
    %v1116 = vld [vmem:[%s810 + $0x27a] sm:$0xff]
    %v1117 = vld [vmem:[%s810 + $0x28a] sm:$0xff]
    %v1118 = vld [vmem:[%s810 + $0x292] sm:$0xff]
    %v1119 = vld [vmem:[%s810 + $0x2a2] sm:$0xff]
    %v1120 = vld [vmem:[%s810 + $0x2aa] sm:$0xff]
    %v1121 = vld [vmem:[%s810 + $0x2ba] sm:$0xff]
    %v1122 = vld [vmem:[%s810 + $0x2c2] sm:$0xff]
    %v1123 = vld [vmem:[%s810 + $0x2d2] sm:$0xff]
    %v1124 = vld [vmem:[%s810 + $0x2da] sm:$0xff]
    %v1125 = vld [vmem:[%s810 + $0x2ea] sm:$0xff]
    %v1126 = vld [vmem:[%s810 + $0x2f2] sm:$0xff]
    %v1127 = vld [vmem:[%s810 + $0x302] sm:$0xff]
    %v1128 = vld [vmem:[%s810 + $0x30a] sm:$0xff]
    %v1129 = vld [vmem:[%s810 + $0x31a] sm:$0xff]
    %v1130 = vld [vmem:[%s810 + $0x322] sm:$0xff]
    %1131 = vst [vmem:[#allocation3 + $0x40] sm:$0xff] %v1067
    %1132 = vst [vmem:[#allocation3 + $0x88] sm:$0xff] %v1068
    %1133 = vst [vmem:[#allocation3 + $0xd0] sm:$0xff] %v1069
    %1134 = vst [vmem:[#allocation3 + $0x118] sm:$0xff] %v1070
    %1135 = vst [vmem:[#allocation3 + $0x160] sm:$0xff] %v1071
    %1136 = vst [vmem:[#allocation3 + $0x1a8] sm:$0xff] %v1072
    %1137 = vst [vmem:[#allocation3 + $0x1f0] sm:$0xff] %v1073
    %1138 = vst [vmem:[#allocation3 + $0x238] sm:$0xff] %v1074
    %1139 = vst [vmem:[#allocation3 + $0x280] sm:$0xff] %v1075
    %1140 = vst [vmem:[#allocation3 + $0x2c8] sm:$0xff] %v1076
    %1141 = vst [vmem:[#allocation3 + $0x310] sm:$0xff] %v1077
    %1142 = vst [vmem:[#allocation3 + $0x358] sm:$0xff] %v1078
    %1143 = vst [vmem:[#allocation3 + $0x3a0] sm:$0xff] %v1079
    %1144 = vst [vmem:[#allocation3 + $0x3e8] sm:$0xff] %v1080
    %1145 = vst [vmem:[#allocation3 + $0x430] sm:$0xff] %v1081
    %1146 = vst [vmem:[#allocation3 + $0x478] sm:$0xff] %v1082
    %1147 = vst [vmem:[#allocation3 + $0x4c0] sm:$0xff] %v1083
    %1148 = vst [vmem:[#allocation3 + $0x508] sm:$0xff] %v1084
    %1149 = vst [vmem:[#allocation3 + $0x550] sm:$0xff] %v1085
    %1150 = vst [vmem:[#allocation3 + $0x598] sm:$0xff] %v1086
    %1151 = vst [vmem:[#allocation3 + $0x5e0] sm:$0xff] %v1087
    %1152 = vst [vmem:[#allocation3 + $0x628] sm:$0xff] %v1088
    %1153 = vst [vmem:[#allocation3 + $0x670] sm:$0xff] %v1089
    %1154 = vst [vmem:[#allocation3 + $0x6b8] sm:$0xff] %v1090
    %1155 = vst [vmem:[#allocation3 + $0x700] sm:$0xff] %v1091
    %1156 = vst [vmem:[#allocation3 + $0x748] sm:$0xff] %v1092
    %1157 = vst [vmem:[#allocation3 + $0x790] sm:$0xff] %v1093
    %1158 = vst [vmem:[#allocation3 + $0x7d8] sm:$0xff] %v1094
    %1159 = vst [vmem:[#allocation3 + $0x820] sm:$0xff] %v1095
    %1160 = vst [vmem:[#allocation3 + $0x868] sm:$0xff] %v1096
    %1161 = vst [vmem:[#allocation3 + $0x8b0] sm:$0xff] %v1097
    %1162 = vst [vmem:[#allocation3 + $0x8f8] sm:$0xff] %v1098
    %1163 = vst [vmem:[#allocation3 + $0x940] sm:$0xff] %v1099
    %1164 = vst [vmem:[#allocation3 + $0x988] sm:$0xff] %v1100
    %1165 = vst [vmem:[#allocation3 + $0x9d0] sm:$0xff] %v1101
    %1166 = vst [vmem:[#allocation3 + $0xa18] sm:$0xff] %v1102
    %1167 = vst [vmem:[#allocation3 + $0xa60] sm:$0xff] %v1103
    %1168 = vst [vmem:[#allocation3 + $0xaa8] sm:$0xff] %v1104
    %1169 = vst [vmem:[#allocation3 + $0xaf0] sm:$0xff] %v1105
    %1170 = vst [vmem:[#allocation3 + $0xb38] sm:$0xff] %v1106
    %1171 = vst [vmem:[#allocation3 + $0xb80] sm:$0xff] %v1107
    %1172 = vst [vmem:[#allocation3 + $0xbc8] sm:$0xff] %v1108
    %1173 = vst [vmem:[#allocation3 + $0xc10] sm:$0xff] %v1109
    %1174 = vst [vmem:[#allocation3 + $0xc58] sm:$0xff] %v1110
    %1175 = vst [vmem:[#allocation3 + $0xca0] sm:$0xff] %v1111
    %1176 = vst [vmem:[#allocation3 + $0xce8] sm:$0xff] %v1112
    %1177 = vst [vmem:[#allocation3 + $0xd30] sm:$0xff] %v1113
    %1178 = vst [vmem:[#allocation3 + $0xd78] sm:$0xff] %v1114
    %1179 = vst [vmem:[#allocation3 + $0xdc0] sm:$0xff] %v1115
    %1180 = vst [vmem:[#allocation3 + $0xe08] sm:$0xff] %v1116
    %1181 = vst [vmem:[#allocation3 + $0xe50] sm:$0xff] %v1117
    %1182 = vst [vmem:[#allocation3 + $0xe98] sm:$0xff] %v1118
    %1183 = vst [vmem:[#allocation3 + $0xee0] sm:$0xff] %v1119
    %1184 = vst [vmem:[#allocation3 + $0xf28] sm:$0xff] %v1120
    %1185 = vst [vmem:[#allocation3 + $0xf70] sm:$0xff] %v1121
    %1186 = vst [vmem:[#allocation3 + $0xfb8] sm:$0xff] %v1122
    %1187 = vst [vmem:[#allocation3 + $0x1000] sm:$0xff] %v1123
    %1188 = vst [vmem:[#allocation3 + $0x1048] sm:$0xff] %v1124
    %1189 = vst [vmem:[#allocation3 + $0x1090] sm:$0xff] %v1125
    %1190 = vst [vmem:[#allocation3 + $0x10d8] sm:$0xff] %v1126
    %1191 = vst [vmem:[#allocation3 + $0x1120] sm:$0xff] %v1127
    %1192 = vst [vmem:[#allocation3 + $0x1168] sm:$0xff] %v1128
    %1193 = vst [vmem:[#allocation3 + $0x11b0] sm:$0xff] %v1129
    %1194 = vst [vmem:[#allocation3 + $0x11f8] sm:$0xff] %v1130
    %v1195 = vld [vmem:[#allocation3] sm:$0xff]
    %v1196 = vld [vmem:[#allocation3 + $0x8] sm:$0xff]
    %v1197 = vld [vmem:[#allocation3 + $0x10] sm:$0xff]
    %v1198 = vld [vmem:[#allocation3 + $0x18] sm:$0xff]
    %v1199 = vld [vmem:[#allocation3 + $0x20] sm:$0xff]
    %v1200 = vld [vmem:[#allocation3 + $0x28] sm:$0xff]
    %v1201 = vld [vmem:[#allocation3 + $0x30] sm:$0xff]
    %v1202 = vld [vmem:[#allocation3 + $0x38] sm:$0xff]
    %v1203 = vld [vmem:[#allocation3 + $0x40] sm:$0xff]
    %v1204 = vld [vmem:[#allocation3 + $0x48] sm:$0xff]
    %v1205 = vld [vmem:[#allocation3 + $0x50] sm:$0xff]
    %v1206 = vld [vmem:[#allocation3 + $0x58] sm:$0xff]
    %v1207 = vld [vmem:[#allocation3 + $0x60] sm:$0xff]
    %v1208 = vld [vmem:[#allocation3 + $0x68] sm:$0xff]
    %v1209 = vld [vmem:[#allocation3 + $0x70] sm:$0xff]
    %v1210 = vld [vmem:[#allocation3 + $0x78] sm:$0xff]
    %v1211 = vld [vmem:[#allocation3 + $0x80] sm:$0xff]
    %v1212 = vld [vmem:[#allocation3 + $0x88] sm:$0xff]
    %v1213 = vld [vmem:[#allocation3 + $0x90] sm:$0xff]
    %v1214 = vld [vmem:[#allocation3 + $0x98] sm:$0xff]
    %v1215 = vld [vmem:[#allocation3 + $0xa0] sm:$0xff]
    %v1216 = vld [vmem:[#allocation3 + $0xa8] sm:$0xff]
    %v1217 = vld [vmem:[#allocation3 + $0xb0] sm:$0xff]
    %v1218 = vld [vmem:[#allocation3 + $0xb8] sm:$0xff]
    %v1219 = vld [vmem:[#allocation3 + $0xc0] sm:$0xff]
    %v1220 = vld [vmem:[#allocation3 + $0xc8] sm:$0xff]
    %v1221 = vld [vmem:[#allocation3 + $0xd0] sm:$0xff]
    %v1222 = vld [vmem:[#allocation3 + $0xd8] sm:$0xff]
    %v1223 = vld [vmem:[#allocation3 + $0xe0] sm:$0xff]
    %v1224 = vld [vmem:[#allocation3 + $0xe8] sm:$0xff]
    %v1225 = vld [vmem:[#allocation3 + $0xf0] sm:$0xff]
    %v1226 = vld [vmem:[#allocation3 + $0xf8] sm:$0xff]
    %v1227 = vld [vmem:[#allocation3 + $0x100] sm:$0xff]
    %v1228 = vld [vmem:[#allocation3 + $0x108] sm:$0xff]
    %v1229 = vld [vmem:[#allocation3 + $0x110] sm:$0xff]
    %v1230 = vld [vmem:[#allocation3 + $0x118] sm:$0xff]
    %v1231 = vld [vmem:[#allocation3 + $0x120] sm:$0xff]
    %v1232 = vld [vmem:[#allocation3 + $0x128] sm:$0xff]
    %v1233 = vld [vmem:[#allocation3 + $0x130] sm:$0xff]
    %v1234 = vld [vmem:[#allocation3 + $0x138] sm:$0xff]
    %v1235 = vld [vmem:[#allocation3 + $0x140] sm:$0xff]
    %v1236 = vld [vmem:[#allocation3 + $0x148] sm:$0xff]
    %v1237 = vld [vmem:[#allocation3 + $0x150] sm:$0xff]
    %v1238 = vld [vmem:[#allocation3 + $0x158] sm:$0xff]
    %v1239 = vld [vmem:[#allocation3 + $0x160] sm:$0xff]
    %v1240 = vld [vmem:[#allocation3 + $0x168] sm:$0xff]
    %v1241 = vld [vmem:[#allocation3 + $0x170] sm:$0xff]
    %v1242 = vld [vmem:[#allocation3 + $0x178] sm:$0xff]
    %v1243 = vld [vmem:[#allocation3 + $0x180] sm:$0xff]
    %v1244 = vld [vmem:[#allocation3 + $0x188] sm:$0xff]
    %v1245 = vld [vmem:[#allocation3 + $0x190] sm:$0xff]
    %v1246 = vld [vmem:[#allocation3 + $0x198] sm:$0xff]
    %v1247 = vld [vmem:[#allocation3 + $0x1a0] sm:$0xff]
    %v1248 = vld [vmem:[#allocation3 + $0x1a8] sm:$0xff]
    %v1249 = vld [vmem:[#allocation3 + $0x1b0] sm:$0xff]
    %v1250 = vld [vmem:[#allocation3 + $0x1b8] sm:$0xff]
    %v1251 = vld [vmem:[#allocation3 + $0x1c0] sm:$0xff]
    %v1252 = vld [vmem:[#allocation3 + $0x1c8] sm:$0xff]
    %v1253 = vld [vmem:[#allocation3 + $0x1d0] sm:$0xff]
    %v1254 = vld [vmem:[#allocation3 + $0x1d8] sm:$0xff]
    %v1255 = vld [vmem:[#allocation3 + $0x1e0] sm:$0xff]
    %v1256 = vld [vmem:[#allocation3 + $0x1e8] sm:$0xff]
    %v1257 = vld [vmem:[#allocation3 + $0x1f0] sm:$0xff]
    %v1258 = vld [vmem:[#allocation3 + $0x1f8] sm:$0xff]
    %v1259 = vld [vmem:[#allocation3 + $0x200] sm:$0xff]
    %v1260 = vld [vmem:[#allocation3 + $0x208] sm:$0xff]
    %v1261 = vld [vmem:[#allocation3 + $0x210] sm:$0xff]
    %v1262 = vld [vmem:[#allocation3 + $0x218] sm:$0xff]
    %v1263 = vld [vmem:[#allocation3 + $0x220] sm:$0xff]
    %v1264 = vld [vmem:[#allocation3 + $0x228] sm:$0xff]
    %v1265 = vld [vmem:[#allocation3 + $0x230] sm:$0xff]
    %v1266 = vld [vmem:[#allocation3 + $0x238] sm:$0xff]
    %v1267 = vld [vmem:[#allocation3 + $0x240] sm:$0xff]
    %v1268 = vld [vmem:[#allocation3 + $0x248] sm:$0xff]
    %v1269 = vld [vmem:[#allocation3 + $0x250] sm:$0xff]
    %v1270 = vld [vmem:[#allocation3 + $0x258] sm:$0xff]
    %v1271 = vld [vmem:[#allocation3 + $0x260] sm:$0xff]
    %v1272 = vld [vmem:[#allocation3 + $0x268] sm:$0xff]
    %v1273 = vld [vmem:[#allocation3 + $0x270] sm:$0xff]
    %v1274 = vld [vmem:[#allocation3 + $0x278] sm:$0xff]
    %v1275 = vld [vmem:[#allocation3 + $0x280] sm:$0xff]
    %v1276 = vld [vmem:[#allocation3 + $0x288] sm:$0xff]
    %v1277 = vld [vmem:[#allocation3 + $0x290] sm:$0xff]
    %v1278 = vld [vmem:[#allocation3 + $0x298] sm:$0xff]
    %v1279 = vld [vmem:[#allocation3 + $0x2a0] sm:$0xff]
    %v1280 = vld [vmem:[#allocation3 + $0x2a8] sm:$0xff]
    %v1281 = vld [vmem:[#allocation3 + $0x2b0] sm:$0xff]
    %v1282 = vld [vmem:[#allocation3 + $0x2b8] sm:$0xff]
    %v1283 = vld [vmem:[#allocation3 + $0x2c0] sm:$0xff]
    %v1284 = vld [vmem:[#allocation3 + $0x2c8] sm:$0xff]
    %v1285 = vld [vmem:[#allocation3 + $0x2d0] sm:$0xff]
    %v1286 = vld [vmem:[#allocation3 + $0x2d8] sm:$0xff]
    %v1287 = vld [vmem:[#allocation3 + $0x2e0] sm:$0xff]
    %v1288 = vld [vmem:[#allocation3 + $0x2e8] sm:$0xff]
    %v1289 = vld [vmem:[#allocation3 + $0x2f0] sm:$0xff]
    %v1290 = vld [vmem:[#allocation3 + $0x2f8] sm:$0xff]
    %v1291 = vld [vmem:[#allocation3 + $0x300] sm:$0xff]
    %v1292 = vld [vmem:[#allocation3 + $0x308] sm:$0xff]
    %v1293 = vld [vmem:[#allocation3 + $0x310] sm:$0xff]
    %v1294 = vld [vmem:[#allocation3 + $0x318] sm:$0xff]
    %v1295 = vld [vmem:[#allocation3 + $0x320] sm:$0xff]
    %v1296 = vld [vmem:[#allocation3 + $0x328] sm:$0xff]
    %v1297 = vld [vmem:[#allocation3 + $0x330] sm:$0xff]
    %v1298 = vld [vmem:[#allocation3 + $0x338] sm:$0xff]
    %v1299 = vld [vmem:[#allocation3 + $0x340] sm:$0xff]
    %v1300 = vld [vmem:[#allocation3 + $0x348] sm:$0xff]
    %v1301 = vld [vmem:[#allocation3 + $0x350] sm:$0xff]
    %v1302 = vld [vmem:[#allocation3 + $0x358] sm:$0xff]
    %v1303 = vld [vmem:[#allocation3 + $0x360] sm:$0xff]
    %v1304 = vld [vmem:[#allocation3 + $0x368] sm:$0xff]
    %v1305 = vld [vmem:[#allocation3 + $0x370] sm:$0xff]
    %v1306 = vld [vmem:[#allocation3 + $0x378] sm:$0xff]
    %v1307 = vld [vmem:[#allocation3 + $0x380] sm:$0xff]
    %v1308 = vld [vmem:[#allocation3 + $0x388] sm:$0xff]
    %v1309 = vld [vmem:[#allocation3 + $0x390] sm:$0xff]
    %v1310 = vld [vmem:[#allocation3 + $0x398] sm:$0xff]
    %v1311 = vld [vmem:[#allocation3 + $0x3a0] sm:$0xff]
    %v1312 = vld [vmem:[#allocation3 + $0x3a8] sm:$0xff]
    %v1313 = vld [vmem:[#allocation3 + $0x3b0] sm:$0xff]
    %v1314 = vld [vmem:[#allocation3 + $0x3b8] sm:$0xff]
    %v1315 = vld [vmem:[#allocation3 + $0x3c0] sm:$0xff]
    %v1316 = vld [vmem:[#allocation3 + $0x3c8] sm:$0xff]
    %v1317 = vld [vmem:[#allocation3 + $0x3d0] sm:$0xff]
    %v1318 = vld [vmem:[#allocation3 + $0x3d8] sm:$0xff]
    %v1319 = vld [vmem:[#allocation3 + $0x3e0] sm:$0xff]
    %v1320 = vld [vmem:[#allocation3 + $0x3e8] sm:$0xff]
    %v1321 = vld [vmem:[#allocation3 + $0x3f0] sm:$0xff]
    %v1322 = vld [vmem:[#allocation3 + $0x3f8] sm:$0xff]
    %v1323 = vld [vmem:[#allocation3 + $0x400] sm:$0xff]
    %v1324 = vld [vmem:[#allocation3 + $0x408] sm:$0xff]
    %v1325 = vld [vmem:[#allocation3 + $0x410] sm:$0xff]
    %v1326 = vld [vmem:[#allocation3 + $0x418] sm:$0xff]
    %v1327 = vld [vmem:[#allocation3 + $0x420] sm:$0xff]
    %v1328 = vld [vmem:[#allocation3 + $0x428] sm:$0xff]
    %v1329 = vld [vmem:[#allocation3 + $0x430] sm:$0xff]
    %v1330 = vld [vmem:[#allocation3 + $0x438] sm:$0xff]
    %v1331 = vld [vmem:[#allocation3 + $0x440] sm:$0xff]
    %v1332 = vld [vmem:[#allocation3 + $0x448] sm:$0xff]
    %v1333 = vld [vmem:[#allocation3 + $0x450] sm:$0xff]
    %v1334 = vld [vmem:[#allocation3 + $0x458] sm:$0xff]
    %v1335 = vld [vmem:[#allocation3 + $0x460] sm:$0xff]
    %v1336 = vld [vmem:[#allocation3 + $0x468] sm:$0xff]
    %v1337 = vld [vmem:[#allocation3 + $0x470] sm:$0xff]
    %v1338 = vld [vmem:[#allocation3 + $0x478] sm:$0xff]
    %v1339 = vld [vmem:[#allocation3 + $0x480] sm:$0xff]
    %v1340 = vld [vmem:[#allocation3 + $0x488] sm:$0xff]
    %v1341 = vld [vmem:[#allocation3 + $0x490] sm:$0xff]
    %v1342 = vld [vmem:[#allocation3 + $0x498] sm:$0xff]
    %v1343 = vld [vmem:[#allocation3 + $0x4a0] sm:$0xff]
    %v1344 = vld [vmem:[#allocation3 + $0x4a8] sm:$0xff]
    %v1345 = vld [vmem:[#allocation3 + $0x4b0] sm:$0xff]
    %v1346 = vld [vmem:[#allocation3 + $0x4b8] sm:$0xff]
    %v1347 = vld [vmem:[#allocation3 + $0x4c0] sm:$0xff]
    %v1348 = vld [vmem:[#allocation3 + $0x4c8] sm:$0xff]
    %v1349 = vld [vmem:[#allocation3 + $0x4d0] sm:$0xff]
    %v1350 = vld [vmem:[#allocation3 + $0x4d8] sm:$0xff]
    %v1351 = vld [vmem:[#allocation3 + $0x4e0] sm:$0xff]
    %v1352 = vld [vmem:[#allocation3 + $0x4e8] sm:$0xff]
    %v1353 = vld [vmem:[#allocation3 + $0x4f0] sm:$0xff]
    %v1354 = vld [vmem:[#allocation3 + $0x4f8] sm:$0xff]
    %v1355 = vld [vmem:[#allocation3 + $0x500] sm:$0xff]
    %v1356 = vld [vmem:[#allocation3 + $0x508] sm:$0xff]
    %v1357 = vld [vmem:[#allocation3 + $0x510] sm:$0xff]
    %v1358 = vld [vmem:[#allocation3 + $0x518] sm:$0xff]
    %v1359 = vld [vmem:[#allocation3 + $0x520] sm:$0xff]
    %v1360 = vld [vmem:[#allocation3 + $0x528] sm:$0xff]
    %v1361 = vld [vmem:[#allocation3 + $0x530] sm:$0xff]
    %v1362 = vld [vmem:[#allocation3 + $0x538] sm:$0xff]
    %v1363 = vld [vmem:[#allocation3 + $0x540] sm:$0xff]
    %v1364 = vld [vmem:[#allocation3 + $0x548] sm:$0xff]
    %v1365 = vld [vmem:[#allocation3 + $0x550] sm:$0xff]
    %v1366 = vld [vmem:[#allocation3 + $0x558] sm:$0xff]
    %v1367 = vld [vmem:[#allocation3 + $0x560] sm:$0xff]
    %v1368 = vld [vmem:[#allocation3 + $0x568] sm:$0xff]
    %v1369 = vld [vmem:[#allocation3 + $0x570] sm:$0xff]
    %v1370 = vld [vmem:[#allocation3 + $0x578] sm:$0xff]
    %v1371 = vld [vmem:[#allocation3 + $0x580] sm:$0xff]
    %v1372 = vld [vmem:[#allocation3 + $0x588] sm:$0xff]
    %v1373 = vld [vmem:[#allocation3 + $0x590] sm:$0xff]
    %v1374 = vld [vmem:[#allocation3 + $0x598] sm:$0xff]
    %v1375 = vld [vmem:[#allocation3 + $0x5a0] sm:$0xff]
    %v1376 = vld [vmem:[#allocation3 + $0x5a8] sm:$0xff]
    %v1377 = vld [vmem:[#allocation3 + $0x5b0] sm:$0xff]
    %v1378 = vld [vmem:[#allocation3 + $0x5b8] sm:$0xff]
    %v1379 = vld [vmem:[#allocation3 + $0x5c0] sm:$0xff]
    %v1380 = vld [vmem:[#allocation3 + $0x5c8] sm:$0xff]
    %v1381 = vld [vmem:[#allocation3 + $0x5d0] sm:$0xff]
    %v1382 = vld [vmem:[#allocation3 + $0x5d8] sm:$0xff]
    %v1383 = vld [vmem:[#allocation3 + $0x5e0] sm:$0xff]
    %v1384 = vld [vmem:[#allocation3 + $0x5e8] sm:$0xff]
    %v1385 = vld [vmem:[#allocation3 + $0x5f0] sm:$0xff]
    %v1386 = vld [vmem:[#allocation3 + $0x5f8] sm:$0xff]
    %v1387 = vld [vmem:[#allocation3 + $0x600] sm:$0xff]
    %v1388 = vld [vmem:[#allocation3 + $0x608] sm:$0xff]
    %v1389 = vld [vmem:[#allocation3 + $0x610] sm:$0xff]
    %v1390 = vld [vmem:[#allocation3 + $0x618] sm:$0xff]
    %v1391 = vld [vmem:[#allocation3 + $0x620] sm:$0xff]
    %v1392 = vld [vmem:[#allocation3 + $0x628] sm:$0xff]
    %v1393 = vld [vmem:[#allocation3 + $0x630] sm:$0xff]
    %v1394 = vld [vmem:[#allocation3 + $0x638] sm:$0xff]
    %v1395 = vld [vmem:[#allocation3 + $0x640] sm:$0xff]
    %v1396 = vld [vmem:[#allocation3 + $0x648] sm:$0xff]
    %v1397 = vld [vmem:[#allocation3 + $0x650] sm:$0xff]
    %v1398 = vld [vmem:[#allocation3 + $0x658] sm:$0xff]
    %v1399 = vld [vmem:[#allocation3 + $0x660] sm:$0xff]
    %v1400 = vld [vmem:[#allocation3 + $0x668] sm:$0xff]
    %v1401 = vld [vmem:[#allocation3 + $0x670] sm:$0xff]
    %v1402 = vld [vmem:[#allocation3 + $0x678] sm:$0xff]
    %v1403 = vld [vmem:[#allocation3 + $0x680] sm:$0xff]
    %v1404 = vld [vmem:[#allocation3 + $0x688] sm:$0xff]
    %v1405 = vld [vmem:[#allocation3 + $0x690] sm:$0xff]
    %v1406 = vld [vmem:[#allocation3 + $0x698] sm:$0xff]
    %v1407 = vld [vmem:[#allocation3 + $0x6a0] sm:$0xff]
    %v1408 = vld [vmem:[#allocation3 + $0x6a8] sm:$0xff]
    %v1409 = vld [vmem:[#allocation3 + $0x6b0] sm:$0xff]
    %v1410 = vld [vmem:[#allocation3 + $0x6b8] sm:$0xff]
    %v1411 = vld [vmem:[#allocation3 + $0x6c0] sm:$0xff]
    %v1412 = vld [vmem:[#allocation3 + $0x6c8] sm:$0xff]
    %v1413 = vld [vmem:[#allocation3 + $0x6d0] sm:$0xff]
    %v1414 = vld [vmem:[#allocation3 + $0x6d8] sm:$0xff]
    %v1415 = vld [vmem:[#allocation3 + $0x6e0] sm:$0xff]
    %v1416 = vld [vmem:[#allocation3 + $0x6e8] sm:$0xff]
    %v1417 = vld [vmem:[#allocation3 + $0x6f0] sm:$0xff]
    %v1418 = vld [vmem:[#allocation3 + $0x6f8] sm:$0xff]
    %v1419 = vld [vmem:[#allocation3 + $0x700] sm:$0xff]
    %v1420 = vld [vmem:[#allocation3 + $0x708] sm:$0xff]
    %v1421 = vld [vmem:[#allocation3 + $0x710] sm:$0xff]
    %v1422 = vld [vmem:[#allocation3 + $0x718] sm:$0xff]
    %v1423 = vld [vmem:[#allocation3 + $0x720] sm:$0xff]
    %v1424 = vld [vmem:[#allocation3 + $0x728] sm:$0xff]
    %v1425 = vld [vmem:[#allocation3 + $0x730] sm:$0xff]
    %v1426 = vld [vmem:[#allocation3 + $0x738] sm:$0xff]
    %v1427 = vld [vmem:[#allocation3 + $0x740] sm:$0xff]
    %v1428 = vld [vmem:[#allocation3 + $0x748] sm:$0xff]
    %v1429 = vld [vmem:[#allocation3 + $0x750] sm:$0xff]
    %v1430 = vld [vmem:[#allocation3 + $0x758] sm:$0xff]
    %v1431 = vld [vmem:[#allocation3 + $0x760] sm:$0xff]
    %v1432 = vld [vmem:[#allocation3 + $0x768] sm:$0xff]
    %v1433 = vld [vmem:[#allocation3 + $0x770] sm:$0xff]
    %v1434 = vld [vmem:[#allocation3 + $0x778] sm:$0xff]
    %v1435 = vld [vmem:[#allocation3 + $0x780] sm:$0xff]
    %v1436 = vld [vmem:[#allocation3 + $0x788] sm:$0xff]
    %v1437 = vld [vmem:[#allocation3 + $0x790] sm:$0xff]
    %v1438 = vld [vmem:[#allocation3 + $0x798] sm:$0xff]
    %v1439 = vld [vmem:[#allocation3 + $0x7a0] sm:$0xff]
    %v1440 = vld [vmem:[#allocation3 + $0x7a8] sm:$0xff]
    %v1441 = vld [vmem:[#allocation3 + $0x7b0] sm:$0xff]
    %v1442 = vld [vmem:[#allocation3 + $0x7b8] sm:$0xff]
    %v1443 = vld [vmem:[#allocation3 + $0x7c0] sm:$0xff]
    %v1444 = vld [vmem:[#allocation3 + $0x7c8] sm:$0xff]
    %v1445 = vld [vmem:[#allocation3 + $0x7d0] sm:$0xff]
    %v1446 = vld [vmem:[#allocation3 + $0x7d8] sm:$0xff]
    %v1447 = vld [vmem:[#allocation3 + $0x7e0] sm:$0xff]
    %v1448 = vld [vmem:[#allocation3 + $0x7e8] sm:$0xff]
    %v1449 = vld [vmem:[#allocation3 + $0x7f0] sm:$0xff]
    %v1450 = vld [vmem:[#allocation3 + $0x7f8] sm:$0xff]
    %v1451 = vld [vmem:[#allocation3 + $0x800] sm:$0xff]
    %v1452 = vld [vmem:[#allocation3 + $0x808] sm:$0xff]
    %v1453 = vld [vmem:[#allocation3 + $0x810] sm:$0xff]
    %v1454 = vld [vmem:[#allocation3 + $0x818] sm:$0xff]
    %v1455 = vld [vmem:[#allocation3 + $0x820] sm:$0xff]
    %v1456 = vld [vmem:[#allocation3 + $0x828] sm:$0xff]
    %v1457 = vld [vmem:[#allocation3 + $0x830] sm:$0xff]
    %v1458 = vld [vmem:[#allocation3 + $0x838] sm:$0xff]
    %v1459 = vld [vmem:[#allocation3 + $0x840] sm:$0xff]
    %v1460 = vld [vmem:[#allocation3 + $0x848] sm:$0xff]
    %v1461 = vld [vmem:[#allocation3 + $0x850] sm:$0xff]
    %v1462 = vld [vmem:[#allocation3 + $0x858] sm:$0xff]
    %v1463 = vld [vmem:[#allocation3 + $0x860] sm:$0xff]
    %v1464 = vld [vmem:[#allocation3 + $0x868] sm:$0xff]
    %v1465 = vld [vmem:[#allocation3 + $0x870] sm:$0xff]
    %v1466 = vld [vmem:[#allocation3 + $0x878] sm:$0xff]
    %v1467 = vld [vmem:[#allocation3 + $0x880] sm:$0xff]
    %v1468 = vld [vmem:[#allocation3 + $0x888] sm:$0xff]
    %v1469 = vld [vmem:[#allocation3 + $0x890] sm:$0xff]
    %v1470 = vld [vmem:[#allocation3 + $0x898] sm:$0xff]
    %v1471 = vld [vmem:[#allocation3 + $0x8a0] sm:$0xff]
    %v1472 = vld [vmem:[#allocation3 + $0x8a8] sm:$0xff]
    %v1473 = vld [vmem:[#allocation3 + $0x8b0] sm:$0xff]
    %v1474 = vld [vmem:[#allocation3 + $0x8b8] sm:$0xff]
    %v1475 = vld [vmem:[#allocation3 + $0x8c0] sm:$0xff]
    %v1476 = vld [vmem:[#allocation3 + $0x8c8] sm:$0xff]
    %v1477 = vld [vmem:[#allocation3 + $0x8d0] sm:$0xff]
    %v1478 = vld [vmem:[#allocation3 + $0x8d8] sm:$0xff]
    %v1479 = vld [vmem:[#allocation3 + $0x8e0] sm:$0xff]
    %v1480 = vld [vmem:[#allocation3 + $0x8e8] sm:$0xff]
    %v1481 = vld [vmem:[#allocation3 + $0x8f0] sm:$0xff]
    %v1482 = vld [vmem:[#allocation3 + $0x8f8] sm:$0xff]
    %v1483 = vld [vmem:[#allocation3 + $0x900] sm:$0xff]
    %v1484 = vld [vmem:[#allocation3 + $0x908] sm:$0xff]
    %v1485 = vld [vmem:[#allocation3 + $0x910] sm:$0xff]
    %v1486 = vld [vmem:[#allocation3 + $0x918] sm:$0xff]
    %v1487 = vld [vmem:[#allocation3 + $0x920] sm:$0xff]
    %v1488 = vld [vmem:[#allocation3 + $0x928] sm:$0xff]
    %v1489 = vld [vmem:[#allocation3 + $0x930] sm:$0xff]
    %v1490 = vld [vmem:[#allocation3 + $0x938] sm:$0xff]
    %v1491 = vld [vmem:[#allocation3 + $0x940] sm:$0xff]
    %v1492 = vld [vmem:[#allocation3 + $0x948] sm:$0xff]
    %v1493 = vld [vmem:[#allocation3 + $0x950] sm:$0xff]
    %v1494 = vld [vmem:[#allocation3 + $0x958] sm:$0xff]
    %v1495 = vld [vmem:[#allocation3 + $0x960] sm:$0xff]
    %v1496 = vld [vmem:[#allocation3 + $0x968] sm:$0xff]
    %v1497 = vld [vmem:[#allocation3 + $0x970] sm:$0xff]
    %v1498 = vld [vmem:[#allocation3 + $0x978] sm:$0xff]
    %v1499 = vld [vmem:[#allocation3 + $0x980] sm:$0xff]
    %v1500 = vld [vmem:[#allocation3 + $0x988] sm:$0xff]
    %v1501 = vld [vmem:[#allocation3 + $0x990] sm:$0xff]
    %v1502 = vld [vmem:[#allocation3 + $0x998] sm:$0xff]
    %v1503 = vld [vmem:[#allocation3 + $0x9a0] sm:$0xff]
    %v1504 = vld [vmem:[#allocation3 + $0x9a8] sm:$0xff]
    %v1505 = vld [vmem:[#allocation3 + $0x9b0] sm:$0xff]
    %v1506 = vld [vmem:[#allocation3 + $0x9b8] sm:$0xff]
    %v1507 = vld [vmem:[#allocation3 + $0x9c0] sm:$0xff]
    %v1508 = vld [vmem:[#allocation3 + $0x9c8] sm:$0xff]
    %v1509 = vld [vmem:[#allocation3 + $0x9d0] sm:$0xff]
    %v1510 = vld [vmem:[#allocation3 + $0x9d8] sm:$0xff]
    %v1511 = vld [vmem:[#allocation3 + $0x9e0] sm:$0xff]
    %v1512 = vld [vmem:[#allocation3 + $0x9e8] sm:$0xff]
    %v1513 = vld [vmem:[#allocation3 + $0x9f0] sm:$0xff]
    %v1514 = vld [vmem:[#allocation3 + $0x9f8] sm:$0xff]
    %v1515 = vld [vmem:[#allocation3 + $0xa00] sm:$0xff]
    %v1516 = vld [vmem:[#allocation3 + $0xa08] sm:$0xff]
    %v1517 = vld [vmem:[#allocation3 + $0xa10] sm:$0xff]
    %v1518 = vld [vmem:[#allocation3 + $0xa18] sm:$0xff]
    %v1519 = vld [vmem:[#allocation3 + $0xa20] sm:$0xff]
    %v1520 = vld [vmem:[#allocation3 + $0xa28] sm:$0xff]
    %v1521 = vld [vmem:[#allocation3 + $0xa30] sm:$0xff]
    %v1522 = vld [vmem:[#allocation3 + $0xa38] sm:$0xff]
    %v1523 = vld [vmem:[#allocation3 + $0xa40] sm:$0xff]
    %v1524 = vld [vmem:[#allocation3 + $0xa48] sm:$0xff]
    %v1525 = vld [vmem:[#allocation3 + $0xa50] sm:$0xff]
    %v1526 = vld [vmem:[#allocation3 + $0xa58] sm:$0xff]
    %v1527 = vld [vmem:[#allocation3 + $0xa60] sm:$0xff]
    %v1528 = vld [vmem:[#allocation3 + $0xa68] sm:$0xff]
    %v1529 = vld [vmem:[#allocation3 + $0xa70] sm:$0xff]
    %v1530 = vld [vmem:[#allocation3 + $0xa78] sm:$0xff]
    %v1531 = vld [vmem:[#allocation3 + $0xa80] sm:$0xff]
    %v1532 = vld [vmem:[#allocation3 + $0xa88] sm:$0xff]
    %v1533 = vld [vmem:[#allocation3 + $0xa90] sm:$0xff]
    %v1534 = vld [vmem:[#allocation3 + $0xa98] sm:$0xff]
    %v1535 = vld [vmem:[#allocation3 + $0xaa0] sm:$0xff]
    %v1536 = vld [vmem:[#allocation3 + $0xaa8] sm:$0xff]
    %v1537 = vld [vmem:[#allocation3 + $0xab0] sm:$0xff]
    %v1538 = vld [vmem:[#allocation3 + $0xab8] sm:$0xff]
    %v1539 = vld [vmem:[#allocation3 + $0xac0] sm:$0xff]
    %v1540 = vld [vmem:[#allocation3 + $0xac8] sm:$0xff]
    %v1541 = vld [vmem:[#allocation3 + $0xad0] sm:$0xff]
    %v1542 = vld [vmem:[#allocation3 + $0xad8] sm:$0xff]
    %v1543 = vld [vmem:[#allocation3 + $0xae0] sm:$0xff]
    %v1544 = vld [vmem:[#allocation3 + $0xae8] sm:$0xff]
    %v1545 = vld [vmem:[#allocation3 + $0xaf0] sm:$0xff]
    %v1546 = vld [vmem:[#allocation3 + $0xaf8] sm:$0xff]
    %v1547 = vld [vmem:[#allocation3 + $0xb00] sm:$0xff]
    %v1548 = vld [vmem:[#allocation3 + $0xb08] sm:$0xff]
    %v1549 = vld [vmem:[#allocation3 + $0xb10] sm:$0xff]
    %v1550 = vld [vmem:[#allocation3 + $0xb18] sm:$0xff]
    %v1551 = vld [vmem:[#allocation3 + $0xb20] sm:$0xff]
    %v1552 = vld [vmem:[#allocation3 + $0xb28] sm:$0xff]
    %v1553 = vld [vmem:[#allocation3 + $0xb30] sm:$0xff]
    %v1554 = vld [vmem:[#allocation3 + $0xb38] sm:$0xff]
    %v1555 = vld [vmem:[#allocation3 + $0xb40] sm:$0xff]
    %v1556 = vld [vmem:[#allocation3 + $0xb48] sm:$0xff]
    %v1557 = vld [vmem:[#allocation3 + $0xb50] sm:$0xff]
    %v1558 = vld [vmem:[#allocation3 + $0xb58] sm:$0xff]
    %v1559 = vld [vmem:[#allocation3 + $0xb60] sm:$0xff]
    %v1560 = vld [vmem:[#allocation3 + $0xb68] sm:$0xff]
    %v1561 = vld [vmem:[#allocation3 + $0xb70] sm:$0xff]
    %v1562 = vld [vmem:[#allocation3 + $0xb78] sm:$0xff]
    %v1563 = vld [vmem:[#allocation3 + $0xb80] sm:$0xff]
    %v1564 = vld [vmem:[#allocation3 + $0xb88] sm:$0xff]
    %v1565 = vld [vmem:[#allocation3 + $0xb90] sm:$0xff]
    %v1566 = vld [vmem:[#allocation3 + $0xb98] sm:$0xff]
    %v1567 = vld [vmem:[#allocation3 + $0xba0] sm:$0xff]
    %v1568 = vld [vmem:[#allocation3 + $0xba8] sm:$0xff]
    %v1569 = vld [vmem:[#allocation3 + $0xbb0] sm:$0xff]
    %v1570 = vld [vmem:[#allocation3 + $0xbb8] sm:$0xff]
    %v1571 = vld [vmem:[#allocation3 + $0xbc0] sm:$0xff]
    %v1572 = vld [vmem:[#allocation3 + $0xbc8] sm:$0xff]
    %v1573 = vld [vmem:[#allocation3 + $0xbd0] sm:$0xff]
    %v1574 = vld [vmem:[#allocation3 + $0xbd8] sm:$0xff]
    %v1575 = vld [vmem:[#allocation3 + $0xbe0] sm:$0xff]
    %v1576 = vld [vmem:[#allocation3 + $0xbe8] sm:$0xff]
    %v1577 = vld [vmem:[#allocation3 + $0xbf0] sm:$0xff]
    %v1578 = vld [vmem:[#allocation3 + $0xbf8] sm:$0xff]
    %v1579 = vld [vmem:[#allocation3 + $0xc00] sm:$0xff]
    %v1580 = vld [vmem:[#allocation3 + $0xc08] sm:$0xff]
    %v1581 = vld [vmem:[#allocation3 + $0xc10] sm:$0xff]
    %v1582 = vld [vmem:[#allocation3 + $0xc18] sm:$0xff]
    %v1583 = vld [vmem:[#allocation3 + $0xc20] sm:$0xff]
    %v1584 = vld [vmem:[#allocation3 + $0xc28] sm:$0xff]
    %v1585 = vld [vmem:[#allocation3 + $0xc30] sm:$0xff]
    %v1586 = vld [vmem:[#allocation3 + $0xc38] sm:$0xff]
    %v1587 = vld [vmem:[#allocation3 + $0xc40] sm:$0xff]
    %v1588 = vld [vmem:[#allocation3 + $0xc48] sm:$0xff]
    %v1589 = vld [vmem:[#allocation3 + $0xc50] sm:$0xff]
    %v1590 = vld [vmem:[#allocation3 + $0xc58] sm:$0xff]
    %v1591 = vld [vmem:[#allocation3 + $0xc60] sm:$0xff]
    %v1592 = vld [vmem:[#allocation3 + $0xc68] sm:$0xff]
    %v1593 = vld [vmem:[#allocation3 + $0xc70] sm:$0xff]
    %v1594 = vld [vmem:[#allocation3 + $0xc78] sm:$0xff]
    %v1595 = vld [vmem:[#allocation3 + $0xc80] sm:$0xff]
    %v1596 = vld [vmem:[#allocation3 + $0xc88] sm:$0xff]
    %v1597 = vld [vmem:[#allocation3 + $0xc90] sm:$0xff]
    %v1598 = vld [vmem:[#allocation3 + $0xc98] sm:$0xff]
    %v1599 = vld [vmem:[#allocation3 + $0xca0] sm:$0xff]
    %v1600 = vld [vmem:[#allocation3 + $0xca8] sm:$0xff]
    %v1601 = vld [vmem:[#allocation3 + $0xcb0] sm:$0xff]
    %v1602 = vld [vmem:[#allocation3 + $0xcb8] sm:$0xff]
    %v1603 = vld [vmem:[#allocation3 + $0xcc0] sm:$0xff]
    %v1604 = vld [vmem:[#allocation3 + $0xcc8] sm:$0xff]
    %v1605 = vld [vmem:[#allocation3 + $0xcd0] sm:$0xff]
    %v1606 = vld [vmem:[#allocation3 + $0xcd8] sm:$0xff]
    %v1607 = vld [vmem:[#allocation3 + $0xce0] sm:$0xff]
    %v1608 = vld [vmem:[#allocation3 + $0xce8] sm:$0xff]
    %v1609 = vld [vmem:[#allocation3 + $0xcf0] sm:$0xff]
    %v1610 = vld [vmem:[#allocation3 + $0xcf8] sm:$0xff]
    %v1611 = vld [vmem:[#allocation3 + $0xd00] sm:$0xff]
    %v1612 = vld [vmem:[#allocation3 + $0xd08] sm:$0xff]
    %v1613 = vld [vmem:[#allocation3 + $0xd10] sm:$0xff]
    %v1614 = vld [vmem:[#allocation3 + $0xd18] sm:$0xff]
    %v1615 = vld [vmem:[#allocation3 + $0xd20] sm:$0xff]
    %v1616 = vld [vmem:[#allocation3 + $0xd28] sm:$0xff]
    %v1617 = vld [vmem:[#allocation3 + $0xd30] sm:$0xff]
    %v1618 = vld [vmem:[#allocation3 + $0xd38] sm:$0xff]
    %v1619 = vld [vmem:[#allocation3 + $0xd40] sm:$0xff]
    %v1620 = vld [vmem:[#allocation3 + $0xd48] sm:$0xff]
    %v1621 = vld [vmem:[#allocation3 + $0xd50] sm:$0xff]
    %v1622 = vld [vmem:[#allocation3 + $0xd58] sm:$0xff]
    %v1623 = vld [vmem:[#allocation3 + $0xd60] sm:$0xff]
    %v1624 = vld [vmem:[#allocation3 + $0xd68] sm:$0xff]
    %v1625 = vld [vmem:[#allocation3 + $0xd70] sm:$0xff]
    %v1626 = vld [vmem:[#allocation3 + $0xd78] sm:$0xff]
    %v1627 = vld [vmem:[#allocation3 + $0xd80] sm:$0xff]
    %v1628 = vld [vmem:[#allocation3 + $0xd88] sm:$0xff]
    %v1629 = vld [vmem:[#allocation3 + $0xd90] sm:$0xff]
    %v1630 = vld [vmem:[#allocation3 + $0xd98] sm:$0xff]
    %v1631 = vld [vmem:[#allocation3 + $0xda0] sm:$0xff]
    %v1632 = vld [vmem:[#allocation3 + $0xda8] sm:$0xff]
    %v1633 = vld [vmem:[#allocation3 + $0xdb0] sm:$0xff]
    %v1634 = vld [vmem:[#allocation3 + $0xdb8] sm:$0xff]
    %v1635 = vld [vmem:[#allocation3 + $0xdc0] sm:$0xff]
    %v1636 = vld [vmem:[#allocation3 + $0xdc8] sm:$0xff]
    %v1637 = vld [vmem:[#allocation3 + $0xdd0] sm:$0xff]
    %v1638 = vld [vmem:[#allocation3 + $0xdd8] sm:$0xff]
    %v1639 = vld [vmem:[#allocation3 + $0xde0] sm:$0xff]
    %v1640 = vld [vmem:[#allocation3 + $0xde8] sm:$0xff]
    %v1641 = vld [vmem:[#allocation3 + $0xdf0] sm:$0xff]
    %v1642 = vld [vmem:[#allocation3 + $0xdf8] sm:$0xff]
    %v1643 = vld [vmem:[#allocation3 + $0xe00] sm:$0xff]
    %v1644 = vld [vmem:[#allocation3 + $0xe08] sm:$0xff]
    %v1645 = vld [vmem:[#allocation3 + $0xe10] sm:$0xff]
    %v1646 = vld [vmem:[#allocation3 + $0xe18] sm:$0xff]
    %v1647 = vld [vmem:[#allocation3 + $0xe20] sm:$0xff]
    %v1648 = vld [vmem:[#allocation3 + $0xe28] sm:$0xff]
    %v1649 = vld [vmem:[#allocation3 + $0xe30] sm:$0xff]
    %v1650 = vld [vmem:[#allocation3 + $0xe38] sm:$0xff]
    %v1651 = vld [vmem:[#allocation3 + $0xe40] sm:$0xff]
    %v1652 = vld [vmem:[#allocation3 + $0xe48] sm:$0xff]
    %v1653 = vld [vmem:[#allocation3 + $0xe50] sm:$0xff]
    %v1654 = vld [vmem:[#allocation3 + $0xe58] sm:$0xff]
    %v1655 = vld [vmem:[#allocation3 + $0xe60] sm:$0xff]
    %v1656 = vld [vmem:[#allocation3 + $0xe68] sm:$0xff]
    %v1657 = vld [vmem:[#allocation3 + $0xe70] sm:$0xff]
    %v1658 = vld [vmem:[#allocation3 + $0xe78] sm:$0xff]
    %v1659 = vld [vmem:[#allocation3 + $0xe80] sm:$0xff]
    %v1660 = vld [vmem:[#allocation3 + $0xe88] sm:$0xff]
    %v1661 = vld [vmem:[#allocation3 + $0xe90] sm:$0xff]
    %v1662 = vld [vmem:[#allocation3 + $0xe98] sm:$0xff]
    %v1663 = vld [vmem:[#allocation3 + $0xea0] sm:$0xff]
    %v1664 = vld [vmem:[#allocation3 + $0xea8] sm:$0xff]
    %v1665 = vld [vmem:[#allocation3 + $0xeb0] sm:$0xff]
    %v1666 = vld [vmem:[#allocation3 + $0xeb8] sm:$0xff]
    %v1667 = vld [vmem:[#allocation3 + $0xec0] sm:$0xff]
    %v1668 = vld [vmem:[#allocation3 + $0xec8] sm:$0xff]
    %v1669 = vld [vmem:[#allocation3 + $0xed0] sm:$0xff]
    %v1670 = vld [vmem:[#allocation3 + $0xed8] sm:$0xff]
    %v1671 = vld [vmem:[#allocation3 + $0xee0] sm:$0xff]
    %v1672 = vld [vmem:[#allocation3 + $0xee8] sm:$0xff]
    %v1673 = vld [vmem:[#allocation3 + $0xef0] sm:$0xff]
    %v1674 = vld [vmem:[#allocation3 + $0xef8] sm:$0xff]
    %v1675 = vld [vmem:[#allocation3 + $0xf00] sm:$0xff]
    %v1676 = vld [vmem:[#allocation3 + $0xf08] sm:$0xff]
    %v1677 = vld [vmem:[#allocation3 + $0xf10] sm:$0xff]
    %v1678 = vld [vmem:[#allocation3 + $0xf18] sm:$0xff]
    %v1679 = vld [vmem:[#allocation3 + $0xf20] sm:$0xff]
    %v1680 = vld [vmem:[#allocation3 + $0xf28] sm:$0xff]
    %v1681 = vld [vmem:[#allocation3 + $0xf30] sm:$0xff]
    %v1682 = vld [vmem:[#allocation3 + $0xf38] sm:$0xff]
    %v1683 = vld [vmem:[#allocation3 + $0xf40] sm:$0xff]
    %v1684 = vld [vmem:[#allocation3 + $0xf48] sm:$0xff]
    %v1685 = vld [vmem:[#allocation3 + $0xf50] sm:$0xff]
    %v1686 = vld [vmem:[#allocation3 + $0xf58] sm:$0xff]
    %v1687 = vld [vmem:[#allocation3 + $0xf60] sm:$0xff]
    %v1688 = vld [vmem:[#allocation3 + $0xf68] sm:$0xff]
    %v1689 = vld [vmem:[#allocation3 + $0xf70] sm:$0xff]
    %v1690 = vld [vmem:[#allocation3 + $0xf78] sm:$0xff]
    %v1691 = vld [vmem:[#allocation3 + $0xf80] sm:$0xff]
    %v1692 = vld [vmem:[#allocation3 + $0xf88] sm:$0xff]
    %v1693 = vld [vmem:[#allocation3 + $0xf90] sm:$0xff]
    %v1694 = vld [vmem:[#allocation3 + $0xf98] sm:$0xff]
    %v1695 = vld [vmem:[#allocation3 + $0xfa0] sm:$0xff]
    %v1696 = vld [vmem:[#allocation3 + $0xfa8] sm:$0xff]
    %v1697 = vld [vmem:[#allocation3 + $0xfb0] sm:$0xff]
    %v1698 = vld [vmem:[#allocation3 + $0xfb8] sm:$0xff]
    %v1699 = vld [vmem:[#allocation3 + $0xfc0] sm:$0xff]
    %v1700 = vld [vmem:[#allocation3 + $0xfc8] sm:$0xff]
    %v1701 = vld [vmem:[#allocation3 + $0xfd0] sm:$0xff]
    %v1702 = vld [vmem:[#allocation3 + $0xfd8] sm:$0xff]
    %v1703 = vld [vmem:[#allocation3 + $0xfe0] sm:$0xff]
    %v1704 = vld [vmem:[#allocation3 + $0xfe8] sm:$0xff]
    %v1705 = vld [vmem:[#allocation3 + $0xff0] sm:$0xff]
    %v1706 = vld [vmem:[#allocation3 + $0xff8] sm:$0xff]
    %v1707 = vld [vmem:[#allocation3 + $0x1000] sm:$0xff]
    %v1708 = vld [vmem:[#allocation3 + $0x1008] sm:$0xff]
    %v1709 = vld [vmem:[#allocation3 + $0x1010] sm:$0xff]
    %v1710 = vld [vmem:[#allocation3 + $0x1018] sm:$0xff]
    %v1711 = vld [vmem:[#allocation3 + $0x1020] sm:$0xff]
    %v1712 = vld [vmem:[#allocation3 + $0x1028] sm:$0xff]
    %v1713 = vld [vmem:[#allocation3 + $0x1030] sm:$0xff]
    %v1714 = vld [vmem:[#allocation3 + $0x1038] sm:$0xff]
    %v1715 = vld [vmem:[#allocation3 + $0x1040] sm:$0xff]
    %v1716 = vld [vmem:[#allocation3 + $0x1048] sm:$0xff]
    %v1717 = vld [vmem:[#allocation3 + $0x1050] sm:$0xff]
    %v1718 = vld [vmem:[#allocation3 + $0x1058] sm:$0xff]
    %v1719 = vld [vmem:[#allocation3 + $0x1060] sm:$0xff]
    %v1720 = vld [vmem:[#allocation3 + $0x1068] sm:$0xff]
    %v1721 = vld [vmem:[#allocation3 + $0x1070] sm:$0xff]
    %v1722 = vld [vmem:[#allocation3 + $0x1078] sm:$0xff]
    %v1723 = vld [vmem:[#allocation3 + $0x1080] sm:$0xff]
    %v1724 = vld [vmem:[#allocation3 + $0x1088] sm:$0xff]
    %v1725 = vld [vmem:[#allocation3 + $0x1090] sm:$0xff]
    %v1726 = vld [vmem:[#allocation3 + $0x1098] sm:$0xff]
    %v1727 = vld [vmem:[#allocation3 + $0x10a0] sm:$0xff]
    %v1728 = vld [vmem:[#allocation3 + $0x10a8] sm:$0xff]
    %v1729 = vld [vmem:[#allocation3 + $0x10b0] sm:$0xff]
    %v1730 = vld [vmem:[#allocation3 + $0x10b8] sm:$0xff]
    %v1731 = vld [vmem:[#allocation3 + $0x10c0] sm:$0xff]
    %v1732 = vld [vmem:[#allocation3 + $0x10c8] sm:$0xff]
    %v1733 = vld [vmem:[#allocation3 + $0x10d0] sm:$0xff]
    %v1734 = vld [vmem:[#allocation3 + $0x10d8] sm:$0xff]
    %v1735 = vld [vmem:[#allocation3 + $0x10e0] sm:$0xff]
    %v1736 = vld [vmem:[#allocation3 + $0x10e8] sm:$0xff]
    %v1737 = vld [vmem:[#allocation3 + $0x10f0] sm:$0xff]
    %v1738 = vld [vmem:[#allocation3 + $0x10f8] sm:$0xff]
    %v1739 = vld [vmem:[#allocation3 + $0x1100] sm:$0xff]
    %v1740 = vld [vmem:[#allocation3 + $0x1108] sm:$0xff]
    %v1741 = vld [vmem:[#allocation3 + $0x1110] sm:$0xff]
    %v1742 = vld [vmem:[#allocation3 + $0x1118] sm:$0xff]
    %v1743 = vld [vmem:[#allocation3 + $0x1120] sm:$0xff]
    %v1744 = vld [vmem:[#allocation3 + $0x1128] sm:$0xff]
    %v1745 = vld [vmem:[#allocation3 + $0x1130] sm:$0xff]
    %v1746 = vld [vmem:[#allocation3 + $0x1138] sm:$0xff]
    %v1747 = vld [vmem:[#allocation3 + $0x1140] sm:$0xff]
    %v1748 = vld [vmem:[#allocation3 + $0x1148] sm:$0xff]
    %v1749 = vld [vmem:[#allocation3 + $0x1150] sm:$0xff]
    %v1750 = vld [vmem:[#allocation3 + $0x1158] sm:$0xff]
    %v1751 = vld [vmem:[#allocation3 + $0x1160] sm:$0xff]
    %v1752 = vld [vmem:[#allocation3 + $0x1168] sm:$0xff]
    %v1753 = vld [vmem:[#allocation3 + $0x1170] sm:$0xff]
    %v1754 = vld [vmem:[#allocation3 + $0x1178] sm:$0xff]
    %v1755 = vld [vmem:[#allocation3 + $0x1180] sm:$0xff]
    %v1756 = vld [vmem:[#allocation3 + $0x1188] sm:$0xff]
    %v1757 = vld [vmem:[#allocation3 + $0x1190] sm:$0xff]
    %v1758 = vld [vmem:[#allocation3 + $0x1198] sm:$0xff]
    %v1759 = vld [vmem:[#allocation3 + $0x11a0] sm:$0xff]
    %v1760 = vld [vmem:[#allocation3 + $0x11a8] sm:$0xff]
    %v1761 = vld [vmem:[#allocation3 + $0x11b0] sm:$0xff]
    %v1762 = vld [vmem:[#allocation3 + $0x11b8] sm:$0xff]
    %v1763 = vld [vmem:[#allocation3 + $0x11c0] sm:$0xff]
    %v1764 = vld [vmem:[#allocation3 + $0x11c8] sm:$0xff]
    %v1765 = vld [vmem:[#allocation3 + $0x11d0] sm:$0xff]
    %v1766 = vld [vmem:[#allocation3 + $0x11d8] sm:$0xff]
    %v1767 = vld [vmem:[#allocation3 + $0x11e0] sm:$0xff]
    %v1768 = vld [vmem:[#allocation3 + $0x11e8] sm:$0xff]
    %v1769 = vld [vmem:[#allocation3 + $0x11f0] sm:$0xff]
    %v1770 = vld [vmem:[#allocation3 + $0x11f8] sm:$0xff]
    %v1771 = vld [vmem:[%s1] sm:$0xff]
    %v1772 = vld [vmem:[%s1 + $0x8] sm:$0xff]
    %v1773 = vld [vmem:[%s1 + $0x10] sm:$0xff]
    %v1774 = vld [vmem:[%s1 + $0x18] sm:$0xff]
    %v1775 = vld [vmem:[%s1 + $0x20] sm:$0xff]
    %v1776 = vld [vmem:[%s1 + $0x28] sm:$0xff]
    %v1777 = vld [vmem:[%s1 + $0x30] sm:$0xff]
    %v1778 = vld [vmem:[%s1 + $0x38] sm:$0xff]
    %v1779 = vld [vmem:[%s1 + $0x40] sm:$0xff]
    %v1780 = vld [vmem:[%s1 + $0x48] sm:$0xff]
    %v1781 = vld [vmem:[%s1 + $0x50] sm:$0xff]
    %v1782 = vld [vmem:[%s1 + $0x58] sm:$0xff]
    %v1783 = vld [vmem:[%s1 + $0x60] sm:$0xff]
    %v1784 = vld [vmem:[%s1 + $0x68] sm:$0xff]
    %v1785 = vld [vmem:[%s1 + $0x70] sm:$0xff]
    %v1786 = vld [vmem:[%s1 + $0x78] sm:$0xff]
    %v1787 = vld [vmem:[%s1 + $0x80] sm:$0xff]
    %v1788 = vld [vmem:[%s1 + $0x88] sm:$0xff]
    %v1789 = vld [vmem:[%s1 + $0x90] sm:$0xff]
    %v1790 = vld [vmem:[%s1 + $0x98] sm:$0xff]
    %v1791 = vld [vmem:[%s1 + $0xa0] sm:$0xff]
    %v1792 = vld [vmem:[%s1 + $0xa8] sm:$0xff]
    %v1793 = vld [vmem:[%s1 + $0xb0] sm:$0xff]
    %v1794 = vld [vmem:[%s1 + $0xb8] sm:$0xff]
    %v1795 = vld [vmem:[%s1 + $0xc0] sm:$0xff]
    %v1796 = vld [vmem:[%s1 + $0xc8] sm:$0xff]
    %v1797 = vld [vmem:[%s1 + $0xd0] sm:$0xff]
    %v1798 = vld [vmem:[%s1 + $0xd8] sm:$0xff]
    %v1799 = vld [vmem:[%s1 + $0xe0] sm:$0xff]
    %v1800 = vld [vmem:[%s1 + $0xe8] sm:$0xff]
    %v1801 = vld [vmem:[%s1 + $0xf0] sm:$0xff]
    %v1802 = vld [vmem:[%s1 + $0xf8] sm:$0xff]
    %v1803 = vld [vmem:[%s1 + $0x100] sm:$0xff]
    %v1804 = vld [vmem:[%s1 + $0x108] sm:$0xff]
    %v1805 = vld [vmem:[%s1 + $0x110] sm:$0xff]
    %v1806 = vld [vmem:[%s1 + $0x118] sm:$0xff]
    %v1807 = vld [vmem:[%s1 + $0x120] sm:$0xff]
    %v1808 = vld [vmem:[%s1 + $0x128] sm:$0xff]
    %v1809 = vld [vmem:[%s1 + $0x130] sm:$0xff]
    %v1810 = vld [vmem:[%s1 + $0x138] sm:$0xff]
    %v1811 = vld [vmem:[%s1 + $0x140] sm:$0xff]
    %v1812 = vld [vmem:[%s1 + $0x148] sm:$0xff]
    %v1813 = vld [vmem:[%s1 + $0x150] sm:$0xff]
    %v1814 = vld [vmem:[%s1 + $0x158] sm:$0xff]
    %v1815 = vld [vmem:[%s1 + $0x160] sm:$0xff]
    %v1816 = vld [vmem:[%s1 + $0x168] sm:$0xff]
    %v1817 = vld [vmem:[%s1 + $0x170] sm:$0xff]
    %v1818 = vld [vmem:[%s1 + $0x178] sm:$0xff]
    %v1819 = vld [vmem:[%s1 + $0x180] sm:$0xff]
    %v1820 = vld [vmem:[%s1 + $0x188] sm:$0xff]
    %v1821 = vld [vmem:[%s1 + $0x190] sm:$0xff]
    %v1822 = vld [vmem:[%s1 + $0x198] sm:$0xff]
    %v1823 = vld [vmem:[%s1 + $0x1a0] sm:$0xff]
    %v1824 = vld [vmem:[%s1 + $0x1a8] sm:$0xff]
    %v1825 = vld [vmem:[%s1 + $0x1b0] sm:$0xff]
    %v1826 = vld [vmem:[%s1 + $0x1b8] sm:$0xff]
    %v1827 = vld [vmem:[%s1 + $0x1c0] sm:$0xff]
    %v1828 = vld [vmem:[%s1 + $0x1c8] sm:$0xff]
    %v1829 = vld [vmem:[%s1 + $0x1d0] sm:$0xff]
    %v1830 = vld [vmem:[%s1 + $0x1d8] sm:$0xff]
    %v1831 = vld [vmem:[%s1 + $0x1e0] sm:$0xff]
    %v1832 = vld [vmem:[%s1 + $0x1e8] sm:$0xff]
    %v1833 = vld [vmem:[%s1 + $0x1f0] sm:$0xff]
    %v1834 = vld [vmem:[%s1 + $0x1f8] sm:$0xff]
    %v1835 = vld [vmem:[%s1 + $0x200] sm:$0xff]
    %v1836 = vld [vmem:[%s1 + $0x208] sm:$0xff]
    %v1837 = vld [vmem:[%s1 + $0x210] sm:$0xff]
    %v1838 = vld [vmem:[%s1 + $0x218] sm:$0xff]
    %v1839 = vld [vmem:[%s1 + $0x220] sm:$0xff]
    %v1840 = vld [vmem:[%s1 + $0x228] sm:$0xff]
    %v1841 = vld [vmem:[%s1 + $0x230] sm:$0xff]
    %v1842 = vld [vmem:[%s1 + $0x238] sm:$0xff]
    %v1843 = vld [vmem:[%s1 + $0x240] sm:$0xff]
    %v1844 = vld [vmem:[%s1 + $0x248] sm:$0xff]
    %v1845 = vld [vmem:[%s1 + $0x250] sm:$0xff]
    %v1846 = vld [vmem:[%s1 + $0x258] sm:$0xff]
    %v1847 = vld [vmem:[%s1 + $0x260] sm:$0xff]
    %v1848 = vld [vmem:[%s1 + $0x268] sm:$0xff]
    %v1849 = vld [vmem:[%s1 + $0x270] sm:$0xff]
    %v1850 = vld [vmem:[%s1 + $0x278] sm:$0xff]
    %v1851 = vld [vmem:[%s1 + $0x280] sm:$0xff]
    %v1852 = vld [vmem:[%s1 + $0x288] sm:$0xff]
    %v1853 = vld [vmem:[%s1 + $0x290] sm:$0xff]
    %v1854 = vld [vmem:[%s1 + $0x298] sm:$0xff]
    %v1855 = vld [vmem:[%s1 + $0x2a0] sm:$0xff]
    %v1856 = vld [vmem:[%s1 + $0x2a8] sm:$0xff]
    %v1857 = vld [vmem:[%s1 + $0x2b0] sm:$0xff]
    %v1858 = vld [vmem:[%s1 + $0x2b8] sm:$0xff]
    %v1859 = vld [vmem:[%s1 + $0x2c0] sm:$0xff]
    %v1860 = vld [vmem:[%s1 + $0x2c8] sm:$0xff]
    %v1861 = vld [vmem:[%s1 + $0x2d0] sm:$0xff]
    %v1862 = vld [vmem:[%s1 + $0x2d8] sm:$0xff]
    %v1863 = vld [vmem:[%s1 + $0x2e0] sm:$0xff]
    %v1864 = vld [vmem:[%s1 + $0x2e8] sm:$0xff]
    %v1865 = vld [vmem:[%s1 + $0x2f0] sm:$0xff]
    %v1866 = vld [vmem:[%s1 + $0x2f8] sm:$0xff]
    %v1867 = vld [vmem:[%s1 + $0x300] sm:$0xff]
    %v1868 = vld [vmem:[%s1 + $0x308] sm:$0xff]
    %v1869 = vld [vmem:[%s1 + $0x310] sm:$0xff]
    %v1870 = vld [vmem:[%s1 + $0x318] sm:$0xff]
    %v1871 = vld [vmem:[%s1 + $0x320] sm:$0xff]
    %v1872 = vld [vmem:[%s1 + $0x328] sm:$0xff]
    %v1873 = vld [vmem:[%s1 + $0x330] sm:$0xff]
    %v1874 = vld [vmem:[%s1 + $0x338] sm:$0xff]
    %v1875 = vld [vmem:[%s1 + $0x340] sm:$0xff]
    %v1876 = vld [vmem:[%s1 + $0x348] sm:$0xff]
    %v1877 = vld [vmem:[%s1 + $0x350] sm:$0xff]
    %v1878 = vld [vmem:[%s1 + $0x358] sm:$0xff]
    %v1879 = vld [vmem:[%s1 + $0x360] sm:$0xff]
    %v1880 = vld [vmem:[%s1 + $0x368] sm:$0xff]
    %v1881 = vld [vmem:[%s1 + $0x370] sm:$0xff]
    %v1882 = vld [vmem:[%s1 + $0x378] sm:$0xff]
    %v1883 = vld [vmem:[%s1 + $0x380] sm:$0xff]
    %v1884 = vld [vmem:[%s1 + $0x388] sm:$0xff]
    %v1885 = vld [vmem:[%s1 + $0x390] sm:$0xff]
    %v1886 = vld [vmem:[%s1 + $0x398] sm:$0xff]
    %v1887 = vld [vmem:[%s1 + $0x3a0] sm:$0xff]
    %v1888 = vld [vmem:[%s1 + $0x3a8] sm:$0xff]
    %v1889 = vld [vmem:[%s1 + $0x3b0] sm:$0xff]
    %v1890 = vld [vmem:[%s1 + $0x3b8] sm:$0xff]
    %v1891 = vld [vmem:[%s1 + $0x3c0] sm:$0xff]
    %v1892 = vld [vmem:[%s1 + $0x3c8] sm:$0xff]
    %v1893 = vld [vmem:[%s1 + $0x3d0] sm:$0xff]
    %v1894 = vld [vmem:[%s1 + $0x3d8] sm:$0xff]
    %v1895 = vld [vmem:[%s1 + $0x3e0] sm:$0xff]
    %v1896 = vld [vmem:[%s1 + $0x3e8] sm:$0xff]
    %v1897 = vld [vmem:[%s1 + $0x3f0] sm:$0xff]
    %v1898 = vld [vmem:[%s1 + $0x3f8] sm:$0xff]
    %v1899 = vld [vmem:[%s1 + $0x400] sm:$0xff]
    %v1900 = vld [vmem:[%s1 + $0x408] sm:$0xff]
    %v1901 = vld [vmem:[%s1 + $0x410] sm:$0xff]
    %v1902 = vld [vmem:[%s1 + $0x418] sm:$0xff]
    %v1903 = vld [vmem:[%s1 + $0x420] sm:$0xff]
    %v1904 = vld [vmem:[%s1 + $0x428] sm:$0xff]
    %v1905 = vld [vmem:[%s1 + $0x430] sm:$0xff]
    %v1906 = vld [vmem:[%s1 + $0x438] sm:$0xff]
    %v1907 = vld [vmem:[%s1 + $0x440] sm:$0xff]
    %v1908 = vld [vmem:[%s1 + $0x448] sm:$0xff]
    %v1909 = vld [vmem:[%s1 + $0x450] sm:$0xff]
    %v1910 = vld [vmem:[%s1 + $0x458] sm:$0xff]
    %v1911 = vld [vmem:[%s1 + $0x460] sm:$0xff]
    %v1912 = vld [vmem:[%s1 + $0x468] sm:$0xff]
    %v1913 = vld [vmem:[%s1 + $0x470] sm:$0xff]
    %v1914 = vld [vmem:[%s1 + $0x478] sm:$0xff]
    %1915 = vmatprep.subr.mxu0 0.0
    %1916 = vmatpush1.msra.mxu0 %v1786
    %1917 = vmatprep.subr.mxu0 0.0
    %1918 = vmatpush1.msra.mxu0 %v1785
    %1919 = vmatprep.subr.mxu0 0.0
    %1920 = vmatpush1.msra.mxu0 %v1784
    %1921 = vmatprep.subr.mxu0 0.0
    %1922 = vmatpush1.msra.mxu0 %v1783
    %1923 = vmatprep.subr.mxu0 0.0
    %1924 = vmatpush1.msra.mxu0 %v1782
    %1925 = vmatprep.subr.mxu0 0.0
    %1926 = vmatpush1.msra.mxu0 %v1781
    %1927 = vmatprep.subr.mxu0 0.0
    %1928 = vmatpush1.msra.mxu0 %v1780
    %1929 = vmatprep.subr.mxu0 0.0
    %1930 = vmatpush1.msra.mxu0 %v1779
    %1931 = vmatprep.subr.mxu0 0.0
    %1932 = vmatpush1.msra.mxu0 %v1778
    %1933 = vmatprep.subr.mxu0 0.0
    %1934 = vmatpush1.msra.mxu0 %v1777
    %1935 = vmatprep.subr.mxu0 0.0
    %1936 = vmatpush1.msra.mxu0 %v1776
    %1937 = vmatprep.subr.mxu0 0.0
    %1938 = vmatpush1.msra.mxu0 %v1775
    %1939 = vmatprep.subr.mxu0 0.0
    %1940 = vmatpush1.msra.mxu0 %v1774
    %1941 = vmatprep.subr.mxu0 0.0
    %1942 = vmatpush1.msra.mxu0 %v1773
    %1943 = vmatprep.subr.mxu0 0.0
    %1944 = vmatpush1.msra.mxu0 %v1772
    %1945 = vmatprep.subr.mxu0 0.0
    %1946 = vmatpush1.msra.mxu0 %v1771
    %1947 = vmatprep.subr.mxu0 0.0
    %1948 = vmatpush2.msra.mxu0 %v1802
    %1949 = vmatprep.subr.mxu0 0.0
    %1950 = vmatpush2.msra.mxu0 %v1801
    %1951 = vmatprep.subr.mxu0 0.0
    %1952 = vmatpush2.msra.mxu0 %v1800
    %1953 = vmatprep.subr.mxu0 0.0
    %1954 = vmatpush2.msra.mxu0 %v1799
    %1955 = vmatprep.subr.mxu0 0.0
    %1956 = vmatpush2.msra.mxu0 %v1798
    %1957 = vmatprep.subr.mxu0 0.0
    %1958 = vmatpush2.msra.mxu0 %v1797
    %1959 = vmatprep.subr.mxu0 0.0
    %1960 = vmatpush2.msra.mxu0 %v1796
    %1961 = vmatprep.subr.mxu0 0.0
    %1962 = vmatpush2.msra.mxu0 %v1795
    %1963 = vmatprep.subr.mxu0 0.0
    %1964 = vmatpush2.msra.mxu0 %v1794
    %1965 = vmatprep.subr.mxu0 0.0
    %1966 = vmatpush2.msra.mxu0 %v1793
    %1967 = vmatprep.subr.mxu0 0.0
    %1968 = vmatpush2.msra.mxu0 %v1792
    %1969 = vmatprep.subr.mxu0 0.0
    %1970 = vmatpush2.msra.mxu0 %v1791
    %1971 = vmatprep.subr.mxu0 0.0
    %1972 = vmatpush2.msra.mxu0 %v1790
    %1973 = vmatprep.subr.mxu0 0.0
    %1974 = vmatpush2.msra.mxu0 %v1789
    %1975 = vmatprep.subr.mxu0 0.0
    %1976 = vmatpush2.msra.mxu0 %v1788
    %1977 = vmatprep.subr.mxu0 0.0
    %1978 = vmatpush2.msra.mxu0 %v1787
    %1979 = vmatprep.mubr.f32.mxu0 %v1196
    %1980 = vmatmul.mubr.f32.gmra.mxu0 %v1195
    %v1981 = vpop.f32.mrf.mxu0
    %v1982 = vadd.f32 0.0, %v1981
    %v1983 = vpop.f32.mrf.mxu0
    %1984 = vmatprep.mubr.f32.mxu0 %v1205
    %1985 = vmatmul.mubr.f32.gmra.mxu0 %v1204
    %v1986 = vpop.f32.mrf.mxu0
    %v1987 = vadd.f32 0.0, %v1986
    %v1988 = vpop.f32.mrf.mxu0
    %1989 = vmatprep.mubr.f32.mxu0 %v1214
    %1990 = vmatmul.mubr.f32.gmra.mxu0 %v1213
    %v1991 = vpop.f32.mrf.mxu0
    %v1992 = vadd.f32 0.0, %v1991
    %v1993 = vpop.f32.mrf.mxu0
    %1994 = vmatprep.mubr.f32.mxu0 %v1223
    %1995 = vmatmul.mubr.f32.gmra.mxu0 %v1222
    %v1996 = vpop.f32.mrf.mxu0
    %v1997 = vadd.f32 0.0, %v1996
    %v1998 = vpop.f32.mrf.mxu0
    %1999 = vmatprep.mubr.f32.mxu0 %v1232
    %2000 = vmatmul.mubr.f32.gmra.mxu0 %v1231
    %v2001 = vpop.f32.mrf.mxu0
    %v2002 = vadd.f32 0.0, %v2001
    %v2003 = vpop.f32.mrf.mxu0
    %2004 = vmatprep.mubr.f32.mxu0 %v1241
    %2005 = vmatmul.mubr.f32.gmra.mxu0 %v1240
    %v2006 = vpop.f32.mrf.mxu0
    %v2007 = vadd.f32 0.0, %v2006
    %v2008 = vpop.f32.mrf.mxu0
    %2009 = vmatprep.mubr.f32.mxu0 %v1250
    %2010 = vmatmul.mubr.f32.gmra.mxu0 %v1249
    %v2011 = vpop.f32.mrf.mxu0
    %v2012 = vadd.f32 0.0, %v2011
    %v2013 = vpop.f32.mrf.mxu0
    %2014 = vmatprep.mubr.f32.mxu0 %v1259
    %2015 = vmatmul.mubr.f32.gmra.mxu0 %v1258
    %v2016 = vpop.f32.mrf.mxu0
    %v2017 = vadd.f32 0.0, %v2016
    %v2018 = vpop.f32.mrf.mxu0
    %2019 = vmatprep.mubr.f32.mxu0 %v1268
    %2020 = vmatmul.mubr.f32.gmra.mxu0 %v1267
    %v2021 = vpop.f32.mrf.mxu0
    %v2022 = vadd.f32 0.0, %v2021
    %v2023 = vpop.f32.mrf.mxu0
    %2024 = vmatprep.mubr.f32.mxu0 %v1277
    %2025 = vmatmul.mubr.f32.gmra.mxu0 %v1276
    %v2026 = vpop.f32.mrf.mxu0
    %v2027 = vadd.f32 0.0, %v2026
    %v2028 = vpop.f32.mrf.mxu0
    %2029 = vmatprep.mubr.f32.mxu0 %v1286
    %2030 = vmatmul.mubr.f32.gmra.mxu0 %v1285
    %v2031 = vpop.f32.mrf.mxu0
    %v2032 = vadd.f32 0.0, %v2031
    %v2033 = vpop.f32.mrf.mxu0
    %2034 = vmatprep.mubr.f32.mxu0 %v1295
    %2035 = vmatmul.mubr.f32.gmra.mxu0 %v1294
    %v2036 = vpop.f32.mrf.mxu0
    %v2037 = vadd.f32 0.0, %v2036
    %v2038 = vpop.f32.mrf.mxu0
    %2039 = vmatprep.mubr.f32.mxu0 %v1304
    %2040 = vmatmul.mubr.f32.gmra.mxu0 %v1303
    %v2041 = vpop.f32.mrf.mxu0
    %v2042 = vadd.f32 0.0, %v2041
    %v2043 = vpop.f32.mrf.mxu0
    %2044 = vmatprep.mubr.f32.mxu0 %v1313
    %2045 = vmatmul.mubr.f32.gmra.mxu0 %v1312
    %v2046 = vpop.f32.mrf.mxu0
    %v2047 = vadd.f32 0.0, %v2046
    %v2048 = vpop.f32.mrf.mxu0
    %2049 = vmatprep.mubr.f32.mxu0 %v1322
    %2050 = vmatmul.mubr.f32.gmra.mxu0 %v1321
    %v2051 = vpop.f32.mrf.mxu0
    %v2052 = vadd.f32 0.0, %v2051
    %v2053 = vpop.f32.mrf.mxu0
    %2054 = vmatprep.mubr.f32.mxu0 %v1331
    %2055 = vmatmul.mubr.f32.gmra.mxu0 %v1330
    %v2056 = vpop.f32.mrf.mxu0
    %v2057 = vadd.f32 0.0, %v2056
    %v2058 = vpop.f32.mrf.mxu0
    %2059 = vmatprep.mubr.f32.mxu0 %v1340
    %2060 = vmatmul.mubr.f32.gmra.mxu0 %v1339
    %v2061 = vpop.f32.mrf.mxu0
    %v2062 = vadd.f32 0.0, %v2061
    %v2063 = vpop.f32.mrf.mxu0
    %2064 = vmatprep.mubr.f32.mxu0 %v1349
    %2065 = vmatmul.mubr.f32.gmra.mxu0 %v1348
    %v2066 = vpop.f32.mrf.mxu0
    %v2067 = vadd.f32 0.0, %v2066
    %v2068 = vpop.f32.mrf.mxu0
    %2069 = vmatprep.mubr.f32.mxu0 %v1358
    %2070 = vmatmul.mubr.f32.gmra.mxu0 %v1357
    %v2071 = vpop.f32.mrf.mxu0
    %v2072 = vadd.f32 0.0, %v2071
    %v2073 = vpop.f32.mrf.mxu0
    %2074 = vmatprep.mubr.f32.mxu0 %v1367
    %2075 = vmatmul.mubr.f32.gmra.mxu0 %v1366
    %v2076 = vpop.f32.mrf.mxu0
    %v2077 = vadd.f32 0.0, %v2076
    %v2078 = vpop.f32.mrf.mxu0
    %2079 = vmatprep.mubr.f32.mxu0 %v1376
    %2080 = vmatmul.mubr.f32.gmra.mxu0 %v1375
    %v2081 = vpop.f32.mrf.mxu0
    %v2082 = vadd.f32 0.0, %v2081
    %v2083 = vpop.f32.mrf.mxu0
    %2084 = vmatprep.mubr.f32.mxu0 %v1385
    %2085 = vmatmul.mubr.f32.gmra.mxu0 %v1384
    %v2086 = vpop.f32.mrf.mxu0
    %v2087 = vadd.f32 0.0, %v2086
    %v2088 = vpop.f32.mrf.mxu0
    %2089 = vmatprep.mubr.f32.mxu0 %v1394
    %2090 = vmatmul.mubr.f32.gmra.mxu0 %v1393
    %v2091 = vpop.f32.mrf.mxu0
    %v2092 = vadd.f32 0.0, %v2091
    %v2093 = vpop.f32.mrf.mxu0
    %2094 = vmatprep.mubr.f32.mxu0 %v1403
    %2095 = vmatmul.mubr.f32.gmra.mxu0 %v1402
    %v2096 = vpop.f32.mrf.mxu0
    %v2097 = vadd.f32 0.0, %v2096
    %v2098 = vpop.f32.mrf.mxu0
    %2099 = vmatprep.mubr.f32.mxu0 %v1412
    %2100 = vmatmul.mubr.f32.gmra.mxu0 %v1411
    %v2101 = vpop.f32.mrf.mxu0
    %v2102 = vadd.f32 0.0, %v2101
    %v2103 = vpop.f32.mrf.mxu0
    %2104 = vmatprep.mubr.f32.mxu0 %v1421
    %2105 = vmatmul.mubr.f32.gmra.mxu0 %v1420
    %v2106 = vpop.f32.mrf.mxu0
    %v2107 = vadd.f32 0.0, %v2106
    %v2108 = vpop.f32.mrf.mxu0
    %2109 = vmatprep.mubr.f32.mxu0 %v1430
    %2110 = vmatmul.mubr.f32.gmra.mxu0 %v1429
    %v2111 = vpop.f32.mrf.mxu0
    %v2112 = vadd.f32 0.0, %v2111
    %v2113 = vpop.f32.mrf.mxu0
    %2114 = vmatprep.mubr.f32.mxu0 %v1439
    %2115 = vmatmul.mubr.f32.gmra.mxu0 %v1438
    %v2116 = vpop.f32.mrf.mxu0
    %v2117 = vadd.f32 0.0, %v2116
    %v2118 = vpop.f32.mrf.mxu0
    %2119 = vmatprep.mubr.f32.mxu0 %v1448
    %2120 = vmatmul.mubr.f32.gmra.mxu0 %v1447
    %v2121 = vpop.f32.mrf.mxu0
    %v2122 = vadd.f32 0.0, %v2121
    %v2123 = vpop.f32.mrf.mxu0
    %2124 = vmatprep.mubr.f32.mxu0 %v1457
    %2125 = vmatmul.mubr.f32.gmra.mxu0 %v1456
    %v2126 = vpop.f32.mrf.mxu0
    %v2127 = vadd.f32 0.0, %v2126
    %v2128 = vpop.f32.mrf.mxu0
    %2129 = vmatprep.mubr.f32.mxu0 %v1466
    %2130 = vmatmul.mubr.f32.gmra.mxu0 %v1465
    %v2131 = vpop.f32.mrf.mxu0
    %v2132 = vadd.f32 0.0, %v2131
    %v2133 = vpop.f32.mrf.mxu0
    %2134 = vmatprep.mubr.f32.mxu0 %v1475
    %2135 = vmatmul.mubr.f32.gmra.mxu0 %v1474
    %v2136 = vpop.f32.mrf.mxu0
    %v2137 = vadd.f32 0.0, %v2136
    %v2138 = vpop.f32.mrf.mxu0
    %2139 = vmatprep.mubr.f32.mxu0 %v1484
    %2140 = vmatmul.mubr.f32.gmra.mxu0 %v1483
    %v2141 = vpop.f32.mrf.mxu0
    %v2142 = vadd.f32 0.0, %v2141
    %v2143 = vpop.f32.mrf.mxu0
    %2144 = vmatprep.mubr.f32.mxu0 %v1493
    %2145 = vmatmul.mubr.f32.gmra.mxu0 %v1492
    %v2146 = vpop.f32.mrf.mxu0
    %v2147 = vadd.f32 0.0, %v2146
    %v2148 = vpop.f32.mrf.mxu0
    %2149 = vmatprep.mubr.f32.mxu0 %v1502
    %2150 = vmatmul.mubr.f32.gmra.mxu0 %v1501
    %v2151 = vpop.f32.mrf.mxu0
    %v2152 = vadd.f32 0.0, %v2151
    %v2153 = vpop.f32.mrf.mxu0
    %2154 = vmatprep.mubr.f32.mxu0 %v1511
    %2155 = vmatmul.mubr.f32.gmra.mxu0 %v1510
    %v2156 = vpop.f32.mrf.mxu0
    %v2157 = vadd.f32 0.0, %v2156
    %v2158 = vpop.f32.mrf.mxu0
    %2159 = vmatprep.mubr.f32.mxu0 %v1520
    %2160 = vmatmul.mubr.f32.gmra.mxu0 %v1519
    %v2161 = vpop.f32.mrf.mxu0
    %v2162 = vadd.f32 0.0, %v2161
    %v2163 = vpop.f32.mrf.mxu0
    %2164 = vmatprep.mubr.f32.mxu0 %v1529
    %2165 = vmatmul.mubr.f32.gmra.mxu0 %v1528
    %v2166 = vpop.f32.mrf.mxu0
    %v2167 = vadd.f32 0.0, %v2166
    %v2168 = vpop.f32.mrf.mxu0
    %2169 = vmatprep.mubr.f32.mxu0 %v1538
    %2170 = vmatmul.mubr.f32.gmra.mxu0 %v1537
    %v2171 = vpop.f32.mrf.mxu0
    %v2172 = vadd.f32 0.0, %v2171
    %v2173 = vpop.f32.mrf.mxu0
    %2174 = vmatprep.mubr.f32.mxu0 %v1547
    %2175 = vmatmul.mubr.f32.gmra.mxu0 %v1546
    %v2176 = vpop.f32.mrf.mxu0
    %v2177 = vadd.f32 0.0, %v2176
    %v2178 = vpop.f32.mrf.mxu0
    %2179 = vmatprep.mubr.f32.mxu0 %v1556
    %2180 = vmatmul.mubr.f32.gmra.mxu0 %v1555
    %v2181 = vpop.f32.mrf.mxu0
    %v2182 = vadd.f32 0.0, %v2181
    %v2183 = vpop.f32.mrf.mxu0
    %2184 = vmatprep.mubr.f32.mxu0 %v1565
    %2185 = vmatmul.mubr.f32.gmra.mxu0 %v1564
    %v2186 = vpop.f32.mrf.mxu0
    %v2187 = vadd.f32 0.0, %v2186
    %v2188 = vpop.f32.mrf.mxu0
    %2189 = vmatprep.mubr.f32.mxu0 %v1574
    %2190 = vmatmul.mubr.f32.gmra.mxu0 %v1573
    %v2191 = vpop.f32.mrf.mxu0
    %v2192 = vadd.f32 0.0, %v2191
    %v2193 = vpop.f32.mrf.mxu0
    %2194 = vmatprep.mubr.f32.mxu0 %v1583
    %2195 = vmatmul.mubr.f32.gmra.mxu0 %v1582
    %v2196 = vpop.f32.mrf.mxu0
    %v2197 = vadd.f32 0.0, %v2196
    %v2198 = vpop.f32.mrf.mxu0
    %2199 = vmatprep.mubr.f32.mxu0 %v1592
    %2200 = vmatmul.mubr.f32.gmra.mxu0 %v1591
    %v2201 = vpop.f32.mrf.mxu0
    %v2202 = vadd.f32 0.0, %v2201
    %v2203 = vpop.f32.mrf.mxu0
    %2204 = vmatprep.mubr.f32.mxu0 %v1601
    %2205 = vmatmul.mubr.f32.gmra.mxu0 %v1600
    %v2206 = vpop.f32.mrf.mxu0
    %v2207 = vadd.f32 0.0, %v2206
    %v2208 = vpop.f32.mrf.mxu0
    %2209 = vmatprep.mubr.f32.mxu0 %v1610
    %2210 = vmatmul.mubr.f32.gmra.mxu0 %v1609
    %v2211 = vpop.f32.mrf.mxu0
    %v2212 = vadd.f32 0.0, %v2211
    %v2213 = vpop.f32.mrf.mxu0
    %2214 = vmatprep.mubr.f32.mxu0 %v1619
    %2215 = vmatmul.mubr.f32.gmra.mxu0 %v1618
    %v2216 = vpop.f32.mrf.mxu0
    %v2217 = vadd.f32 0.0, %v2216
    %v2218 = vpop.f32.mrf.mxu0
    %2219 = vmatprep.mubr.f32.mxu0 %v1628
    %2220 = vmatmul.mubr.f32.gmra.mxu0 %v1627
    %v2221 = vpop.f32.mrf.mxu0
    %v2222 = vadd.f32 0.0, %v2221
    %v2223 = vpop.f32.mrf.mxu0
    %2224 = vmatprep.mubr.f32.mxu0 %v1637
    %2225 = vmatmul.mubr.f32.gmra.mxu0 %v1636
    %v2226 = vpop.f32.mrf.mxu0
    %v2227 = vadd.f32 0.0, %v2226
    %v2228 = vpop.f32.mrf.mxu0
    %2229 = vmatprep.mubr.f32.mxu0 %v1646
    %2230 = vmatmul.mubr.f32.gmra.mxu0 %v1645
    %v2231 = vpop.f32.mrf.mxu0
    %v2232 = vadd.f32 0.0, %v2231
    %v2233 = vpop.f32.mrf.mxu0
    %2234 = vmatprep.mubr.f32.mxu0 %v1655
    %2235 = vmatmul.mubr.f32.gmra.mxu0 %v1654
    %v2236 = vpop.f32.mrf.mxu0
    %v2237 = vadd.f32 0.0, %v2236
    %v2238 = vpop.f32.mrf.mxu0
    %2239 = vmatprep.mubr.f32.mxu0 %v1664
    %2240 = vmatmul.mubr.f32.gmra.mxu0 %v1663
    %v2241 = vpop.f32.mrf.mxu0
    %v2242 = vadd.f32 0.0, %v2241
    %v2243 = vpop.f32.mrf.mxu0
    %2244 = vmatprep.mubr.f32.mxu0 %v1673
    %2245 = vmatmul.mubr.f32.gmra.mxu0 %v1672
    %v2246 = vpop.f32.mrf.mxu0
    %v2247 = vadd.f32 0.0, %v2246
    %v2248 = vpop.f32.mrf.mxu0
    %2249 = vmatprep.mubr.f32.mxu0 %v1682
    %2250 = vmatmul.mubr.f32.gmra.mxu0 %v1681
    %v2251 = vpop.f32.mrf.mxu0
    %v2252 = vadd.f32 0.0, %v2251
    %v2253 = vpop.f32.mrf.mxu0
    %2254 = vmatprep.mubr.f32.mxu0 %v1691
    %2255 = vmatmul.mubr.f32.gmra.mxu0 %v1690
    %v2256 = vpop.f32.mrf.mxu0
    %v2257 = vadd.f32 0.0, %v2256
    %v2258 = vpop.f32.mrf.mxu0
    %2259 = vmatprep.mubr.f32.mxu0 %v1700
    %2260 = vmatmul.mubr.f32.gmra.mxu0 %v1699
    %v2261 = vpop.f32.mrf.mxu0
    %v2262 = vadd.f32 0.0, %v2261
    %v2263 = vpop.f32.mrf.mxu0
    %2264 = vmatprep.mubr.f32.mxu0 %v1709
    %2265 = vmatmul.mubr.f32.gmra.mxu0 %v1708
    %v2266 = vpop.f32.mrf.mxu0
    %v2267 = vadd.f32 0.0, %v2266
    %v2268 = vpop.f32.mrf.mxu0
    %2269 = vmatprep.mubr.f32.mxu0 %v1718
    %2270 = vmatmul.mubr.f32.gmra.mxu0 %v1717
    %v2271 = vpop.f32.mrf.mxu0
    %v2272 = vadd.f32 0.0, %v2271
    %v2273 = vpop.f32.mrf.mxu0
    %2274 = vmatprep.mubr.f32.mxu0 %v1727
    %2275 = vmatmul.mubr.f32.gmra.mxu0 %v1726
    %v2276 = vpop.f32.mrf.mxu0
    %v2277 = vadd.f32 0.0, %v2276
    %v2278 = vpop.f32.mrf.mxu0
    %2279 = vmatprep.mubr.f32.mxu0 %v1736
    %2280 = vmatmul.mubr.f32.gmra.mxu0 %v1735
    %v2281 = vpop.f32.mrf.mxu0
    %v2282 = vadd.f32 0.0, %v2281
    %v2283 = vpop.f32.mrf.mxu0
    %2284 = vmatprep.mubr.f32.mxu0 %v1745
    %2285 = vmatmul.mubr.f32.gmra.mxu0 %v1744
    %v2286 = vpop.f32.mrf.mxu0
    %v2287 = vadd.f32 0.0, %v2286
    %v2288 = vpop.f32.mrf.mxu0
    %2289 = vmatprep.mubr.f32.mxu0 %v1754
    %2290 = vmatmul.mubr.f32.gmra.mxu0 %v1753
    %v2291 = vpop.f32.mrf.mxu0
    %v2292 = vadd.f32 0.0, %v2291
    %v2293 = vpop.f32.mrf.mxu0
    %2294 = vmatprep.mubr.f32.mxu0 %v1763
    %2295 = vmatmul.mubr.f32.gmra.mxu0 %v1762
    %v2296 = vpop.f32.mrf.mxu0
    %v2297 = vadd.f32 0.0, %v2296
    %v2298 = vpop.f32.mrf.mxu0
    %2299 = vdwg.mxu0
    %2300 = vmatprep.subr.mxu0 0.0
    %2301 = vmatpush1.msra.mxu0 %v1818
    %2302 = vmatprep.subr.mxu0 0.0
    %2303 = vmatpush1.msra.mxu0 %v1817
    %2304 = vmatprep.subr.mxu0 0.0
    %2305 = vmatpush1.msra.mxu0 %v1816
    %2306 = vmatprep.subr.mxu0 0.0
    %2307 = vmatpush1.msra.mxu0 %v1815
    %2308 = vmatprep.subr.mxu0 0.0
    %2309 = vmatpush1.msra.mxu0 %v1814
    %2310 = vmatprep.subr.mxu0 0.0
    %2311 = vmatpush1.msra.mxu0 %v1813
    %2312 = vmatprep.subr.mxu0 0.0
    %2313 = vmatpush1.msra.mxu0 %v1812
    %2314 = vmatprep.subr.mxu0 0.0
    %2315 = vmatpush1.msra.mxu0 %v1811
    %2316 = vmatprep.subr.mxu0 0.0
    %2317 = vmatpush1.msra.mxu0 %v1810
    %2318 = vmatprep.subr.mxu0 0.0
    %2319 = vmatpush1.msra.mxu0 %v1809
    %2320 = vmatprep.subr.mxu0 0.0
    %2321 = vmatpush1.msra.mxu0 %v1808
    %2322 = vmatprep.subr.mxu0 0.0
    %2323 = vmatpush1.msra.mxu0 %v1807
    %2324 = vmatprep.subr.mxu0 0.0
    %2325 = vmatpush1.msra.mxu0 %v1806
    %2326 = vmatprep.subr.mxu0 0.0
    %2327 = vmatpush1.msra.mxu0 %v1805
    %2328 = vmatprep.subr.mxu0 0.0
    %2329 = vmatpush1.msra.mxu0 %v1804
    %2330 = vmatprep.subr.mxu0 0.0
    %2331 = vmatpush1.msra.mxu0 %v1803
    %2332 = vmatprep.subr.mxu0 0.0
    %2333 = vmatpush2.msra.mxu0 %v1834
    %2334 = vmatprep.subr.mxu0 0.0
    %2335 = vmatpush2.msra.mxu0 %v1833
    %2336 = vmatprep.subr.mxu0 0.0
    %2337 = vmatpush2.msra.mxu0 %v1832
    %2338 = vmatprep.subr.mxu0 0.0
    %2339 = vmatpush2.msra.mxu0 %v1831
    %2340 = vmatprep.subr.mxu0 0.0
    %2341 = vmatpush2.msra.mxu0 %v1830
    %2342 = vmatprep.subr.mxu0 0.0
    %2343 = vmatpush2.msra.mxu0 %v1829
    %2344 = vmatprep.subr.mxu0 0.0
    %2345 = vmatpush2.msra.mxu0 %v1828
    %2346 = vmatprep.subr.mxu0 0.0
    %2347 = vmatpush2.msra.mxu0 %v1827
    %2348 = vmatprep.subr.mxu0 0.0
    %2349 = vmatpush2.msra.mxu0 %v1826
    %2350 = vmatprep.subr.mxu0 0.0
    %2351 = vmatpush2.msra.mxu0 %v1825
    %2352 = vmatprep.subr.mxu0 0.0
    %2353 = vmatpush2.msra.mxu0 %v1824
    %2354 = vmatprep.subr.mxu0 0.0
    %2355 = vmatpush2.msra.mxu0 %v1823
    %2356 = vmatprep.subr.mxu0 0.0
    %2357 = vmatpush2.msra.mxu0 %v1822
    %2358 = vmatprep.subr.mxu0 0.0
    %2359 = vmatpush2.msra.mxu0 %v1821
    %2360 = vmatprep.subr.mxu0 0.0
    %2361 = vmatpush2.msra.mxu0 %v1820
    %2362 = vmatprep.subr.mxu0 0.0
    %2363 = vmatpush2.msra.mxu0 %v1819
    %2364 = vmatprep.mubr.f32.mxu0 %v1198
    %2365 = vmatmul.mubr.f32.gmra.mxu0 %v1197
    %v2366 = vpop.f32.mrf.mxu0
    %v2367 = vadd.f32 %v1982, %v2366
    %v2368 = vpop.f32.mrf.mxu0
    %2369 = vmatprep.mubr.f32.mxu0 %v1207
    %2370 = vmatmul.mubr.f32.gmra.mxu0 %v1206
    %v2371 = vpop.f32.mrf.mxu0
    %v2372 = vadd.f32 %v1987, %v2371
    %v2373 = vpop.f32.mrf.mxu0
    %2374 = vmatprep.mubr.f32.mxu0 %v1216
    %2375 = vmatmul.mubr.f32.gmra.mxu0 %v1215
    %v2376 = vpop.f32.mrf.mxu0
    %v2377 = vadd.f32 %v1992, %v2376
    %v2378 = vpop.f32.mrf.mxu0
    %2379 = vmatprep.mubr.f32.mxu0 %v1225
    %2380 = vmatmul.mubr.f32.gmra.mxu0 %v1224
    %v2381 = vpop.f32.mrf.mxu0
    %v2382 = vadd.f32 %v1997, %v2381
    %v2383 = vpop.f32.mrf.mxu0
    %2384 = vmatprep.mubr.f32.mxu0 %v1234
    %2385 = vmatmul.mubr.f32.gmra.mxu0 %v1233
    %v2386 = vpop.f32.mrf.mxu0
    %v2387 = vadd.f32 %v2002, %v2386
    %v2388 = vpop.f32.mrf.mxu0
    %2389 = vmatprep.mubr.f32.mxu0 %v1243
    %2390 = vmatmul.mubr.f32.gmra.mxu0 %v1242
    %v2391 = vpop.f32.mrf.mxu0
    %v2392 = vadd.f32 %v2007, %v2391
    %v2393 = vpop.f32.mrf.mxu0
    %2394 = vmatprep.mubr.f32.mxu0 %v1252
    %2395 = vmatmul.mubr.f32.gmra.mxu0 %v1251
    %v2396 = vpop.f32.mrf.mxu0
    %v2397 = vadd.f32 %v2012, %v2396
    %v2398 = vpop.f32.mrf.mxu0
    %2399 = vmatprep.mubr.f32.mxu0 %v1261
    %2400 = vmatmul.mubr.f32.gmra.mxu0 %v1260
    %v2401 = vpop.f32.mrf.mxu0
    %v2402 = vadd.f32 %v2017, %v2401
    %v2403 = vpop.f32.mrf.mxu0
    %2404 = vmatprep.mubr.f32.mxu0 %v1270
    %2405 = vmatmul.mubr.f32.gmra.mxu0 %v1269
    %v2406 = vpop.f32.mrf.mxu0
    %v2407 = vadd.f32 %v2022, %v2406
    %v2408 = vpop.f32.mrf.mxu0
    %2409 = vmatprep.mubr.f32.mxu0 %v1279
    %2410 = vmatmul.mubr.f32.gmra.mxu0 %v1278
    %v2411 = vpop.f32.mrf.mxu0
    %v2412 = vadd.f32 %v2027, %v2411
    %v2413 = vpop.f32.mrf.mxu0
    %2414 = vmatprep.mubr.f32.mxu0 %v1288
    %2415 = vmatmul.mubr.f32.gmra.mxu0 %v1287
    %v2416 = vpop.f32.mrf.mxu0
    %v2417 = vadd.f32 %v2032, %v2416
    %v2418 = vpop.f32.mrf.mxu0
    %2419 = vmatprep.mubr.f32.mxu0 %v1297
    %2420 = vmatmul.mubr.f32.gmra.mxu0 %v1296
    %v2421 = vpop.f32.mrf.mxu0
    %v2422 = vadd.f32 %v2037, %v2421
    %v2423 = vpop.f32.mrf.mxu0
    %2424 = vmatprep.mubr.f32.mxu0 %v1306
    %2425 = vmatmul.mubr.f32.gmra.mxu0 %v1305
    %v2426 = vpop.f32.mrf.mxu0
    %v2427 = vadd.f32 %v2042, %v2426
    %v2428 = vpop.f32.mrf.mxu0
    %2429 = vmatprep.mubr.f32.mxu0 %v1315
    %2430 = vmatmul.mubr.f32.gmra.mxu0 %v1314
    %v2431 = vpop.f32.mrf.mxu0
    %v2432 = vadd.f32 %v2047, %v2431
    %v2433 = vpop.f32.mrf.mxu0
    %2434 = vmatprep.mubr.f32.mxu0 %v1324
    %2435 = vmatmul.mubr.f32.gmra.mxu0 %v1323
    %v2436 = vpop.f32.mrf.mxu0
    %v2437 = vadd.f32 %v2052, %v2436
    %v2438 = vpop.f32.mrf.mxu0
    %2439 = vmatprep.mubr.f32.mxu0 %v1333
    %2440 = vmatmul.mubr.f32.gmra.mxu0 %v1332
    %v2441 = vpop.f32.mrf.mxu0
    %v2442 = vadd.f32 %v2057, %v2441
    %v2443 = vpop.f32.mrf.mxu0
    %2444 = vmatprep.mubr.f32.mxu0 %v1342
    %2445 = vmatmul.mubr.f32.gmra.mxu0 %v1341
    %v2446 = vpop.f32.mrf.mxu0
    %v2447 = vadd.f32 %v2062, %v2446
    %v2448 = vpop.f32.mrf.mxu0
    %2449 = vmatprep.mubr.f32.mxu0 %v1351
    %2450 = vmatmul.mubr.f32.gmra.mxu0 %v1350
    %v2451 = vpop.f32.mrf.mxu0
    %v2452 = vadd.f32 %v2067, %v2451
    %v2453 = vpop.f32.mrf.mxu0
    %2454 = vmatprep.mubr.f32.mxu0 %v1360
    %2455 = vmatmul.mubr.f32.gmra.mxu0 %v1359
    %v2456 = vpop.f32.mrf.mxu0
    %v2457 = vadd.f32 %v2072, %v2456
    %v2458 = vpop.f32.mrf.mxu0
    %2459 = vmatprep.mubr.f32.mxu0 %v1369
    %2460 = vmatmul.mubr.f32.gmra.mxu0 %v1368
    %v2461 = vpop.f32.mrf.mxu0
    %v2462 = vadd.f32 %v2077, %v2461
    %v2463 = vpop.f32.mrf.mxu0
    %2464 = vmatprep.mubr.f32.mxu0 %v1378
    %2465 = vmatmul.mubr.f32.gmra.mxu0 %v1377
    %v2466 = vpop.f32.mrf.mxu0
    %v2467 = vadd.f32 %v2082, %v2466
    %v2468 = vpop.f32.mrf.mxu0
    %2469 = vmatprep.mubr.f32.mxu0 %v1387
    %2470 = vmatmul.mubr.f32.gmra.mxu0 %v1386
    %v2471 = vpop.f32.mrf.mxu0
    %v2472 = vadd.f32 %v2087, %v2471
    %v2473 = vpop.f32.mrf.mxu0
    %2474 = vmatprep.mubr.f32.mxu0 %v1396
    %2475 = vmatmul.mubr.f32.gmra.mxu0 %v1395
    %v2476 = vpop.f32.mrf.mxu0
    %v2477 = vadd.f32 %v2092, %v2476
    %v2478 = vpop.f32.mrf.mxu0
    %2479 = vmatprep.mubr.f32.mxu0 %v1405
    %2480 = vmatmul.mubr.f32.gmra.mxu0 %v1404
    %v2481 = vpop.f32.mrf.mxu0
    %v2482 = vadd.f32 %v2097, %v2481
    %v2483 = vpop.f32.mrf.mxu0
    %2484 = vmatprep.mubr.f32.mxu0 %v1414
    %2485 = vmatmul.mubr.f32.gmra.mxu0 %v1413
    %v2486 = vpop.f32.mrf.mxu0
    %v2487 = vadd.f32 %v2102, %v2486
    %v2488 = vpop.f32.mrf.mxu0
    %2489 = vmatprep.mubr.f32.mxu0 %v1423
    %2490 = vmatmul.mubr.f32.gmra.mxu0 %v1422
    %v2491 = vpop.f32.mrf.mxu0
    %v2492 = vadd.f32 %v2107, %v2491
    %v2493 = vpop.f32.mrf.mxu0
    %2494 = vmatprep.mubr.f32.mxu0 %v1432
    %2495 = vmatmul.mubr.f32.gmra.mxu0 %v1431
    %v2496 = vpop.f32.mrf.mxu0
    %v2497 = vadd.f32 %v2112, %v2496
    %v2498 = vpop.f32.mrf.mxu0
    %2499 = vmatprep.mubr.f32.mxu0 %v1441
    %2500 = vmatmul.mubr.f32.gmra.mxu0 %v1440
    %v2501 = vpop.f32.mrf.mxu0
    %v2502 = vadd.f32 %v2117, %v2501
    %v2503 = vpop.f32.mrf.mxu0
    %2504 = vmatprep.mubr.f32.mxu0 %v1450
    %2505 = vmatmul.mubr.f32.gmra.mxu0 %v1449
    %v2506 = vpop.f32.mrf.mxu0
    %v2507 = vadd.f32 %v2122, %v2506
    %v2508 = vpop.f32.mrf.mxu0
    %2509 = vmatprep.mubr.f32.mxu0 %v1459
    %2510 = vmatmul.mubr.f32.gmra.mxu0 %v1458
    %v2511 = vpop.f32.mrf.mxu0
    %v2512 = vadd.f32 %v2127, %v2511
    %v2513 = vpop.f32.mrf.mxu0
    %2514 = vmatprep.mubr.f32.mxu0 %v1468
    %2515 = vmatmul.mubr.f32.gmra.mxu0 %v1467
    %v2516 = vpop.f32.mrf.mxu0
    %v2517 = vadd.f32 %v2132, %v2516
    %v2518 = vpop.f32.mrf.mxu0
    %2519 = vmatprep.mubr.f32.mxu0 %v1477
    %2520 = vmatmul.mubr.f32.gmra.mxu0 %v1476
    %v2521 = vpop.f32.mrf.mxu0
    %v2522 = vadd.f32 %v2137, %v2521
    %v2523 = vpop.f32.mrf.mxu0
    %2524 = vmatprep.mubr.f32.mxu0 %v1486
    %2525 = vmatmul.mubr.f32.gmra.mxu0 %v1485
    %v2526 = vpop.f32.mrf.mxu0
    %v2527 = vadd.f32 %v2142, %v2526
    %v2528 = vpop.f32.mrf.mxu0
    %2529 = vmatprep.mubr.f32.mxu0 %v1495
    %2530 = vmatmul.mubr.f32.gmra.mxu0 %v1494
    %v2531 = vpop.f32.mrf.mxu0
    %v2532 = vadd.f32 %v2147, %v2531
    %v2533 = vpop.f32.mrf.mxu0
    %2534 = vmatprep.mubr.f32.mxu0 %v1504
    %2535 = vmatmul.mubr.f32.gmra.mxu0 %v1503
    %v2536 = vpop.f32.mrf.mxu0
    %v2537 = vadd.f32 %v2152, %v2536
    %v2538 = vpop.f32.mrf.mxu0
    %2539 = vmatprep.mubr.f32.mxu0 %v1513
    %2540 = vmatmul.mubr.f32.gmra.mxu0 %v1512
    %v2541 = vpop.f32.mrf.mxu0
    %v2542 = vadd.f32 %v2157, %v2541
    %v2543 = vpop.f32.mrf.mxu0
    %2544 = vmatprep.mubr.f32.mxu0 %v1522
    %2545 = vmatmul.mubr.f32.gmra.mxu0 %v1521
    %v2546 = vpop.f32.mrf.mxu0
    %v2547 = vadd.f32 %v2162, %v2546
    %v2548 = vpop.f32.mrf.mxu0
    %2549 = vmatprep.mubr.f32.mxu0 %v1531
    %2550 = vmatmul.mubr.f32.gmra.mxu0 %v1530
    %v2551 = vpop.f32.mrf.mxu0
    %v2552 = vadd.f32 %v2167, %v2551
    %v2553 = vpop.f32.mrf.mxu0
    %2554 = vmatprep.mubr.f32.mxu0 %v1540
    %2555 = vmatmul.mubr.f32.gmra.mxu0 %v1539
    %v2556 = vpop.f32.mrf.mxu0
    %v2557 = vadd.f32 %v2172, %v2556
    %v2558 = vpop.f32.mrf.mxu0
    %2559 = vmatprep.mubr.f32.mxu0 %v1549
    %2560 = vmatmul.mubr.f32.gmra.mxu0 %v1548
    %v2561 = vpop.f32.mrf.mxu0
    %v2562 = vadd.f32 %v2177, %v2561
    %v2563 = vpop.f32.mrf.mxu0
    %2564 = vmatprep.mubr.f32.mxu0 %v1558
    %2565 = vmatmul.mubr.f32.gmra.mxu0 %v1557
    %v2566 = vpop.f32.mrf.mxu0
    %v2567 = vadd.f32 %v2182, %v2566
    %v2568 = vpop.f32.mrf.mxu0
    %2569 = vmatprep.mubr.f32.mxu0 %v1567
    %2570 = vmatmul.mubr.f32.gmra.mxu0 %v1566
    %v2571 = vpop.f32.mrf.mxu0
    %v2572 = vadd.f32 %v2187, %v2571
    %v2573 = vpop.f32.mrf.mxu0
    %2574 = vmatprep.mubr.f32.mxu0 %v1576
    %2575 = vmatmul.mubr.f32.gmra.mxu0 %v1575
    %v2576 = vpop.f32.mrf.mxu0
    %v2577 = vadd.f32 %v2192, %v2576
    %v2578 = vpop.f32.mrf.mxu0
    %2579 = vmatprep.mubr.f32.mxu0 %v1585
    %2580 = vmatmul.mubr.f32.gmra.mxu0 %v1584
    %v2581 = vpop.f32.mrf.mxu0
    %v2582 = vadd.f32 %v2197, %v2581
    %v2583 = vpop.f32.mrf.mxu0
    %2584 = vmatprep.mubr.f32.mxu0 %v1594
    %2585 = vmatmul.mubr.f32.gmra.mxu0 %v1593
    %v2586 = vpop.f32.mrf.mxu0
    %v2587 = vadd.f32 %v2202, %v2586
    %v2588 = vpop.f32.mrf.mxu0
    %2589 = vmatprep.mubr.f32.mxu0 %v1603
    %2590 = vmatmul.mubr.f32.gmra.mxu0 %v1602
    %v2591 = vpop.f32.mrf.mxu0
    %v2592 = vadd.f32 %v2207, %v2591
    %v2593 = vpop.f32.mrf.mxu0
    %2594 = vmatprep.mubr.f32.mxu0 %v1612
    %2595 = vmatmul.mubr.f32.gmra.mxu0 %v1611
    %v2596 = vpop.f32.mrf.mxu0
    %v2597 = vadd.f32 %v2212, %v2596
    %v2598 = vpop.f32.mrf.mxu0
    %2599 = vmatprep.mubr.f32.mxu0 %v1621
    %2600 = vmatmul.mubr.f32.gmra.mxu0 %v1620
    %v2601 = vpop.f32.mrf.mxu0
    %v2602 = vadd.f32 %v2217, %v2601
    %v2603 = vpop.f32.mrf.mxu0
    %2604 = vmatprep.mubr.f32.mxu0 %v1630
    %2605 = vmatmul.mubr.f32.gmra.mxu0 %v1629
    %v2606 = vpop.f32.mrf.mxu0
    %v2607 = vadd.f32 %v2222, %v2606
    %v2608 = vpop.f32.mrf.mxu0
    %2609 = vmatprep.mubr.f32.mxu0 %v1639
    %2610 = vmatmul.mubr.f32.gmra.mxu0 %v1638
    %v2611 = vpop.f32.mrf.mxu0
    %v2612 = vadd.f32 %v2227, %v2611
    %v2613 = vpop.f32.mrf.mxu0
    %2614 = vmatprep.mubr.f32.mxu0 %v1648
    %2615 = vmatmul.mubr.f32.gmra.mxu0 %v1647
    %v2616 = vpop.f32.mrf.mxu0
    %v2617 = vadd.f32 %v2232, %v2616
    %v2618 = vpop.f32.mrf.mxu0
    %2619 = vmatprep.mubr.f32.mxu0 %v1657
    %2620 = vmatmul.mubr.f32.gmra.mxu0 %v1656
    %v2621 = vpop.f32.mrf.mxu0
    %v2622 = vadd.f32 %v2237, %v2621
    %v2623 = vpop.f32.mrf.mxu0
    %2624 = vmatprep.mubr.f32.mxu0 %v1666
    %2625 = vmatmul.mubr.f32.gmra.mxu0 %v1665
    %v2626 = vpop.f32.mrf.mxu0
    %v2627 = vadd.f32 %v2242, %v2626
    %v2628 = vpop.f32.mrf.mxu0
    %2629 = vmatprep.mubr.f32.mxu0 %v1675
    %2630 = vmatmul.mubr.f32.gmra.mxu0 %v1674
    %v2631 = vpop.f32.mrf.mxu0
    %v2632 = vadd.f32 %v2247, %v2631
    %v2633 = vpop.f32.mrf.mxu0
    %2634 = vmatprep.mubr.f32.mxu0 %v1684
    %2635 = vmatmul.mubr.f32.gmra.mxu0 %v1683
    %v2636 = vpop.f32.mrf.mxu0
    %v2637 = vadd.f32 %v2252, %v2636
    %v2638 = vpop.f32.mrf.mxu0
    %2639 = vmatprep.mubr.f32.mxu0 %v1693
    %2640 = vmatmul.mubr.f32.gmra.mxu0 %v1692
    %v2641 = vpop.f32.mrf.mxu0
    %v2642 = vadd.f32 %v2257, %v2641
    %v2643 = vpop.f32.mrf.mxu0
    %2644 = vmatprep.mubr.f32.mxu0 %v1702
    %2645 = vmatmul.mubr.f32.gmra.mxu0 %v1701
    %v2646 = vpop.f32.mrf.mxu0
    %v2647 = vadd.f32 %v2262, %v2646
    %v2648 = vpop.f32.mrf.mxu0
    %2649 = vmatprep.mubr.f32.mxu0 %v1711
    %2650 = vmatmul.mubr.f32.gmra.mxu0 %v1710
    %v2651 = vpop.f32.mrf.mxu0
    %v2652 = vadd.f32 %v2267, %v2651
    %v2653 = vpop.f32.mrf.mxu0
    %2654 = vmatprep.mubr.f32.mxu0 %v1720
    %2655 = vmatmul.mubr.f32.gmra.mxu0 %v1719
    %v2656 = vpop.f32.mrf.mxu0
    %v2657 = vadd.f32 %v2272, %v2656
    %v2658 = vpop.f32.mrf.mxu0
    %2659 = vmatprep.mubr.f32.mxu0 %v1729
    %2660 = vmatmul.mubr.f32.gmra.mxu0 %v1728
    %v2661 = vpop.f32.mrf.mxu0
    %v2662 = vadd.f32 %v2277, %v2661
    %v2663 = vpop.f32.mrf.mxu0
    %2664 = vmatprep.mubr.f32.mxu0 %v1738
    %2665 = vmatmul.mubr.f32.gmra.mxu0 %v1737
    %v2666 = vpop.f32.mrf.mxu0
    %v2667 = vadd.f32 %v2282, %v2666
    %v2668 = vpop.f32.mrf.mxu0
    %2669 = vmatprep.mubr.f32.mxu0 %v1747
    %2670 = vmatmul.mubr.f32.gmra.mxu0 %v1746
    %v2671 = vpop.f32.mrf.mxu0
    %v2672 = vadd.f32 %v2287, %v2671
    %v2673 = vpop.f32.mrf.mxu0
    %2674 = vmatprep.mubr.f32.mxu0 %v1756
    %2675 = vmatmul.mubr.f32.gmra.mxu0 %v1755
    %v2676 = vpop.f32.mrf.mxu0
    %v2677 = vadd.f32 %v2292, %v2676
    %v2678 = vpop.f32.mrf.mxu0
    %2679 = vmatprep.mubr.f32.mxu0 %v1765
    %2680 = vmatmul.mubr.f32.gmra.mxu0 %v1764
    %v2681 = vpop.f32.mrf.mxu0
    %v2682 = vadd.f32 %v2297, %v2681
    %v2683 = vpop.f32.mrf.mxu0
    %2684 = vdwg.mxu0
    %2685 = vmatprep.subr.mxu0 0.0
    %2686 = vmatpush1.msra.mxu0 %v1850
    %2687 = vmatprep.subr.mxu0 0.0
    %2688 = vmatpush1.msra.mxu0 %v1849
    %2689 = vmatprep.subr.mxu0 0.0
    %2690 = vmatpush1.msra.mxu0 %v1848
    %2691 = vmatprep.subr.mxu0 0.0
    %2692 = vmatpush1.msra.mxu0 %v1847
    %2693 = vmatprep.subr.mxu0 0.0
    %2694 = vmatpush1.msra.mxu0 %v1846
    %2695 = vmatprep.subr.mxu0 0.0
    %2696 = vmatpush1.msra.mxu0 %v1845
    %2697 = vmatprep.subr.mxu0 0.0
    %2698 = vmatpush1.msra.mxu0 %v1844
    %2699 = vmatprep.subr.mxu0 0.0
    %2700 = vmatpush1.msra.mxu0 %v1843
    %2701 = vmatprep.subr.mxu0 0.0
    %2702 = vmatpush1.msra.mxu0 %v1842
    %2703 = vmatprep.subr.mxu0 0.0
    %2704 = vmatpush1.msra.mxu0 %v1841
    %2705 = vmatprep.subr.mxu0 0.0
    %2706 = vmatpush1.msra.mxu0 %v1840
    %2707 = vmatprep.subr.mxu0 0.0
    %2708 = vmatpush1.msra.mxu0 %v1839
    %2709 = vmatprep.subr.mxu0 0.0
    %2710 = vmatpush1.msra.mxu0 %v1838
    %2711 = vmatprep.subr.mxu0 0.0
    %2712 = vmatpush1.msra.mxu0 %v1837
    %2713 = vmatprep.subr.mxu0 0.0
    %2714 = vmatpush1.msra.mxu0 %v1836
    %2715 = vmatprep.subr.mxu0 0.0
    %2716 = vmatpush1.msra.mxu0 %v1835
    %2717 = vmatprep.subr.mxu0 0.0
    %2718 = vmatpush2.msra.mxu0 %v1866
    %2719 = vmatprep.subr.mxu0 0.0
    %2720 = vmatpush2.msra.mxu0 %v1865
    %2721 = vmatprep.subr.mxu0 0.0
    %2722 = vmatpush2.msra.mxu0 %v1864
    %2723 = vmatprep.subr.mxu0 0.0
    %2724 = vmatpush2.msra.mxu0 %v1863
    %2725 = vmatprep.subr.mxu0 0.0
    %2726 = vmatpush2.msra.mxu0 %v1862
    %2727 = vmatprep.subr.mxu0 0.0
    %2728 = vmatpush2.msra.mxu0 %v1861
    %2729 = vmatprep.subr.mxu0 0.0
    %2730 = vmatpush2.msra.mxu0 %v1860
    %2731 = vmatprep.subr.mxu0 0.0
    %2732 = vmatpush2.msra.mxu0 %v1859
    %2733 = vmatprep.subr.mxu0 0.0
    %2734 = vmatpush2.msra.mxu0 %v1858
    %2735 = vmatprep.subr.mxu0 0.0
    %2736 = vmatpush2.msra.mxu0 %v1857
    %2737 = vmatprep.subr.mxu0 0.0
    %2738 = vmatpush2.msra.mxu0 %v1856
    %2739 = vmatprep.subr.mxu0 0.0
    %2740 = vmatpush2.msra.mxu0 %v1855
    %2741 = vmatprep.subr.mxu0 0.0
    %2742 = vmatpush2.msra.mxu0 %v1854
    %2743 = vmatprep.subr.mxu0 0.0
    %2744 = vmatpush2.msra.mxu0 %v1853
    %2745 = vmatprep.subr.mxu0 0.0
    %2746 = vmatpush2.msra.mxu0 %v1852
    %2747 = vmatprep.subr.mxu0 0.0
    %2748 = vmatpush2.msra.mxu0 %v1851
    %2749 = vmatprep.mubr.f32.mxu0 %v1200
    %2750 = vmatmul.mubr.f32.gmra.mxu0 %v1199
    %v2751 = vpop.f32.mrf.mxu0
    %v2752 = vadd.f32 %v2367, %v2751
    %v2753 = vpop.f32.mrf.mxu0
    %2754 = vmatprep.mubr.f32.mxu0 %v1209
    %2755 = vmatmul.mubr.f32.gmra.mxu0 %v1208
    %v2756 = vpop.f32.mrf.mxu0
    %v2757 = vadd.f32 %v2372, %v2756
    %v2758 = vpop.f32.mrf.mxu0
    %2759 = vmatprep.mubr.f32.mxu0 %v1218
    %2760 = vmatmul.mubr.f32.gmra.mxu0 %v1217
    %v2761 = vpop.f32.mrf.mxu0
    %v2762 = vadd.f32 %v2377, %v2761
    %v2763 = vpop.f32.mrf.mxu0
    %2764 = vmatprep.mubr.f32.mxu0 %v1227
    %2765 = vmatmul.mubr.f32.gmra.mxu0 %v1226
    %v2766 = vpop.f32.mrf.mxu0
    %v2767 = vadd.f32 %v2382, %v2766
    %v2768 = vpop.f32.mrf.mxu0
    %2769 = vmatprep.mubr.f32.mxu0 %v1236
    %2770 = vmatmul.mubr.f32.gmra.mxu0 %v1235
    %v2771 = vpop.f32.mrf.mxu0
    %v2772 = vadd.f32 %v2387, %v2771
    %v2773 = vpop.f32.mrf.mxu0
    %2774 = vmatprep.mubr.f32.mxu0 %v1245
    %2775 = vmatmul.mubr.f32.gmra.mxu0 %v1244
    %v2776 = vpop.f32.mrf.mxu0
    %v2777 = vadd.f32 %v2392, %v2776
    %v2778 = vpop.f32.mrf.mxu0
    %2779 = vmatprep.mubr.f32.mxu0 %v1254
    %2780 = vmatmul.mubr.f32.gmra.mxu0 %v1253
    %v2781 = vpop.f32.mrf.mxu0
    %v2782 = vadd.f32 %v2397, %v2781
    %v2783 = vpop.f32.mrf.mxu0
    %2784 = vmatprep.mubr.f32.mxu0 %v1263
    %2785 = vmatmul.mubr.f32.gmra.mxu0 %v1262
    %v2786 = vpop.f32.mrf.mxu0
    %v2787 = vadd.f32 %v2402, %v2786
    %v2788 = vpop.f32.mrf.mxu0
    %2789 = vmatprep.mubr.f32.mxu0 %v1272
    %2790 = vmatmul.mubr.f32.gmra.mxu0 %v1271
    %v2791 = vpop.f32.mrf.mxu0
    %v2792 = vadd.f32 %v2407, %v2791
    %v2793 = vpop.f32.mrf.mxu0
    %2794 = vmatprep.mubr.f32.mxu0 %v1281
    %2795 = vmatmul.mubr.f32.gmra.mxu0 %v1280
    %v2796 = vpop.f32.mrf.mxu0
    %v2797 = vadd.f32 %v2412, %v2796
    %v2798 = vpop.f32.mrf.mxu0
    %2799 = vmatprep.mubr.f32.mxu0 %v1290
    %2800 = vmatmul.mubr.f32.gmra.mxu0 %v1289
    %v2801 = vpop.f32.mrf.mxu0
    %v2802 = vadd.f32 %v2417, %v2801
    %v2803 = vpop.f32.mrf.mxu0
    %2804 = vmatprep.mubr.f32.mxu0 %v1299
    %2805 = vmatmul.mubr.f32.gmra.mxu0 %v1298
    %v2806 = vpop.f32.mrf.mxu0
    %v2807 = vadd.f32 %v2422, %v2806
    %v2808 = vpop.f32.mrf.mxu0
    %2809 = vmatprep.mubr.f32.mxu0 %v1308
    %2810 = vmatmul.mubr.f32.gmra.mxu0 %v1307
    %v2811 = vpop.f32.mrf.mxu0
    %v2812 = vadd.f32 %v2427, %v2811
    %v2813 = vpop.f32.mrf.mxu0
    %2814 = vmatprep.mubr.f32.mxu0 %v1317
    %2815 = vmatmul.mubr.f32.gmra.mxu0 %v1316
    %v2816 = vpop.f32.mrf.mxu0
    %v2817 = vadd.f32 %v2432, %v2816
    %v2818 = vpop.f32.mrf.mxu0
    %2819 = vmatprep.mubr.f32.mxu0 %v1326
    %2820 = vmatmul.mubr.f32.gmra.mxu0 %v1325
    %v2821 = vpop.f32.mrf.mxu0
    %v2822 = vadd.f32 %v2437, %v2821
    %v2823 = vpop.f32.mrf.mxu0
    %2824 = vmatprep.mubr.f32.mxu0 %v1335
    %2825 = vmatmul.mubr.f32.gmra.mxu0 %v1334
    %v2826 = vpop.f32.mrf.mxu0
    %v2827 = vadd.f32 %v2442, %v2826
    %v2828 = vpop.f32.mrf.mxu0
    %2829 = vmatprep.mubr.f32.mxu0 %v1344
    %2830 = vmatmul.mubr.f32.gmra.mxu0 %v1343
    %v2831 = vpop.f32.mrf.mxu0
    %v2832 = vadd.f32 %v2447, %v2831
    %v2833 = vpop.f32.mrf.mxu0
    %2834 = vmatprep.mubr.f32.mxu0 %v1353
    %2835 = vmatmul.mubr.f32.gmra.mxu0 %v1352
    %v2836 = vpop.f32.mrf.mxu0
    %v2837 = vadd.f32 %v2452, %v2836
    %v2838 = vpop.f32.mrf.mxu0
    %2839 = vmatprep.mubr.f32.mxu0 %v1362
    %2840 = vmatmul.mubr.f32.gmra.mxu0 %v1361
    %v2841 = vpop.f32.mrf.mxu0
    %v2842 = vadd.f32 %v2457, %v2841
    %v2843 = vpop.f32.mrf.mxu0
    %2844 = vmatprep.mubr.f32.mxu0 %v1371
    %2845 = vmatmul.mubr.f32.gmra.mxu0 %v1370
    %v2846 = vpop.f32.mrf.mxu0
    %v2847 = vadd.f32 %v2462, %v2846
    %v2848 = vpop.f32.mrf.mxu0
    %2849 = vmatprep.mubr.f32.mxu0 %v1380
    %2850 = vmatmul.mubr.f32.gmra.mxu0 %v1379
    %v2851 = vpop.f32.mrf.mxu0
    %v2852 = vadd.f32 %v2467, %v2851
    %v2853 = vpop.f32.mrf.mxu0
    %2854 = vmatprep.mubr.f32.mxu0 %v1389
    %2855 = vmatmul.mubr.f32.gmra.mxu0 %v1388
    %v2856 = vpop.f32.mrf.mxu0
    %v2857 = vadd.f32 %v2472, %v2856
    %v2858 = vpop.f32.mrf.mxu0
    %2859 = vmatprep.mubr.f32.mxu0 %v1398
    %2860 = vmatmul.mubr.f32.gmra.mxu0 %v1397
    %v2861 = vpop.f32.mrf.mxu0
    %v2862 = vadd.f32 %v2477, %v2861
    %v2863 = vpop.f32.mrf.mxu0
    %2864 = vmatprep.mubr.f32.mxu0 %v1407
    %2865 = vmatmul.mubr.f32.gmra.mxu0 %v1406
    %v2866 = vpop.f32.mrf.mxu0
    %v2867 = vadd.f32 %v2482, %v2866
    %v2868 = vpop.f32.mrf.mxu0
    %2869 = vmatprep.mubr.f32.mxu0 %v1416
    %2870 = vmatmul.mubr.f32.gmra.mxu0 %v1415
    %v2871 = vpop.f32.mrf.mxu0
    %v2872 = vadd.f32 %v2487, %v2871
    %v2873 = vpop.f32.mrf.mxu0
    %2874 = vmatprep.mubr.f32.mxu0 %v1425
    %2875 = vmatmul.mubr.f32.gmra.mxu0 %v1424
    %v2876 = vpop.f32.mrf.mxu0
    %v2877 = vadd.f32 %v2492, %v2876
    %v2878 = vpop.f32.mrf.mxu0
    %2879 = vmatprep.mubr.f32.mxu0 %v1434
    %2880 = vmatmul.mubr.f32.gmra.mxu0 %v1433
    %v2881 = vpop.f32.mrf.mxu0
    %v2882 = vadd.f32 %v2497, %v2881
    %v2883 = vpop.f32.mrf.mxu0
    %2884 = vmatprep.mubr.f32.mxu0 %v1443
    %2885 = vmatmul.mubr.f32.gmra.mxu0 %v1442
    %v2886 = vpop.f32.mrf.mxu0
    %v2887 = vadd.f32 %v2502, %v2886
    %v2888 = vpop.f32.mrf.mxu0
    %2889 = vmatprep.mubr.f32.mxu0 %v1452
    %2890 = vmatmul.mubr.f32.gmra.mxu0 %v1451
    %v2891 = vpop.f32.mrf.mxu0
    %v2892 = vadd.f32 %v2507, %v2891
    %v2893 = vpop.f32.mrf.mxu0
    %2894 = vmatprep.mubr.f32.mxu0 %v1461
    %2895 = vmatmul.mubr.f32.gmra.mxu0 %v1460
    %v2896 = vpop.f32.mrf.mxu0
    %v2897 = vadd.f32 %v2512, %v2896
    %v2898 = vpop.f32.mrf.mxu0
    %2899 = vmatprep.mubr.f32.mxu0 %v1470
    %2900 = vmatmul.mubr.f32.gmra.mxu0 %v1469
    %v2901 = vpop.f32.mrf.mxu0
    %v2902 = vadd.f32 %v2517, %v2901
    %v2903 = vpop.f32.mrf.mxu0
    %2904 = vmatprep.mubr.f32.mxu0 %v1479
    %2905 = vmatmul.mubr.f32.gmra.mxu0 %v1478
    %v2906 = vpop.f32.mrf.mxu0
    %v2907 = vadd.f32 %v2522, %v2906
    %v2908 = vpop.f32.mrf.mxu0
    %2909 = vmatprep.mubr.f32.mxu0 %v1488
    %2910 = vmatmul.mubr.f32.gmra.mxu0 %v1487
    %v2911 = vpop.f32.mrf.mxu0
    %v2912 = vadd.f32 %v2527, %v2911
    %v2913 = vpop.f32.mrf.mxu0
    %2914 = vmatprep.mubr.f32.mxu0 %v1497
    %2915 = vmatmul.mubr.f32.gmra.mxu0 %v1496
    %v2916 = vpop.f32.mrf.mxu0
    %v2917 = vadd.f32 %v2532, %v2916
    %v2918 = vpop.f32.mrf.mxu0
    %2919 = vmatprep.mubr.f32.mxu0 %v1506
    %2920 = vmatmul.mubr.f32.gmra.mxu0 %v1505
    %v2921 = vpop.f32.mrf.mxu0
    %v2922 = vadd.f32 %v2537, %v2921
    %v2923 = vpop.f32.mrf.mxu0
    %2924 = vmatprep.mubr.f32.mxu0 %v1515
    %2925 = vmatmul.mubr.f32.gmra.mxu0 %v1514
    %v2926 = vpop.f32.mrf.mxu0
    %v2927 = vadd.f32 %v2542, %v2926
    %v2928 = vpop.f32.mrf.mxu0
    %2929 = vmatprep.mubr.f32.mxu0 %v1524
    %2930 = vmatmul.mubr.f32.gmra.mxu0 %v1523
    %v2931 = vpop.f32.mrf.mxu0
    %v2932 = vadd.f32 %v2547, %v2931
    %v2933 = vpop.f32.mrf.mxu0
    %2934 = vmatprep.mubr.f32.mxu0 %v1533
    %2935 = vmatmul.mubr.f32.gmra.mxu0 %v1532
    %v2936 = vpop.f32.mrf.mxu0
    %v2937 = vadd.f32 %v2552, %v2936
    %v2938 = vpop.f32.mrf.mxu0
    %2939 = vmatprep.mubr.f32.mxu0 %v1542
    %2940 = vmatmul.mubr.f32.gmra.mxu0 %v1541
    %v2941 = vpop.f32.mrf.mxu0
    %v2942 = vadd.f32 %v2557, %v2941
    %v2943 = vpop.f32.mrf.mxu0
    %2944 = vmatprep.mubr.f32.mxu0 %v1551
    %2945 = vmatmul.mubr.f32.gmra.mxu0 %v1550
    %v2946 = vpop.f32.mrf.mxu0
    %v2947 = vadd.f32 %v2562, %v2946
    %v2948 = vpop.f32.mrf.mxu0
    %2949 = vmatprep.mubr.f32.mxu0 %v1560
    %2950 = vmatmul.mubr.f32.gmra.mxu0 %v1559
    %v2951 = vpop.f32.mrf.mxu0
    %v2952 = vadd.f32 %v2567, %v2951
    %v2953 = vpop.f32.mrf.mxu0
    %2954 = vmatprep.mubr.f32.mxu0 %v1569
    %2955 = vmatmul.mubr.f32.gmra.mxu0 %v1568
    %v2956 = vpop.f32.mrf.mxu0
    %v2957 = vadd.f32 %v2572, %v2956
    %v2958 = vpop.f32.mrf.mxu0
    %2959 = vmatprep.mubr.f32.mxu0 %v1578
    %2960 = vmatmul.mubr.f32.gmra.mxu0 %v1577
    %v2961 = vpop.f32.mrf.mxu0
    %v2962 = vadd.f32 %v2577, %v2961
    %v2963 = vpop.f32.mrf.mxu0
    %2964 = vmatprep.mubr.f32.mxu0 %v1587
    %2965 = vmatmul.mubr.f32.gmra.mxu0 %v1586
    %v2966 = vpop.f32.mrf.mxu0
    %v2967 = vadd.f32 %v2582, %v2966
    %v2968 = vpop.f32.mrf.mxu0
    %2969 = vmatprep.mubr.f32.mxu0 %v1596
    %2970 = vmatmul.mubr.f32.gmra.mxu0 %v1595
    %v2971 = vpop.f32.mrf.mxu0
    %v2972 = vadd.f32 %v2587, %v2971
    %v2973 = vpop.f32.mrf.mxu0
    %2974 = vmatprep.mubr.f32.mxu0 %v1605
    %2975 = vmatmul.mubr.f32.gmra.mxu0 %v1604
    %v2976 = vpop.f32.mrf.mxu0
    %v2977 = vadd.f32 %v2592, %v2976
    %v2978 = vpop.f32.mrf.mxu0
    %2979 = vmatprep.mubr.f32.mxu0 %v1614
    %2980 = vmatmul.mubr.f32.gmra.mxu0 %v1613
    %v2981 = vpop.f32.mrf.mxu0
    %v2982 = vadd.f32 %v2597, %v2981
    %v2983 = vpop.f32.mrf.mxu0
    %2984 = vmatprep.mubr.f32.mxu0 %v1623
    %2985 = vmatmul.mubr.f32.gmra.mxu0 %v1622
    %v2986 = vpop.f32.mrf.mxu0
    %v2987 = vadd.f32 %v2602, %v2986
    %v2988 = vpop.f32.mrf.mxu0
    %2989 = vmatprep.mubr.f32.mxu0 %v1632
    %2990 = vmatmul.mubr.f32.gmra.mxu0 %v1631
    %v2991 = vpop.f32.mrf.mxu0
    %v2992 = vadd.f32 %v2607, %v2991
    %v2993 = vpop.f32.mrf.mxu0
    %2994 = vmatprep.mubr.f32.mxu0 %v1641
    %2995 = vmatmul.mubr.f32.gmra.mxu0 %v1640
    %v2996 = vpop.f32.mrf.mxu0
    %v2997 = vadd.f32 %v2612, %v2996
    %v2998 = vpop.f32.mrf.mxu0
    %2999 = vmatprep.mubr.f32.mxu0 %v1650
    %3000 = vmatmul.mubr.f32.gmra.mxu0 %v1649
    %v3001 = vpop.f32.mrf.mxu0
    %v3002 = vadd.f32 %v2617, %v3001
    %v3003 = vpop.f32.mrf.mxu0
    %3004 = vmatprep.mubr.f32.mxu0 %v1659
    %3005 = vmatmul.mubr.f32.gmra.mxu0 %v1658
    %v3006 = vpop.f32.mrf.mxu0
    %v3007 = vadd.f32 %v2622, %v3006
    %v3008 = vpop.f32.mrf.mxu0
    %3009 = vmatprep.mubr.f32.mxu0 %v1668
    %3010 = vmatmul.mubr.f32.gmra.mxu0 %v1667
    %v3011 = vpop.f32.mrf.mxu0
    %v3012 = vadd.f32 %v2627, %v3011
    %v3013 = vpop.f32.mrf.mxu0
    %3014 = vmatprep.mubr.f32.mxu0 %v1677
    %3015 = vmatmul.mubr.f32.gmra.mxu0 %v1676
    %v3016 = vpop.f32.mrf.mxu0
    %v3017 = vadd.f32 %v2632, %v3016
    %v3018 = vpop.f32.mrf.mxu0
    %3019 = vmatprep.mubr.f32.mxu0 %v1686
    %3020 = vmatmul.mubr.f32.gmra.mxu0 %v1685
    %v3021 = vpop.f32.mrf.mxu0
    %v3022 = vadd.f32 %v2637, %v3021
    %v3023 = vpop.f32.mrf.mxu0
    %3024 = vmatprep.mubr.f32.mxu0 %v1695
    %3025 = vmatmul.mubr.f32.gmra.mxu0 %v1694
    %v3026 = vpop.f32.mrf.mxu0
    %v3027 = vadd.f32 %v2642, %v3026
    %v3028 = vpop.f32.mrf.mxu0
    %3029 = vmatprep.mubr.f32.mxu0 %v1704
    %3030 = vmatmul.mubr.f32.gmra.mxu0 %v1703
    %v3031 = vpop.f32.mrf.mxu0
    %v3032 = vadd.f32 %v2647, %v3031
    %v3033 = vpop.f32.mrf.mxu0
    %3034 = vmatprep.mubr.f32.mxu0 %v1713
    %3035 = vmatmul.mubr.f32.gmra.mxu0 %v1712
    %v3036 = vpop.f32.mrf.mxu0
    %v3037 = vadd.f32 %v2652, %v3036
    %v3038 = vpop.f32.mrf.mxu0
    %3039 = vmatprep.mubr.f32.mxu0 %v1722
    %3040 = vmatmul.mubr.f32.gmra.mxu0 %v1721
    %v3041 = vpop.f32.mrf.mxu0
    %v3042 = vadd.f32 %v2657, %v3041
    %v3043 = vpop.f32.mrf.mxu0
    %3044 = vmatprep.mubr.f32.mxu0 %v1731
    %3045 = vmatmul.mubr.f32.gmra.mxu0 %v1730
    %v3046 = vpop.f32.mrf.mxu0
    %v3047 = vadd.f32 %v2662, %v3046
    %v3048 = vpop.f32.mrf.mxu0
    %3049 = vmatprep.mubr.f32.mxu0 %v1740
    %3050 = vmatmul.mubr.f32.gmra.mxu0 %v1739
    %v3051 = vpop.f32.mrf.mxu0
    %v3052 = vadd.f32 %v2667, %v3051
    %v3053 = vpop.f32.mrf.mxu0
    %3054 = vmatprep.mubr.f32.mxu0 %v1749
    %3055 = vmatmul.mubr.f32.gmra.mxu0 %v1748
    %v3056 = vpop.f32.mrf.mxu0
    %v3057 = vadd.f32 %v2672, %v3056
    %v3058 = vpop.f32.mrf.mxu0
    %3059 = vmatprep.mubr.f32.mxu0 %v1758
    %3060 = vmatmul.mubr.f32.gmra.mxu0 %v1757
    %v3061 = vpop.f32.mrf.mxu0
    %v3062 = vadd.f32 %v2677, %v3061
    %v3063 = vpop.f32.mrf.mxu0
    %3064 = vmatprep.mubr.f32.mxu0 %v1767
    %3065 = vmatmul.mubr.f32.gmra.mxu0 %v1766
    %v3066 = vpop.f32.mrf.mxu0
    %v3067 = vadd.f32 %v2682, %v3066
    %v3068 = vpop.f32.mrf.mxu0
    %3069 = vdwg.mxu0
    %3070 = vmatprep.subr.mxu0 0.0
    %3071 = vmatpush1.msra.mxu0 %v1882
    %3072 = vmatprep.subr.mxu0 0.0
    %3073 = vmatpush1.msra.mxu0 %v1881
    %3074 = vmatprep.subr.mxu0 0.0
    %3075 = vmatpush1.msra.mxu0 %v1880
    %3076 = vmatprep.subr.mxu0 0.0
    %3077 = vmatpush1.msra.mxu0 %v1879
    %3078 = vmatprep.subr.mxu0 0.0
    %3079 = vmatpush1.msra.mxu0 %v1878
    %3080 = vmatprep.subr.mxu0 0.0
    %3081 = vmatpush1.msra.mxu0 %v1877
    %3082 = vmatprep.subr.mxu0 0.0
    %3083 = vmatpush1.msra.mxu0 %v1876
    %3084 = vmatprep.subr.mxu0 0.0
    %3085 = vmatpush1.msra.mxu0 %v1875
    %3086 = vmatprep.subr.mxu0 0.0
    %3087 = vmatpush1.msra.mxu0 %v1874
    %3088 = vmatprep.subr.mxu0 0.0
    %3089 = vmatpush1.msra.mxu0 %v1873
    %3090 = vmatprep.subr.mxu0 0.0
    %3091 = vmatpush1.msra.mxu0 %v1872
    %3092 = vmatprep.subr.mxu0 0.0
    %3093 = vmatpush1.msra.mxu0 %v1871
    %3094 = vmatprep.subr.mxu0 0.0
    %3095 = vmatpush1.msra.mxu0 %v1870
    %3096 = vmatprep.subr.mxu0 0.0
    %3097 = vmatpush1.msra.mxu0 %v1869
    %3098 = vmatprep.subr.mxu0 0.0
    %3099 = vmatpush1.msra.mxu0 %v1868
    %3100 = vmatprep.subr.mxu0 0.0
    %3101 = vmatpush1.msra.mxu0 %v1867
    %3102 = vmatprep.subr.mxu0 0.0
    %3103 = vmatpush2.msra.mxu0 %v1898
    %3104 = vmatprep.subr.mxu0 0.0
    %3105 = vmatpush2.msra.mxu0 %v1897
    %3106 = vmatprep.subr.mxu0 0.0
    %3107 = vmatpush2.msra.mxu0 %v1896
    %3108 = vmatprep.subr.mxu0 0.0
    %3109 = vmatpush2.msra.mxu0 %v1895
    %3110 = vmatprep.subr.mxu0 0.0
    %3111 = vmatpush2.msra.mxu0 %v1894
    %3112 = vmatprep.subr.mxu0 0.0
    %3113 = vmatpush2.msra.mxu0 %v1893
    %3114 = vmatprep.subr.mxu0 0.0
    %3115 = vmatpush2.msra.mxu0 %v1892
    %3116 = vmatprep.subr.mxu0 0.0
    %3117 = vmatpush2.msra.mxu0 %v1891
    %3118 = vmatprep.subr.mxu0 0.0
    %3119 = vmatpush2.msra.mxu0 %v1890
    %3120 = vmatprep.subr.mxu0 0.0
    %3121 = vmatpush2.msra.mxu0 %v1889
    %3122 = vmatprep.subr.mxu0 0.0
    %3123 = vmatpush2.msra.mxu0 %v1888
    %3124 = vmatprep.subr.mxu0 0.0
    %3125 = vmatpush2.msra.mxu0 %v1887
    %3126 = vmatprep.subr.mxu0 0.0
    %3127 = vmatpush2.msra.mxu0 %v1886
    %3128 = vmatprep.subr.mxu0 0.0
    %3129 = vmatpush2.msra.mxu0 %v1885
    %3130 = vmatprep.subr.mxu0 0.0
    %3131 = vmatpush2.msra.mxu0 %v1884
    %3132 = vmatprep.subr.mxu0 0.0
    %3133 = vmatpush2.msra.mxu0 %v1883
    %3134 = vmatprep.mubr.f32.mxu0 %v1202
    %3135 = vmatmul.mubr.f32.gmra.mxu0 %v1201
    %v3136 = vpop.f32.mrf.mxu0
    %v3137 = vadd.f32 %v2752, %v3136
    %v3138 = vpop.f32.mrf.mxu0
    %3139 = vmatprep.mubr.f32.mxu0 %v1211
    %3140 = vmatmul.mubr.f32.gmra.mxu0 %v1210
    %v3141 = vpop.f32.mrf.mxu0
    %v3142 = vadd.f32 %v2757, %v3141
    %v3143 = vpop.f32.mrf.mxu0
    %3144 = vmatprep.mubr.f32.mxu0 %v1220
    %3145 = vmatmul.mubr.f32.gmra.mxu0 %v1219
    %v3146 = vpop.f32.mrf.mxu0
    %v3147 = vadd.f32 %v2762, %v3146
    %v3148 = vpop.f32.mrf.mxu0
    %3149 = vmatprep.mubr.f32.mxu0 %v1229
    %3150 = vmatmul.mubr.f32.gmra.mxu0 %v1228
    %v3151 = vpop.f32.mrf.mxu0
    %v3152 = vadd.f32 %v2767, %v3151
    %v3153 = vpop.f32.mrf.mxu0
    %3154 = vmatprep.mubr.f32.mxu0 %v1238
    %3155 = vmatmul.mubr.f32.gmra.mxu0 %v1237
    %v3156 = vpop.f32.mrf.mxu0
    %v3157 = vadd.f32 %v2772, %v3156
    %v3158 = vpop.f32.mrf.mxu0
    %3159 = vmatprep.mubr.f32.mxu0 %v1247
    %3160 = vmatmul.mubr.f32.gmra.mxu0 %v1246
    %v3161 = vpop.f32.mrf.mxu0
    %v3162 = vadd.f32 %v2777, %v3161
    %v3163 = vpop.f32.mrf.mxu0
    %3164 = vmatprep.mubr.f32.mxu0 %v1256
    %3165 = vmatmul.mubr.f32.gmra.mxu0 %v1255
    %v3166 = vpop.f32.mrf.mxu0
    %v3167 = vadd.f32 %v2782, %v3166
    %v3168 = vpop.f32.mrf.mxu0
    %3169 = vmatprep.mubr.f32.mxu0 %v1265
    %3170 = vmatmul.mubr.f32.gmra.mxu0 %v1264
    %v3171 = vpop.f32.mrf.mxu0
    %v3172 = vadd.f32 %v2787, %v3171
    %v3173 = vpop.f32.mrf.mxu0
    %3174 = vmatprep.mubr.f32.mxu0 %v1274
    %3175 = vmatmul.mubr.f32.gmra.mxu0 %v1273
    %v3176 = vpop.f32.mrf.mxu0
    %v3177 = vadd.f32 %v2792, %v3176
    %v3178 = vpop.f32.mrf.mxu0
    %3179 = vmatprep.mubr.f32.mxu0 %v1283
    %3180 = vmatmul.mubr.f32.gmra.mxu0 %v1282
    %v3181 = vpop.f32.mrf.mxu0
    %v3182 = vadd.f32 %v2797, %v3181
    %v3183 = vpop.f32.mrf.mxu0
    %3184 = vmatprep.mubr.f32.mxu0 %v1292
    %3185 = vmatmul.mubr.f32.gmra.mxu0 %v1291
    %v3186 = vpop.f32.mrf.mxu0
    %v3187 = vadd.f32 %v2802, %v3186
    %v3188 = vpop.f32.mrf.mxu0
    %3189 = vmatprep.mubr.f32.mxu0 %v1301
    %3190 = vmatmul.mubr.f32.gmra.mxu0 %v1300
    %v3191 = vpop.f32.mrf.mxu0
    %v3192 = vadd.f32 %v2807, %v3191
    %v3193 = vpop.f32.mrf.mxu0
    %3194 = vmatprep.mubr.f32.mxu0 %v1310
    %3195 = vmatmul.mubr.f32.gmra.mxu0 %v1309
    %v3196 = vpop.f32.mrf.mxu0
    %v3197 = vadd.f32 %v2812, %v3196
    %v3198 = vpop.f32.mrf.mxu0
    %3199 = vmatprep.mubr.f32.mxu0 %v1319
    %3200 = vmatmul.mubr.f32.gmra.mxu0 %v1318
    %v3201 = vpop.f32.mrf.mxu0
    %v3202 = vadd.f32 %v2817, %v3201
    %v3203 = vpop.f32.mrf.mxu0
    %3204 = vmatprep.mubr.f32.mxu0 %v1328
    %3205 = vmatmul.mubr.f32.gmra.mxu0 %v1327
    %v3206 = vpop.f32.mrf.mxu0
    %v3207 = vadd.f32 %v2822, %v3206
    %v3208 = vpop.f32.mrf.mxu0
    %3209 = vmatprep.mubr.f32.mxu0 %v1337
    %3210 = vmatmul.mubr.f32.gmra.mxu0 %v1336
    %v3211 = vpop.f32.mrf.mxu0
    %v3212 = vadd.f32 %v2827, %v3211
    %v3213 = vpop.f32.mrf.mxu0
    %3214 = vmatprep.mubr.f32.mxu0 %v1346
    %3215 = vmatmul.mubr.f32.gmra.mxu0 %v1345
    %v3216 = vpop.f32.mrf.mxu0
    %v3217 = vadd.f32 %v2832, %v3216
    %v3218 = vpop.f32.mrf.mxu0
    %3219 = vmatprep.mubr.f32.mxu0 %v1355
    %3220 = vmatmul.mubr.f32.gmra.mxu0 %v1354
    %v3221 = vpop.f32.mrf.mxu0
    %v3222 = vadd.f32 %v2837, %v3221
    %v3223 = vpop.f32.mrf.mxu0
    %3224 = vmatprep.mubr.f32.mxu0 %v1364
    %3225 = vmatmul.mubr.f32.gmra.mxu0 %v1363
    %v3226 = vpop.f32.mrf.mxu0
    %v3227 = vadd.f32 %v2842, %v3226
    %v3228 = vpop.f32.mrf.mxu0
    %3229 = vmatprep.mubr.f32.mxu0 %v1373
    %3230 = vmatmul.mubr.f32.gmra.mxu0 %v1372
    %v3231 = vpop.f32.mrf.mxu0
    %v3232 = vadd.f32 %v2847, %v3231
    %v3233 = vpop.f32.mrf.mxu0
    %3234 = vmatprep.mubr.f32.mxu0 %v1382
    %3235 = vmatmul.mubr.f32.gmra.mxu0 %v1381
    %v3236 = vpop.f32.mrf.mxu0
    %v3237 = vadd.f32 %v2852, %v3236
    %v3238 = vpop.f32.mrf.mxu0
    %3239 = vmatprep.mubr.f32.mxu0 %v1391
    %3240 = vmatmul.mubr.f32.gmra.mxu0 %v1390
    %v3241 = vpop.f32.mrf.mxu0
    %v3242 = vadd.f32 %v2857, %v3241
    %v3243 = vpop.f32.mrf.mxu0
    %3244 = vmatprep.mubr.f32.mxu0 %v1400
    %3245 = vmatmul.mubr.f32.gmra.mxu0 %v1399
    %v3246 = vpop.f32.mrf.mxu0
    %v3247 = vadd.f32 %v2862, %v3246
    %v3248 = vpop.f32.mrf.mxu0
    %3249 = vmatprep.mubr.f32.mxu0 %v1409
    %3250 = vmatmul.mubr.f32.gmra.mxu0 %v1408
    %v3251 = vpop.f32.mrf.mxu0
    %v3252 = vadd.f32 %v2867, %v3251
    %v3253 = vpop.f32.mrf.mxu0
    %3254 = vmatprep.mubr.f32.mxu0 %v1418
    %3255 = vmatmul.mubr.f32.gmra.mxu0 %v1417
    %v3256 = vpop.f32.mrf.mxu0
    %v3257 = vadd.f32 %v2872, %v3256
    %v3258 = vpop.f32.mrf.mxu0
    %3259 = vmatprep.mubr.f32.mxu0 %v1427
    %3260 = vmatmul.mubr.f32.gmra.mxu0 %v1426
    %v3261 = vpop.f32.mrf.mxu0
    %v3262 = vadd.f32 %v2877, %v3261
    %v3263 = vpop.f32.mrf.mxu0
    %3264 = vmatprep.mubr.f32.mxu0 %v1436
    %3265 = vmatmul.mubr.f32.gmra.mxu0 %v1435
    %v3266 = vpop.f32.mrf.mxu0
    %v3267 = vadd.f32 %v2882, %v3266
    %v3268 = vpop.f32.mrf.mxu0
    %3269 = vmatprep.mubr.f32.mxu0 %v1445
    %3270 = vmatmul.mubr.f32.gmra.mxu0 %v1444
    %v3271 = vpop.f32.mrf.mxu0
    %v3272 = vadd.f32 %v2887, %v3271
    %v3273 = vpop.f32.mrf.mxu0
    %3274 = vmatprep.mubr.f32.mxu0 %v1454
    %3275 = vmatmul.mubr.f32.gmra.mxu0 %v1453
    %v3276 = vpop.f32.mrf.mxu0
    %v3277 = vadd.f32 %v2892, %v3276
    %v3278 = vpop.f32.mrf.mxu0
    %3279 = vmatprep.mubr.f32.mxu0 %v1463
    %3280 = vmatmul.mubr.f32.gmra.mxu0 %v1462
    %v3281 = vpop.f32.mrf.mxu0
    %v3282 = vadd.f32 %v2897, %v3281
    %v3283 = vpop.f32.mrf.mxu0
    %3284 = vmatprep.mubr.f32.mxu0 %v1472
    %3285 = vmatmul.mubr.f32.gmra.mxu0 %v1471
    %v3286 = vpop.f32.mrf.mxu0
    %v3287 = vadd.f32 %v2902, %v3286
    %v3288 = vpop.f32.mrf.mxu0
    %3289 = vmatprep.mubr.f32.mxu0 %v1481
    %3290 = vmatmul.mubr.f32.gmra.mxu0 %v1480
    %v3291 = vpop.f32.mrf.mxu0
    %v3292 = vadd.f32 %v2907, %v3291
    %v3293 = vpop.f32.mrf.mxu0
    %3294 = vmatprep.mubr.f32.mxu0 %v1490
    %3295 = vmatmul.mubr.f32.gmra.mxu0 %v1489
    %v3296 = vpop.f32.mrf.mxu0
    %v3297 = vadd.f32 %v2912, %v3296
    %v3298 = vpop.f32.mrf.mxu0
    %3299 = vmatprep.mubr.f32.mxu0 %v1499
    %3300 = vmatmul.mubr.f32.gmra.mxu0 %v1498
    %v3301 = vpop.f32.mrf.mxu0
    %v3302 = vadd.f32 %v2917, %v3301
    %v3303 = vpop.f32.mrf.mxu0
    %3304 = vmatprep.mubr.f32.mxu0 %v1508
    %3305 = vmatmul.mubr.f32.gmra.mxu0 %v1507
    %v3306 = vpop.f32.mrf.mxu0
    %v3307 = vadd.f32 %v2922, %v3306
    %v3308 = vpop.f32.mrf.mxu0
    %3309 = vmatprep.mubr.f32.mxu0 %v1517
    %3310 = vmatmul.mubr.f32.gmra.mxu0 %v1516
    %v3311 = vpop.f32.mrf.mxu0
    %v3312 = vadd.f32 %v2927, %v3311
    %v3313 = vpop.f32.mrf.mxu0
    %3314 = vmatprep.mubr.f32.mxu0 %v1526
    %3315 = vmatmul.mubr.f32.gmra.mxu0 %v1525
    %v3316 = vpop.f32.mrf.mxu0
    %v3317 = vadd.f32 %v2932, %v3316
    %v3318 = vpop.f32.mrf.mxu0
    %3319 = vmatprep.mubr.f32.mxu0 %v1535
    %3320 = vmatmul.mubr.f32.gmra.mxu0 %v1534
    %v3321 = vpop.f32.mrf.mxu0
    %v3322 = vadd.f32 %v2937, %v3321
    %v3323 = vpop.f32.mrf.mxu0
    %3324 = vmatprep.mubr.f32.mxu0 %v1544
    %3325 = vmatmul.mubr.f32.gmra.mxu0 %v1543
    %v3326 = vpop.f32.mrf.mxu0
    %v3327 = vadd.f32 %v2942, %v3326
    %v3328 = vpop.f32.mrf.mxu0
    %3329 = vmatprep.mubr.f32.mxu0 %v1553
    %3330 = vmatmul.mubr.f32.gmra.mxu0 %v1552
    %v3331 = vpop.f32.mrf.mxu0
    %v3332 = vadd.f32 %v2947, %v3331
    %v3333 = vpop.f32.mrf.mxu0
    %3334 = vmatprep.mubr.f32.mxu0 %v1562
    %3335 = vmatmul.mubr.f32.gmra.mxu0 %v1561
    %v3336 = vpop.f32.mrf.mxu0
    %v3337 = vadd.f32 %v2952, %v3336
    %v3338 = vpop.f32.mrf.mxu0
    %3339 = vmatprep.mubr.f32.mxu0 %v1571
    %3340 = vmatmul.mubr.f32.gmra.mxu0 %v1570
    %v3341 = vpop.f32.mrf.mxu0
    %v3342 = vadd.f32 %v2957, %v3341
    %v3343 = vpop.f32.mrf.mxu0
    %3344 = vmatprep.mubr.f32.mxu0 %v1580
    %3345 = vmatmul.mubr.f32.gmra.mxu0 %v1579
    %v3346 = vpop.f32.mrf.mxu0
    %v3347 = vadd.f32 %v2962, %v3346
    %v3348 = vpop.f32.mrf.mxu0
    %3349 = vmatprep.mubr.f32.mxu0 %v1589
    %3350 = vmatmul.mubr.f32.gmra.mxu0 %v1588
    %v3351 = vpop.f32.mrf.mxu0
    %v3352 = vadd.f32 %v2967, %v3351
    %v3353 = vpop.f32.mrf.mxu0
    %3354 = vmatprep.mubr.f32.mxu0 %v1598
    %3355 = vmatmul.mubr.f32.gmra.mxu0 %v1597
    %v3356 = vpop.f32.mrf.mxu0
    %v3357 = vadd.f32 %v2972, %v3356
    %v3358 = vpop.f32.mrf.mxu0
    %3359 = vmatprep.mubr.f32.mxu0 %v1607
    %3360 = vmatmul.mubr.f32.gmra.mxu0 %v1606
    %v3361 = vpop.f32.mrf.mxu0
    %v3362 = vadd.f32 %v2977, %v3361
    %v3363 = vpop.f32.mrf.mxu0
    %3364 = vmatprep.mubr.f32.mxu0 %v1616
    %3365 = vmatmul.mubr.f32.gmra.mxu0 %v1615
    %v3366 = vpop.f32.mrf.mxu0
    %v3367 = vadd.f32 %v2982, %v3366
    %v3368 = vpop.f32.mrf.mxu0
    %3369 = vmatprep.mubr.f32.mxu0 %v1625
    %3370 = vmatmul.mubr.f32.gmra.mxu0 %v1624
    %v3371 = vpop.f32.mrf.mxu0
    %v3372 = vadd.f32 %v2987, %v3371
    %v3373 = vpop.f32.mrf.mxu0
    %3374 = vmatprep.mubr.f32.mxu0 %v1634
    %3375 = vmatmul.mubr.f32.gmra.mxu0 %v1633
    %v3376 = vpop.f32.mrf.mxu0
    %v3377 = vadd.f32 %v2992, %v3376
    %v3378 = vpop.f32.mrf.mxu0
    %3379 = vmatprep.mubr.f32.mxu0 %v1643
    %3380 = vmatmul.mubr.f32.gmra.mxu0 %v1642
    %v3381 = vpop.f32.mrf.mxu0
    %v3382 = vadd.f32 %v2997, %v3381
    %v3383 = vpop.f32.mrf.mxu0
    %3384 = vmatprep.mubr.f32.mxu0 %v1652
    %3385 = vmatmul.mubr.f32.gmra.mxu0 %v1651
    %v3386 = vpop.f32.mrf.mxu0
    %v3387 = vadd.f32 %v3002, %v3386
    %v3388 = vpop.f32.mrf.mxu0
    %3389 = vmatprep.mubr.f32.mxu0 %v1661
    %3390 = vmatmul.mubr.f32.gmra.mxu0 %v1660
    %v3391 = vpop.f32.mrf.mxu0
    %v3392 = vadd.f32 %v3007, %v3391
    %v3393 = vpop.f32.mrf.mxu0
    %3394 = vmatprep.mubr.f32.mxu0 %v1670
    %3395 = vmatmul.mubr.f32.gmra.mxu0 %v1669
    %v3396 = vpop.f32.mrf.mxu0
    %v3397 = vadd.f32 %v3012, %v3396
    %v3398 = vpop.f32.mrf.mxu0
    %3399 = vmatprep.mubr.f32.mxu0 %v1679
    %3400 = vmatmul.mubr.f32.gmra.mxu0 %v1678
    %v3401 = vpop.f32.mrf.mxu0
    %v3402 = vadd.f32 %v3017, %v3401
    %v3403 = vpop.f32.mrf.mxu0
    %3404 = vmatprep.mubr.f32.mxu0 %v1688
    %3405 = vmatmul.mubr.f32.gmra.mxu0 %v1687
    %v3406 = vpop.f32.mrf.mxu0
    %v3407 = vadd.f32 %v3022, %v3406
    %v3408 = vpop.f32.mrf.mxu0
    %3409 = vmatprep.mubr.f32.mxu0 %v1697
    %3410 = vmatmul.mubr.f32.gmra.mxu0 %v1696
    %v3411 = vpop.f32.mrf.mxu0
    %v3412 = vadd.f32 %v3027, %v3411
    %v3413 = vpop.f32.mrf.mxu0
    %3414 = vmatprep.mubr.f32.mxu0 %v1706
    %3415 = vmatmul.mubr.f32.gmra.mxu0 %v1705
    %v3416 = vpop.f32.mrf.mxu0
    %v3417 = vadd.f32 %v3032, %v3416
    %v3418 = vpop.f32.mrf.mxu0
    %3419 = vmatprep.mubr.f32.mxu0 %v1715
    %3420 = vmatmul.mubr.f32.gmra.mxu0 %v1714
    %v3421 = vpop.f32.mrf.mxu0
    %v3422 = vadd.f32 %v3037, %v3421
    %v3423 = vpop.f32.mrf.mxu0
    %3424 = vmatprep.mubr.f32.mxu0 %v1724
    %3425 = vmatmul.mubr.f32.gmra.mxu0 %v1723
    %v3426 = vpop.f32.mrf.mxu0
    %v3427 = vadd.f32 %v3042, %v3426
    %v3428 = vpop.f32.mrf.mxu0
    %3429 = vmatprep.mubr.f32.mxu0 %v1733
    %3430 = vmatmul.mubr.f32.gmra.mxu0 %v1732
    %v3431 = vpop.f32.mrf.mxu0
    %v3432 = vadd.f32 %v3047, %v3431
    %v3433 = vpop.f32.mrf.mxu0
    %3434 = vmatprep.mubr.f32.mxu0 %v1742
    %3435 = vmatmul.mubr.f32.gmra.mxu0 %v1741
    %v3436 = vpop.f32.mrf.mxu0
    %v3437 = vadd.f32 %v3052, %v3436
    %v3438 = vpop.f32.mrf.mxu0
    %3439 = vmatprep.mubr.f32.mxu0 %v1751
    %3440 = vmatmul.mubr.f32.gmra.mxu0 %v1750
    %v3441 = vpop.f32.mrf.mxu0
    %v3442 = vadd.f32 %v3057, %v3441
    %v3443 = vpop.f32.mrf.mxu0
    %3444 = vmatprep.mubr.f32.mxu0 %v1760
    %3445 = vmatmul.mubr.f32.gmra.mxu0 %v1759
    %v3446 = vpop.f32.mrf.mxu0
    %v3447 = vadd.f32 %v3062, %v3446
    %v3448 = vpop.f32.mrf.mxu0
    %3449 = vmatprep.mubr.f32.mxu0 %v1769
    %3450 = vmatmul.mubr.f32.gmra.mxu0 %v1768
    %v3451 = vpop.f32.mrf.mxu0
    %v3452 = vadd.f32 %v3067, %v3451
    %v3453 = vpop.f32.mrf.mxu0
    %3454 = vdwg.mxu0
    %3455 = vmatprep.subr.mxu0 0.0
    %3456 = vmatpush1.msra.mxu0 %v1914
    %3457 = vmatprep.subr.mxu0 0.0
    %3458 = vmatpush1.msra.mxu0 %v1913
    %3459 = vmatprep.subr.mxu0 0.0
    %3460 = vmatpush1.msra.mxu0 %v1912
    %3461 = vmatprep.subr.mxu0 0.0
    %3462 = vmatpush1.msra.mxu0 %v1911
    %3463 = vmatprep.subr.mxu0 0.0
    %3464 = vmatpush1.msra.mxu0 %v1910
    %3465 = vmatprep.subr.mxu0 0.0
    %3466 = vmatpush1.msra.mxu0 %v1909
    %3467 = vmatprep.subr.mxu0 0.0
    %3468 = vmatpush1.msra.mxu0 %v1908
    %3469 = vmatprep.subr.mxu0 0.0
    %3470 = vmatpush1.msra.mxu0 %v1907
    %3471 = vmatprep.subr.mxu0 0.0
    %3472 = vmatpush1.msra.mxu0 %v1906
    %3473 = vmatprep.subr.mxu0 0.0
    %3474 = vmatpush1.msra.mxu0 %v1905
    %3475 = vmatprep.subr.mxu0 0.0
    %3476 = vmatpush1.msra.mxu0 %v1904
    %3477 = vmatprep.subr.mxu0 0.0
    %3478 = vmatpush1.msra.mxu0 %v1903
    %3479 = vmatprep.subr.mxu0 0.0
    %3480 = vmatpush1.msra.mxu0 %v1902
    %3481 = vmatprep.subr.mxu0 0.0
    %3482 = vmatpush1.msra.mxu0 %v1901
    %3483 = vmatprep.subr.mxu0 0.0
    %3484 = vmatpush1.msra.mxu0 %v1900
    %3485 = vmatprep.subr.mxu0 0.0
    %3486 = vmatpush1.msra.mxu0 %v1899
    %3487 = vmatprep.subr.mxu0 0.0
    %3488 = vmatpush2.msra.mxu0 0.0
    %3489 = vmatprep.subr.mxu0 0.0
    %3490 = vmatpush2.msra.mxu0 0.0
    %3491 = vmatprep.subr.mxu0 0.0
    %3492 = vmatpush2.msra.mxu0 0.0
    %3493 = vmatprep.subr.mxu0 0.0
    %3494 = vmatpush2.msra.mxu0 0.0
    %3495 = vmatprep.subr.mxu0 0.0
    %3496 = vmatpush2.msra.mxu0 0.0
    %3497 = vmatprep.subr.mxu0 0.0
    %3498 = vmatpush2.msra.mxu0 0.0
    %3499 = vmatprep.subr.mxu0 0.0
    %3500 = vmatpush2.msra.mxu0 0.0
    %3501 = vmatprep.subr.mxu0 0.0
    %3502 = vmatpush2.msra.mxu0 0.0
    %3503 = vmatprep.subr.mxu0 0.0
    %3504 = vmatpush2.msra.mxu0 0.0
    %3505 = vmatprep.subr.mxu0 0.0
    %3506 = vmatpush2.msra.mxu0 0.0
    %3507 = vmatprep.subr.mxu0 0.0
    %3508 = vmatpush2.msra.mxu0 0.0
    %3509 = vmatprep.subr.mxu0 0.0
    %3510 = vmatpush2.msra.mxu0 0.0
    %3511 = vmatprep.subr.mxu0 0.0
    %3512 = vmatpush2.msra.mxu0 0.0
    %3513 = vmatprep.subr.mxu0 0.0
    %3514 = vmatpush2.msra.mxu0 0.0
    %3515 = vmatprep.subr.mxu0 0.0
    %3516 = vmatpush2.msra.mxu0 0.0
    %3517 = vmatprep.subr.mxu0 0.0
    %3518 = vmatpush2.msra.mxu0 0.0
    %3519 = vmatprep.mubr.f32.mxu0 0.0
    %3520 = vmatmul.mubr.f32.gmra.mxu0 %v1203
    %v3521 = vpop.f32.mrf.mxu0
    %v3522 = vadd.f32 %v3137, %v3521
    %v3523 = vpop.f32.mrf.mxu0
    %3524 = vmatprep.mubr.f32.mxu0 0.0
    %3525 = vmatmul.mubr.f32.gmra.mxu0 %v1212
    %v3526 = vpop.f32.mrf.mxu0
    %v3527 = vadd.f32 %v3142, %v3526
    %v3528 = vpop.f32.mrf.mxu0
    %3529 = vmatprep.mubr.f32.mxu0 0.0
    %3530 = vmatmul.mubr.f32.gmra.mxu0 %v1221
    %v3531 = vpop.f32.mrf.mxu0
    %v3532 = vadd.f32 %v3147, %v3531
    %v3533 = vpop.f32.mrf.mxu0
    %3534 = vmatprep.mubr.f32.mxu0 0.0
    %3535 = vmatmul.mubr.f32.gmra.mxu0 %v1230
    %v3536 = vpop.f32.mrf.mxu0
    %v3537 = vadd.f32 %v3152, %v3536
    %v3538 = vpop.f32.mrf.mxu0
    %3539 = vmatprep.mubr.f32.mxu0 0.0
    %3540 = vmatmul.mubr.f32.gmra.mxu0 %v1239
    %v3541 = vpop.f32.mrf.mxu0
    %v3542 = vadd.f32 %v3157, %v3541
    %v3543 = vpop.f32.mrf.mxu0
    %3544 = vmatprep.mubr.f32.mxu0 0.0
    %3545 = vmatmul.mubr.f32.gmra.mxu0 %v1248
    %v3546 = vpop.f32.mrf.mxu0
    %v3547 = vadd.f32 %v3162, %v3546
    %v3548 = vpop.f32.mrf.mxu0
    %3549 = vmatprep.mubr.f32.mxu0 0.0
    %3550 = vmatmul.mubr.f32.gmra.mxu0 %v1257
    %v3551 = vpop.f32.mrf.mxu0
    %v3552 = vadd.f32 %v3167, %v3551
    %v3553 = vpop.f32.mrf.mxu0
    %3554 = vmatprep.mubr.f32.mxu0 0.0
    %3555 = vmatmul.mubr.f32.gmra.mxu0 %v1266
    %v3556 = vpop.f32.mrf.mxu0
    %v3557 = vadd.f32 %v3172, %v3556
    %v3558 = vpop.f32.mrf.mxu0
    %3559 = vmatprep.mubr.f32.mxu0 0.0
    %3560 = vmatmul.mubr.f32.gmra.mxu0 %v1275
    %v3561 = vpop.f32.mrf.mxu0
    %v3562 = vadd.f32 %v3177, %v3561
    %v3563 = vpop.f32.mrf.mxu0
    %3564 = vmatprep.mubr.f32.mxu0 0.0
    %3565 = vmatmul.mubr.f32.gmra.mxu0 %v1284
    %v3566 = vpop.f32.mrf.mxu0
    %v3567 = vadd.f32 %v3182, %v3566
    %v3568 = vpop.f32.mrf.mxu0
    %3569 = vmatprep.mubr.f32.mxu0 0.0
    %3570 = vmatmul.mubr.f32.gmra.mxu0 %v1293
    %v3571 = vpop.f32.mrf.mxu0
    %v3572 = vadd.f32 %v3187, %v3571
    %v3573 = vpop.f32.mrf.mxu0
    %3574 = vmatprep.mubr.f32.mxu0 0.0
    %3575 = vmatmul.mubr.f32.gmra.mxu0 %v1302
    %v3576 = vpop.f32.mrf.mxu0
    %v3577 = vadd.f32 %v3192, %v3576
    %v3578 = vpop.f32.mrf.mxu0
    %3579 = vmatprep.mubr.f32.mxu0 0.0
    %3580 = vmatmul.mubr.f32.gmra.mxu0 %v1311
    %v3581 = vpop.f32.mrf.mxu0
    %v3582 = vadd.f32 %v3197, %v3581
    %v3583 = vpop.f32.mrf.mxu0
    %3584 = vmatprep.mubr.f32.mxu0 0.0
    %3585 = vmatmul.mubr.f32.gmra.mxu0 %v1320
    %v3586 = vpop.f32.mrf.mxu0
    %v3587 = vadd.f32 %v3202, %v3586
    %v3588 = vpop.f32.mrf.mxu0
    %3589 = vmatprep.mubr.f32.mxu0 0.0
    %3590 = vmatmul.mubr.f32.gmra.mxu0 %v1329
    %v3591 = vpop.f32.mrf.mxu0
    %v3592 = vadd.f32 %v3207, %v3591
    %v3593 = vpop.f32.mrf.mxu0
    %3594 = vmatprep.mubr.f32.mxu0 0.0
    %3595 = vmatmul.mubr.f32.gmra.mxu0 %v1338
    %v3596 = vpop.f32.mrf.mxu0
    %v3597 = vadd.f32 %v3212, %v3596
    %v3598 = vpop.f32.mrf.mxu0
    %3599 = vmatprep.mubr.f32.mxu0 0.0
    %3600 = vmatmul.mubr.f32.gmra.mxu0 %v1347
    %v3601 = vpop.f32.mrf.mxu0
    %v3602 = vadd.f32 %v3217, %v3601
    %v3603 = vpop.f32.mrf.mxu0
    %3604 = vmatprep.mubr.f32.mxu0 0.0
    %3605 = vmatmul.mubr.f32.gmra.mxu0 %v1356
    %v3606 = vpop.f32.mrf.mxu0
    %v3607 = vadd.f32 %v3222, %v3606
    %v3608 = vpop.f32.mrf.mxu0
    %3609 = vmatprep.mubr.f32.mxu0 0.0
    %3610 = vmatmul.mubr.f32.gmra.mxu0 %v1365
    %v3611 = vpop.f32.mrf.mxu0
    %v3612 = vadd.f32 %v3227, %v3611
    %v3613 = vpop.f32.mrf.mxu0
    %3614 = vmatprep.mubr.f32.mxu0 0.0
    %3615 = vmatmul.mubr.f32.gmra.mxu0 %v1374
    %v3616 = vpop.f32.mrf.mxu0
    %v3617 = vadd.f32 %v3232, %v3616
    %v3618 = vpop.f32.mrf.mxu0
    %3619 = vmatprep.mubr.f32.mxu0 0.0
    %3620 = vmatmul.mubr.f32.gmra.mxu0 %v1383
    %v3621 = vpop.f32.mrf.mxu0
    %v3622 = vadd.f32 %v3237, %v3621
    %v3623 = vpop.f32.mrf.mxu0
    %3624 = vmatprep.mubr.f32.mxu0 0.0
    %3625 = vmatmul.mubr.f32.gmra.mxu0 %v1392
    %v3626 = vpop.f32.mrf.mxu0
    %v3627 = vadd.f32 %v3242, %v3626
    %v3628 = vpop.f32.mrf.mxu0
    %3629 = vmatprep.mubr.f32.mxu0 0.0
    %3630 = vmatmul.mubr.f32.gmra.mxu0 %v1401
    %v3631 = vpop.f32.mrf.mxu0
    %v3632 = vadd.f32 %v3247, %v3631
    %v3633 = vpop.f32.mrf.mxu0
    %3634 = vmatprep.mubr.f32.mxu0 0.0
    %3635 = vmatmul.mubr.f32.gmra.mxu0 %v1410
    %v3636 = vpop.f32.mrf.mxu0
    %v3637 = vadd.f32 %v3252, %v3636
    %v3638 = vpop.f32.mrf.mxu0
    %3639 = vmatprep.mubr.f32.mxu0 0.0
    %3640 = vmatmul.mubr.f32.gmra.mxu0 %v1419
    %v3641 = vpop.f32.mrf.mxu0
    %v3642 = vadd.f32 %v3257, %v3641
    %v3643 = vpop.f32.mrf.mxu0
    %3644 = vmatprep.mubr.f32.mxu0 0.0
    %3645 = vmatmul.mubr.f32.gmra.mxu0 %v1428
    %v3646 = vpop.f32.mrf.mxu0
    %v3647 = vadd.f32 %v3262, %v3646
    %v3648 = vpop.f32.mrf.mxu0
    %3649 = vmatprep.mubr.f32.mxu0 0.0
    %3650 = vmatmul.mubr.f32.gmra.mxu0 %v1437
    %v3651 = vpop.f32.mrf.mxu0
    %v3652 = vadd.f32 %v3267, %v3651
    %v3653 = vpop.f32.mrf.mxu0
    %3654 = vmatprep.mubr.f32.mxu0 0.0
    %3655 = vmatmul.mubr.f32.gmra.mxu0 %v1446
    %v3656 = vpop.f32.mrf.mxu0
    %v3657 = vadd.f32 %v3272, %v3656
    %v3658 = vpop.f32.mrf.mxu0
    %3659 = vmatprep.mubr.f32.mxu0 0.0
    %3660 = vmatmul.mubr.f32.gmra.mxu0 %v1455
    %v3661 = vpop.f32.mrf.mxu0
    %v3662 = vadd.f32 %v3277, %v3661
    %v3663 = vpop.f32.mrf.mxu0
    %3664 = vmatprep.mubr.f32.mxu0 0.0
    %3665 = vmatmul.mubr.f32.gmra.mxu0 %v1464
    %v3666 = vpop.f32.mrf.mxu0
    %v3667 = vadd.f32 %v3282, %v3666
    %v3668 = vpop.f32.mrf.mxu0
    %3669 = vmatprep.mubr.f32.mxu0 0.0
    %3670 = vmatmul.mubr.f32.gmra.mxu0 %v1473
    %v3671 = vpop.f32.mrf.mxu0
    %v3672 = vadd.f32 %v3287, %v3671
    %v3673 = vpop.f32.mrf.mxu0
    %3674 = vmatprep.mubr.f32.mxu0 0.0
    %3675 = vmatmul.mubr.f32.gmra.mxu0 %v1482
    %v3676 = vpop.f32.mrf.mxu0
    %v3677 = vadd.f32 %v3292, %v3676
    %v3678 = vpop.f32.mrf.mxu0
    %3679 = vmatprep.mubr.f32.mxu0 0.0
    %3680 = vmatmul.mubr.f32.gmra.mxu0 %v1491
    %v3681 = vpop.f32.mrf.mxu0
    %v3682 = vadd.f32 %v3297, %v3681
    %v3683 = vpop.f32.mrf.mxu0
    %3684 = vmatprep.mubr.f32.mxu0 0.0
    %3685 = vmatmul.mubr.f32.gmra.mxu0 %v1500
    %v3686 = vpop.f32.mrf.mxu0
    %v3687 = vadd.f32 %v3302, %v3686
    %v3688 = vpop.f32.mrf.mxu0
    %3689 = vmatprep.mubr.f32.mxu0 0.0
    %3690 = vmatmul.mubr.f32.gmra.mxu0 %v1509
    %v3691 = vpop.f32.mrf.mxu0
    %v3692 = vadd.f32 %v3307, %v3691
    %v3693 = vpop.f32.mrf.mxu0
    %3694 = vmatprep.mubr.f32.mxu0 0.0
    %3695 = vmatmul.mubr.f32.gmra.mxu0 %v1518
    %v3696 = vpop.f32.mrf.mxu0
    %v3697 = vadd.f32 %v3312, %v3696
    %v3698 = vpop.f32.mrf.mxu0
    %3699 = vmatprep.mubr.f32.mxu0 0.0
    %3700 = vmatmul.mubr.f32.gmra.mxu0 %v1527
    %v3701 = vpop.f32.mrf.mxu0
    %v3702 = vadd.f32 %v3317, %v3701
    %v3703 = vpop.f32.mrf.mxu0
    %3704 = vmatprep.mubr.f32.mxu0 0.0
    %3705 = vmatmul.mubr.f32.gmra.mxu0 %v1536
    %v3706 = vpop.f32.mrf.mxu0
    %v3707 = vadd.f32 %v3322, %v3706
    %v3708 = vpop.f32.mrf.mxu0
    %3709 = vmatprep.mubr.f32.mxu0 0.0
    %3710 = vmatmul.mubr.f32.gmra.mxu0 %v1545
    %v3711 = vpop.f32.mrf.mxu0
    %v3712 = vadd.f32 %v3327, %v3711
    %v3713 = vpop.f32.mrf.mxu0
    %3714 = vmatprep.mubr.f32.mxu0 0.0
    %3715 = vmatmul.mubr.f32.gmra.mxu0 %v1554
    %v3716 = vpop.f32.mrf.mxu0
    %v3717 = vadd.f32 %v3332, %v3716
    %v3718 = vpop.f32.mrf.mxu0
    %3719 = vmatprep.mubr.f32.mxu0 0.0
    %3720 = vmatmul.mubr.f32.gmra.mxu0 %v1563
    %v3721 = vpop.f32.mrf.mxu0
    %v3722 = vadd.f32 %v3337, %v3721
    %v3723 = vpop.f32.mrf.mxu0
    %3724 = vmatprep.mubr.f32.mxu0 0.0
    %3725 = vmatmul.mubr.f32.gmra.mxu0 %v1572
    %v3726 = vpop.f32.mrf.mxu0
    %v3727 = vadd.f32 %v3342, %v3726
    %v3728 = vpop.f32.mrf.mxu0
    %3729 = vmatprep.mubr.f32.mxu0 0.0
    %3730 = vmatmul.mubr.f32.gmra.mxu0 %v1581
    %v3731 = vpop.f32.mrf.mxu0
    %v3732 = vadd.f32 %v3347, %v3731
    %v3733 = vpop.f32.mrf.mxu0
    %3734 = vmatprep.mubr.f32.mxu0 0.0
    %3735 = vmatmul.mubr.f32.gmra.mxu0 %v1590
    %v3736 = vpop.f32.mrf.mxu0
    %v3737 = vadd.f32 %v3352, %v3736
    %v3738 = vpop.f32.mrf.mxu0
    %3739 = vmatprep.mubr.f32.mxu0 0.0
    %3740 = vmatmul.mubr.f32.gmra.mxu0 %v1599
    %v3741 = vpop.f32.mrf.mxu0
    %v3742 = vadd.f32 %v3357, %v3741
    %v3743 = vpop.f32.mrf.mxu0
    %3744 = vmatprep.mubr.f32.mxu0 0.0
    %3745 = vmatmul.mubr.f32.gmra.mxu0 %v1608
    %v3746 = vpop.f32.mrf.mxu0
    %v3747 = vadd.f32 %v3362, %v3746
    %v3748 = vpop.f32.mrf.mxu0
    %3749 = vmatprep.mubr.f32.mxu0 0.0
    %3750 = vmatmul.mubr.f32.gmra.mxu0 %v1617
    %v3751 = vpop.f32.mrf.mxu0
    %v3752 = vadd.f32 %v3367, %v3751
    %v3753 = vpop.f32.mrf.mxu0
    %3754 = vmatprep.mubr.f32.mxu0 0.0
    %3755 = vmatmul.mubr.f32.gmra.mxu0 %v1626
    %v3756 = vpop.f32.mrf.mxu0
    %v3757 = vadd.f32 %v3372, %v3756
    %v3758 = vpop.f32.mrf.mxu0
    %3759 = vmatprep.mubr.f32.mxu0 0.0
    %3760 = vmatmul.mubr.f32.gmra.mxu0 %v1635
    %v3761 = vpop.f32.mrf.mxu0
    %v3762 = vadd.f32 %v3377, %v3761
    %v3763 = vpop.f32.mrf.mxu0
    %3764 = vmatprep.mubr.f32.mxu0 0.0
    %3765 = vmatmul.mubr.f32.gmra.mxu0 %v1644
    %v3766 = vpop.f32.mrf.mxu0
    %v3767 = vadd.f32 %v3382, %v3766
    %v3768 = vpop.f32.mrf.mxu0
    %3769 = vmatprep.mubr.f32.mxu0 0.0
    %3770 = vmatmul.mubr.f32.gmra.mxu0 %v1653
    %v3771 = vpop.f32.mrf.mxu0
    %v3772 = vadd.f32 %v3387, %v3771
    %v3773 = vpop.f32.mrf.mxu0
    %3774 = vmatprep.mubr.f32.mxu0 0.0
    %3775 = vmatmul.mubr.f32.gmra.mxu0 %v1662
    %v3776 = vpop.f32.mrf.mxu0
    %v3777 = vadd.f32 %v3392, %v3776
    %v3778 = vpop.f32.mrf.mxu0
    %3779 = vmatprep.mubr.f32.mxu0 0.0
    %3780 = vmatmul.mubr.f32.gmra.mxu0 %v1671
    %v3781 = vpop.f32.mrf.mxu0
    %v3782 = vadd.f32 %v3397, %v3781
    %v3783 = vpop.f32.mrf.mxu0
    %3784 = vmatprep.mubr.f32.mxu0 0.0
    %3785 = vmatmul.mubr.f32.gmra.mxu0 %v1680
    %v3786 = vpop.f32.mrf.mxu0
    %v3787 = vadd.f32 %v3402, %v3786
    %v3788 = vpop.f32.mrf.mxu0
    %3789 = vmatprep.mubr.f32.mxu0 0.0
    %3790 = vmatmul.mubr.f32.gmra.mxu0 %v1689
    %v3791 = vpop.f32.mrf.mxu0
    %v3792 = vadd.f32 %v3407, %v3791
    %v3793 = vpop.f32.mrf.mxu0
    %3794 = vmatprep.mubr.f32.mxu0 0.0
    %3795 = vmatmul.mubr.f32.gmra.mxu0 %v1698
    %v3796 = vpop.f32.mrf.mxu0
    %v3797 = vadd.f32 %v3412, %v3796
    %v3798 = vpop.f32.mrf.mxu0
    %3799 = vmatprep.mubr.f32.mxu0 0.0
    %3800 = vmatmul.mubr.f32.gmra.mxu0 %v1707
    %v3801 = vpop.f32.mrf.mxu0
    %v3802 = vadd.f32 %v3417, %v3801
    %v3803 = vpop.f32.mrf.mxu0
    %3804 = vmatprep.mubr.f32.mxu0 0.0
    %3805 = vmatmul.mubr.f32.gmra.mxu0 %v1716
    %v3806 = vpop.f32.mrf.mxu0
    %v3807 = vadd.f32 %v3422, %v3806
    %v3808 = vpop.f32.mrf.mxu0
    %3809 = vmatprep.mubr.f32.mxu0 0.0
    %3810 = vmatmul.mubr.f32.gmra.mxu0 %v1725
    %v3811 = vpop.f32.mrf.mxu0
    %v3812 = vadd.f32 %v3427, %v3811
    %v3813 = vpop.f32.mrf.mxu0
    %3814 = vmatprep.mubr.f32.mxu0 0.0
    %3815 = vmatmul.mubr.f32.gmra.mxu0 %v1734
    %v3816 = vpop.f32.mrf.mxu0
    %v3817 = vadd.f32 %v3432, %v3816
    %v3818 = vpop.f32.mrf.mxu0
    %3819 = vmatprep.mubr.f32.mxu0 0.0
    %3820 = vmatmul.mubr.f32.gmra.mxu0 %v1743
    %v3821 = vpop.f32.mrf.mxu0
    %v3822 = vadd.f32 %v3437, %v3821
    %v3823 = vpop.f32.mrf.mxu0
    %3824 = vmatprep.mubr.f32.mxu0 0.0
    %3825 = vmatmul.mubr.f32.gmra.mxu0 %v1752
    %v3826 = vpop.f32.mrf.mxu0
    %v3827 = vadd.f32 %v3442, %v3826
    %v3828 = vpop.f32.mrf.mxu0
    %3829 = vmatprep.mubr.f32.mxu0 0.0
    %3830 = vmatmul.mubr.f32.gmra.mxu0 %v1761
    %v3831 = vpop.f32.mrf.mxu0
    %v3832 = vadd.f32 %v3447, %v3831
    %v3833 = vpop.f32.mrf.mxu0
    %3834 = vmatprep.mubr.f32.mxu0 0.0
    %3835 = vmatmul.mubr.f32.gmra.mxu0 %v1770
    %v3836 = vpop.f32.mrf.mxu0
    %v3837 = vadd.f32 %v3452, %v3836
    %v3838 = vpop.f32.mrf.mxu0
    %3839 = vdwg.mxu0
    %v3840 = vadd.f32 %v3522, %v3527
    %v3841 = vadd.f32 %v3840, %v3532
    %v3842 = vadd.f32 %v3841, %v3537
    %v3843 = vadd.f32 %v3842, %v3542
    %v3844 = vadd.f32 %v3843, %v3547
    %v3845 = vadd.f32 %v3844, %v3552
    %v3846 = vadd.f32 %v3845, %v3557
    %v3847 = vadd.f32 %v3846, %v3562
    %v3848 = vadd.f32 %v3847, %v3567
    %v3849 = vadd.f32 %v3848, %v3572
    %v3850 = vadd.f32 %v3849, %v3577
    %v3851 = vadd.f32 %v3850, %v3582
    %v3852 = vadd.f32 %v3851, %v3587
    %v3853 = vadd.f32 %v3852, %v3592
    %v3854 = vadd.f32 %v3853, %v3597
    %v3855 = vadd.f32 %v3854, %v3602
    %v3856 = vadd.f32 %v3855, %v3607
    %v3857 = vadd.f32 %v3856, %v3612
    %v3858 = vadd.f32 %v3857, %v3617
    %v3859 = vadd.f32 %v3858, %v3622
    %v3860 = vadd.f32 %v3859, %v3627
    %v3861 = vadd.f32 %v3860, %v3632
    %v3862 = vadd.f32 %v3861, %v3637
    %v3863 = vadd.f32 %v3862, %v3642
    %v3864 = vadd.f32 %v3863, %v3647
    %v3865 = vadd.f32 %v3864, %v3652
    %v3866 = vadd.f32 %v3865, %v3657
    %v3867 = vadd.f32 %v3866, %v3662
    %v3868 = vadd.f32 %v3867, %v3667
    %v3869 = vadd.f32 %v3868, %v3672
    %v3870 = vadd.f32 %v3869, %v3677
    %v3871 = vadd.f32 %v3870, %v3682
    %v3872 = vadd.f32 %v3871, %v3687
    %v3873 = vadd.f32 %v3872, %v3692
    %v3874 = vadd.f32 %v3873, %v3697
    %v3875 = vadd.f32 %v3874, %v3702
    %v3876 = vadd.f32 %v3875, %v3707
    %v3877 = vadd.f32 %v3876, %v3712
    %v3878 = vadd.f32 %v3877, %v3717
    %v3879 = vadd.f32 %v3878, %v3722
    %v3880 = vadd.f32 %v3879, %v3727
    %v3881 = vadd.f32 %v3880, %v3732
    %v3882 = vadd.f32 %v3881, %v3737
    %v3883 = vadd.f32 %v3882, %v3742
    %v3884 = vadd.f32 %v3883, %v3747
    %v3885 = vadd.f32 %v3884, %v3752
    %v3886 = vadd.f32 %v3885, %v3757
    %v3887 = vadd.f32 %v3886, %v3762
    %v3888 = vadd.f32 %v3887, %v3767
    %v3889 = vadd.f32 %v3888, %v3772
    %v3890 = vadd.f32 %v3889, %v3777
    %v3891 = vadd.f32 %v3890, %v3782
    %v3892 = vadd.f32 %v3891, %v3787
    %v3893 = vadd.f32 %v3892, %v3792
    %v3894 = vadd.f32 %v3893, %v3797
    %v3895 = vadd.f32 %v3894, %v3802
    %v3896 = vadd.f32 %v3895, %v3807
    %v3897 = vadd.f32 %v3896, %v3812
    %v3898 = vadd.f32 %v3897, %v3817
    %v3899 = vadd.f32 %v3898, %v3822
    %v3900 = vadd.f32 %v3899, %v3827
    %v3901 = vadd.f32 %v3900, %v3832
    %v3902 = vadd.f32 %v3901, %v3837
    %v3903 = vrot.slane %v3902, 4
    %v3904 = vadd.f32 %v3902, %v3903
    %v3905 = vrot.slane %v3904, 2
    %v3906 = vadd.f32 %v3904, %v3905
    %v3907 = vrot.slane %v3906, 1
    %v3908 = vadd.f32 %v3906, %v3907
    %v3909 = vmul.f32 %v3522, %v3522
    %v3910 = vmul.f32 %v3527, %v3527
    %v3911 = vmul.f32 %v3532, %v3532
    %v3912 = vmul.f32 %v3537, %v3537
    %v3913 = vmul.f32 %v3542, %v3542
    %v3914 = vmul.f32 %v3547, %v3547
    %v3915 = vmul.f32 %v3552, %v3552
    %v3916 = vmul.f32 %v3557, %v3557
    %v3917 = vmul.f32 %v3562, %v3562
    %v3918 = vmul.f32 %v3567, %v3567
    %v3919 = vmul.f32 %v3572, %v3572
    %v3920 = vmul.f32 %v3577, %v3577
    %v3921 = vmul.f32 %v3582, %v3582
    %v3922 = vmul.f32 %v3587, %v3587
    %v3923 = vmul.f32 %v3592, %v3592
    %v3924 = vmul.f32 %v3597, %v3597
    %v3925 = vmul.f32 %v3602, %v3602
    %v3926 = vmul.f32 %v3607, %v3607
    %v3927 = vmul.f32 %v3612, %v3612
    %v3928 = vmul.f32 %v3617, %v3617
    %v3929 = vmul.f32 %v3622, %v3622
    %v3930 = vmul.f32 %v3627, %v3627
    %v3931 = vmul.f32 %v3632, %v3632
    %v3932 = vmul.f32 %v3637, %v3637
    %v3933 = vmul.f32 %v3642, %v3642
    %v3934 = vmul.f32 %v3647, %v3647
    %v3935 = vmul.f32 %v3652, %v3652
    %v3936 = vmul.f32 %v3657, %v3657
    %v3937 = vmul.f32 %v3662, %v3662
    %v3938 = vmul.f32 %v3667, %v3667
    %v3939 = vmul.f32 %v3672, %v3672
    %v3940 = vmul.f32 %v3677, %v3677
    %v3941 = vmul.f32 %v3682, %v3682
    %v3942 = vmul.f32 %v3687, %v3687
    %v3943 = vmul.f32 %v3692, %v3692
    %v3944 = vmul.f32 %v3697, %v3697
    %v3945 = vmul.f32 %v3702, %v3702
    %v3946 = vmul.f32 %v3707, %v3707
    %v3947 = vmul.f32 %v3712, %v3712
    %v3948 = vmul.f32 %v3717, %v3717
    %v3949 = vmul.f32 %v3722, %v3722
    %v3950 = vmul.f32 %v3727, %v3727
    %v3951 = vmul.f32 %v3732, %v3732
    %v3952 = vmul.f32 %v3737, %v3737
    %v3953 = vmul.f32 %v3742, %v3742
    %v3954 = vmul.f32 %v3747, %v3747
    %v3955 = vmul.f32 %v3752, %v3752
    %v3956 = vmul.f32 %v3757, %v3757
    %v3957 = vmul.f32 %v3762, %v3762
    %v3958 = vmul.f32 %v3767, %v3767
    %v3959 = vmul.f32 %v3772, %v3772
    %v3960 = vmul.f32 %v3777, %v3777
    %v3961 = vmul.f32 %v3782, %v3782
    %v3962 = vmul.f32 %v3787, %v3787
    %v3963 = vmul.f32 %v3792, %v3792
    %v3964 = vmul.f32 %v3797, %v3797
    %v3965 = vmul.f32 %v3802, %v3802
    %v3966 = vmul.f32 %v3807, %v3807
    %v3967 = vmul.f32 %v3812, %v3812
    %v3968 = vmul.f32 %v3817, %v3817
    %v3969 = vmul.f32 %v3822, %v3822
    %v3970 = vmul.f32 %v3827, %v3827
    %v3971 = vmul.f32 %v3832, %v3832
    %v3972 = vmul.f32 %v3837, %v3837
    %v3973 = vadd.f32 %v3909, %v3910
    %v3974 = vadd.f32 %v3973, %v3911
    %v3975 = vadd.f32 %v3974, %v3912
    %v3976 = vadd.f32 %v3975, %v3913
    %v3977 = vadd.f32 %v3976, %v3914
    %v3978 = vadd.f32 %v3977, %v3915
    %v3979 = vadd.f32 %v3978, %v3916
    %v3980 = vadd.f32 %v3979, %v3917
    %v3981 = vadd.f32 %v3980, %v3918
    %v3982 = vadd.f32 %v3981, %v3919
    %v3983 = vadd.f32 %v3982, %v3920
    %v3984 = vadd.f32 %v3983, %v3921
    %v3985 = vadd.f32 %v3984, %v3922
    %v3986 = vadd.f32 %v3985, %v3923
    %v3987 = vadd.f32 %v3986, %v3924
    %v3988 = vadd.f32 %v3987, %v3925
    %v3989 = vadd.f32 %v3988, %v3926
    %v3990 = vadd.f32 %v3989, %v3927
    %v3991 = vadd.f32 %v3990, %v3928
    %v3992 = vadd.f32 %v3991, %v3929
    %v3993 = vadd.f32 %v3992, %v3930
    %v3994 = vadd.f32 %v3993, %v3931
    %v3995 = vadd.f32 %v3994, %v3932
    %v3996 = vadd.f32 %v3995, %v3933
    %v3997 = vadd.f32 %v3996, %v3934
    %v3998 = vadd.f32 %v3997, %v3935
    %v3999 = vadd.f32 %v3998, %v3936
    %v4000 = vadd.f32 %v3999, %v3937
    %v4001 = vadd.f32 %v4000, %v3938
    %v4002 = vadd.f32 %v4001, %v3939
    %v4003 = vadd.f32 %v4002, %v3940
    %v4004 = vadd.f32 %v4003, %v3941
    %v4005 = vadd.f32 %v4004, %v3942
    %v4006 = vadd.f32 %v4005, %v3943
    %v4007 = vadd.f32 %v4006, %v3944
    %v4008 = vadd.f32 %v4007, %v3945
    %v4009 = vadd.f32 %v4008, %v3946
    %v4010 = vadd.f32 %v4009, %v3947
    %v4011 = vadd.f32 %v4010, %v3948
    %v4012 = vadd.f32 %v4011, %v3949
    %v4013 = vadd.f32 %v4012, %v3950
    %v4014 = vadd.f32 %v4013, %v3951
    %v4015 = vadd.f32 %v4014, %v3952
    %v4016 = vadd.f32 %v4015, %v3953
    %v4017 = vadd.f32 %v4016, %v3954
    %v4018 = vadd.f32 %v4017, %v3955
    %v4019 = vadd.f32 %v4018, %v3956
    %v4020 = vadd.f32 %v4019, %v3957
    %v4021 = vadd.f32 %v4020, %v3958
    %v4022 = vadd.f32 %v4021, %v3959
    %v4023 = vadd.f32 %v4022, %v3960
    %v4024 = vadd.f32 %v4023, %v3961
    %v4025 = vadd.f32 %v4024, %v3962
    %v4026 = vadd.f32 %v4025, %v3963
    %v4027 = vadd.f32 %v4026, %v3964
    %v4028 = vadd.f32 %v4027, %v3965
    %v4029 = vadd.f32 %v4028, %v3966
    %v4030 = vadd.f32 %v4029, %v3967
    %v4031 = vadd.f32 %v4030, %v3968
    %v4032 = vadd.f32 %v4031, %v3969
    %v4033 = vadd.f32 %v4032, %v3970
    %v4034 = vadd.f32 %v4033, %v3971
    %v4035 = vadd.f32 %v4034, %v3972
    %v4036 = vrot.slane %v4035, 4
    %v4037 = vadd.f32 %v4035, %v4036
    %v4038 = vrot.slane %v4037, 2
    %v4039 = vadd.f32 %v4037, %v4038
    %v4040 = vrot.slane %v4039, 1
    %v4041 = vadd.f32 %v4039, %v4040
    %v4042 = vmul.f32 %v3908, 0.001953125
    %v4043 = vmul.f32 %v4041, 0.001953125
    %v4044 = vmul.f32 %v4042, %v4042
    %v4045 = vsub.f32 %v4043, %v4044
    %v4046 = vmax.f32 %v4045, 0.0
    %v4047 = vld [vmem:[%s2] sm:$0x1]
    %v4048 = vadd.f32 %v4046, 1e-05
    %v4049 = vrsqrt.pop %v4048
    %v4050 = vmul.f32 %v4047, %v4049
    %v4051 = vld [vmem:[%s3] sm:$0x1]
    %v4052 = vmul.f32 %v4042, %v4050
    %v4053 = vsub.f32 %v4051, %v4052
    %v4055 = vlaneseq
    %v4056 = vshrl.u32 %v4055, 7
    %v4057 = vsub.s32 0, %v4056
    %v4058 = vrot.slane %v4050, %v4057
    %v4060 = vmul.f32 %v3522, %v4058
    %v4061 = vmul.f32 %v3527, %v4058
    %v4062 = vmul.f32 %v3532, %v4058
    %v4063 = vmul.f32 %v3537, %v4058
    %v4064 = vmul.f32 %v3542, %v4058
    %v4065 = vmul.f32 %v3547, %v4058
    %v4066 = vmul.f32 %v3552, %v4058
    %v4067 = vmul.f32 %v3557, %v4058
    %v4068 = vmul.f32 %v3562, %v4058
    %v4069 = vmul.f32 %v3567, %v4058
    %v4070 = vmul.f32 %v3572, %v4058
    %v4071 = vmul.f32 %v3577, %v4058
    %v4072 = vmul.f32 %v3582, %v4058
    %v4073 = vmul.f32 %v3587, %v4058
    %v4074 = vmul.f32 %v3592, %v4058
    %v4075 = vmul.f32 %v3597, %v4058
    %v4076 = vmul.f32 %v3602, %v4058
    %v4077 = vmul.f32 %v3607, %v4058
    %v4078 = vmul.f32 %v3612, %v4058
    %v4079 = vmul.f32 %v3617, %v4058
    %v4080 = vmul.f32 %v3622, %v4058
    %v4081 = vmul.f32 %v3627, %v4058
    %v4082 = vmul.f32 %v3632, %v4058
    %v4083 = vmul.f32 %v3637, %v4058
    %v4084 = vmul.f32 %v3642, %v4058
    %v4085 = vmul.f32 %v3647, %v4058
    %v4086 = vmul.f32 %v3652, %v4058
    %v4087 = vmul.f32 %v3657, %v4058
    %v4088 = vmul.f32 %v3662, %v4058
    %v4089 = vmul.f32 %v3667, %v4058
    %v4090 = vmul.f32 %v3672, %v4058
    %v4091 = vmul.f32 %v3677, %v4058
    %v4092 = vmul.f32 %v3682, %v4058
    %v4093 = vmul.f32 %v3687, %v4058
    %v4094 = vmul.f32 %v3692, %v4058
    %v4095 = vmul.f32 %v3697, %v4058
    %v4096 = vmul.f32 %v3702, %v4058
    %v4097 = vmul.f32 %v3707, %v4058
    %v4098 = vmul.f32 %v3712, %v4058
    %v4099 = vmul.f32 %v3717, %v4058
    %v4100 = vmul.f32 %v3722, %v4058
    %v4101 = vmul.f32 %v3727, %v4058
    %v4102 = vmul.f32 %v3732, %v4058
    %v4103 = vmul.f32 %v3737, %v4058
    %v4104 = vmul.f32 %v3742, %v4058
    %v4105 = vmul.f32 %v3747, %v4058
    %v4106 = vmul.f32 %v3752, %v4058
    %v4107 = vmul.f32 %v3757, %v4058
    %v4108 = vmul.f32 %v3762, %v4058
    %v4109 = vmul.f32 %v3767, %v4058
    %v4110 = vmul.f32 %v3772, %v4058
    %v4111 = vmul.f32 %v3777, %v4058
    %v4112 = vmul.f32 %v3782, %v4058
    %v4113 = vmul.f32 %v3787, %v4058
    %v4114 = vmul.f32 %v3792, %v4058
    %v4115 = vmul.f32 %v3797, %v4058
    %v4116 = vmul.f32 %v3802, %v4058
    %v4117 = vmul.f32 %v3807, %v4058
    %v4118 = vmul.f32 %v3812, %v4058
    %v4119 = vmul.f32 %v3817, %v4058
    %v4120 = vmul.f32 %v3822, %v4058
    %v4121 = vmul.f32 %v3827, %v4058
    %v4122 = vmul.f32 %v3832, %v4058
    %v4123 = vmul.f32 %v3837, %v4058
    %v4125 = vlaneseq
    %v4126 = vshrl.u32 %v4125, 7
    %v4127 = vsub.s32 0, %v4126
    %v4128 = vrot.slane %v4053, %v4127
    %v4130 = vadd.f32 %v4060, %v4128
    %v4131 = vadd.f32 %v4061, %v4128
    %v4132 = vadd.f32 %v4062, %v4128
    %v4133 = vadd.f32 %v4063, %v4128
    %v4134 = vadd.f32 %v4064, %v4128
    %v4135 = vadd.f32 %v4065, %v4128
    %v4136 = vadd.f32 %v4066, %v4128
    %v4137 = vadd.f32 %v4067, %v4128
    %v4138 = vadd.f32 %v4068, %v4128
    %v4139 = vadd.f32 %v4069, %v4128
    %v4140 = vadd.f32 %v4070, %v4128
    %v4141 = vadd.f32 %v4071, %v4128
    %v4142 = vadd.f32 %v4072, %v4128
    %v4143 = vadd.f32 %v4073, %v4128
    %v4144 = vadd.f32 %v4074, %v4128
    %v4145 = vadd.f32 %v4075, %v4128
    %v4146 = vadd.f32 %v4076, %v4128
    %v4147 = vadd.f32 %v4077, %v4128
    %v4148 = vadd.f32 %v4078, %v4128
    %v4149 = vadd.f32 %v4079, %v4128
    %v4150 = vadd.f32 %v4080, %v4128
    %v4151 = vadd.f32 %v4081, %v4128
    %v4152 = vadd.f32 %v4082, %v4128
    %v4153 = vadd.f32 %v4083, %v4128
    %v4154 = vadd.f32 %v4084, %v4128
    %v4155 = vadd.f32 %v4085, %v4128
    %v4156 = vadd.f32 %v4086, %v4128
    %v4157 = vadd.f32 %v4087, %v4128
    %v4158 = vadd.f32 %v4088, %v4128
    %v4159 = vadd.f32 %v4089, %v4128
    %v4160 = vadd.f32 %v4090, %v4128
    %v4161 = vadd.f32 %v4091, %v4128
    %v4162 = vadd.f32 %v4092, %v4128
    %v4163 = vadd.f32 %v4093, %v4128
    %v4164 = vadd.f32 %v4094, %v4128
    %v4165 = vadd.f32 %v4095, %v4128
    %v4166 = vadd.f32 %v4096, %v4128
    %v4167 = vadd.f32 %v4097, %v4128
    %v4168 = vadd.f32 %v4098, %v4128
    %v4169 = vadd.f32 %v4099, %v4128
    %v4170 = vadd.f32 %v4100, %v4128
    %v4171 = vadd.f32 %v4101, %v4128
    %v4172 = vadd.f32 %v4102, %v4128
    %v4173 = vadd.f32 %v4103, %v4128
    %v4174 = vadd.f32 %v4104, %v4128
    %v4175 = vadd.f32 %v4105, %v4128
    %v4176 = vadd.f32 %v4106, %v4128
    %v4177 = vadd.f32 %v4107, %v4128
    %v4178 = vadd.f32 %v4108, %v4128
    %v4179 = vadd.f32 %v4109, %v4128
    %v4180 = vadd.f32 %v4110, %v4128
    %v4181 = vadd.f32 %v4111, %v4128
    %v4182 = vadd.f32 %v4112, %v4128
    %v4183 = vadd.f32 %v4113, %v4128
    %v4184 = vadd.f32 %v4114, %v4128
    %v4185 = vadd.f32 %v4115, %v4128
    %v4186 = vadd.f32 %v4116, %v4128
    %v4187 = vadd.f32 %v4117, %v4128
    %v4188 = vadd.f32 %v4118, %v4128
    %v4189 = vadd.f32 %v4119, %v4128
    %v4190 = vadd.f32 %v4120, %v4128
    %v4191 = vadd.f32 %v4121, %v4128
    %v4192 = vadd.f32 %v4122, %v4128
    %v4193 = vadd.f32 %v4123, %v4128
    %v4194 = vmax.f32 %v4130, 0.0
    %v4195 = vmax.f32 %v4131, 0.0
    %v4196 = vmax.f32 %v4132, 0.0
    %v4197 = vmax.f32 %v4133, 0.0
    %v4198 = vmax.f32 %v4134, 0.0
    %v4199 = vmax.f32 %v4135, 0.0
    %v4200 = vmax.f32 %v4136, 0.0
    %v4201 = vmax.f32 %v4137, 0.0
    %v4202 = vmax.f32 %v4138, 0.0
    %v4203 = vmax.f32 %v4139, 0.0
    %v4204 = vmax.f32 %v4140, 0.0
    %v4205 = vmax.f32 %v4141, 0.0
    %v4206 = vmax.f32 %v4142, 0.0
    %v4207 = vmax.f32 %v4143, 0.0
    %v4208 = vmax.f32 %v4144, 0.0
    %v4209 = vmax.f32 %v4145, 0.0
    %v4210 = vmax.f32 %v4146, 0.0
    %v4211 = vmax.f32 %v4147, 0.0
    %v4212 = vmax.f32 %v4148, 0.0
    %v4213 = vmax.f32 %v4149, 0.0
    %v4214 = vmax.f32 %v4150, 0.0
    %v4215 = vmax.f32 %v4151, 0.0
    %v4216 = vmax.f32 %v4152, 0.0
    %v4217 = vmax.f32 %v4153, 0.0
    %v4218 = vmax.f32 %v4154, 0.0
    %v4219 = vmax.f32 %v4155, 0.0
    %v4220 = vmax.f32 %v4156, 0.0
    %v4221 = vmax.f32 %v4157, 0.0
    %v4222 = vmax.f32 %v4158, 0.0
    %v4223 = vmax.f32 %v4159, 0.0
    %v4224 = vmax.f32 %v4160, 0.0
    %v4225 = vmax.f32 %v4161, 0.0
    %v4226 = vmax.f32 %v4162, 0.0
    %v4227 = vmax.f32 %v4163, 0.0
    %v4228 = vmax.f32 %v4164, 0.0
    %v4229 = vmax.f32 %v4165, 0.0
    %v4230 = vmax.f32 %v4166, 0.0
    %v4231 = vmax.f32 %v4167, 0.0
    %v4232 = vmax.f32 %v4168, 0.0
    %v4233 = vmax.f32 %v4169, 0.0
    %v4234 = vmax.f32 %v4170, 0.0
    %v4235 = vmax.f32 %v4171, 0.0
    %v4236 = vmax.f32 %v4172, 0.0
    %v4237 = vmax.f32 %v4173, 0.0
    %v4238 = vmax.f32 %v4174, 0.0
    %v4239 = vmax.f32 %v4175, 0.0
    %v4240 = vmax.f32 %v4176, 0.0
    %v4241 = vmax.f32 %v4177, 0.0
    %v4242 = vmax.f32 %v4178, 0.0
    %v4243 = vmax.f32 %v4179, 0.0
    %v4244 = vmax.f32 %v4180, 0.0
    %v4245 = vmax.f32 %v4181, 0.0
    %v4246 = vmax.f32 %v4182, 0.0
    %v4247 = vmax.f32 %v4183, 0.0
    %v4248 = vmax.f32 %v4184, 0.0
    %v4249 = vmax.f32 %v4185, 0.0
    %v4250 = vmax.f32 %v4186, 0.0
    %v4251 = vmax.f32 %v4187, 0.0
    %v4252 = vmax.f32 %v4188, 0.0
    %v4253 = vmax.f32 %v4189, 0.0
    %v4254 = vmax.f32 %v4190, 0.0
    %v4255 = vmax.f32 %v4191, 0.0
    %v4256 = vmax.f32 %v4192, 0.0
    %v4257 = vmax.f32 %v4193, 0.0
    %s4258 = scalar_lea.vmem [#allocation2], 24
    %4259 = vst [vmem:[%s4258 + $0x1] sm:$0xff] %v4194
    %4260 = vst [vmem:[%s4258 + $0x9] sm:$0xff] %v4195
    %4261 = vst [vmem:[%s4258 + $0x19] sm:$0xff] %v4196
    %4262 = vst [vmem:[%s4258 + $0x21] sm:$0xff] %v4197
    %4263 = vst [vmem:[%s4258 + $0x31] sm:$0xff] %v4198
    %4264 = vst [vmem:[%s4258 + $0x39] sm:$0xff] %v4199
    %4265 = vst [vmem:[%s4258 + $0x49] sm:$0xff] %v4200
    %4266 = vst [vmem:[%s4258 + $0x51] sm:$0xff] %v4201
    %4267 = vst [vmem:[%s4258 + $0x61] sm:$0xff] %v4202
    %4268 = vst [vmem:[%s4258 + $0x69] sm:$0xff] %v4203
    %4269 = vst [vmem:[%s4258 + $0x79] sm:$0xff] %v4204
    %4270 = vst [vmem:[%s4258 + $0x81] sm:$0xff] %v4205
    %4271 = vst [vmem:[%s4258 + $0x91] sm:$0xff] %v4206
    %4272 = vst [vmem:[%s4258 + $0x99] sm:$0xff] %v4207
    %4273 = vst [vmem:[%s4258 + $0xa9] sm:$0xff] %v4208
    %4274 = vst [vmem:[%s4258 + $0xb1] sm:$0xff] %v4209
    %4275 = vst [vmem:[%s4258 + $0xc1] sm:$0xff] %v4210
    %4276 = vst [vmem:[%s4258 + $0xc9] sm:$0xff] %v4211
    %4277 = vst [vmem:[%s4258 + $0xd9] sm:$0xff] %v4212
    %4278 = vst [vmem:[%s4258 + $0xe1] sm:$0xff] %v4213
    %4279 = vst [vmem:[%s4258 + $0xf1] sm:$0xff] %v4214
    %4280 = vst [vmem:[%s4258 + $0xf9] sm:$0xff] %v4215
    %4281 = vst [vmem:[%s4258 + $0x109] sm:$0xff] %v4216
    %4282 = vst [vmem:[%s4258 + $0x111] sm:$0xff] %v4217
    %4283 = vst [vmem:[%s4258 + $0x121] sm:$0xff] %v4218
    %4284 = vst [vmem:[%s4258 + $0x129] sm:$0xff] %v4219
    %4285 = vst [vmem:[%s4258 + $0x139] sm:$0xff] %v4220
    %4286 = vst [vmem:[%s4258 + $0x141] sm:$0xff] %v4221
    %4287 = vst [vmem:[%s4258 + $0x151] sm:$0xff] %v4222
    %4288 = vst [vmem:[%s4258 + $0x159] sm:$0xff] %v4223
    %4289 = vst [vmem:[%s4258 + $0x169] sm:$0xff] %v4224
    %4290 = vst [vmem:[%s4258 + $0x171] sm:$0xff] %v4225
    %4291 = vst [vmem:[%s4258 + $0x1b1] sm:$0xff] %v4226
    %4292 = vst [vmem:[%s4258 + $0x1b9] sm:$0xff] %v4227
    %4293 = vst [vmem:[%s4258 + $0x1c9] sm:$0xff] %v4228
    %4294 = vst [vmem:[%s4258 + $0x1d1] sm:$0xff] %v4229
    %4295 = vst [vmem:[%s4258 + $0x1e1] sm:$0xff] %v4230
    %4296 = vst [vmem:[%s4258 + $0x1e9] sm:$0xff] %v4231
    %4297 = vst [vmem:[%s4258 + $0x1f9] sm:$0xff] %v4232
    %4298 = vst [vmem:[%s4258 + $0x201] sm:$0xff] %v4233
    %4299 = vst [vmem:[%s4258 + $0x211] sm:$0xff] %v4234
    %4300 = vst [vmem:[%s4258 + $0x219] sm:$0xff] %v4235
    %4301 = vst [vmem:[%s4258 + $0x229] sm:$0xff] %v4236
    %4302 = vst [vmem:[%s4258 + $0x231] sm:$0xff] %v4237
    %4303 = vst [vmem:[%s4258 + $0x241] sm:$0xff] %v4238
    %4304 = vst [vmem:[%s4258 + $0x249] sm:$0xff] %v4239
    %4305 = vst [vmem:[%s4258 + $0x259] sm:$0xff] %v4240
    %4306 = vst [vmem:[%s4258 + $0x261] sm:$0xff] %v4241
    %4307 = vst [vmem:[%s4258 + $0x271] sm:$0xff] %v4242
    %4308 = vst [vmem:[%s4258 + $0x279] sm:$0xff] %v4243
    %4309 = vst [vmem:[%s4258 + $0x289] sm:$0xff] %v4244
    %4310 = vst [vmem:[%s4258 + $0x291] sm:$0xff] %v4245
    %4311 = vst [vmem:[%s4258 + $0x2a1] sm:$0xff] %v4246
    %4312 = vst [vmem:[%s4258 + $0x2a9] sm:$0xff] %v4247
    %4313 = vst [vmem:[%s4258 + $0x2b9] sm:$0xff] %v4248
    %4314 = vst [vmem:[%s4258 + $0x2c1] sm:$0xff] %v4249
    %4315 = vst [vmem:[%s4258 + $0x2d1] sm:$0xff] %v4250
    %4316 = vst [vmem:[%s4258 + $0x2d9] sm:$0xff] %v4251
    %4317 = vst [vmem:[%s4258 + $0x2e9] sm:$0xff] %v4252
    %4318 = vst [vmem:[%s4258 + $0x2f1] sm:$0xff] %v4253
    %4319 = vst [vmem:[%s4258 + $0x301] sm:$0xff] %v4254
    %4320 = vst [vmem:[%s4258 + $0x309] sm:$0xff] %v4255
    %4321 = vst [vmem:[%s4258 + $0x319] sm:$0xff] %v4256
    %4322 = vst [vmem:[%s4258 + $0x321] sm:$0xff] %v4257
    %4323 = vst [vmem:[#allocation2] sm:$0xff] 0.0
    %4324 = vst [vmem:[#allocation2 + $0x8] sm:$0xff] 0.0
    %4325 = vst [vmem:[#allocation2 + $0x10] sm:$0x3] 0.0
    %4326 = vst [vmem:[#allocation2 + $0x1b0] sm:$0xff] 0.0
    %4327 = vst [vmem:[#allocation2 + $0x1b8] sm:$0xff] 0.0
    %4328 = vst [vmem:[#allocation2 + $0x1c0] sm:$0x3] 0.0
    %s4329 = scalar_lea.vmem [#allocation2], 408
    %4330 = vst [vmem:[%s4329] sm:$0xff] 0.0
    %4331 = vst [vmem:[%s4329 + $0x8] sm:$0xff] 0.0
    %4332 = vst [vmem:[%s4329 + $0x10] sm:$0x3] 0.0
    %4333 = vst [vmem:[%s4329 + $0x1b0] sm:$0xff] 0.0
    %4334 = vst [vmem:[%s4329 + $0x1b8] sm:$0xff] 0.0
    %4335 = vst [vmem:[%s4329 + $0x1c0] sm:$0x3] 0.0
    %4336 = vst [vmem:[#allocation2] sm:$0x1] 0.0
    %4337 = vst [vmem:[#allocation2 + $0x18] sm:$0x1] 0.0
    %4338 = vst [vmem:[#allocation2 + $0x30] sm:$0x1] 0.0
    %4339 = vst [vmem:[#allocation2 + $0x48] sm:$0x1] 0.0
    %4340 = vst [vmem:[#allocation2 + $0x60] sm:$0x1] 0.0
    %4341 = vst [vmem:[#allocation2 + $0x78] sm:$0x1] 0.0
    %4342 = vst [vmem:[#allocation2 + $0x90] sm:$0x1] 0.0
    %4343 = vst [vmem:[#allocation2 + $0xa8] sm:$0x1] 0.0
    %4344 = vst [vmem:[#allocation2 + $0xc0] sm:$0x1] 0.0
    %4345 = vst [vmem:[#allocation2 + $0xd8] sm:$0x1] 0.0
    %4346 = vst [vmem:[#allocation2 + $0xf0] sm:$0x1] 0.0
    %4347 = vst [vmem:[#allocation2 + $0x108] sm:$0x1] 0.0
    %4348 = vst [vmem:[#allocation2 + $0x120] sm:$0x1] 0.0
    %4349 = vst [vmem:[#allocation2 + $0x138] sm:$0x1] 0.0
    %4350 = vst [vmem:[#allocation2 + $0x150] sm:$0x1] 0.0
    %4351 = vst [vmem:[#allocation2 + $0x168] sm:$0x1] 0.0
    %4352 = vst [vmem:[#allocation2 + $0x180] sm:$0x1] 0.0
    %4353 = vst [vmem:[#allocation2 + $0x198] sm:$0x1] 0.0
    %4354 = vst [vmem:[#allocation2 + $0x1b0] sm:$0x1] 0.0
    %4355 = vst [vmem:[#allocation2 + $0x1c8] sm:$0x1] 0.0
    %4356 = vst [vmem:[#allocation2 + $0x1e0] sm:$0x1] 0.0
    %4357 = vst [vmem:[#allocation2 + $0x1f8] sm:$0x1] 0.0
    %4358 = vst [vmem:[#allocation2 + $0x210] sm:$0x1] 0.0
    %4359 = vst [vmem:[#allocation2 + $0x228] sm:$0x1] 0.0
    %4360 = vst [vmem:[#allocation2 + $0x240] sm:$0x1] 0.0
    %4361 = vst [vmem:[#allocation2 + $0x258] sm:$0x1] 0.0
    %4362 = vst [vmem:[#allocation2 + $0x270] sm:$0x1] 0.0
    %4363 = vst [vmem:[#allocation2 + $0x288] sm:$0x1] 0.0
    %4364 = vst [vmem:[#allocation2 + $0x2a0] sm:$0x1] 0.0
    %4365 = vst [vmem:[#allocation2 + $0x2b8] sm:$0x1] 0.0
    %4366 = vst [vmem:[#allocation2 + $0x2d0] sm:$0x1] 0.0
    %4367 = vst [vmem:[#allocation2 + $0x2e8] sm:$0x1] 0.0
    %4368 = vst [vmem:[#allocation2 + $0x300] sm:$0x1] 0.0
    %4369 = vst [vmem:[#allocation2 + $0x318] sm:$0x1] 0.0
    %4370 = vst [vmem:[#allocation2 + $0x330] sm:$0x1] 0.0
    %4371 = vst [vmem:[#allocation2 + $0x348] sm:$0x1] 0.0
    %4372 = vst [vmem:[#allocation2 + $0x11] sm:$0x1] 0.0
    %4373 = vst [vmem:[#allocation2 + $0x29] sm:$0x1] 0.0
    %4374 = vst [vmem:[#allocation2 + $0x41] sm:$0x1] 0.0
    %4375 = vst [vmem:[#allocation2 + $0x59] sm:$0x1] 0.0
    %4376 = vst [vmem:[#allocation2 + $0x71] sm:$0x1] 0.0
    %4377 = vst [vmem:[#allocation2 + $0x89] sm:$0x1] 0.0
    %4378 = vst [vmem:[#allocation2 + $0xa1] sm:$0x1] 0.0
    %4379 = vst [vmem:[#allocation2 + $0xb9] sm:$0x1] 0.0
    %4380 = vst [vmem:[#allocation2 + $0xd1] sm:$0x1] 0.0
    %4381 = vst [vmem:[#allocation2 + $0xe9] sm:$0x1] 0.0
    %4382 = vst [vmem:[#allocation2 + $0x101] sm:$0x1] 0.0
    %4383 = vst [vmem:[#allocation2 + $0x119] sm:$0x1] 0.0
    %4384 = vst [vmem:[#allocation2 + $0x131] sm:$0x1] 0.0
    %4385 = vst [vmem:[#allocation2 + $0x149] sm:$0x1] 0.0
    %4386 = vst [vmem:[#allocation2 + $0x161] sm:$0x1] 0.0
    %4387 = vst [vmem:[#allocation2 + $0x179] sm:$0x1] 0.0
    %4388 = vst [vmem:[#allocation2 + $0x191] sm:$0x1] 0.0
    %4389 = vst [vmem:[#allocation2 + $0x1a9] sm:$0x1] 0.0
    %4390 = vst [vmem:[#allocation2 + $0x1c1] sm:$0x1] 0.0
    %4391 = vst [vmem:[#allocation2 + $0x1d9] sm:$0x1] 0.0
    %4392 = vst [vmem:[#allocation2 + $0x1f1] sm:$0x1] 0.0
    %4393 = vst [vmem:[#allocation2 + $0x209] sm:$0x1] 0.0
    %4394 = vst [vmem:[#allocation2 + $0x221] sm:$0x1] 0.0
    %4395 = vst [vmem:[#allocation2 + $0x239] sm:$0x1] 0.0
    %4396 = vst [vmem:[#allocation2 + $0x251] sm:$0x1] 0.0
    %4397 = vst [vmem:[#allocation2 + $0x269] sm:$0x1] 0.0
    %4398 = vst [vmem:[#allocation2 + $0x281] sm:$0x1] 0.0
    %4399 = vst [vmem:[#allocation2 + $0x299] sm:$0x1] 0.0
    %4400 = vst [vmem:[#allocation2 + $0x2b1] sm:$0x1] 0.0
    %4401 = vst [vmem:[#allocation2 + $0x2c9] sm:$0x1] 0.0
    %4402 = vst [vmem:[#allocation2 + $0x2e1] sm:$0x1] 0.0
    %4403 = vst [vmem:[#allocation2 + $0x2f9] sm:$0x1] 0.0
    %4404 = vst [vmem:[#allocation2 + $0x311] sm:$0x1] 0.0
    %4405 = vst [vmem:[#allocation2 + $0x329] sm:$0x1] 0.0
    %4406 = vst [vmem:[#allocation2 + $0x341] sm:$0x1] 0.0
    %4407 = vst [vmem:[#allocation2 + $0x359] sm:$0x1] 0.0
    %v4408 = vld [vmem:[#allocation2] sm:$0xff]
    %v4409 = vld [vmem:[#allocation2 + $0x8] sm:$0xff]
    %v4410 = vld [vmem:[#allocation2 + $0x18] sm:$0xff]
    %v4411 = vld [vmem:[#allocation2 + $0x20] sm:$0xff]
    %v4412 = vld [vmem:[#allocation2 + $0x30] sm:$0xff]
    %v4413 = vld [vmem:[#allocation2 + $0x38] sm:$0xff]
    %v4414 = vld [vmem:[#allocation2 + $0x48] sm:$0xff]
    %v4415 = vld [vmem:[#allocation2 + $0x50] sm:$0xff]
    %v4416 = vld [vmem:[#allocation2 + $0x60] sm:$0xff]
    %v4417 = vld [vmem:[#allocation2 + $0x68] sm:$0xff]
    %v4418 = vld [vmem:[#allocation2 + $0x78] sm:$0xff]
    %v4419 = vld [vmem:[#allocation2 + $0x80] sm:$0xff]
    %v4420 = vld [vmem:[#allocation2 + $0x90] sm:$0xff]
    %v4421 = vld [vmem:[#allocation2 + $0x98] sm:$0xff]
    %v4422 = vld [vmem:[#allocation2 + $0xa8] sm:$0xff]
    %v4423 = vld [vmem:[#allocation2 + $0xb0] sm:$0xff]
    %v4424 = vld [vmem:[#allocation2 + $0xc0] sm:$0xff]
    %v4425 = vld [vmem:[#allocation2 + $0xc8] sm:$0xff]
    %v4426 = vld [vmem:[#allocation2 + $0xd8] sm:$0xff]
    %v4427 = vld [vmem:[#allocation2 + $0xe0] sm:$0xff]
    %v4428 = vld [vmem:[#allocation2 + $0xf0] sm:$0xff]
    %v4429 = vld [vmem:[#allocation2 + $0xf8] sm:$0xff]
    %v4430 = vld [vmem:[#allocation2 + $0x108] sm:$0xff]
    %v4431 = vld [vmem:[#allocation2 + $0x110] sm:$0xff]
    %v4432 = vld [vmem:[#allocation2 + $0x120] sm:$0xff]
    %v4433 = vld [vmem:[#allocation2 + $0x128] sm:$0xff]
    %v4434 = vld [vmem:[#allocation2 + $0x138] sm:$0xff]
    %v4435 = vld [vmem:[#allocation2 + $0x140] sm:$0xff]
    %v4436 = vld [vmem:[#allocation2 + $0x150] sm:$0xff]
    %v4437 = vld [vmem:[#allocation2 + $0x158] sm:$0xff]
    %v4438 = vld [vmem:[#allocation2 + $0x168] sm:$0xff]
    %v4439 = vld [vmem:[#allocation2 + $0x170] sm:$0xff]
    %v4440 = vld [vmem:[#allocation2 + $0x1b0] sm:$0xff]
    %v4441 = vld [vmem:[#allocation2 + $0x1b8] sm:$0xff]
    %v4442 = vld [vmem:[#allocation2 + $0x1c8] sm:$0xff]
    %v4443 = vld [vmem:[#allocation2 + $0x1d0] sm:$0xff]
    %v4444 = vld [vmem:[#allocation2 + $0x1e0] sm:$0xff]
    %v4445 = vld [vmem:[#allocation2 + $0x1e8] sm:$0xff]
    %v4446 = vld [vmem:[#allocation2 + $0x1f8] sm:$0xff]
    %v4447 = vld [vmem:[#allocation2 + $0x200] sm:$0xff]
    %v4448 = vld [vmem:[#allocation2 + $0x210] sm:$0xff]
    %v4449 = vld [vmem:[#allocation2 + $0x218] sm:$0xff]
    %v4450 = vld [vmem:[#allocation2 + $0x228] sm:$0xff]
    %v4451 = vld [vmem:[#allocation2 + $0x230] sm:$0xff]
    %v4452 = vld [vmem:[#allocation2 + $0x240] sm:$0xff]
    %v4453 = vld [vmem:[#allocation2 + $0x248] sm:$0xff]
    %v4454 = vld [vmem:[#allocation2 + $0x258] sm:$0xff]
    %v4455 = vld [vmem:[#allocation2 + $0x260] sm:$0xff]
    %v4456 = vld [vmem:[#allocation2 + $0x270] sm:$0xff]
    %v4457 = vld [vmem:[#allocation2 + $0x278] sm:$0xff]
    %v4458 = vld [vmem:[#allocation2 + $0x288] sm:$0xff]
    %v4459 = vld [vmem:[#allocation2 + $0x290] sm:$0xff]
    %v4460 = vld [vmem:[#allocation2 + $0x2a0] sm:$0xff]
    %v4461 = vld [vmem:[#allocation2 + $0x2a8] sm:$0xff]
    %v4462 = vld [vmem:[#allocation2 + $0x2b8] sm:$0xff]
    %v4463 = vld [vmem:[#allocation2 + $0x2c0] sm:$0xff]
    %v4464 = vld [vmem:[#allocation2 + $0x2d0] sm:$0xff]
    %v4465 = vld [vmem:[#allocation2 + $0x2d8] sm:$0xff]
    %v4466 = vld [vmem:[#allocation2 + $0x2e8] sm:$0xff]
    %v4467 = vld [vmem:[#allocation2 + $0x2f0] sm:$0xff]
    %v4468 = vld [vmem:[#allocation2 + $0x300] sm:$0xff]
    %v4469 = vld [vmem:[#allocation2 + $0x308] sm:$0xff]
    %v4470 = vld [vmem:[#allocation2 + $0x318] sm:$0xff]
    %v4471 = vld [vmem:[#allocation2 + $0x320] sm:$0xff]
    %4472 = vst [vmem:[#allocation3] sm:$0xff] %v4408
    %4473 = vst [vmem:[#allocation3 + $0x48] sm:$0xff] %v4409
    %4474 = vst [vmem:[#allocation3 + $0x90] sm:$0xff] %v4410
    %4475 = vst [vmem:[#allocation3 + $0xd8] sm:$0xff] %v4411
    %4476 = vst [vmem:[#allocation3 + $0x120] sm:$0xff] %v4412
    %4477 = vst [vmem:[#allocation3 + $0x168] sm:$0xff] %v4413
    %4478 = vst [vmem:[#allocation3 + $0x1b0] sm:$0xff] %v4414
    %4479 = vst [vmem:[#allocation3 + $0x1f8] sm:$0xff] %v4415
    %4480 = vst [vmem:[#allocation3 + $0x240] sm:$0xff] %v4416
    %4481 = vst [vmem:[#allocation3 + $0x288] sm:$0xff] %v4417
    %4482 = vst [vmem:[#allocation3 + $0x2d0] sm:$0xff] %v4418
    %4483 = vst [vmem:[#allocation3 + $0x318] sm:$0xff] %v4419
    %4484 = vst [vmem:[#allocation3 + $0x360] sm:$0xff] %v4420
    %4485 = vst [vmem:[#allocation3 + $0x3a8] sm:$0xff] %v4421
    %4486 = vst [vmem:[#allocation3 + $0x3f0] sm:$0xff] %v4422
    %4487 = vst [vmem:[#allocation3 + $0x438] sm:$0xff] %v4423
    %4488 = vst [vmem:[#allocation3 + $0x480] sm:$0xff] %v4424
    %4489 = vst [vmem:[#allocation3 + $0x4c8] sm:$0xff] %v4425
    %4490 = vst [vmem:[#allocation3 + $0x510] sm:$0xff] %v4426
    %4491 = vst [vmem:[#allocation3 + $0x558] sm:$0xff] %v4427
    %4492 = vst [vmem:[#allocation3 + $0x5a0] sm:$0xff] %v4428
    %4493 = vst [vmem:[#allocation3 + $0x5e8] sm:$0xff] %v4429
    %4494 = vst [vmem:[#allocation3 + $0x630] sm:$0xff] %v4430
    %4495 = vst [vmem:[#allocation3 + $0x678] sm:$0xff] %v4431
    %4496 = vst [vmem:[#allocation3 + $0x6c0] sm:$0xff] %v4432
    %4497 = vst [vmem:[#allocation3 + $0x708] sm:$0xff] %v4433
    %4498 = vst [vmem:[#allocation3 + $0x750] sm:$0xff] %v4434
    %4499 = vst [vmem:[#allocation3 + $0x798] sm:$0xff] %v4435
    %4500 = vst [vmem:[#allocation3 + $0x7e0] sm:$0xff] %v4436
    %4501 = vst [vmem:[#allocation3 + $0x828] sm:$0xff] %v4437
    %4502 = vst [vmem:[#allocation3 + $0x870] sm:$0xff] %v4438
    %4503 = vst [vmem:[#allocation3 + $0x8b8] sm:$0xff] %v4439
    %4504 = vst [vmem:[#allocation3 + $0x900] sm:$0xff] %v4440
    %4505 = vst [vmem:[#allocation3 + $0x948] sm:$0xff] %v4441
    %4506 = vst [vmem:[#allocation3 + $0x990] sm:$0xff] %v4442
    %4507 = vst [vmem:[#allocation3 + $0x9d8] sm:$0xff] %v4443
    %4508 = vst [vmem:[#allocation3 + $0xa20] sm:$0xff] %v4444
    %4509 = vst [vmem:[#allocation3 + $0xa68] sm:$0xff] %v4445
    %4510 = vst [vmem:[#allocation3 + $0xab0] sm:$0xff] %v4446
    %4511 = vst [vmem:[#allocation3 + $0xaf8] sm:$0xff] %v4447
    %4512 = vst [vmem:[#allocation3 + $0xb40] sm:$0xff] %v4448
    %4513 = vst [vmem:[#allocation3 + $0xb88] sm:$0xff] %v4449
    %4514 = vst [vmem:[#allocation3 + $0xbd0] sm:$0xff] %v4450
    %4515 = vst [vmem:[#allocation3 + $0xc18] sm:$0xff] %v4451
    %4516 = vst [vmem:[#allocation3 + $0xc60] sm:$0xff] %v4452
    %4517 = vst [vmem:[#allocation3 + $0xca8] sm:$0xff] %v4453
    %4518 = vst [vmem:[#allocation3 + $0xcf0] sm:$0xff] %v4454
    %4519 = vst [vmem:[#allocation3 + $0xd38] sm:$0xff] %v4455
    %4520 = vst [vmem:[#allocation3 + $0xd80] sm:$0xff] %v4456
    %4521 = vst [vmem:[#allocation3 + $0xdc8] sm:$0xff] %v4457
    %4522 = vst [vmem:[#allocation3 + $0xe10] sm:$0xff] %v4458
    %4523 = vst [vmem:[#allocation3 + $0xe58] sm:$0xff] %v4459
    %4524 = vst [vmem:[#allocation3 + $0xea0] sm:$0xff] %v4460
    %4525 = vst [vmem:[#allocation3 + $0xee8] sm:$0xff] %v4461
    %4526 = vst [vmem:[#allocation3 + $0xf30] sm:$0xff] %v4462
    %4527 = vst [vmem:[#allocation3 + $0xf78] sm:$0xff] %v4463
    %4528 = vst [vmem:[#allocation3 + $0xfc0] sm:$0xff] %v4464
    %4529 = vst [vmem:[#allocation3 + $0x1008] sm:$0xff] %v4465
    %4530 = vst [vmem:[#allocation3 + $0x1050] sm:$0xff] %v4466
    %4531 = vst [vmem:[#allocation3 + $0x1098] sm:$0xff] %v4467
    %4532 = vst [vmem:[#allocation3 + $0x10e0] sm:$0xff] %v4468
    %4533 = vst [vmem:[#allocation3 + $0x1128] sm:$0xff] %v4469
    %4534 = vst [vmem:[#allocation3 + $0x1170] sm:$0xff] %v4470
    %4535 = vst [vmem:[#allocation3 + $0x11b8] sm:$0xff] %v4471
    %v4536 = vld [vmem:[#allocation2 + $0x1] sm:$0xff]
    %v4537 = vld [vmem:[#allocation2 + $0x9] sm:$0xff]
    %v4538 = vld [vmem:[#allocation2 + $0x19] sm:$0xff]
    %v4539 = vld [vmem:[#allocation2 + $0x21] sm:$0xff]
    %v4540 = vld [vmem:[#allocation2 + $0x31] sm:$0xff]
    %v4541 = vld [vmem:[#allocation2 + $0x39] sm:$0xff]
    %v4542 = vld [vmem:[#allocation2 + $0x49] sm:$0xff]
    %v4543 = vld [vmem:[#allocation2 + $0x51] sm:$0xff]
    %v4544 = vld [vmem:[#allocation2 + $0x61] sm:$0xff]
    %v4545 = vld [vmem:[#allocation2 + $0x69] sm:$0xff]
    %v4546 = vld [vmem:[#allocation2 + $0x79] sm:$0xff]
    %v4547 = vld [vmem:[#allocation2 + $0x81] sm:$0xff]
    %v4548 = vld [vmem:[#allocation2 + $0x91] sm:$0xff]
    %v4549 = vld [vmem:[#allocation2 + $0x99] sm:$0xff]
    %v4550 = vld [vmem:[#allocation2 + $0xa9] sm:$0xff]
    %v4551 = vld [vmem:[#allocation2 + $0xb1] sm:$0xff]
    %v4552 = vld [vmem:[#allocation2 + $0xc1] sm:$0xff]
    %v4553 = vld [vmem:[#allocation2 + $0xc9] sm:$0xff]
    %v4554 = vld [vmem:[#allocation2 + $0xd9] sm:$0xff]
    %v4555 = vld [vmem:[#allocation2 + $0xe1] sm:$0xff]
    %v4556 = vld [vmem:[#allocation2 + $0xf1] sm:$0xff]
    %v4557 = vld [vmem:[#allocation2 + $0xf9] sm:$0xff]
    %v4558 = vld [vmem:[#allocation2 + $0x109] sm:$0xff]
    %v4559 = vld [vmem:[#allocation2 + $0x111] sm:$0xff]
    %v4560 = vld [vmem:[#allocation2 + $0x121] sm:$0xff]
    %v4561 = vld [vmem:[#allocation2 + $0x129] sm:$0xff]
    %v4562 = vld [vmem:[#allocation2 + $0x139] sm:$0xff]
    %v4563 = vld [vmem:[#allocation2 + $0x141] sm:$0xff]
    %v4564 = vld [vmem:[#allocation2 + $0x151] sm:$0xff]
    %v4565 = vld [vmem:[#allocation2 + $0x159] sm:$0xff]
    %v4566 = vld [vmem:[#allocation2 + $0x169] sm:$0xff]
    %v4567 = vld [vmem:[#allocation2 + $0x171] sm:$0xff]
    %v4568 = vld [vmem:[#allocation2 + $0x1b1] sm:$0xff]
    %v4569 = vld [vmem:[#allocation2 + $0x1b9] sm:$0xff]
    %v4570 = vld [vmem:[#allocation2 + $0x1c9] sm:$0xff]
    %v4571 = vld [vmem:[#allocation2 + $0x1d1] sm:$0xff]
    %v4572 = vld [vmem:[#allocation2 + $0x1e1] sm:$0xff]
    %v4573 = vld [vmem:[#allocation2 + $0x1e9] sm:$0xff]
    %v4574 = vld [vmem:[#allocation2 + $0x1f9] sm:$0xff]
    %v4575 = vld [vmem:[#allocation2 + $0x201] sm:$0xff]
    %v4576 = vld [vmem:[#allocation2 + $0x211] sm:$0xff]
    %v4577 = vld [vmem:[#allocation2 + $0x219] sm:$0xff]
    %v4578 = vld [vmem:[#allocation2 + $0x229] sm:$0xff]
    %v4579 = vld [vmem:[#allocation2 + $0x231] sm:$0xff]
    %v4580 = vld [vmem:[#allocation2 + $0x241] sm:$0xff]
    %v4581 = vld [vmem:[#allocation2 + $0x249] sm:$0xff]
    %v4582 = vld [vmem:[#allocation2 + $0x259] sm:$0xff]
    %v4583 = vld [vmem:[#allocation2 + $0x261] sm:$0xff]
    %v4584 = vld [vmem:[#allocation2 + $0x271] sm:$0xff]
    %v4585 = vld [vmem:[#allocation2 + $0x279] sm:$0xff]
    %v4586 = vld [vmem:[#allocation2 + $0x289] sm:$0xff]
    %v4587 = vld [vmem:[#allocation2 + $0x291] sm:$0xff]
    %v4588 = vld [vmem:[#allocation2 + $0x2a1] sm:$0xff]
    %v4589 = vld [vmem:[#allocation2 + $0x2a9] sm:$0xff]
    %v4590 = vld [vmem:[#allocation2 + $0x2b9] sm:$0xff]
    %v4591 = vld [vmem:[#allocation2 + $0x2c1] sm:$0xff]
    %v4592 = vld [vmem:[#allocation2 + $0x2d1] sm:$0xff]
    %v4593 = vld [vmem:[#allocation2 + $0x2d9] sm:$0xff]
    %v4594 = vld [vmem:[#allocation2 + $0x2e9] sm:$0xff]
    %v4595 = vld [vmem:[#allocation2 + $0x2f1] sm:$0xff]
    %v4596 = vld [vmem:[#allocation2 + $0x301] sm:$0xff]
    %v4597 = vld [vmem:[#allocation2 + $0x309] sm:$0xff]
    %v4598 = vld [vmem:[#allocation2 + $0x319] sm:$0xff]
    %v4599 = vld [vmem:[#allocation2 + $0x321] sm:$0xff]
    %4600 = vst [vmem:[#allocation3 + $0x8] sm:$0xff] %v4536
    %4601 = vst [vmem:[#allocation3 + $0x50] sm:$0xff] %v4537
    %4602 = vst [vmem:[#allocation3 + $0x98] sm:$0xff] %v4538
    %4603 = vst [vmem:[#allocation3 + $0xe0] sm:$0xff] %v4539
    %4604 = vst [vmem:[#allocation3 + $0x128] sm:$0xff] %v4540
    %4605 = vst [vmem:[#allocation3 + $0x170] sm:$0xff] %v4541
    %4606 = vst [vmem:[#allocation3 + $0x1b8] sm:$0xff] %v4542
    %4607 = vst [vmem:[#allocation3 + $0x200] sm:$0xff] %v4543
    %4608 = vst [vmem:[#allocation3 + $0x248] sm:$0xff] %v4544
    %4609 = vst [vmem:[#allocation3 + $0x290] sm:$0xff] %v4545
    %4610 = vst [vmem:[#allocation3 + $0x2d8] sm:$0xff] %v4546
    %4611 = vst [vmem:[#allocation3 + $0x320] sm:$0xff] %v4547
    %4612 = vst [vmem:[#allocation3 + $0x368] sm:$0xff] %v4548
    %4613 = vst [vmem:[#allocation3 + $0x3b0] sm:$0xff] %v4549
    %4614 = vst [vmem:[#allocation3 + $0x3f8] sm:$0xff] %v4550
    %4615 = vst [vmem:[#allocation3 + $0x440] sm:$0xff] %v4551
    %4616 = vst [vmem:[#allocation3 + $0x488] sm:$0xff] %v4552
    %4617 = vst [vmem:[#allocation3 + $0x4d0] sm:$0xff] %v4553
    %4618 = vst [vmem:[#allocation3 + $0x518] sm:$0xff] %v4554
    %4619 = vst [vmem:[#allocation3 + $0x560] sm:$0xff] %v4555
    %4620 = vst [vmem:[#allocation3 + $0x5a8] sm:$0xff] %v4556
    %4621 = vst [vmem:[#allocation3 + $0x5f0] sm:$0xff] %v4557
    %4622 = vst [vmem:[#allocation3 + $0x638] sm:$0xff] %v4558
    %4623 = vst [vmem:[#allocation3 + $0x680] sm:$0xff] %v4559
    %4624 = vst [vmem:[#allocation3 + $0x6c8] sm:$0xff] %v4560
    %4625 = vst [vmem:[#allocation3 + $0x710] sm:$0xff] %v4561
    %4626 = vst [vmem:[#allocation3 + $0x758] sm:$0xff] %v4562
    %4627 = vst [vmem:[#allocation3 + $0x7a0] sm:$0xff] %v4563
    %4628 = vst [vmem:[#allocation3 + $0x7e8] sm:$0xff] %v4564
    %4629 = vst [vmem:[#allocation3 + $0x830] sm:$0xff] %v4565
    %4630 = vst [vmem:[#allocation3 + $0x878] sm:$0xff] %v4566
    %4631 = vst [vmem:[#allocation3 + $0x8c0] sm:$0xff] %v4567
    %4632 = vst [vmem:[#allocation3 + $0x908] sm:$0xff] %v4568
    %4633 = vst [vmem:[#allocation3 + $0x950] sm:$0xff] %v4569
    %4634 = vst [vmem:[#allocation3 + $0x998] sm:$0xff] %v4570
    %4635 = vst [vmem:[#allocation3 + $0x9e0] sm:$0xff] %v4571
    %4636 = vst [vmem:[#allocation3 + $0xa28] sm:$0xff] %v4572
    %4637 = vst [vmem:[#allocation3 + $0xa70] sm:$0xff] %v4573
    %4638 = vst [vmem:[#allocation3 + $0xab8] sm:$0xff] %v4574
    %4639 = vst [vmem:[#allocation3 + $0xb00] sm:$0xff] %v4575
    %4640 = vst [vmem:[#allocation3 + $0xb48] sm:$0xff] %v4576
    %4641 = vst [vmem:[#allocation3 + $0xb90] sm:$0xff] %v4577
    %4642 = vst [vmem:[#allocation3 + $0xbd8] sm:$0xff] %v4578
    %4643 = vst [vmem:[#allocation3 + $0xc20] sm:$0xff] %v4579
    %4644 = vst [vmem:[#allocation3 + $0xc68] sm:$0xff] %v4580
    %4645 = vst [vmem:[#allocation3 + $0xcb0] sm:$0xff] %v4581
    %4646 = vst [vmem:[#allocation3 + $0xcf8] sm:$0xff] %v4582
    %4647 = vst [vmem:[#allocation3 + $0xd40] sm:$0xff] %v4583
    %4648 = vst [vmem:[#allocation3 + $0xd88] sm:$0xff] %v4584
    %4649 = vst [vmem:[#allocation3 + $0xdd0] sm:$0xff] %v4585
    %4650 = vst [vmem:[#allocation3 + $0xe18] sm:$0xff] %v4586
    %4651 = vst [vmem:[#allocation3 + $0xe60] sm:$0xff] %v4587
    %4652 = vst [vmem:[#allocation3 + $0xea8] sm:$0xff] %v4588
    %4653 = vst [vmem:[#allocation3 + $0xef0] sm:$0xff] %v4589
    %4654 = vst [vmem:[#allocation3 + $0xf38] sm:$0xff] %v4590
    %4655 = vst [vmem:[#allocation3 + $0xf80] sm:$0xff] %v4591
    %4656 = vst [vmem:[#allocation3 + $0xfc8] sm:$0xff] %v4592
    %4657 = vst [vmem:[#allocation3 + $0x1010] sm:$0xff] %v4593
    %4658 = vst [vmem:[#allocation3 + $0x1058] sm:$0xff] %v4594
    %4659 = vst [vmem:[#allocation3 + $0x10a0] sm:$0xff] %v4595
    %4660 = vst [vmem:[#allocation3 + $0x10e8] sm:$0xff] %v4596
    %4661 = vst [vmem:[#allocation3 + $0x1130] sm:$0xff] %v4597
    %4662 = vst [vmem:[#allocation3 + $0x1178] sm:$0xff] %v4598
    %4663 = vst [vmem:[#allocation3 + $0x11c0] sm:$0xff] %v4599
    %v4664 = vld [vmem:[#allocation2 + $0x2] sm:$0xff]
    %v4665 = vld [vmem:[#allocation2 + $0xa] sm:$0xff]
    %v4666 = vld [vmem:[#allocation2 + $0x1a] sm:$0xff]
    %v4667 = vld [vmem:[#allocation2 + $0x22] sm:$0xff]
    %v4668 = vld [vmem:[#allocation2 + $0x32] sm:$0xff]
    %v4669 = vld [vmem:[#allocation2 + $0x3a] sm:$0xff]
    %v4670 = vld [vmem:[#allocation2 + $0x4a] sm:$0xff]
    %v4671 = vld [vmem:[#allocation2 + $0x52] sm:$0xff]
    %v4672 = vld [vmem:[#allocation2 + $0x62] sm:$0xff]
    %v4673 = vld [vmem:[#allocation2 + $0x6a] sm:$0xff]
    %v4674 = vld [vmem:[#allocation2 + $0x7a] sm:$0xff]
    %v4675 = vld [vmem:[#allocation2 + $0x82] sm:$0xff]
    %v4676 = vld [vmem:[#allocation2 + $0x92] sm:$0xff]
    %v4677 = vld [vmem:[#allocation2 + $0x9a] sm:$0xff]
    %v4678 = vld [vmem:[#allocation2 + $0xaa] sm:$0xff]
    %v4679 = vld [vmem:[#allocation2 + $0xb2] sm:$0xff]
    %v4680 = vld [vmem:[#allocation2 + $0xc2] sm:$0xff]
    %v4681 = vld [vmem:[#allocation2 + $0xca] sm:$0xff]
    %v4682 = vld [vmem:[#allocation2 + $0xda] sm:$0xff]
    %v4683 = vld [vmem:[#allocation2 + $0xe2] sm:$0xff]
    %v4684 = vld [vmem:[#allocation2 + $0xf2] sm:$0xff]
    %v4685 = vld [vmem:[#allocation2 + $0xfa] sm:$0xff]
    %v4686 = vld [vmem:[#allocation2 + $0x10a] sm:$0xff]
    %v4687 = vld [vmem:[#allocation2 + $0x112] sm:$0xff]
    %v4688 = vld [vmem:[#allocation2 + $0x122] sm:$0xff]
    %v4689 = vld [vmem:[#allocation2 + $0x12a] sm:$0xff]
    %v4690 = vld [vmem:[#allocation2 + $0x13a] sm:$0xff]
    %v4691 = vld [vmem:[#allocation2 + $0x142] sm:$0xff]
    %v4692 = vld [vmem:[#allocation2 + $0x152] sm:$0xff]
    %v4693 = vld [vmem:[#allocation2 + $0x15a] sm:$0xff]
    %v4694 = vld [vmem:[#allocation2 + $0x16a] sm:$0xff]
    %v4695 = vld [vmem:[#allocation2 + $0x172] sm:$0xff]
    %v4696 = vld [vmem:[#allocation2 + $0x1b2] sm:$0xff]
    %v4697 = vld [vmem:[#allocation2 + $0x1ba] sm:$0xff]
    %v4698 = vld [vmem:[#allocation2 + $0x1ca] sm:$0xff]
    %v4699 = vld [vmem:[#allocation2 + $0x1d2] sm:$0xff]
    %v4700 = vld [vmem:[#allocation2 + $0x1e2] sm:$0xff]
    %v4701 = vld [vmem:[#allocation2 + $0x1ea] sm:$0xff]
    %v4702 = vld [vmem:[#allocation2 + $0x1fa] sm:$0xff]
    %v4703 = vld [vmem:[#allocation2 + $0x202] sm:$0xff]
    %v4704 = vld [vmem:[#allocation2 + $0x212] sm:$0xff]
    %v4705 = vld [vmem:[#allocation2 + $0x21a] sm:$0xff]
    %v4706 = vld [vmem:[#allocation2 + $0x22a] sm:$0xff]
    %v4707 = vld [vmem:[#allocation2 + $0x232] sm:$0xff]
    %v4708 = vld [vmem:[#allocation2 + $0x242] sm:$0xff]
    %v4709 = vld [vmem:[#allocation2 + $0x24a] sm:$0xff]
    %v4710 = vld [vmem:[#allocation2 + $0x25a] sm:$0xff]
    %v4711 = vld [vmem:[#allocation2 + $0x262] sm:$0xff]
    %v4712 = vld [vmem:[#allocation2 + $0x272] sm:$0xff]
    %v4713 = vld [vmem:[#allocation2 + $0x27a] sm:$0xff]
    %v4714 = vld [vmem:[#allocation2 + $0x28a] sm:$0xff]
    %v4715 = vld [vmem:[#allocation2 + $0x292] sm:$0xff]
    %v4716 = vld [vmem:[#allocation2 + $0x2a2] sm:$0xff]
    %v4717 = vld [vmem:[#allocation2 + $0x2aa] sm:$0xff]
    %v4718 = vld [vmem:[#allocation2 + $0x2ba] sm:$0xff]
    %v4719 = vld [vmem:[#allocation2 + $0x2c2] sm:$0xff]
    %v4720 = vld [vmem:[#allocation2 + $0x2d2] sm:$0xff]
    %v4721 = vld [vmem:[#allocation2 + $0x2da] sm:$0xff]
    %v4722 = vld [vmem:[#allocation2 + $0x2ea] sm:$0xff]
    %v4723 = vld [vmem:[#allocation2 + $0x2f2] sm:$0xff]
    %v4724 = vld [vmem:[#allocation2 + $0x302] sm:$0xff]
    %v4725 = vld [vmem:[#allocation2 + $0x30a] sm:$0xff]
    %v4726 = vld [vmem:[#allocation2 + $0x31a] sm:$0xff]
    %v4727 = vld [vmem:[#allocation2 + $0x322] sm:$0xff]
    %4728 = vst [vmem:[#allocation3 + $0x10] sm:$0xff] %v4664
    %4729 = vst [vmem:[#allocation3 + $0x58] sm:$0xff] %v4665
    %4730 = vst [vmem:[#allocation3 + $0xa0] sm:$0xff] %v4666
    %4731 = vst [vmem:[#allocation3 + $0xe8] sm:$0xff] %v4667
    %4732 = vst [vmem:[#allocation3 + $0x130] sm:$0xff] %v4668
    %4733 = vst [vmem:[#allocation3 + $0x178] sm:$0xff] %v4669
    %4734 = vst [vmem:[#allocation3 + $0x1c0] sm:$0xff] %v4670
    %4735 = vst [vmem:[#allocation3 + $0x208] sm:$0xff] %v4671
    %4736 = vst [vmem:[#allocation3 + $0x250] sm:$0xff] %v4672
    %4737 = vst [vmem:[#allocation3 + $0x298] sm:$0xff] %v4673
    %4738 = vst [vmem:[#allocation3 + $0x2e0] sm:$0xff] %v4674
    %4739 = vst [vmem:[#allocation3 + $0x328] sm:$0xff] %v4675
    %4740 = vst [vmem:[#allocation3 + $0x370] sm:$0xff] %v4676
    %4741 = vst [vmem:[#allocation3 + $0x3b8] sm:$0xff] %v4677
    %4742 = vst [vmem:[#allocation3 + $0x400] sm:$0xff] %v4678
    %4743 = vst [vmem:[#allocation3 + $0x448] sm:$0xff] %v4679
    %4744 = vst [vmem:[#allocation3 + $0x490] sm:$0xff] %v4680
    %4745 = vst [vmem:[#allocation3 + $0x4d8] sm:$0xff] %v4681
    %4746 = vst [vmem:[#allocation3 + $0x520] sm:$0xff] %v4682
    %4747 = vst [vmem:[#allocation3 + $0x568] sm:$0xff] %v4683
    %4748 = vst [vmem:[#allocation3 + $0x5b0] sm:$0xff] %v4684
    %4749 = vst [vmem:[#allocation3 + $0x5f8] sm:$0xff] %v4685
    %4750 = vst [vmem:[#allocation3 + $0x640] sm:$0xff] %v4686
    %4751 = vst [vmem:[#allocation3 + $0x688] sm:$0xff] %v4687
    %4752 = vst [vmem:[#allocation3 + $0x6d0] sm:$0xff] %v4688
    %4753 = vst [vmem:[#allocation3 + $0x718] sm:$0xff] %v4689
    %4754 = vst [vmem:[#allocation3 + $0x760] sm:$0xff] %v4690
    %4755 = vst [vmem:[#allocation3 + $0x7a8] sm:$0xff] %v4691
    %4756 = vst [vmem:[#allocation3 + $0x7f0] sm:$0xff] %v4692
    %4757 = vst [vmem:[#allocation3 + $0x838] sm:$0xff] %v4693
    %4758 = vst [vmem:[#allocation3 + $0x880] sm:$0xff] %v4694
    %4759 = vst [vmem:[#allocation3 + $0x8c8] sm:$0xff] %v4695
    %4760 = vst [vmem:[#allocation3 + $0x910] sm:$0xff] %v4696
    %4761 = vst [vmem:[#allocation3 + $0x958] sm:$0xff] %v4697
    %4762 = vst [vmem:[#allocation3 + $0x9a0] sm:$0xff] %v4698
    %4763 = vst [vmem:[#allocation3 + $0x9e8] sm:$0xff] %v4699
    %4764 = vst [vmem:[#allocation3 + $0xa30] sm:$0xff] %v4700
    %4765 = vst [vmem:[#allocation3 + $0xa78] sm:$0xff] %v4701
    %4766 = vst [vmem:[#allocation3 + $0xac0] sm:$0xff] %v4702
    %4767 = vst [vmem:[#allocation3 + $0xb08] sm:$0xff] %v4703
    %4768 = vst [vmem:[#allocation3 + $0xb50] sm:$0xff] %v4704
    %4769 = vst [vmem:[#allocation3 + $0xb98] sm:$0xff] %v4705
    %4770 = vst [vmem:[#allocation3 + $0xbe0] sm:$0xff] %v4706
    %4771 = vst [vmem:[#allocation3 + $0xc28] sm:$0xff] %v4707
    %4772 = vst [vmem:[#allocation3 + $0xc70] sm:$0xff] %v4708
    %4773 = vst [vmem:[#allocation3 + $0xcb8] sm:$0xff] %v4709
    %4774 = vst [vmem:[#allocation3 + $0xd00] sm:$0xff] %v4710
    %4775 = vst [vmem:[#allocation3 + $0xd48] sm:$0xff] %v4711
    %4776 = vst [vmem:[#allocation3 + $0xd90] sm:$0xff] %v4712
    %4777 = vst [vmem:[#allocation3 + $0xdd8] sm:$0xff] %v4713
    %4778 = vst [vmem:[#allocation3 + $0xe20] sm:$0xff] %v4714
    %4779 = vst [vmem:[#allocation3 + $0xe68] sm:$0xff] %v4715
    %4780 = vst [vmem:[#allocation3 + $0xeb0] sm:$0xff] %v4716
    %4781 = vst [vmem:[#allocation3 + $0xef8] sm:$0xff] %v4717
    %4782 = vst [vmem:[#allocation3 + $0xf40] sm:$0xff] %v4718
    %4783 = vst [vmem:[#allocation3 + $0xf88] sm:$0xff] %v4719
    %4784 = vst [vmem:[#allocation3 + $0xfd0] sm:$0xff] %v4720
    %4785 = vst [vmem:[#allocation3 + $0x1018] sm:$0xff] %v4721
    %4786 = vst [vmem:[#allocation3 + $0x1060] sm:$0xff] %v4722
    %4787 = vst [vmem:[#allocation3 + $0x10a8] sm:$0xff] %v4723
    %4788 = vst [vmem:[#allocation3 + $0x10f0] sm:$0xff] %v4724
    %4789 = vst [vmem:[#allocation3 + $0x1138] sm:$0xff] %v4725
    %4790 = vst [vmem:[#allocation3 + $0x1180] sm:$0xff] %v4726
    %4791 = vst [vmem:[#allocation3 + $0x11c8] sm:$0xff] %v4727
    %v4792 = vld [vmem:[%s4258] sm:$0xff]
    %v4793 = vld [vmem:[%s4258 + $0x8] sm:$0xff]
    %v4794 = vld [vmem:[%s4258 + $0x18] sm:$0xff]
    %v4795 = vld [vmem:[%s4258 + $0x20] sm:$0xff]
    %v4796 = vld [vmem:[%s4258 + $0x30] sm:$0xff]
    %v4797 = vld [vmem:[%s4258 + $0x38] sm:$0xff]
    %v4798 = vld [vmem:[%s4258 + $0x48] sm:$0xff]
    %v4799 = vld [vmem:[%s4258 + $0x50] sm:$0xff]
    %v4800 = vld [vmem:[%s4258 + $0x60] sm:$0xff]
    %v4801 = vld [vmem:[%s4258 + $0x68] sm:$0xff]
    %v4802 = vld [vmem:[%s4258 + $0x78] sm:$0xff]
    %v4803 = vld [vmem:[%s4258 + $0x80] sm:$0xff]
    %v4804 = vld [vmem:[%s4258 + $0x90] sm:$0xff]
    %v4805 = vld [vmem:[%s4258 + $0x98] sm:$0xff]
    %v4806 = vld [vmem:[%s4258 + $0xa8] sm:$0xff]
    %v4807 = vld [vmem:[%s4258 + $0xb0] sm:$0xff]
    %v4808 = vld [vmem:[%s4258 + $0xc0] sm:$0xff]
    %v4809 = vld [vmem:[%s4258 + $0xc8] sm:$0xff]
    %v4810 = vld [vmem:[%s4258 + $0xd8] sm:$0xff]
    %v4811 = vld [vmem:[%s4258 + $0xe0] sm:$0xff]
    %v4812 = vld [vmem:[%s4258 + $0xf0] sm:$0xff]
    %v4813 = vld [vmem:[%s4258 + $0xf8] sm:$0xff]
    %v4814 = vld [vmem:[%s4258 + $0x108] sm:$0xff]
    %v4815 = vld [vmem:[%s4258 + $0x110] sm:$0xff]
    %v4816 = vld [vmem:[%s4258 + $0x120] sm:$0xff]
    %v4817 = vld [vmem:[%s4258 + $0x128] sm:$0xff]
    %v4818 = vld [vmem:[%s4258 + $0x138] sm:$0xff]
    %v4819 = vld [vmem:[%s4258 + $0x140] sm:$0xff]
    %v4820 = vld [vmem:[%s4258 + $0x150] sm:$0xff]
    %v4821 = vld [vmem:[%s4258 + $0x158] sm:$0xff]
    %v4822 = vld [vmem:[%s4258 + $0x168] sm:$0xff]
    %v4823 = vld [vmem:[%s4258 + $0x170] sm:$0xff]
    %v4824 = vld [vmem:[%s4258 + $0x1b0] sm:$0xff]
    %v4825 = vld [vmem:[%s4258 + $0x1b8] sm:$0xff]
    %v4826 = vld [vmem:[%s4258 + $0x1c8] sm:$0xff]
    %v4827 = vld [vmem:[%s4258 + $0x1d0] sm:$0xff]
    %v4828 = vld [vmem:[%s4258 + $0x1e0] sm:$0xff]
    %v4829 = vld [vmem:[%s4258 + $0x1e8] sm:$0xff]
    %v4830 = vld [vmem:[%s4258 + $0x1f8] sm:$0xff]
    %v4831 = vld [vmem:[%s4258 + $0x200] sm:$0xff]
    %v4832 = vld [vmem:[%s4258 + $0x210] sm:$0xff]
    %v4833 = vld [vmem:[%s4258 + $0x218] sm:$0xff]
    %v4834 = vld [vmem:[%s4258 + $0x228] sm:$0xff]
    %v4835 = vld [vmem:[%s4258 + $0x230] sm:$0xff]
    %v4836 = vld [vmem:[%s4258 + $0x240] sm:$0xff]
    %v4837 = vld [vmem:[%s4258 + $0x248] sm:$0xff]
    %v4838 = vld [vmem:[%s4258 + $0x258] sm:$0xff]
    %v4839 = vld [vmem:[%s4258 + $0x260] sm:$0xff]
    %v4840 = vld [vmem:[%s4258 + $0x270] sm:$0xff]
    %v4841 = vld [vmem:[%s4258 + $0x278] sm:$0xff]
    %v4842 = vld [vmem:[%s4258 + $0x288] sm:$0xff]
    %v4843 = vld [vmem:[%s4258 + $0x290] sm:$0xff]
    %v4844 = vld [vmem:[%s4258 + $0x2a0] sm:$0xff]
    %v4845 = vld [vmem:[%s4258 + $0x2a8] sm:$0xff]
    %v4846 = vld [vmem:[%s4258 + $0x2b8] sm:$0xff]
    %v4847 = vld [vmem:[%s4258 + $0x2c0] sm:$0xff]
    %v4848 = vld [vmem:[%s4258 + $0x2d0] sm:$0xff]
    %v4849 = vld [vmem:[%s4258 + $0x2d8] sm:$0xff]
    %v4850 = vld [vmem:[%s4258 + $0x2e8] sm:$0xff]
    %v4851 = vld [vmem:[%s4258 + $0x2f0] sm:$0xff]
    %v4852 = vld [vmem:[%s4258 + $0x300] sm:$0xff]
    %v4853 = vld [vmem:[%s4258 + $0x308] sm:$0xff]
    %v4854 = vld [vmem:[%s4258 + $0x318] sm:$0xff]
    %v4855 = vld [vmem:[%s4258 + $0x320] sm:$0xff]
    %4856 = vst [vmem:[#allocation3 + $0x18] sm:$0xff] %v4792
    %4857 = vst [vmem:[#allocation3 + $0x60] sm:$0xff] %v4793
    %4858 = vst [vmem:[#allocation3 + $0xa8] sm:$0xff] %v4794
    %4859 = vst [vmem:[#allocation3 + $0xf0] sm:$0xff] %v4795
    %4860 = vst [vmem:[#allocation3 + $0x138] sm:$0xff] %v4796
    %4861 = vst [vmem:[#allocation3 + $0x180] sm:$0xff] %v4797
    %4862 = vst [vmem:[#allocation3 + $0x1c8] sm:$0xff] %v4798
    %4863 = vst [vmem:[#allocation3 + $0x210] sm:$0xff] %v4799
    %4864 = vst [vmem:[#allocation3 + $0x258] sm:$0xff] %v4800
    %4865 = vst [vmem:[#allocation3 + $0x2a0] sm:$0xff] %v4801
    %4866 = vst [vmem:[#allocation3 + $0x2e8] sm:$0xff] %v4802
    %4867 = vst [vmem:[#allocation3 + $0x330] sm:$0xff] %v4803
    %4868 = vst [vmem:[#allocation3 + $0x378] sm:$0xff] %v4804
    %4869 = vst [vmem:[#allocation3 + $0x3c0] sm:$0xff] %v4805
    %4870 = vst [vmem:[#allocation3 + $0x408] sm:$0xff] %v4806
    %4871 = vst [vmem:[#allocation3 + $0x450] sm:$0xff] %v4807
    %4872 = vst [vmem:[#allocation3 + $0x498] sm:$0xff] %v4808
    %4873 = vst [vmem:[#allocation3 + $0x4e0] sm:$0xff] %v4809
    %4874 = vst [vmem:[#allocation3 + $0x528] sm:$0xff] %v4810
    %4875 = vst [vmem:[#allocation3 + $0x570] sm:$0xff] %v4811
    %4876 = vst [vmem:[#allocation3 + $0x5b8] sm:$0xff] %v4812
    %4877 = vst [vmem:[#allocation3 + $0x600] sm:$0xff] %v4813
    %4878 = vst [vmem:[#allocation3 + $0x648] sm:$0xff] %v4814
    %4879 = vst [vmem:[#allocation3 + $0x690] sm:$0xff] %v4815
    %4880 = vst [vmem:[#allocation3 + $0x6d8] sm:$0xff] %v4816
    %4881 = vst [vmem:[#allocation3 + $0x720] sm:$0xff] %v4817
    %4882 = vst [vmem:[#allocation3 + $0x768] sm:$0xff] %v4818
    %4883 = vst [vmem:[#allocation3 + $0x7b0] sm:$0xff] %v4819
    %4884 = vst [vmem:[#allocation3 + $0x7f8] sm:$0xff] %v4820
    %4885 = vst [vmem:[#allocation3 + $0x840] sm:$0xff] %v4821
    %4886 = vst [vmem:[#allocation3 + $0x888] sm:$0xff] %v4822
    %4887 = vst [vmem:[#allocation3 + $0x8d0] sm:$0xff] %v4823
    %4888 = vst [vmem:[#allocation3 + $0x918] sm:$0xff] %v4824
    %4889 = vst [vmem:[#allocation3 + $0x960] sm:$0xff] %v4825
    %4890 = vst [vmem:[#allocation3 + $0x9a8] sm:$0xff] %v4826
    %4891 = vst [vmem:[#allocation3 + $0x9f0] sm:$0xff] %v4827
    %4892 = vst [vmem:[#allocation3 + $0xa38] sm:$0xff] %v4828
    %4893 = vst [vmem:[#allocation3 + $0xa80] sm:$0xff] %v4829
    %4894 = vst [vmem:[#allocation3 + $0xac8] sm:$0xff] %v4830
    %4895 = vst [vmem:[#allocation3 + $0xb10] sm:$0xff] %v4831
    %4896 = vst [vmem:[#allocation3 + $0xb58] sm:$0xff] %v4832
    %4897 = vst [vmem:[#allocation3 + $0xba0] sm:$0xff] %v4833
    %4898 = vst [vmem:[#allocation3 + $0xbe8] sm:$0xff] %v4834
    %4899 = vst [vmem:[#allocation3 + $0xc30] sm:$0xff] %v4835
    %4900 = vst [vmem:[#allocation3 + $0xc78] sm:$0xff] %v4836
    %4901 = vst [vmem:[#allocation3 + $0xcc0] sm:$0xff] %v4837
    %4902 = vst [vmem:[#allocation3 + $0xd08] sm:$0xff] %v4838
    %4903 = vst [vmem:[#allocation3 + $0xd50] sm:$0xff] %v4839
    %4904 = vst [vmem:[#allocation3 + $0xd98] sm:$0xff] %v4840
    %4905 = vst [vmem:[#allocation3 + $0xde0] sm:$0xff] %v4841
    %4906 = vst [vmem:[#allocation3 + $0xe28] sm:$0xff] %v4842
    %4907 = vst [vmem:[#allocation3 + $0xe70] sm:$0xff] %v4843
    %4908 = vst [vmem:[#allocation3 + $0xeb8] sm:$0xff] %v4844
    %4909 = vst [vmem:[#allocation3 + $0xf00] sm:$0xff] %v4845
    %4910 = vst [vmem:[#allocation3 + $0xf48] sm:$0xff] %v4846
    %4911 = vst [vmem:[#allocation3 + $0xf90] sm:$0xff] %v4847
    %4912 = vst [vmem:[#allocation3 + $0xfd8] sm:$0xff] %v4848
    %4913 = vst [vmem:[#allocation3 + $0x1020] sm:$0xff] %v4849
    %4914 = vst [vmem:[#allocation3 + $0x1068] sm:$0xff] %v4850
    %4915 = vst [vmem:[#allocation3 + $0x10b0] sm:$0xff] %v4851
    %4916 = vst [vmem:[#allocation3 + $0x10f8] sm:$0xff] %v4852
    %4917 = vst [vmem:[#allocation3 + $0x1140] sm:$0xff] %v4853
    %4918 = vst [vmem:[#allocation3 + $0x1188] sm:$0xff] %v4854
    %4919 = vst [vmem:[#allocation3 + $0x11d0] sm:$0xff] %v4855
    %v4920 = vld [vmem:[%s4258 + $0x1] sm:$0xff]
    %v4921 = vld [vmem:[%s4258 + $0x9] sm:$0xff]
    %v4922 = vld [vmem:[%s4258 + $0x19] sm:$0xff]
    %v4923 = vld [vmem:[%s4258 + $0x21] sm:$0xff]
    %v4924 = vld [vmem:[%s4258 + $0x31] sm:$0xff]
    %v4925 = vld [vmem:[%s4258 + $0x39] sm:$0xff]
    %v4926 = vld [vmem:[%s4258 + $0x49] sm:$0xff]
    %v4927 = vld [vmem:[%s4258 + $0x51] sm:$0xff]
    %v4928 = vld [vmem:[%s4258 + $0x61] sm:$0xff]
    %v4929 = vld [vmem:[%s4258 + $0x69] sm:$0xff]
    %v4930 = vld [vmem:[%s4258 + $0x79] sm:$0xff]
    %v4931 = vld [vmem:[%s4258 + $0x81] sm:$0xff]
    %v4932 = vld [vmem:[%s4258 + $0x91] sm:$0xff]
    %v4933 = vld [vmem:[%s4258 + $0x99] sm:$0xff]
    %v4934 = vld [vmem:[%s4258 + $0xa9] sm:$0xff]
    %v4935 = vld [vmem:[%s4258 + $0xb1] sm:$0xff]
    %v4936 = vld [vmem:[%s4258 + $0xc1] sm:$0xff]
    %v4937 = vld [vmem:[%s4258 + $0xc9] sm:$0xff]
    %v4938 = vld [vmem:[%s4258 + $0xd9] sm:$0xff]
    %v4939 = vld [vmem:[%s4258 + $0xe1] sm:$0xff]
    %v4940 = vld [vmem:[%s4258 + $0xf1] sm:$0xff]
    %v4941 = vld [vmem:[%s4258 + $0xf9] sm:$0xff]
    %v4942 = vld [vmem:[%s4258 + $0x109] sm:$0xff]
    %v4943 = vld [vmem:[%s4258 + $0x111] sm:$0xff]
    %v4944 = vld [vmem:[%s4258 + $0x121] sm:$0xff]
    %v4945 = vld [vmem:[%s4258 + $0x129] sm:$0xff]
    %v4946 = vld [vmem:[%s4258 + $0x139] sm:$0xff]
    %v4947 = vld [vmem:[%s4258 + $0x141] sm:$0xff]
    %v4948 = vld [vmem:[%s4258 + $0x151] sm:$0xff]
    %v4949 = vld [vmem:[%s4258 + $0x159] sm:$0xff]
    %v4950 = vld [vmem:[%s4258 + $0x169] sm:$0xff]
    %v4951 = vld [vmem:[%s4258 + $0x171] sm:$0xff]
    %v4952 = vld [vmem:[%s4258 + $0x1b1] sm:$0xff]
    %v4953 = vld [vmem:[%s4258 + $0x1b9] sm:$0xff]
    %v4954 = vld [vmem:[%s4258 + $0x1c9] sm:$0xff]
    %v4955 = vld [vmem:[%s4258 + $0x1d1] sm:$0xff]
    %v4956 = vld [vmem:[%s4258 + $0x1e1] sm:$0xff]
    %v4957 = vld [vmem:[%s4258 + $0x1e9] sm:$0xff]
    %v4958 = vld [vmem:[%s4258 + $0x1f9] sm:$0xff]
    %v4959 = vld [vmem:[%s4258 + $0x201] sm:$0xff]
    %v4960 = vld [vmem:[%s4258 + $0x211] sm:$0xff]
    %v4961 = vld [vmem:[%s4258 + $0x219] sm:$0xff]
    %v4962 = vld [vmem:[%s4258 + $0x229] sm:$0xff]
    %v4963 = vld [vmem:[%s4258 + $0x231] sm:$0xff]
    %v4964 = vld [vmem:[%s4258 + $0x241] sm:$0xff]
    %v4965 = vld [vmem:[%s4258 + $0x249] sm:$0xff]
    %v4966 = vld [vmem:[%s4258 + $0x259] sm:$0xff]
    %v4967 = vld [vmem:[%s4258 + $0x261] sm:$0xff]
    %v4968 = vld [vmem:[%s4258 + $0x271] sm:$0xff]
    %v4969 = vld [vmem:[%s4258 + $0x279] sm:$0xff]
    %v4970 = vld [vmem:[%s4258 + $0x289] sm:$0xff]
    %v4971 = vld [vmem:[%s4258 + $0x291] sm:$0xff]
    %v4972 = vld [vmem:[%s4258 + $0x2a1] sm:$0xff]
    %v4973 = vld [vmem:[%s4258 + $0x2a9] sm:$0xff]
    %v4974 = vld [vmem:[%s4258 + $0x2b9] sm:$0xff]
    %v4975 = vld [vmem:[%s4258 + $0x2c1] sm:$0xff]
    %v4976 = vld [vmem:[%s4258 + $0x2d1] sm:$0xff]
    %v4977 = vld [vmem:[%s4258 + $0x2d9] sm:$0xff]
    %v4978 = vld [vmem:[%s4258 + $0x2e9] sm:$0xff]
    %v4979 = vld [vmem:[%s4258 + $0x2f1] sm:$0xff]
    %v4980 = vld [vmem:[%s4258 + $0x301] sm:$0xff]
    %v4981 = vld [vmem:[%s4258 + $0x309] sm:$0xff]
    %v4982 = vld [vmem:[%s4258 + $0x319] sm:$0xff]
    %v4983 = vld [vmem:[%s4258 + $0x321] sm:$0xff]
    %4984 = vst [vmem:[#allocation3 + $0x20] sm:$0xff] %v4920
    %4985 = vst [vmem:[#allocation3 + $0x68] sm:$0xff] %v4921
    %4986 = vst [vmem:[#allocation3 + $0xb0] sm:$0xff] %v4922
    %4987 = vst [vmem:[#allocation3 + $0xf8] sm:$0xff] %v4923
    %4988 = vst [vmem:[#allocation3 + $0x140] sm:$0xff] %v4924
    %4989 = vst [vmem:[#allocation3 + $0x188] sm:$0xff] %v4925
    %4990 = vst [vmem:[#allocation3 + $0x1d0] sm:$0xff] %v4926
    %4991 = vst [vmem:[#allocation3 + $0x218] sm:$0xff] %v4927
    %4992 = vst [vmem:[#allocation3 + $0x260] sm:$0xff] %v4928
    %4993 = vst [vmem:[#allocation3 + $0x2a8] sm:$0xff] %v4929
    %4994 = vst [vmem:[#allocation3 + $0x2f0] sm:$0xff] %v4930
    %4995 = vst [vmem:[#allocation3 + $0x338] sm:$0xff] %v4931
    %4996 = vst [vmem:[#allocation3 + $0x380] sm:$0xff] %v4932
    %4997 = vst [vmem:[#allocation3 + $0x3c8] sm:$0xff] %v4933
    %4998 = vst [vmem:[#allocation3 + $0x410] sm:$0xff] %v4934
    %4999 = vst [vmem:[#allocation3 + $0x458] sm:$0xff] %v4935
    %5000 = vst [vmem:[#allocation3 + $0x4a0] sm:$0xff] %v4936
    %5001 = vst [vmem:[#allocation3 + $0x4e8] sm:$0xff] %v4937
    %5002 = vst [vmem:[#allocation3 + $0x530] sm:$0xff] %v4938
    %5003 = vst [vmem:[#allocation3 + $0x578] sm:$0xff] %v4939
    %5004 = vst [vmem:[#allocation3 + $0x5c0] sm:$0xff] %v4940
    %5005 = vst [vmem:[#allocation3 + $0x608] sm:$0xff] %v4941
    %5006 = vst [vmem:[#allocation3 + $0x650] sm:$0xff] %v4942
    %5007 = vst [vmem:[#allocation3 + $0x698] sm:$0xff] %v4943
    %5008 = vst [vmem:[#allocation3 + $0x6e0] sm:$0xff] %v4944
    %5009 = vst [vmem:[#allocation3 + $0x728] sm:$0xff] %v4945
    %5010 = vst [vmem:[#allocation3 + $0x770] sm:$0xff] %v4946
    %5011 = vst [vmem:[#allocation3 + $0x7b8] sm:$0xff] %v4947
    %5012 = vst [vmem:[#allocation3 + $0x800] sm:$0xff] %v4948
    %5013 = vst [vmem:[#allocation3 + $0x848] sm:$0xff] %v4949
    %5014 = vst [vmem:[#allocation3 + $0x890] sm:$0xff] %v4950
    %5015 = vst [vmem:[#allocation3 + $0x8d8] sm:$0xff] %v4951
    %5016 = vst [vmem:[#allocation3 + $0x920] sm:$0xff] %v4952
    %5017 = vst [vmem:[#allocation3 + $0x968] sm:$0xff] %v4953
    %5018 = vst [vmem:[#allocation3 + $0x9b0] sm:$0xff] %v4954
    %5019 = vst [vmem:[#allocation3 + $0x9f8] sm:$0xff] %v4955
    %5020 = vst [vmem:[#allocation3 + $0xa40] sm:$0xff] %v4956
    %5021 = vst [vmem:[#allocation3 + $0xa88] sm:$0xff] %v4957
    %5022 = vst [vmem:[#allocation3 + $0xad0] sm:$0xff] %v4958
    %5023 = vst [vmem:[#allocation3 + $0xb18] sm:$0xff] %v4959
    %5024 = vst [vmem:[#allocation3 + $0xb60] sm:$0xff] %v4960
    %5025 = vst [vmem:[#allocation3 + $0xba8] sm:$0xff] %v4961
    %5026 = vst [vmem:[#allocation3 + $0xbf0] sm:$0xff] %v4962
    %5027 = vst [vmem:[#allocation3 + $0xc38] sm:$0xff] %v4963
    %5028 = vst [vmem:[#allocation3 + $0xc80] sm:$0xff] %v4964
    %5029 = vst [vmem:[#allocation3 + $0xcc8] sm:$0xff] %v4965
    %5030 = vst [vmem:[#allocation3 + $0xd10] sm:$0xff] %v4966
    %5031 = vst [vmem:[#allocation3 + $0xd58] sm:$0xff] %v4967
    %5032 = vst [vmem:[#allocation3 + $0xda0] sm:$0xff] %v4968
    %5033 = vst [vmem:[#allocation3 + $0xde8] sm:$0xff] %v4969
    %5034 = vst [vmem:[#allocation3 + $0xe30] sm:$0xff] %v4970
    %5035 = vst [vmem:[#allocation3 + $0xe78] sm:$0xff] %v4971
    %5036 = vst [vmem:[#allocation3 + $0xec0] sm:$0xff] %v4972
    %5037 = vst [vmem:[#allocation3 + $0xf08] sm:$0xff] %v4973
    %5038 = vst [vmem:[#allocation3 + $0xf50] sm:$0xff] %v4974
    %5039 = vst [vmem:[#allocation3 + $0xf98] sm:$0xff] %v4975
    %5040 = vst [vmem:[#allocation3 + $0xfe0] sm:$0xff] %v4976
    %5041 = vst [vmem:[#allocation3 + $0x1028] sm:$0xff] %v4977
    %5042 = vst [vmem:[#allocation3 + $0x1070] sm:$0xff] %v4978
    %5043 = vst [vmem:[#allocation3 + $0x10b8] sm:$0xff] %v4979
    %5044 = vst [vmem:[#allocation3 + $0x1100] sm:$0xff] %v4980
    %5045 = vst [vmem:[#allocation3 + $0x1148] sm:$0xff] %v4981
    %5046 = vst [vmem:[#allocation3 + $0x1190] sm:$0xff] %v4982
    %5047 = vst [vmem:[#allocation3 + $0x11d8] sm:$0xff] %v4983
    %v5048 = vld [vmem:[%s4258 + $0x2] sm:$0xff]
    %v5049 = vld [vmem:[%s4258 + $0xa] sm:$0xff]
    %v5050 = vld [vmem:[%s4258 + $0x1a] sm:$0xff]
    %v5051 = vld [vmem:[%s4258 + $0x22] sm:$0xff]
    %v5052 = vld [vmem:[%s4258 + $0x32] sm:$0xff]
    %v5053 = vld [vmem:[%s4258 + $0x3a] sm:$0xff]
    %v5054 = vld [vmem:[%s4258 + $0x4a] sm:$0xff]
    %v5055 = vld [vmem:[%s4258 + $0x52] sm:$0xff]
    %v5056 = vld [vmem:[%s4258 + $0x62] sm:$0xff]
    %v5057 = vld [vmem:[%s4258 + $0x6a] sm:$0xff]
    %v5058 = vld [vmem:[%s4258 + $0x7a] sm:$0xff]
    %v5059 = vld [vmem:[%s4258 + $0x82] sm:$0xff]
    %v5060 = vld [vmem:[%s4258 + $0x92] sm:$0xff]
    %v5061 = vld [vmem:[%s4258 + $0x9a] sm:$0xff]
    %v5062 = vld [vmem:[%s4258 + $0xaa] sm:$0xff]
    %v5063 = vld [vmem:[%s4258 + $0xb2] sm:$0xff]
    %v5064 = vld [vmem:[%s4258 + $0xc2] sm:$0xff]
    %v5065 = vld [vmem:[%s4258 + $0xca] sm:$0xff]
    %v5066 = vld [vmem:[%s4258 + $0xda] sm:$0xff]
    %v5067 = vld [vmem:[%s4258 + $0xe2] sm:$0xff]
    %v5068 = vld [vmem:[%s4258 + $0xf2] sm:$0xff]
    %v5069 = vld [vmem:[%s4258 + $0xfa] sm:$0xff]
    %v5070 = vld [vmem:[%s4258 + $0x10a] sm:$0xff]
    %v5071 = vld [vmem:[%s4258 + $0x112] sm:$0xff]
    %v5072 = vld [vmem:[%s4258 + $0x122] sm:$0xff]
    %v5073 = vld [vmem:[%s4258 + $0x12a] sm:$0xff]
    %v5074 = vld [vmem:[%s4258 + $0x13a] sm:$0xff]
    %v5075 = vld [vmem:[%s4258 + $0x142] sm:$0xff]
    %v5076 = vld [vmem:[%s4258 + $0x152] sm:$0xff]
    %v5077 = vld [vmem:[%s4258 + $0x15a] sm:$0xff]
    %v5078 = vld [vmem:[%s4258 + $0x16a] sm:$0xff]
    %v5079 = vld [vmem:[%s4258 + $0x172] sm:$0xff]
    %v5080 = vld [vmem:[%s4258 + $0x1b2] sm:$0xff]
    %v5081 = vld [vmem:[%s4258 + $0x1ba] sm:$0xff]
    %v5082 = vld [vmem:[%s4258 + $0x1ca] sm:$0xff]
    %v5083 = vld [vmem:[%s4258 + $0x1d2] sm:$0xff]
    %v5084 = vld [vmem:[%s4258 + $0x1e2] sm:$0xff]
    %v5085 = vld [vmem:[%s4258 + $0x1ea] sm:$0xff]
    %v5086 = vld [vmem:[%s4258 + $0x1fa] sm:$0xff]
    %v5087 = vld [vmem:[%s4258 + $0x202] sm:$0xff]
    %v5088 = vld [vmem:[%s4258 + $0x212] sm:$0xff]
    %v5089 = vld [vmem:[%s4258 + $0x21a] sm:$0xff]
    %v5090 = vld [vmem:[%s4258 + $0x22a] sm:$0xff]
    %v5091 = vld [vmem:[%s4258 + $0x232] sm:$0xff]
    %v5092 = vld [vmem:[%s4258 + $0x242] sm:$0xff]
    %v5093 = vld [vmem:[%s4258 + $0x24a] sm:$0xff]
    %v5094 = vld [vmem:[%s4258 + $0x25a] sm:$0xff]
    %v5095 = vld [vmem:[%s4258 + $0x262] sm:$0xff]
    %v5096 = vld [vmem:[%s4258 + $0x272] sm:$0xff]
    %v5097 = vld [vmem:[%s4258 + $0x27a] sm:$0xff]
    %v5098 = vld [vmem:[%s4258 + $0x28a] sm:$0xff]
    %v5099 = vld [vmem:[%s4258 + $0x292] sm:$0xff]
    %v5100 = vld [vmem:[%s4258 + $0x2a2] sm:$0xff]
    %v5101 = vld [vmem:[%s4258 + $0x2aa] sm:$0xff]
    %v5102 = vld [vmem:[%s4258 + $0x2ba] sm:$0xff]
    %v5103 = vld [vmem:[%s4258 + $0x2c2] sm:$0xff]
    %v5104 = vld [vmem:[%s4258 + $0x2d2] sm:$0xff]
    %v5105 = vld [vmem:[%s4258 + $0x2da] sm:$0xff]
    %v5106 = vld [vmem:[%s4258 + $0x2ea] sm:$0xff]
    %v5107 = vld [vmem:[%s4258 + $0x2f2] sm:$0xff]
    %v5108 = vld [vmem:[%s4258 + $0x302] sm:$0xff]
    %v5109 = vld [vmem:[%s4258 + $0x30a] sm:$0xff]
    %v5110 = vld [vmem:[%s4258 + $0x31a] sm:$0xff]
    %v5111 = vld [vmem:[%s4258 + $0x322] sm:$0xff]
    %5112 = vst [vmem:[#allocation3 + $0x28] sm:$0xff] %v5048
    %5113 = vst [vmem:[#allocation3 + $0x70] sm:$0xff] %v5049
    %5114 = vst [vmem:[#allocation3 + $0xb8] sm:$0xff] %v5050
    %5115 = vst [vmem:[#allocation3 + $0x100] sm:$0xff] %v5051
    %5116 = vst [vmem:[#allocation3 + $0x148] sm:$0xff] %v5052
    %5117 = vst [vmem:[#allocation3 + $0x190] sm:$0xff] %v5053
    %5118 = vst [vmem:[#allocation3 + $0x1d8] sm:$0xff] %v5054
    %5119 = vst [vmem:[#allocation3 + $0x220] sm:$0xff] %v5055
    %5120 = vst [vmem:[#allocation3 + $0x268] sm:$0xff] %v5056
    %5121 = vst [vmem:[#allocation3 + $0x2b0] sm:$0xff] %v5057
    %5122 = vst [vmem:[#allocation3 + $0x2f8] sm:$0xff] %v5058
    %5123 = vst [vmem:[#allocation3 + $0x340] sm:$0xff] %v5059
    %5124 = vst [vmem:[#allocation3 + $0x388] sm:$0xff] %v5060
    %5125 = vst [vmem:[#allocation3 + $0x3d0] sm:$0xff] %v5061
    %5126 = vst [vmem:[#allocation3 + $0x418] sm:$0xff] %v5062
    %5127 = vst [vmem:[#allocation3 + $0x460] sm:$0xff] %v5063
    %5128 = vst [vmem:[#allocation3 + $0x4a8] sm:$0xff] %v5064
    %5129 = vst [vmem:[#allocation3 + $0x4f0] sm:$0xff] %v5065
    %5130 = vst [vmem:[#allocation3 + $0x538] sm:$0xff] %v5066
    %5131 = vst [vmem:[#allocation3 + $0x580] sm:$0xff] %v5067
    %5132 = vst [vmem:[#allocation3 + $0x5c8] sm:$0xff] %v5068
    %5133 = vst [vmem:[#allocation3 + $0x610] sm:$0xff] %v5069
    %5134 = vst [vmem:[#allocation3 + $0x658] sm:$0xff] %v5070
    %5135 = vst [vmem:[#allocation3 + $0x6a0] sm:$0xff] %v5071
    %5136 = vst [vmem:[#allocation3 + $0x6e8] sm:$0xff] %v5072
    %5137 = vst [vmem:[#allocation3 + $0x730] sm:$0xff] %v5073
    %5138 = vst [vmem:[#allocation3 + $0x778] sm:$0xff] %v5074
    %5139 = vst [vmem:[#allocation3 + $0x7c0] sm:$0xff] %v5075
    %5140 = vst [vmem:[#allocation3 + $0x808] sm:$0xff] %v5076
    %5141 = vst [vmem:[#allocation3 + $0x850] sm:$0xff] %v5077
    %5142 = vst [vmem:[#allocation3 + $0x898] sm:$0xff] %v5078
    %5143 = vst [vmem:[#allocation3 + $0x8e0] sm:$0xff] %v5079
    %5144 = vst [vmem:[#allocation3 + $0x928] sm:$0xff] %v5080
    %5145 = vst [vmem:[#allocation3 + $0x970] sm:$0xff] %v5081
    %5146 = vst [vmem:[#allocation3 + $0x9b8] sm:$0xff] %v5082
    %5147 = vst [vmem:[#allocation3 + $0xa00] sm:$0xff] %v5083
    %5148 = vst [vmem:[#allocation3 + $0xa48] sm:$0xff] %v5084
    %5149 = vst [vmem:[#allocation3 + $0xa90] sm:$0xff] %v5085
    %5150 = vst [vmem:[#allocation3 + $0xad8] sm:$0xff] %v5086
    %5151 = vst [vmem:[#allocation3 + $0xb20] sm:$0xff] %v5087
    %5152 = vst [vmem:[#allocation3 + $0xb68] sm:$0xff] %v5088
    %5153 = vst [vmem:[#allocation3 + $0xbb0] sm:$0xff] %v5089
    %5154 = vst [vmem:[#allocation3 + $0xbf8] sm:$0xff] %v5090
    %5155 = vst [vmem:[#allocation3 + $0xc40] sm:$0xff] %v5091
    %5156 = vst [vmem:[#allocation3 + $0xc88] sm:$0xff] %v5092
    %5157 = vst [vmem:[#allocation3 + $0xcd0] sm:$0xff] %v5093
    %5158 = vst [vmem:[#allocation3 + $0xd18] sm:$0xff] %v5094
    %5159 = vst [vmem:[#allocation3 + $0xd60] sm:$0xff] %v5095
    %5160 = vst [vmem:[#allocation3 + $0xda8] sm:$0xff] %v5096
    %5161 = vst [vmem:[#allocation3 + $0xdf0] sm:$0xff] %v5097
    %5162 = vst [vmem:[#allocation3 + $0xe38] sm:$0xff] %v5098
    %5163 = vst [vmem:[#allocation3 + $0xe80] sm:$0xff] %v5099
    %5164 = vst [vmem:[#allocation3 + $0xec8] sm:$0xff] %v5100
    %5165 = vst [vmem:[#allocation3 + $0xf10] sm:$0xff] %v5101
    %5166 = vst [vmem:[#allocation3 + $0xf58] sm:$0xff] %v5102
    %5167 = vst [vmem:[#allocation3 + $0xfa0] sm:$0xff] %v5103
    %5168 = vst [vmem:[#allocation3 + $0xfe8] sm:$0xff] %v5104
    %5169 = vst [vmem:[#allocation3 + $0x1030] sm:$0xff] %v5105
    %5170 = vst [vmem:[#allocation3 + $0x1078] sm:$0xff] %v5106
    %5171 = vst [vmem:[#allocation3 + $0x10c0] sm:$0xff] %v5107
    %5172 = vst [vmem:[#allocation3 + $0x1108] sm:$0xff] %v5108
    %5173 = vst [vmem:[#allocation3 + $0x1150] sm:$0xff] %v5109
    %5174 = vst [vmem:[#allocation3 + $0x1198] sm:$0xff] %v5110
    %5175 = vst [vmem:[#allocation3 + $0x11e0] sm:$0xff] %v5111
    %s5176 = scalar_lea.vmem [#allocation2], 48
    %v5177 = vld [vmem:[%s5176] sm:$0xff]
    %v5178 = vld [vmem:[%s5176 + $0x8] sm:$0xff]
    %v5179 = vld [vmem:[%s5176 + $0x18] sm:$0xff]
    %v5180 = vld [vmem:[%s5176 + $0x20] sm:$0xff]
    %v5181 = vld [vmem:[%s5176 + $0x30] sm:$0xff]
    %v5182 = vld [vmem:[%s5176 + $0x38] sm:$0xff]
    %v5183 = vld [vmem:[%s5176 + $0x48] sm:$0xff]
    %v5184 = vld [vmem:[%s5176 + $0x50] sm:$0xff]
    %v5185 = vld [vmem:[%s5176 + $0x60] sm:$0xff]
    %v5186 = vld [vmem:[%s5176 + $0x68] sm:$0xff]
    %v5187 = vld [vmem:[%s5176 + $0x78] sm:$0xff]
    %v5188 = vld [vmem:[%s5176 + $0x80] sm:$0xff]
    %v5189 = vld [vmem:[%s5176 + $0x90] sm:$0xff]
    %v5190 = vld [vmem:[%s5176 + $0x98] sm:$0xff]
    %v5191 = vld [vmem:[%s5176 + $0xa8] sm:$0xff]
    %v5192 = vld [vmem:[%s5176 + $0xb0] sm:$0xff]
    %v5193 = vld [vmem:[%s5176 + $0xc0] sm:$0xff]
    %v5194 = vld [vmem:[%s5176 + $0xc8] sm:$0xff]
    %v5195 = vld [vmem:[%s5176 + $0xd8] sm:$0xff]
    %v5196 = vld [vmem:[%s5176 + $0xe0] sm:$0xff]
    %v5197 = vld [vmem:[%s5176 + $0xf0] sm:$0xff]
    %v5198 = vld [vmem:[%s5176 + $0xf8] sm:$0xff]
    %v5199 = vld [vmem:[%s5176 + $0x108] sm:$0xff]
    %v5200 = vld [vmem:[%s5176 + $0x110] sm:$0xff]
    %v5201 = vld [vmem:[%s5176 + $0x120] sm:$0xff]
    %v5202 = vld [vmem:[%s5176 + $0x128] sm:$0xff]
    %v5203 = vld [vmem:[%s5176 + $0x138] sm:$0xff]
    %v5204 = vld [vmem:[%s5176 + $0x140] sm:$0xff]
    %v5205 = vld [vmem:[%s5176 + $0x150] sm:$0xff]
    %v5206 = vld [vmem:[%s5176 + $0x158] sm:$0xff]
    %v5207 = vld [vmem:[%s5176 + $0x168] sm:$0xff]
    %v5208 = vld [vmem:[%s5176 + $0x170] sm:$0xff]
    %v5209 = vld [vmem:[%s5176 + $0x1b0] sm:$0xff]
    %v5210 = vld [vmem:[%s5176 + $0x1b8] sm:$0xff]
    %v5211 = vld [vmem:[%s5176 + $0x1c8] sm:$0xff]
    %v5212 = vld [vmem:[%s5176 + $0x1d0] sm:$0xff]
    %v5213 = vld [vmem:[%s5176 + $0x1e0] sm:$0xff]
    %v5214 = vld [vmem:[%s5176 + $0x1e8] sm:$0xff]
    %v5215 = vld [vmem:[%s5176 + $0x1f8] sm:$0xff]
    %v5216 = vld [vmem:[%s5176 + $0x200] sm:$0xff]
    %v5217 = vld [vmem:[%s5176 + $0x210] sm:$0xff]
    %v5218 = vld [vmem:[%s5176 + $0x218] sm:$0xff]
    %v5219 = vld [vmem:[%s5176 + $0x228] sm:$0xff]
    %v5220 = vld [vmem:[%s5176 + $0x230] sm:$0xff]
    %v5221 = vld [vmem:[%s5176 + $0x240] sm:$0xff]
    %v5222 = vld [vmem:[%s5176 + $0x248] sm:$0xff]
    %v5223 = vld [vmem:[%s5176 + $0x258] sm:$0xff]
    %v5224 = vld [vmem:[%s5176 + $0x260] sm:$0xff]
    %v5225 = vld [vmem:[%s5176 + $0x270] sm:$0xff]
    %v5226 = vld [vmem:[%s5176 + $0x278] sm:$0xff]
    %v5227 = vld [vmem:[%s5176 + $0x288] sm:$0xff]
    %v5228 = vld [vmem:[%s5176 + $0x290] sm:$0xff]
    %v5229 = vld [vmem:[%s5176 + $0x2a0] sm:$0xff]
    %v5230 = vld [vmem:[%s5176 + $0x2a8] sm:$0xff]
    %v5231 = vld [vmem:[%s5176 + $0x2b8] sm:$0xff]
    %v5232 = vld [vmem:[%s5176 + $0x2c0] sm:$0xff]
    %v5233 = vld [vmem:[%s5176 + $0x2d0] sm:$0xff]
    %v5234 = vld [vmem:[%s5176 + $0x2d8] sm:$0xff]
    %v5235 = vld [vmem:[%s5176 + $0x2e8] sm:$0xff]
    %v5236 = vld [vmem:[%s5176 + $0x2f0] sm:$0xff]
    %v5237 = vld [vmem:[%s5176 + $0x300] sm:$0xff]
    %v5238 = vld [vmem:[%s5176 + $0x308] sm:$0xff]
    %v5239 = vld [vmem:[%s5176 + $0x318] sm:$0xff]
    %v5240 = vld [vmem:[%s5176 + $0x320] sm:$0xff]
    %5241 = vst [vmem:[#allocation3 + $0x30] sm:$0xff] %v5177
    %5242 = vst [vmem:[#allocation3 + $0x78] sm:$0xff] %v5178
    %5243 = vst [vmem:[#allocation3 + $0xc0] sm:$0xff] %v5179
    %5244 = vst [vmem:[#allocation3 + $0x108] sm:$0xff] %v5180
    %5245 = vst [vmem:[#allocation3 + $0x150] sm:$0xff] %v5181
    %5246 = vst [vmem:[#allocation3 + $0x198] sm:$0xff] %v5182
    %5247 = vst [vmem:[#allocation3 + $0x1e0] sm:$0xff] %v5183
    %5248 = vst [vmem:[#allocation3 + $0x228] sm:$0xff] %v5184
    %5249 = vst [vmem:[#allocation3 + $0x270] sm:$0xff] %v5185
    %5250 = vst [vmem:[#allocation3 + $0x2b8] sm:$0xff] %v5186
    %5251 = vst [vmem:[#allocation3 + $0x300] sm:$0xff] %v5187
    %5252 = vst [vmem:[#allocation3 + $0x348] sm:$0xff] %v5188
    %5253 = vst [vmem:[#allocation3 + $0x390] sm:$0xff] %v5189
    %5254 = vst [vmem:[#allocation3 + $0x3d8] sm:$0xff] %v5190
    %5255 = vst [vmem:[#allocation3 + $0x420] sm:$0xff] %v5191
    %5256 = vst [vmem:[#allocation3 + $0x468] sm:$0xff] %v5192
    %5257 = vst [vmem:[#allocation3 + $0x4b0] sm:$0xff] %v5193
    %5258 = vst [vmem:[#allocation3 + $0x4f8] sm:$0xff] %v5194
    %5259 = vst [vmem:[#allocation3 + $0x540] sm:$0xff] %v5195
    %5260 = vst [vmem:[#allocation3 + $0x588] sm:$0xff] %v5196
    %5261 = vst [vmem:[#allocation3 + $0x5d0] sm:$0xff] %v5197
    %5262 = vst [vmem:[#allocation3 + $0x618] sm:$0xff] %v5198
    %5263 = vst [vmem:[#allocation3 + $0x660] sm:$0xff] %v5199
    %5264 = vst [vmem:[#allocation3 + $0x6a8] sm:$0xff] %v5200
    %5265 = vst [vmem:[#allocation3 + $0x6f0] sm:$0xff] %v5201
    %5266 = vst [vmem:[#allocation3 + $0x738] sm:$0xff] %v5202
    %5267 = vst [vmem:[#allocation3 + $0x780] sm:$0xff] %v5203
    %5268 = vst [vmem:[#allocation3 + $0x7c8] sm:$0xff] %v5204
    %5269 = vst [vmem:[#allocation3 + $0x810] sm:$0xff] %v5205
    %5270 = vst [vmem:[#allocation3 + $0x858] sm:$0xff] %v5206
    %5271 = vst [vmem:[#allocation3 + $0x8a0] sm:$0xff] %v5207
    %5272 = vst [vmem:[#allocation3 + $0x8e8] sm:$0xff] %v5208
    %5273 = vst [vmem:[#allocation3 + $0x930] sm:$0xff] %v5209
    %5274 = vst [vmem:[#allocation3 + $0x978] sm:$0xff] %v5210
    %5275 = vst [vmem:[#allocation3 + $0x9c0] sm:$0xff] %v5211
    %5276 = vst [vmem:[#allocation3 + $0xa08] sm:$0xff] %v5212
    %5277 = vst [vmem:[#allocation3 + $0xa50] sm:$0xff] %v5213
    %5278 = vst [vmem:[#allocation3 + $0xa98] sm:$0xff] %v5214
    %5279 = vst [vmem:[#allocation3 + $0xae0] sm:$0xff] %v5215
    %5280 = vst [vmem:[#allocation3 + $0xb28] sm:$0xff] %v5216
    %5281 = vst [vmem:[#allocation3 + $0xb70] sm:$0xff] %v5217
    %5282 = vst [vmem:[#allocation3 + $0xbb8] sm:$0xff] %v5218
    %5283 = vst [vmem:[#allocation3 + $0xc00] sm:$0xff] %v5219
    %5284 = vst [vmem:[#allocation3 + $0xc48] sm:$0xff] %v5220
    %5285 = vst [vmem:[#allocation3 + $0xc90] sm:$0xff] %v5221
    %5286 = vst [vmem:[#allocation3 + $0xcd8] sm:$0xff] %v5222
    %5287 = vst [vmem:[#allocation3 + $0xd20] sm:$0xff] %v5223
    %5288 = vst [vmem:[#allocation3 + $0xd68] sm:$0xff] %v5224
    %5289 = vst [vmem:[#allocation3 + $0xdb0] sm:$0xff] %v5225
    %5290 = vst [vmem:[#allocation3 + $0xdf8] sm:$0xff] %v5226
    %5291 = vst [vmem:[#allocation3 + $0xe40] sm:$0xff] %v5227
    %5292 = vst [vmem:[#allocation3 + $0xe88] sm:$0xff] %v5228
    %5293 = vst [vmem:[#allocation3 + $0xed0] sm:$0xff] %v5229
    %5294 = vst [vmem:[#allocation3 + $0xf18] sm:$0xff] %v5230
    %5295 = vst [vmem:[#allocation3 + $0xf60] sm:$0xff] %v5231
    %5296 = vst [vmem:[#allocation3 + $0xfa8] sm:$0xff] %v5232
    %5297 = vst [vmem:[#allocation3 + $0xff0] sm:$0xff] %v5233
    %5298 = vst [vmem:[#allocation3 + $0x1038] sm:$0xff] %v5234
    %5299 = vst [vmem:[#allocation3 + $0x1080] sm:$0xff] %v5235
    %5300 = vst [vmem:[#allocation3 + $0x10c8] sm:$0xff] %v5236
    %5301 = vst [vmem:[#allocation3 + $0x1110] sm:$0xff] %v5237
    %5302 = vst [vmem:[#allocation3 + $0x1158] sm:$0xff] %v5238
    %5303 = vst [vmem:[#allocation3 + $0x11a0] sm:$0xff] %v5239
    %5304 = vst [vmem:[#allocation3 + $0x11e8] sm:$0xff] %v5240
    %v5305 = vld [vmem:[%s5176 + $0x1] sm:$0xff]
    %v5306 = vld [vmem:[%s5176 + $0x9] sm:$0xff]
    %v5307 = vld [vmem:[%s5176 + $0x19] sm:$0xff]
    %v5308 = vld [vmem:[%s5176 + $0x21] sm:$0xff]
    %v5309 = vld [vmem:[%s5176 + $0x31] sm:$0xff]
    %v5310 = vld [vmem:[%s5176 + $0x39] sm:$0xff]
    %v5311 = vld [vmem:[%s5176 + $0x49] sm:$0xff]
    %v5312 = vld [vmem:[%s5176 + $0x51] sm:$0xff]
    %v5313 = vld [vmem:[%s5176 + $0x61] sm:$0xff]
    %v5314 = vld [vmem:[%s5176 + $0x69] sm:$0xff]
    %v5315 = vld [vmem:[%s5176 + $0x79] sm:$0xff]
    %v5316 = vld [vmem:[%s5176 + $0x81] sm:$0xff]
    %v5317 = vld [vmem:[%s5176 + $0x91] sm:$0xff]
    %v5318 = vld [vmem:[%s5176 + $0x99] sm:$0xff]
    %v5319 = vld [vmem:[%s5176 + $0xa9] sm:$0xff]
    %v5320 = vld [vmem:[%s5176 + $0xb1] sm:$0xff]
    %v5321 = vld [vmem:[%s5176 + $0xc1] sm:$0xff]
    %v5322 = vld [vmem:[%s5176 + $0xc9] sm:$0xff]
    %v5323 = vld [vmem:[%s5176 + $0xd9] sm:$0xff]
    %v5324 = vld [vmem:[%s5176 + $0xe1] sm:$0xff]
    %v5325 = vld [vmem:[%s5176 + $0xf1] sm:$0xff]
    %v5326 = vld [vmem:[%s5176 + $0xf9] sm:$0xff]
    %v5327 = vld [vmem:[%s5176 + $0x109] sm:$0xff]
    %v5328 = vld [vmem:[%s5176 + $0x111] sm:$0xff]
    %v5329 = vld [vmem:[%s5176 + $0x121] sm:$0xff]
    %v5330 = vld [vmem:[%s5176 + $0x129] sm:$0xff]
    %v5331 = vld [vmem:[%s5176 + $0x139] sm:$0xff]
    %v5332 = vld [vmem:[%s5176 + $0x141] sm:$0xff]
    %v5333 = vld [vmem:[%s5176 + $0x151] sm:$0xff]
    %v5334 = vld [vmem:[%s5176 + $0x159] sm:$0xff]
    %v5335 = vld [vmem:[%s5176 + $0x169] sm:$0xff]
    %v5336 = vld [vmem:[%s5176 + $0x171] sm:$0xff]
    %v5337 = vld [vmem:[%s5176 + $0x1b1] sm:$0xff]
    %v5338 = vld [vmem:[%s5176 + $0x1b9] sm:$0xff]
    %v5339 = vld [vmem:[%s5176 + $0x1c9] sm:$0xff]
    %v5340 = vld [vmem:[%s5176 + $0x1d1] sm:$0xff]
    %v5341 = vld [vmem:[%s5176 + $0x1e1] sm:$0xff]
    %v5342 = vld [vmem:[%s5176 + $0x1e9] sm:$0xff]
    %v5343 = vld [vmem:[%s5176 + $0x1f9] sm:$0xff]
    %v5344 = vld [vmem:[%s5176 + $0x201] sm:$0xff]
    %v5345 = vld [vmem:[%s5176 + $0x211] sm:$0xff]
    %v5346 = vld [vmem:[%s5176 + $0x219] sm:$0xff]
    %v5347 = vld [vmem:[%s5176 + $0x229] sm:$0xff]
    %v5348 = vld [vmem:[%s5176 + $0x231] sm:$0xff]
    %v5349 = vld [vmem:[%s5176 + $0x241] sm:$0xff]
    %v5350 = vld [vmem:[%s5176 + $0x249] sm:$0xff]
    %v5351 = vld [vmem:[%s5176 + $0x259] sm:$0xff]
    %v5352 = vld [vmem:[%s5176 + $0x261] sm:$0xff]
    %v5353 = vld [vmem:[%s5176 + $0x271] sm:$0xff]
    %v5354 = vld [vmem:[%s5176 + $0x279] sm:$0xff]
    %v5355 = vld [vmem:[%s5176 + $0x289] sm:$0xff]
    %v5356 = vld [vmem:[%s5176 + $0x291] sm:$0xff]
    %v5357 = vld [vmem:[%s5176 + $0x2a1] sm:$0xff]
    %v5358 = vld [vmem:[%s5176 + $0x2a9] sm:$0xff]
    %v5359 = vld [vmem:[%s5176 + $0x2b9] sm:$0xff]
    %v5360 = vld [vmem:[%s5176 + $0x2c1] sm:$0xff]
    %v5361 = vld [vmem:[%s5176 + $0x2d1] sm:$0xff]
    %v5362 = vld [vmem:[%s5176 + $0x2d9] sm:$0xff]
    %v5363 = vld [vmem:[%s5176 + $0x2e9] sm:$0xff]
    %v5364 = vld [vmem:[%s5176 + $0x2f1] sm:$0xff]
    %v5365 = vld [vmem:[%s5176 + $0x301] sm:$0xff]
    %v5366 = vld [vmem:[%s5176 + $0x309] sm:$0xff]
    %v5367 = vld [vmem:[%s5176 + $0x319] sm:$0xff]
    %v5368 = vld [vmem:[%s5176 + $0x321] sm:$0xff]
    %5369 = vst [vmem:[#allocation3 + $0x38] sm:$0xff] %v5305
    %5370 = vst [vmem:[#allocation3 + $0x80] sm:$0xff] %v5306
    %5371 = vst [vmem:[#allocation3 + $0xc8] sm:$0xff] %v5307
    %5372 = vst [vmem:[#allocation3 + $0x110] sm:$0xff] %v5308
    %5373 = vst [vmem:[#allocation3 + $0x158] sm:$0xff] %v5309
    %5374 = vst [vmem:[#allocation3 + $0x1a0] sm:$0xff] %v5310
    %5375 = vst [vmem:[#allocation3 + $0x1e8] sm:$0xff] %v5311
    %5376 = vst [vmem:[#allocation3 + $0x230] sm:$0xff] %v5312
    %5377 = vst [vmem:[#allocation3 + $0x278] sm:$0xff] %v5313
    %5378 = vst [vmem:[#allocation3 + $0x2c0] sm:$0xff] %v5314
    %5379 = vst [vmem:[#allocation3 + $0x308] sm:$0xff] %v5315
    %5380 = vst [vmem:[#allocation3 + $0x350] sm:$0xff] %v5316
    %5381 = vst [vmem:[#allocation3 + $0x398] sm:$0xff] %v5317
    %5382 = vst [vmem:[#allocation3 + $0x3e0] sm:$0xff] %v5318
    %5383 = vst [vmem:[#allocation3 + $0x428] sm:$0xff] %v5319
    %5384 = vst [vmem:[#allocation3 + $0x470] sm:$0xff] %v5320
    %5385 = vst [vmem:[#allocation3 + $0x4b8] sm:$0xff] %v5321
    %5386 = vst [vmem:[#allocation3 + $0x500] sm:$0xff] %v5322
    %5387 = vst [vmem:[#allocation3 + $0x548] sm:$0xff] %v5323
    %5388 = vst [vmem:[#allocation3 + $0x590] sm:$0xff] %v5324
    %5389 = vst [vmem:[#allocation3 + $0x5d8] sm:$0xff] %v5325
    %5390 = vst [vmem:[#allocation3 + $0x620] sm:$0xff] %v5326
    %5391 = vst [vmem:[#allocation3 + $0x668] sm:$0xff] %v5327
    %5392 = vst [vmem:[#allocation3 + $0x6b0] sm:$0xff] %v5328
    %5393 = vst [vmem:[#allocation3 + $0x6f8] sm:$0xff] %v5329
    %5394 = vst [vmem:[#allocation3 + $0x740] sm:$0xff] %v5330
    %5395 = vst [vmem:[#allocation3 + $0x788] sm:$0xff] %v5331
    %5396 = vst [vmem:[#allocation3 + $0x7d0] sm:$0xff] %v5332
    %5397 = vst [vmem:[#allocation3 + $0x818] sm:$0xff] %v5333
    %5398 = vst [vmem:[#allocation3 + $0x860] sm:$0xff] %v5334
    %5399 = vst [vmem:[#allocation3 + $0x8a8] sm:$0xff] %v5335
    %5400 = vst [vmem:[#allocation3 + $0x8f0] sm:$0xff] %v5336
    %5401 = vst [vmem:[#allocation3 + $0x938] sm:$0xff] %v5337
    %5402 = vst [vmem:[#allocation3 + $0x980] sm:$0xff] %v5338
    %5403 = vst [vmem:[#allocation3 + $0x9c8] sm:$0xff] %v5339
    %5404 = vst [vmem:[#allocation3 + $0xa10] sm:$0xff] %v5340
    %5405 = vst [vmem:[#allocation3 + $0xa58] sm:$0xff] %v5341
    %5406 = vst [vmem:[#allocation3 + $0xaa0] sm:$0xff] %v5342
    %5407 = vst [vmem:[#allocation3 + $0xae8] sm:$0xff] %v5343
    %5408 = vst [vmem:[#allocation3 + $0xb30] sm:$0xff] %v5344
    %5409 = vst [vmem:[#allocation3 + $0xb78] sm:$0xff] %v5345
    %5410 = vst [vmem:[#allocation3 + $0xbc0] sm:$0xff] %v5346
    %5411 = vst [vmem:[#allocation3 + $0xc08] sm:$0xff] %v5347
    %5412 = vst [vmem:[#allocation3 + $0xc50] sm:$0xff] %v5348
    %5413 = vst [vmem:[#allocation3 + $0xc98] sm:$0xff] %v5349
    %5414 = vst [vmem:[#allocation3 + $0xce0] sm:$0xff] %v5350
    %5415 = vst [vmem:[#allocation3 + $0xd28] sm:$0xff] %v5351
    %5416 = vst [vmem:[#allocation3 + $0xd70] sm:$0xff] %v5352
    %5417 = vst [vmem:[#allocation3 + $0xdb8] sm:$0xff] %v5353
    %5418 = vst [vmem:[#allocation3 + $0xe00] sm:$0xff] %v5354
    %5419 = vst [vmem:[#allocation3 + $0xe48] sm:$0xff] %v5355
    %5420 = vst [vmem:[#allocation3 + $0xe90] sm:$0xff] %v5356
    %5421 = vst [vmem:[#allocation3 + $0xed8] sm:$0xff] %v5357
    %5422 = vst [vmem:[#allocation3 + $0xf20] sm:$0xff] %v5358
    %5423 = vst [vmem:[#allocation3 + $0xf68] sm:$0xff] %v5359
    %5424 = vst [vmem:[#allocation3 + $0xfb0] sm:$0xff] %v5360
    %5425 = vst [vmem:[#allocation3 + $0xff8] sm:$0xff] %v5361
    %5426 = vst [vmem:[#allocation3 + $0x1040] sm:$0xff] %v5362
    %5427 = vst [vmem:[#allocation3 + $0x1088] sm:$0xff] %v5363
    %5428 = vst [vmem:[#allocation3 + $0x10d0] sm:$0xff] %v5364
    %5429 = vst [vmem:[#allocation3 + $0x1118] sm:$0xff] %v5365
    %5430 = vst [vmem:[#allocation3 + $0x1160] sm:$0xff] %v5366
    %5431 = vst [vmem:[#allocation3 + $0x11a8] sm:$0xff] %v5367
    %5432 = vst [vmem:[#allocation3 + $0x11f0] sm:$0xff] %v5368
    %v5433 = vld [vmem:[%s5176 + $0x2] sm:$0xff]
    %v5434 = vld [vmem:[%s5176 + $0xa] sm:$0xff]
    %v5435 = vld [vmem:[%s5176 + $0x1a] sm:$0xff]
    %v5436 = vld [vmem:[%s5176 + $0x22] sm:$0xff]
    %v5437 = vld [vmem:[%s5176 + $0x32] sm:$0xff]
    %v5438 = vld [vmem:[%s5176 + $0x3a] sm:$0xff]
    %v5439 = vld [vmem:[%s5176 + $0x4a] sm:$0xff]
    %v5440 = vld [vmem:[%s5176 + $0x52] sm:$0xff]
    %v5441 = vld [vmem:[%s5176 + $0x62] sm:$0xff]
    %v5442 = vld [vmem:[%s5176 + $0x6a] sm:$0xff]
    %v5443 = vld [vmem:[%s5176 + $0x7a] sm:$0xff]
    %v5444 = vld [vmem:[%s5176 + $0x82] sm:$0xff]
    %v5445 = vld [vmem:[%s5176 + $0x92] sm:$0xff]
    %v5446 = vld [vmem:[%s5176 + $0x9a] sm:$0xff]
    %v5447 = vld [vmem:[%s5176 + $0xaa] sm:$0xff]
    %v5448 = vld [vmem:[%s5176 + $0xb2] sm:$0xff]
    %v5449 = vld [vmem:[%s5176 + $0xc2] sm:$0xff]
    %v5450 = vld [vmem:[%s5176 + $0xca] sm:$0xff]
    %v5451 = vld [vmem:[%s5176 + $0xda] sm:$0xff]
    %v5452 = vld [vmem:[%s5176 + $0xe2] sm:$0xff]
    %v5453 = vld [vmem:[%s5176 + $0xf2] sm:$0xff]
    %v5454 = vld [vmem:[%s5176 + $0xfa] sm:$0xff]
    %v5455 = vld [vmem:[%s5176 + $0x10a] sm:$0xff]
    %v5456 = vld [vmem:[%s5176 + $0x112] sm:$0xff]
    %v5457 = vld [vmem:[%s5176 + $0x122] sm:$0xff]
    %v5458 = vld [vmem:[%s5176 + $0x12a] sm:$0xff]
    %v5459 = vld [vmem:[%s5176 + $0x13a] sm:$0xff]
    %v5460 = vld [vmem:[%s5176 + $0x142] sm:$0xff]
    %v5461 = vld [vmem:[%s5176 + $0x152] sm:$0xff]
    %v5462 = vld [vmem:[%s5176 + $0x15a] sm:$0xff]
    %v5463 = vld [vmem:[%s5176 + $0x16a] sm:$0xff]
    %v5464 = vld [vmem:[%s5176 + $0x172] sm:$0xff]
    %v5465 = vld [vmem:[%s5176 + $0x1b2] sm:$0xff]
    %v5466 = vld [vmem:[%s5176 + $0x1ba] sm:$0xff]
    %v5467 = vld [vmem:[%s5176 + $0x1ca] sm:$0xff]
    %v5468 = vld [vmem:[%s5176 + $0x1d2] sm:$0xff]
    %v5469 = vld [vmem:[%s5176 + $0x1e2] sm:$0xff]
    %v5470 = vld [vmem:[%s5176 + $0x1ea] sm:$0xff]
    %v5471 = vld [vmem:[%s5176 + $0x1fa] sm:$0xff]
    %v5472 = vld [vmem:[%s5176 + $0x202] sm:$0xff]
    %v5473 = vld [vmem:[%s5176 + $0x212] sm:$0xff]
    %v5474 = vld [vmem:[%s5176 + $0x21a] sm:$0xff]
    %v5475 = vld [vmem:[%s5176 + $0x22a] sm:$0xff]
    %v5476 = vld [vmem:[%s5176 + $0x232] sm:$0xff]
    %v5477 = vld [vmem:[%s5176 + $0x242] sm:$0xff]
    %v5478 = vld [vmem:[%s5176 + $0x24a] sm:$0xff]
    %v5479 = vld [vmem:[%s5176 + $0x25a] sm:$0xff]
    %v5480 = vld [vmem:[%s5176 + $0x262] sm:$0xff]
    %v5481 = vld [vmem:[%s5176 + $0x272] sm:$0xff]
    %v5482 = vld [vmem:[%s5176 + $0x27a] sm:$0xff]
    %v5483 = vld [vmem:[%s5176 + $0x28a] sm:$0xff]
    %v5484 = vld [vmem:[%s5176 + $0x292] sm:$0xff]
    %v5485 = vld [vmem:[%s5176 + $0x2a2] sm:$0xff]
    %v5486 = vld [vmem:[%s5176 + $0x2aa] sm:$0xff]
    %v5487 = vld [vmem:[%s5176 + $0x2ba] sm:$0xff]
    %v5488 = vld [vmem:[%s5176 + $0x2c2] sm:$0xff]
    %v5489 = vld [vmem:[%s5176 + $0x2d2] sm:$0xff]
    %v5490 = vld [vmem:[%s5176 + $0x2da] sm:$0xff]
    %v5491 = vld [vmem:[%s5176 + $0x2ea] sm:$0xff]
    %v5492 = vld [vmem:[%s5176 + $0x2f2] sm:$0xff]
    %v5493 = vld [vmem:[%s5176 + $0x302] sm:$0xff]
    %v5494 = vld [vmem:[%s5176 + $0x30a] sm:$0xff]
    %v5495 = vld [vmem:[%s5176 + $0x31a] sm:$0xff]
    %v5496 = vld [vmem:[%s5176 + $0x322] sm:$0xff]
    %5497 = vst [vmem:[#allocation3 + $0x40] sm:$0xff] %v5433
    %5498 = vst [vmem:[#allocation3 + $0x88] sm:$0xff] %v5434
    %5499 = vst [vmem:[#allocation3 + $0xd0] sm:$0xff] %v5435
    %5500 = vst [vmem:[#allocation3 + $0x118] sm:$0xff] %v5436
    %5501 = vst [vmem:[#allocation3 + $0x160] sm:$0xff] %v5437
    %5502 = vst [vmem:[#allocation3 + $0x1a8] sm:$0xff] %v5438
    %5503 = vst [vmem:[#allocation3 + $0x1f0] sm:$0xff] %v5439
    %5504 = vst [vmem:[#allocation3 + $0x238] sm:$0xff] %v5440
    %5505 = vst [vmem:[#allocation3 + $0x280] sm:$0xff] %v5441
    %5506 = vst [vmem:[#allocation3 + $0x2c8] sm:$0xff] %v5442
    %5507 = vst [vmem:[#allocation3 + $0x310] sm:$0xff] %v5443
    %5508 = vst [vmem:[#allocation3 + $0x358] sm:$0xff] %v5444
    %5509 = vst [vmem:[#allocation3 + $0x3a0] sm:$0xff] %v5445
    %5510 = vst [vmem:[#allocation3 + $0x3e8] sm:$0xff] %v5446
    %5511 = vst [vmem:[#allocation3 + $0x430] sm:$0xff] %v5447
    %5512 = vst [vmem:[#allocation3 + $0x478] sm:$0xff] %v5448
    %5513 = vst [vmem:[#allocation3 + $0x4c0] sm:$0xff] %v5449
    %5514 = vst [vmem:[#allocation3 + $0x508] sm:$0xff] %v5450
    %5515 = vst [vmem:[#allocation3 + $0x550] sm:$0xff] %v5451
    %5516 = vst [vmem:[#allocation3 + $0x598] sm:$0xff] %v5452
    %5517 = vst [vmem:[#allocation3 + $0x5e0] sm:$0xff] %v5453
    %5518 = vst [vmem:[#allocation3 + $0x628] sm:$0xff] %v5454
    %5519 = vst [vmem:[#allocation3 + $0x670] sm:$0xff] %v5455
    %5520 = vst [vmem:[#allocation3 + $0x6b8] sm:$0xff] %v5456
    %5521 = vst [vmem:[#allocation3 + $0x700] sm:$0xff] %v5457
    %5522 = vst [vmem:[#allocation3 + $0x748] sm:$0xff] %v5458
    %5523 = vst [vmem:[#allocation3 + $0x790] sm:$0xff] %v5459
    %5524 = vst [vmem:[#allocation3 + $0x7d8] sm:$0xff] %v5460
    %5525 = vst [vmem:[#allocation3 + $0x820] sm:$0xff] %v5461
    %5526 = vst [vmem:[#allocation3 + $0x868] sm:$0xff] %v5462
    %5527 = vst [vmem:[#allocation3 + $0x8b0] sm:$0xff] %v5463
    %5528 = vst [vmem:[#allocation3 + $0x8f8] sm:$0xff] %v5464
    %5529 = vst [vmem:[#allocation3 + $0x940] sm:$0xff] %v5465
    %5530 = vst [vmem:[#allocation3 + $0x988] sm:$0xff] %v5466
    %5531 = vst [vmem:[#allocation3 + $0x9d0] sm:$0xff] %v5467
    %5532 = vst [vmem:[#allocation3 + $0xa18] sm:$0xff] %v5468
    %5533 = vst [vmem:[#allocation3 + $0xa60] sm:$0xff] %v5469
    %5534 = vst [vmem:[#allocation3 + $0xaa8] sm:$0xff] %v5470
    %5535 = vst [vmem:[#allocation3 + $0xaf0] sm:$0xff] %v5471
    %5536 = vst [vmem:[#allocation3 + $0xb38] sm:$0xff] %v5472
    %5537 = vst [vmem:[#allocation3 + $0xb80] sm:$0xff] %v5473
    %5538 = vst [vmem:[#allocation3 + $0xbc8] sm:$0xff] %v5474
    %5539 = vst [vmem:[#allocation3 + $0xc10] sm:$0xff] %v5475
    %5540 = vst [vmem:[#allocation3 + $0xc58] sm:$0xff] %v5476
    %5541 = vst [vmem:[#allocation3 + $0xca0] sm:$0xff] %v5477
    %5542 = vst [vmem:[#allocation3 + $0xce8] sm:$0xff] %v5478
    %5543 = vst [vmem:[#allocation3 + $0xd30] sm:$0xff] %v5479
    %5544 = vst [vmem:[#allocation3 + $0xd78] sm:$0xff] %v5480
    %5545 = vst [vmem:[#allocation3 + $0xdc0] sm:$0xff] %v5481
    %5546 = vst [vmem:[#allocation3 + $0xe08] sm:$0xff] %v5482
    %5547 = vst [vmem:[#allocation3 + $0xe50] sm:$0xff] %v5483
    %5548 = vst [vmem:[#allocation3 + $0xe98] sm:$0xff] %v5484
    %5549 = vst [vmem:[#allocation3 + $0xee0] sm:$0xff] %v5485
    %5550 = vst [vmem:[#allocation3 + $0xf28] sm:$0xff] %v5486
    %5551 = vst [vmem:[#allocation3 + $0xf70] sm:$0xff] %v5487
    %5552 = vst [vmem:[#allocation3 + $0xfb8] sm:$0xff] %v5488
    %5553 = vst [vmem:[#allocation3 + $0x1000] sm:$0xff] %v5489
    %5554 = vst [vmem:[#allocation3 + $0x1048] sm:$0xff] %v5490
    %5555 = vst [vmem:[#allocation3 + $0x1090] sm:$0xff] %v5491
    %5556 = vst [vmem:[#allocation3 + $0x10d8] sm:$0xff] %v5492
    %5557 = vst [vmem:[#allocation3 + $0x1120] sm:$0xff] %v5493
    %5558 = vst [vmem:[#allocation3 + $0x1168] sm:$0xff] %v5494
    %5559 = vst [vmem:[#allocation3 + $0x11b0] sm:$0xff] %v5495
    %5560 = vst [vmem:[#allocation3 + $0x11f8] sm:$0xff] %v5496
    %v5561 = vld [vmem:[#allocation3] sm:$0xff]
    %v5562 = vld [vmem:[#allocation3 + $0x8] sm:$0xff]
    %v5563 = vld [vmem:[#allocation3 + $0x10] sm:$0xff]
    %v5564 = vld [vmem:[#allocation3 + $0x18] sm:$0xff]
    %v5565 = vld [vmem:[#allocation3 + $0x20] sm:$0xff]
    %v5566 = vld [vmem:[#allocation3 + $0x28] sm:$0xff]
    %v5567 = vld [vmem:[#allocation3 + $0x30] sm:$0xff]
    %v5568 = vld [vmem:[#allocation3 + $0x38] sm:$0xff]
    %v5569 = vld [vmem:[#allocation3 + $0x40] sm:$0xff]
    %v5570 = vld [vmem:[#allocation3 + $0x48] sm:$0xff]
    %v5571 = vld [vmem:[#allocation3 + $0x50] sm:$0xff]
    %v5572 = vld [vmem:[#allocation3 + $0x58] sm:$0xff]
    %v5573 = vld [vmem:[#allocation3 + $0x60] sm:$0xff]
    %v5574 = vld [vmem:[#allocation3 + $0x68] sm:$0xff]
    %v5575 = vld [vmem:[#allocation3 + $0x70] sm:$0xff]
    %v5576 = vld [vmem:[#allocation3 + $0x78] sm:$0xff]
    %v5577 = vld [vmem:[#allocation3 + $0x80] sm:$0xff]
    %v5578 = vld [vmem:[#allocation3 + $0x88] sm:$0xff]
    %v5579 = vld [vmem:[#allocation3 + $0x90] sm:$0xff]
    %v5580 = vld [vmem:[#allocation3 + $0x98] sm:$0xff]
    %v5581 = vld [vmem:[#allocation3 + $0xa0] sm:$0xff]
    %v5582 = vld [vmem:[#allocation3 + $0xa8] sm:$0xff]
    %v5583 = vld [vmem:[#allocation3 + $0xb0] sm:$0xff]
    %v5584 = vld [vmem:[#allocation3 + $0xb8] sm:$0xff]
    %v5585 = vld [vmem:[#allocation3 + $0xc0] sm:$0xff]
    %v5586 = vld [vmem:[#allocation3 + $0xc8] sm:$0xff]
    %v5587 = vld [vmem:[#allocation3 + $0xd0] sm:$0xff]
    %v5588 = vld [vmem:[#allocation3 + $0xd8] sm:$0xff]
    %v5589 = vld [vmem:[#allocation3 + $0xe0] sm:$0xff]
    %v5590 = vld [vmem:[#allocation3 + $0xe8] sm:$0xff]
    %v5591 = vld [vmem:[#allocation3 + $0xf0] sm:$0xff]
    %v5592 = vld [vmem:[#allocation3 + $0xf8] sm:$0xff]
    %v5593 = vld [vmem:[#allocation3 + $0x100] sm:$0xff]
    %v5594 = vld [vmem:[#allocation3 + $0x108] sm:$0xff]
    %v5595 = vld [vmem:[#allocation3 + $0x110] sm:$0xff]
    %v5596 = vld [vmem:[#allocation3 + $0x118] sm:$0xff]
    %v5597 = vld [vmem:[#allocation3 + $0x120] sm:$0xff]
    %v5598 = vld [vmem:[#allocation3 + $0x128] sm:$0xff]
    %v5599 = vld [vmem:[#allocation3 + $0x130] sm:$0xff]
    %v5600 = vld [vmem:[#allocation3 + $0x138] sm:$0xff]
    %v5601 = vld [vmem:[#allocation3 + $0x140] sm:$0xff]
    %v5602 = vld [vmem:[#allocation3 + $0x148] sm:$0xff]
    %v5603 = vld [vmem:[#allocation3 + $0x150] sm:$0xff]
    %v5604 = vld [vmem:[#allocation3 + $0x158] sm:$0xff]
    %v5605 = vld [vmem:[#allocation3 + $0x160] sm:$0xff]
    %v5606 = vld [vmem:[#allocation3 + $0x168] sm:$0xff]
    %v5607 = vld [vmem:[#allocation3 + $0x170] sm:$0xff]
    %v5608 = vld [vmem:[#allocation3 + $0x178] sm:$0xff]
    %v5609 = vld [vmem:[#allocation3 + $0x180] sm:$0xff]
    %v5610 = vld [vmem:[#allocation3 + $0x188] sm:$0xff]
    %v5611 = vld [vmem:[#allocation3 + $0x190] sm:$0xff]
    %v5612 = vld [vmem:[#allocation3 + $0x198] sm:$0xff]
    %v5613 = vld [vmem:[#allocation3 + $0x1a0] sm:$0xff]
    %v5614 = vld [vmem:[#allocation3 + $0x1a8] sm:$0xff]
    %v5615 = vld [vmem:[#allocation3 + $0x1b0] sm:$0xff]
    %v5616 = vld [vmem:[#allocation3 + $0x1b8] sm:$0xff]
    %v5617 = vld [vmem:[#allocation3 + $0x1c0] sm:$0xff]
    %v5618 = vld [vmem:[#allocation3 + $0x1c8] sm:$0xff]
    %v5619 = vld [vmem:[#allocation3 + $0x1d0] sm:$0xff]
    %v5620 = vld [vmem:[#allocation3 + $0x1d8] sm:$0xff]
    %v5621 = vld [vmem:[#allocation3 + $0x1e0] sm:$0xff]
    %v5622 = vld [vmem:[#allocation3 + $0x1e8] sm:$0xff]
    %v5623 = vld [vmem:[#allocation3 + $0x1f0] sm:$0xff]
    %v5624 = vld [vmem:[#allocation3 + $0x1f8] sm:$0xff]
    %v5625 = vld [vmem:[#allocation3 + $0x200] sm:$0xff]
    %v5626 = vld [vmem:[#allocation3 + $0x208] sm:$0xff]
    %v5627 = vld [vmem:[#allocation3 + $0x210] sm:$0xff]
    %v5628 = vld [vmem:[#allocation3 + $0x218] sm:$0xff]
    %v5629 = vld [vmem:[#allocation3 + $0x220] sm:$0xff]
    %v5630 = vld [vmem:[#allocation3 + $0x228] sm:$0xff]
    %v5631 = vld [vmem:[#allocation3 + $0x230] sm:$0xff]
    %v5632 = vld [vmem:[#allocation3 + $0x238] sm:$0xff]
    %v5633 = vld [vmem:[#allocation3 + $0x240] sm:$0xff]
    %v5634 = vld [vmem:[#allocation3 + $0x248] sm:$0xff]
    %v5635 = vld [vmem:[#allocation3 + $0x250] sm:$0xff]
    %v5636 = vld [vmem:[#allocation3 + $0x258] sm:$0xff]
    %v5637 = vld [vmem:[#allocation3 + $0x260] sm:$0xff]
    %v5638 = vld [vmem:[#allocation3 + $0x268] sm:$0xff]
    %v5639 = vld [vmem:[#allocation3 + $0x270] sm:$0xff]
    %v5640 = vld [vmem:[#allocation3 + $0x278] sm:$0xff]
    %v5641 = vld [vmem:[#allocation3 + $0x280] sm:$0xff]
    %v5642 = vld [vmem:[#allocation3 + $0x288] sm:$0xff]
    %v5643 = vld [vmem:[#allocation3 + $0x290] sm:$0xff]
    %v5644 = vld [vmem:[#allocation3 + $0x298] sm:$0xff]
    %v5645 = vld [vmem:[#allocation3 + $0x2a0] sm:$0xff]
    %v5646 = vld [vmem:[#allocation3 + $0x2a8] sm:$0xff]
    %v5647 = vld [vmem:[#allocation3 + $0x2b0] sm:$0xff]
    %v5648 = vld [vmem:[#allocation3 + $0x2b8] sm:$0xff]
    %v5649 = vld [vmem:[#allocation3 + $0x2c0] sm:$0xff]
    %v5650 = vld [vmem:[#allocation3 + $0x2c8] sm:$0xff]
    %v5651 = vld [vmem:[#allocation3 + $0x2d0] sm:$0xff]
    %v5652 = vld [vmem:[#allocation3 + $0x2d8] sm:$0xff]
    %v5653 = vld [vmem:[#allocation3 + $0x2e0] sm:$0xff]
    %v5654 = vld [vmem:[#allocation3 + $0x2e8] sm:$0xff]
    %v5655 = vld [vmem:[#allocation3 + $0x2f0] sm:$0xff]
    %v5656 = vld [vmem:[#allocation3 + $0x2f8] sm:$0xff]
    %v5657 = vld [vmem:[#allocation3 + $0x300] sm:$0xff]
    %v5658 = vld [vmem:[#allocation3 + $0x308] sm:$0xff]
    %v5659 = vld [vmem:[#allocation3 + $0x310] sm:$0xff]
    %v5660 = vld [vmem:[#allocation3 + $0x318] sm:$0xff]
    %v5661 = vld [vmem:[#allocation3 + $0x320] sm:$0xff]
    %v5662 = vld [vmem:[#allocation3 + $0x328] sm:$0xff]
    %v5663 = vld [vmem:[#allocation3 + $0x330] sm:$0xff]
    %v5664 = vld [vmem:[#allocation3 + $0x338] sm:$0xff]
    %v5665 = vld [vmem:[#allocation3 + $0x340] sm:$0xff]
    %v5666 = vld [vmem:[#allocation3 + $0x348] sm:$0xff]
    %v5667 = vld [vmem:[#allocation3 + $0x350] sm:$0xff]
    %v5668 = vld [vmem:[#allocation3 + $0x358] sm:$0xff]
    %v5669 = vld [vmem:[#allocation3 + $0x360] sm:$0xff]
    %v5670 = vld [vmem:[#allocation3 + $0x368] sm:$0xff]
    %v5671 = vld [vmem:[#allocation3 + $0x370] sm:$0xff]
    %v5672 = vld [vmem:[#allocation3 + $0x378] sm:$0xff]
    %v5673 = vld [vmem:[#allocation3 + $0x380] sm:$0xff]
    %v5674 = vld [vmem:[#allocation3 + $0x388] sm:$0xff]
    %v5675 = vld [vmem:[#allocation3 + $0x390] sm:$0xff]
    %v5676 = vld [vmem:[#allocation3 + $0x398] sm:$0xff]
    %v5677 = vld [vmem:[#allocation3 + $0x3a0] sm:$0xff]
    %v5678 = vld [vmem:[#allocation3 + $0x3a8] sm:$0xff]
    %v5679 = vld [vmem:[#allocation3 + $0x3b0] sm:$0xff]
    %v5680 = vld [vmem:[#allocation3 + $0x3b8] sm:$0xff]
    %v5681 = vld [vmem:[#allocation3 + $0x3c0] sm:$0xff]
    %v5682 = vld [vmem:[#allocation3 + $0x3c8] sm:$0xff]
    %v5683 = vld [vmem:[#allocation3 + $0x3d0] sm:$0xff]
    %v5684 = vld [vmem:[#allocation3 + $0x3d8] sm:$0xff]
    %v5685 = vld [vmem:[#allocation3 + $0x3e0] sm:$0xff]
    %v5686 = vld [vmem:[#allocation3 + $0x3e8] sm:$0xff]
    %v5687 = vld [vmem:[#allocation3 + $0x3f0] sm:$0xff]
    %v5688 = vld [vmem:[#allocation3 + $0x3f8] sm:$0xff]
    %v5689 = vld [vmem:[#allocation3 + $0x400] sm:$0xff]
    %v5690 = vld [vmem:[#allocation3 + $0x408] sm:$0xff]
    %v5691 = vld [vmem:[#allocation3 + $0x410] sm:$0xff]
    %v5692 = vld [vmem:[#allocation3 + $0x418] sm:$0xff]
    %v5693 = vld [vmem:[#allocation3 + $0x420] sm:$0xff]
    %v5694 = vld [vmem:[#allocation3 + $0x428] sm:$0xff]
    %v5695 = vld [vmem:[#allocation3 + $0x430] sm:$0xff]
    %v5696 = vld [vmem:[#allocation3 + $0x438] sm:$0xff]
    %v5697 = vld [vmem:[#allocation3 + $0x440] sm:$0xff]
    %v5698 = vld [vmem:[#allocation3 + $0x448] sm:$0xff]
    %v5699 = vld [vmem:[#allocation3 + $0x450] sm:$0xff]
    %v5700 = vld [vmem:[#allocation3 + $0x458] sm:$0xff]
    %v5701 = vld [vmem:[#allocation3 + $0x460] sm:$0xff]
    %v5702 = vld [vmem:[#allocation3 + $0x468] sm:$0xff]
    %v5703 = vld [vmem:[#allocation3 + $0x470] sm:$0xff]
    %v5704 = vld [vmem:[#allocation3 + $0x478] sm:$0xff]
    %v5705 = vld [vmem:[#allocation3 + $0x480] sm:$0xff]
    %v5706 = vld [vmem:[#allocation3 + $0x488] sm:$0xff]
    %v5707 = vld [vmem:[#allocation3 + $0x490] sm:$0xff]
    %v5708 = vld [vmem:[#allocation3 + $0x498] sm:$0xff]
    %v5709 = vld [vmem:[#allocation3 + $0x4a0] sm:$0xff]
    %v5710 = vld [vmem:[#allocation3 + $0x4a8] sm:$0xff]
    %v5711 = vld [vmem:[#allocation3 + $0x4b0] sm:$0xff]
    %v5712 = vld [vmem:[#allocation3 + $0x4b8] sm:$0xff]
    %v5713 = vld [vmem:[#allocation3 + $0x4c0] sm:$0xff]
    %v5714 = vld [vmem:[#allocation3 + $0x4c8] sm:$0xff]
    %v5715 = vld [vmem:[#allocation3 + $0x4d0] sm:$0xff]
    %v5716 = vld [vmem:[#allocation3 + $0x4d8] sm:$0xff]
    %v5717 = vld [vmem:[#allocation3 + $0x4e0] sm:$0xff]
    %v5718 = vld [vmem:[#allocation3 + $0x4e8] sm:$0xff]
    %v5719 = vld [vmem:[#allocation3 + $0x4f0] sm:$0xff]
    %v5720 = vld [vmem:[#allocation3 + $0x4f8] sm:$0xff]
    %v5721 = vld [vmem:[#allocation3 + $0x500] sm:$0xff]
    %v5722 = vld [vmem:[#allocation3 + $0x508] sm:$0xff]
    %v5723 = vld [vmem:[#allocation3 + $0x510] sm:$0xff]
    %v5724 = vld [vmem:[#allocation3 + $0x518] sm:$0xff]
    %v5725 = vld [vmem:[#allocation3 + $0x520] sm:$0xff]
    %v5726 = vld [vmem:[#allocation3 + $0x528] sm:$0xff]
    %v5727 = vld [vmem:[#allocation3 + $0x530] sm:$0xff]
    %v5728 = vld [vmem:[#allocation3 + $0x538] sm:$0xff]
    %v5729 = vld [vmem:[#allocation3 + $0x540] sm:$0xff]
    %v5730 = vld [vmem:[#allocation3 + $0x548] sm:$0xff]
    %v5731 = vld [vmem:[#allocation3 + $0x550] sm:$0xff]
    %v5732 = vld [vmem:[#allocation3 + $0x558] sm:$0xff]
    %v5733 = vld [vmem:[#allocation3 + $0x560] sm:$0xff]
    %v5734 = vld [vmem:[#allocation3 + $0x568] sm:$0xff]
    %v5735 = vld [vmem:[#allocation3 + $0x570] sm:$0xff]
    %v5736 = vld [vmem:[#allocation3 + $0x578] sm:$0xff]
    %v5737 = vld [vmem:[#allocation3 + $0x580] sm:$0xff]
    %v5738 = vld [vmem:[#allocation3 + $0x588] sm:$0xff]
    %v5739 = vld [vmem:[#allocation3 + $0x590] sm:$0xff]
    %v5740 = vld [vmem:[#allocation3 + $0x598] sm:$0xff]
    %v5741 = vld [vmem:[#allocation3 + $0x5a0] sm:$0xff]
    %v5742 = vld [vmem:[#allocation3 + $0x5a8] sm:$0xff]
    %v5743 = vld [vmem:[#allocation3 + $0x5b0] sm:$0xff]
    %v5744 = vld [vmem:[#allocation3 + $0x5b8] sm:$0xff]
    %v5745 = vld [vmem:[#allocation3 + $0x5c0] sm:$0xff]
    %v5746 = vld [vmem:[#allocation3 + $0x5c8] sm:$0xff]
    %v5747 = vld [vmem:[#allocation3 + $0x5d0] sm:$0xff]
    %v5748 = vld [vmem:[#allocation3 + $0x5d8] sm:$0xff]
    %v5749 = vld [vmem:[#allocation3 + $0x5e0] sm:$0xff]
    %v5750 = vld [vmem:[#allocation3 + $0x5e8] sm:$0xff]
    %v5751 = vld [vmem:[#allocation3 + $0x5f0] sm:$0xff]
    %v5752 = vld [vmem:[#allocation3 + $0x5f8] sm:$0xff]
    %v5753 = vld [vmem:[#allocation3 + $0x600] sm:$0xff]
    %v5754 = vld [vmem:[#allocation3 + $0x608] sm:$0xff]
    %v5755 = vld [vmem:[#allocation3 + $0x610] sm:$0xff]
    %v5756 = vld [vmem:[#allocation3 + $0x618] sm:$0xff]
    %v5757 = vld [vmem:[#allocation3 + $0x620] sm:$0xff]
    %v5758 = vld [vmem:[#allocation3 + $0x628] sm:$0xff]
    %v5759 = vld [vmem:[#allocation3 + $0x630] sm:$0xff]
    %v5760 = vld [vmem:[#allocation3 + $0x638] sm:$0xff]
    %v5761 = vld [vmem:[#allocation3 + $0x640] sm:$0xff]
    %v5762 = vld [vmem:[#allocation3 + $0x648] sm:$0xff]
    %v5763 = vld [vmem:[#allocation3 + $0x650] sm:$0xff]
    %v5764 = vld [vmem:[#allocation3 + $0x658] sm:$0xff]
    %v5765 = vld [vmem:[#allocation3 + $0x660] sm:$0xff]
    %v5766 = vld [vmem:[#allocation3 + $0x668] sm:$0xff]
    %v5767 = vld [vmem:[#allocation3 + $0x670] sm:$0xff]
    %v5768 = vld [vmem:[#allocation3 + $0x678] sm:$0xff]
    %v5769 = vld [vmem:[#allocation3 + $0x680] sm:$0xff]
    %v5770 = vld [vmem:[#allocation3 + $0x688] sm:$0xff]
    %v5771 = vld [vmem:[#allocation3 + $0x690] sm:$0xff]
    %v5772 = vld [vmem:[#allocation3 + $0x698] sm:$0xff]
    %v5773 = vld [vmem:[#allocation3 + $0x6a0] sm:$0xff]
    %v5774 = vld [vmem:[#allocation3 + $0x6a8] sm:$0xff]
    %v5775 = vld [vmem:[#allocation3 + $0x6b0] sm:$0xff]
    %v5776 = vld [vmem:[#allocation3 + $0x6b8] sm:$0xff]
    %v5777 = vld [vmem:[#allocation3 + $0x6c0] sm:$0xff]
    %v5778 = vld [vmem:[#allocation3 + $0x6c8] sm:$0xff]
    %v5779 = vld [vmem:[#allocation3 + $0x6d0] sm:$0xff]
    %v5780 = vld [vmem:[#allocation3 + $0x6d8] sm:$0xff]
    %v5781 = vld [vmem:[#allocation3 + $0x6e0] sm:$0xff]
    %v5782 = vld [vmem:[#allocation3 + $0x6e8] sm:$0xff]
    %v5783 = vld [vmem:[#allocation3 + $0x6f0] sm:$0xff]
    %v5784 = vld [vmem:[#allocation3 + $0x6f8] sm:$0xff]
    %v5785 = vld [vmem:[#allocation3 + $0x700] sm:$0xff]
    %v5786 = vld [vmem:[#allocation3 + $0x708] sm:$0xff]
    %v5787 = vld [vmem:[#allocation3 + $0x710] sm:$0xff]
    %v5788 = vld [vmem:[#allocation3 + $0x718] sm:$0xff]
    %v5789 = vld [vmem:[#allocation3 + $0x720] sm:$0xff]
    %v5790 = vld [vmem:[#allocation3 + $0x728] sm:$0xff]
    %v5791 = vld [vmem:[#allocation3 + $0x730] sm:$0xff]
    %v5792 = vld [vmem:[#allocation3 + $0x738] sm:$0xff]
    %v5793 = vld [vmem:[#allocation3 + $0x740] sm:$0xff]
    %v5794 = vld [vmem:[#allocation3 + $0x748] sm:$0xff]
    %v5795 = vld [vmem:[#allocation3 + $0x750] sm:$0xff]
    %v5796 = vld [vmem:[#allocation3 + $0x758] sm:$0xff]
    %v5797 = vld [vmem:[#allocation3 + $0x760] sm:$0xff]
    %v5798 = vld [vmem:[#allocation3 + $0x768] sm:$0xff]
    %v5799 = vld [vmem:[#allocation3 + $0x770] sm:$0xff]
    %v5800 = vld [vmem:[#allocation3 + $0x778] sm:$0xff]
    %v5801 = vld [vmem:[#allocation3 + $0x780] sm:$0xff]
    %v5802 = vld [vmem:[#allocation3 + $0x788] sm:$0xff]
    %v5803 = vld [vmem:[#allocation3 + $0x790] sm:$0xff]
    %v5804 = vld [vmem:[#allocation3 + $0x798] sm:$0xff]
    %v5805 = vld [vmem:[#allocation3 + $0x7a0] sm:$0xff]
    %v5806 = vld [vmem:[#allocation3 + $0x7a8] sm:$0xff]
    %v5807 = vld [vmem:[#allocation3 + $0x7b0] sm:$0xff]
    %v5808 = vld [vmem:[#allocation3 + $0x7b8] sm:$0xff]
    %v5809 = vld [vmem:[#allocation3 + $0x7c0] sm:$0xff]
    %v5810 = vld [vmem:[#allocation3 + $0x7c8] sm:$0xff]
    %v5811 = vld [vmem:[#allocation3 + $0x7d0] sm:$0xff]
    %v5812 = vld [vmem:[#allocation3 + $0x7d8] sm:$0xff]
    %v5813 = vld [vmem:[#allocation3 + $0x7e0] sm:$0xff]
    %v5814 = vld [vmem:[#allocation3 + $0x7e8] sm:$0xff]
    %v5815 = vld [vmem:[#allocation3 + $0x7f0] sm:$0xff]
    %v5816 = vld [vmem:[#allocation3 + $0x7f8] sm:$0xff]
    %v5817 = vld [vmem:[#allocation3 + $0x800] sm:$0xff]
    %v5818 = vld [vmem:[#allocation3 + $0x808] sm:$0xff]
    %v5819 = vld [vmem:[#allocation3 + $0x810] sm:$0xff]
    %v5820 = vld [vmem:[#allocation3 + $0x818] sm:$0xff]
    %v5821 = vld [vmem:[#allocation3 + $0x820] sm:$0xff]
    %v5822 = vld [vmem:[#allocation3 + $0x828] sm:$0xff]
    %v5823 = vld [vmem:[#allocation3 + $0x830] sm:$0xff]
    %v5824 = vld [vmem:[#allocation3 + $0x838] sm:$0xff]
    %v5825 = vld [vmem:[#allocation3 + $0x840] sm:$0xff]
    %v5826 = vld [vmem:[#allocation3 + $0x848] sm:$0xff]
    %v5827 = vld [vmem:[#allocation3 + $0x850] sm:$0xff]
    %v5828 = vld [vmem:[#allocation3 + $0x858] sm:$0xff]
    %v5829 = vld [vmem:[#allocation3 + $0x860] sm:$0xff]
    %v5830 = vld [vmem:[#allocation3 + $0x868] sm:$0xff]
    %v5831 = vld [vmem:[#allocation3 + $0x870] sm:$0xff]
    %v5832 = vld [vmem:[#allocation3 + $0x878] sm:$0xff]
    %v5833 = vld [vmem:[#allocation3 + $0x880] sm:$0xff]
    %v5834 = vld [vmem:[#allocation3 + $0x888] sm:$0xff]
    %v5835 = vld [vmem:[#allocation3 + $0x890] sm:$0xff]
    %v5836 = vld [vmem:[#allocation3 + $0x898] sm:$0xff]
    %v5837 = vld [vmem:[#allocation3 + $0x8a0] sm:$0xff]
    %v5838 = vld [vmem:[#allocation3 + $0x8a8] sm:$0xff]
    %v5839 = vld [vmem:[#allocation3 + $0x8b0] sm:$0xff]
    %v5840 = vld [vmem:[#allocation3 + $0x8b8] sm:$0xff]
    %v5841 = vld [vmem:[#allocation3 + $0x8c0] sm:$0xff]
    %v5842 = vld [vmem:[#allocation3 + $0x8c8] sm:$0xff]
    %v5843 = vld [vmem:[#allocation3 + $0x8d0] sm:$0xff]
    %v5844 = vld [vmem:[#allocation3 + $0x8d8] sm:$0xff]
    %v5845 = vld [vmem:[#allocation3 + $0x8e0] sm:$0xff]
    %v5846 = vld [vmem:[#allocation3 + $0x8e8] sm:$0xff]
    %v5847 = vld [vmem:[#allocation3 + $0x8f0] sm:$0xff]
    %v5848 = vld [vmem:[#allocation3 + $0x8f8] sm:$0xff]
    %v5849 = vld [vmem:[#allocation3 + $0x900] sm:$0xff]
    %v5850 = vld [vmem:[#allocation3 + $0x908] sm:$0xff]
    %v5851 = vld [vmem:[#allocation3 + $0x910] sm:$0xff]
    %v5852 = vld [vmem:[#allocation3 + $0x918] sm:$0xff]
    %v5853 = vld [vmem:[#allocation3 + $0x920] sm:$0xff]
    %v5854 = vld [vmem:[#allocation3 + $0x928] sm:$0xff]
    %v5855 = vld [vmem:[#allocation3 + $0x930] sm:$0xff]
    %v5856 = vld [vmem:[#allocation3 + $0x938] sm:$0xff]
    %v5857 = vld [vmem:[#allocation3 + $0x940] sm:$0xff]
    %v5858 = vld [vmem:[#allocation3 + $0x948] sm:$0xff]
    %v5859 = vld [vmem:[#allocation3 + $0x950] sm:$0xff]
    %v5860 = vld [vmem:[#allocation3 + $0x958] sm:$0xff]
    %v5861 = vld [vmem:[#allocation3 + $0x960] sm:$0xff]
    %v5862 = vld [vmem:[#allocation3 + $0x968] sm:$0xff]
    %v5863 = vld [vmem:[#allocation3 + $0x970] sm:$0xff]
    %v5864 = vld [vmem:[#allocation3 + $0x978] sm:$0xff]
    %v5865 = vld [vmem:[#allocation3 + $0x980] sm:$0xff]
    %v5866 = vld [vmem:[#allocation3 + $0x988] sm:$0xff]
    %v5867 = vld [vmem:[#allocation3 + $0x990] sm:$0xff]
    %v5868 = vld [vmem:[#allocation3 + $0x998] sm:$0xff]
    %v5869 = vld [vmem:[#allocation3 + $0x9a0] sm:$0xff]
    %v5870 = vld [vmem:[#allocation3 + $0x9a8] sm:$0xff]
    %v5871 = vld [vmem:[#allocation3 + $0x9b0] sm:$0xff]
    %v5872 = vld [vmem:[#allocation3 + $0x9b8] sm:$0xff]
    %v5873 = vld [vmem:[#allocation3 + $0x9c0] sm:$0xff]
    %v5874 = vld [vmem:[#allocation3 + $0x9c8] sm:$0xff]
    %v5875 = vld [vmem:[#allocation3 + $0x9d0] sm:$0xff]
    %v5876 = vld [vmem:[#allocation3 + $0x9d8] sm:$0xff]
    %v5877 = vld [vmem:[#allocation3 + $0x9e0] sm:$0xff]
    %v5878 = vld [vmem:[#allocation3 + $0x9e8] sm:$0xff]
    %v5879 = vld [vmem:[#allocation3 + $0x9f0] sm:$0xff]
    %v5880 = vld [vmem:[#allocation3 + $0x9f8] sm:$0xff]
    %v5881 = vld [vmem:[#allocation3 + $0xa00] sm:$0xff]
    %v5882 = vld [vmem:[#allocation3 + $0xa08] sm:$0xff]
    %v5883 = vld [vmem:[#allocation3 + $0xa10] sm:$0xff]
    %v5884 = vld [vmem:[#allocation3 + $0xa18] sm:$0xff]
    %v5885 = vld [vmem:[#allocation3 + $0xa20] sm:$0xff]
    %v5886 = vld [vmem:[#allocation3 + $0xa28] sm:$0xff]
    %v5887 = vld [vmem:[#allocation3 + $0xa30] sm:$0xff]
    %v5888 = vld [vmem:[#allocation3 + $0xa38] sm:$0xff]
    %v5889 = vld [vmem:[#allocation3 + $0xa40] sm:$0xff]
    %v5890 = vld [vmem:[#allocation3 + $0xa48] sm:$0xff]
    %v5891 = vld [vmem:[#allocation3 + $0xa50] sm:$0xff]
    %v5892 = vld [vmem:[#allocation3 + $0xa58] sm:$0xff]
    %v5893 = vld [vmem:[#allocation3 + $0xa60] sm:$0xff]
    %v5894 = vld [vmem:[#allocation3 + $0xa68] sm:$0xff]
    %v5895 = vld [vmem:[#allocation3 + $0xa70] sm:$0xff]
    %v5896 = vld [vmem:[#allocation3 + $0xa78] sm:$0xff]
    %v5897 = vld [vmem:[#allocation3 + $0xa80] sm:$0xff]
    %v5898 = vld [vmem:[#allocation3 + $0xa88] sm:$0xff]
    %v5899 = vld [vmem:[#allocation3 + $0xa90] sm:$0xff]
    %v5900 = vld [vmem:[#allocation3 + $0xa98] sm:$0xff]
    %v5901 = vld [vmem:[#allocation3 + $0xaa0] sm:$0xff]
    %v5902 = vld [vmem:[#allocation3 + $0xaa8] sm:$0xff]
    %v5903 = vld [vmem:[#allocation3 + $0xab0] sm:$0xff]
    %v5904 = vld [vmem:[#allocation3 + $0xab8] sm:$0xff]
    %v5905 = vld [vmem:[#allocation3 + $0xac0] sm:$0xff]
    %v5906 = vld [vmem:[#allocation3 + $0xac8] sm:$0xff]
    %v5907 = vld [vmem:[#allocation3 + $0xad0] sm:$0xff]
    %v5908 = vld [vmem:[#allocation3 + $0xad8] sm:$0xff]
    %v5909 = vld [vmem:[#allocation3 + $0xae0] sm:$0xff]
    %v5910 = vld [vmem:[#allocation3 + $0xae8] sm:$0xff]
    %v5911 = vld [vmem:[#allocation3 + $0xaf0] sm:$0xff]
    %v5912 = vld [vmem:[#allocation3 + $0xaf8] sm:$0xff]
    %v5913 = vld [vmem:[#allocation3 + $0xb00] sm:$0xff]
    %v5914 = vld [vmem:[#allocation3 + $0xb08] sm:$0xff]
    %v5915 = vld [vmem:[#allocation3 + $0xb10] sm:$0xff]
    %v5916 = vld [vmem:[#allocation3 + $0xb18] sm:$0xff]
    %v5917 = vld [vmem:[#allocation3 + $0xb20] sm:$0xff]
    %v5918 = vld [vmem:[#allocation3 + $0xb28] sm:$0xff]
    %v5919 = vld [vmem:[#allocation3 + $0xb30] sm:$0xff]
    %v5920 = vld [vmem:[#allocation3 + $0xb38] sm:$0xff]
    %v5921 = vld [vmem:[#allocation3 + $0xb40] sm:$0xff]
    %v5922 = vld [vmem:[#allocation3 + $0xb48] sm:$0xff]
    %v5923 = vld [vmem:[#allocation3 + $0xb50] sm:$0xff]
    %v5924 = vld [vmem:[#allocation3 + $0xb58] sm:$0xff]
    %v5925 = vld [vmem:[#allocation3 + $0xb60] sm:$0xff]
    %v5926 = vld [vmem:[#allocation3 + $0xb68] sm:$0xff]
    %v5927 = vld [vmem:[#allocation3 + $0xb70] sm:$0xff]
    %v5928 = vld [vmem:[#allocation3 + $0xb78] sm:$0xff]
    %v5929 = vld [vmem:[#allocation3 + $0xb80] sm:$0xff]
    %v5930 = vld [vmem:[#allocation3 + $0xb88] sm:$0xff]
    %v5931 = vld [vmem:[#allocation3 + $0xb90] sm:$0xff]
    %v5932 = vld [vmem:[#allocation3 + $0xb98] sm:$0xff]
    %v5933 = vld [vmem:[#allocation3 + $0xba0] sm:$0xff]
    %v5934 = vld [vmem:[#allocation3 + $0xba8] sm:$0xff]
    %v5935 = vld [vmem:[#allocation3 + $0xbb0] sm:$0xff]
    %v5936 = vld [vmem:[#allocation3 + $0xbb8] sm:$0xff]
    %v5937 = vld [vmem:[#allocation3 + $0xbc0] sm:$0xff]
    %v5938 = vld [vmem:[#allocation3 + $0xbc8] sm:$0xff]
    %v5939 = vld [vmem:[#allocation3 + $0xbd0] sm:$0xff]
    %v5940 = vld [vmem:[#allocation3 + $0xbd8] sm:$0xff]
    %v5941 = vld [vmem:[#allocation3 + $0xbe0] sm:$0xff]
    %v5942 = vld [vmem:[#allocation3 + $0xbe8] sm:$0xff]
    %v5943 = vld [vmem:[#allocation3 + $0xbf0] sm:$0xff]
    %v5944 = vld [vmem:[#allocation3 + $0xbf8] sm:$0xff]
    %v5945 = vld [vmem:[#allocation3 + $0xc00] sm:$0xff]
    %v5946 = vld [vmem:[#allocation3 + $0xc08] sm:$0xff]
    %v5947 = vld [vmem:[#allocation3 + $0xc10] sm:$0xff]
    %v5948 = vld [vmem:[#allocation3 + $0xc18] sm:$0xff]
    %v5949 = vld [vmem:[#allocation3 + $0xc20] sm:$0xff]
    %v5950 = vld [vmem:[#allocation3 + $0xc28] sm:$0xff]
    %v5951 = vld [vmem:[#allocation3 + $0xc30] sm:$0xff]
    %v5952 = vld [vmem:[#allocation3 + $0xc38] sm:$0xff]
    %v5953 = vld [vmem:[#allocation3 + $0xc40] sm:$0xff]
    %v5954 = vld [vmem:[#allocation3 + $0xc48] sm:$0xff]
    %v5955 = vld [vmem:[#allocation3 + $0xc50] sm:$0xff]
    %v5956 = vld [vmem:[#allocation3 + $0xc58] sm:$0xff]
    %v5957 = vld [vmem:[#allocation3 + $0xc60] sm:$0xff]
    %v5958 = vld [vmem:[#allocation3 + $0xc68] sm:$0xff]
    %v5959 = vld [vmem:[#allocation3 + $0xc70] sm:$0xff]
    %v5960 = vld [vmem:[#allocation3 + $0xc78] sm:$0xff]
    %v5961 = vld [vmem:[#allocation3 + $0xc80] sm:$0xff]
    %v5962 = vld [vmem:[#allocation3 + $0xc88] sm:$0xff]
    %v5963 = vld [vmem:[#allocation3 + $0xc90] sm:$0xff]
    %v5964 = vld [vmem:[#allocation3 + $0xc98] sm:$0xff]
    %v5965 = vld [vmem:[#allocation3 + $0xca0] sm:$0xff]
    %v5966 = vld [vmem:[#allocation3 + $0xca8] sm:$0xff]
    %v5967 = vld [vmem:[#allocation3 + $0xcb0] sm:$0xff]
    %v5968 = vld [vmem:[#allocation3 + $0xcb8] sm:$0xff]
    %v5969 = vld [vmem:[#allocation3 + $0xcc0] sm:$0xff]
    %v5970 = vld [vmem:[#allocation3 + $0xcc8] sm:$0xff]
    %v5971 = vld [vmem:[#allocation3 + $0xcd0] sm:$0xff]
    %v5972 = vld [vmem:[#allocation3 + $0xcd8] sm:$0xff]
    %v5973 = vld [vmem:[#allocation3 + $0xce0] sm:$0xff]
    %v5974 = vld [vmem:[#allocation3 + $0xce8] sm:$0xff]
    %v5975 = vld [vmem:[#allocation3 + $0xcf0] sm:$0xff]
    %v5976 = vld [vmem:[#allocation3 + $0xcf8] sm:$0xff]
    %v5977 = vld [vmem:[#allocation3 + $0xd00] sm:$0xff]
    %v5978 = vld [vmem:[#allocation3 + $0xd08] sm:$0xff]
    %v5979 = vld [vmem:[#allocation3 + $0xd10] sm:$0xff]
    %v5980 = vld [vmem:[#allocation3 + $0xd18] sm:$0xff]
    %v5981 = vld [vmem:[#allocation3 + $0xd20] sm:$0xff]
    %v5982 = vld [vmem:[#allocation3 + $0xd28] sm:$0xff]
    %v5983 = vld [vmem:[#allocation3 + $0xd30] sm:$0xff]
    %v5984 = vld [vmem:[#allocation3 + $0xd38] sm:$0xff]
    %v5985 = vld [vmem:[#allocation3 + $0xd40] sm:$0xff]
    %v5986 = vld [vmem:[#allocation3 + $0xd48] sm:$0xff]
    %v5987 = vld [vmem:[#allocation3 + $0xd50] sm:$0xff]
    %v5988 = vld [vmem:[#allocation3 + $0xd58] sm:$0xff]
    %v5989 = vld [vmem:[#allocation3 + $0xd60] sm:$0xff]
    %v5990 = vld [vmem:[#allocation3 + $0xd68] sm:$0xff]
    %v5991 = vld [vmem:[#allocation3 + $0xd70] sm:$0xff]
    %v5992 = vld [vmem:[#allocation3 + $0xd78] sm:$0xff]
    %v5993 = vld [vmem:[#allocation3 + $0xd80] sm:$0xff]
    %v5994 = vld [vmem:[#allocation3 + $0xd88] sm:$0xff]
    %v5995 = vld [vmem:[#allocation3 + $0xd90] sm:$0xff]
    %v5996 = vld [vmem:[#allocation3 + $0xd98] sm:$0xff]
    %v5997 = vld [vmem:[#allocation3 + $0xda0] sm:$0xff]
    %v5998 = vld [vmem:[#allocation3 + $0xda8] sm:$0xff]
    %v5999 = vld [vmem:[#allocation3 + $0xdb0] sm:$0xff]
    %v6000 = vld [vmem:[#allocation3 + $0xdb8] sm:$0xff]
    %v6001 = vld [vmem:[#allocation3 + $0xdc0] sm:$0xff]
    %v6002 = vld [vmem:[#allocation3 + $0xdc8] sm:$0xff]
    %v6003 = vld [vmem:[#allocation3 + $0xdd0] sm:$0xff]
    %v6004 = vld [vmem:[#allocation3 + $0xdd8] sm:$0xff]
    %v6005 = vld [vmem:[#allocation3 + $0xde0] sm:$0xff]
    %v6006 = vld [vmem:[#allocation3 + $0xde8] sm:$0xff]
    %v6007 = vld [vmem:[#allocation3 + $0xdf0] sm:$0xff]
    %v6008 = vld [vmem:[#allocation3 + $0xdf8] sm:$0xff]
    %v6009 = vld [vmem:[#allocation3 + $0xe00] sm:$0xff]
    %v6010 = vld [vmem:[#allocation3 + $0xe08] sm:$0xff]
    %v6011 = vld [vmem:[#allocation3 + $0xe10] sm:$0xff]
    %v6012 = vld [vmem:[#allocation3 + $0xe18] sm:$0xff]
    %v6013 = vld [vmem:[#allocation3 + $0xe20] sm:$0xff]
    %v6014 = vld [vmem:[#allocation3 + $0xe28] sm:$0xff]
    %v6015 = vld [vmem:[#allocation3 + $0xe30] sm:$0xff]
    %v6016 = vld [vmem:[#allocation3 + $0xe38] sm:$0xff]
    %v6017 = vld [vmem:[#allocation3 + $0xe40] sm:$0xff]
    %v6018 = vld [vmem:[#allocation3 + $0xe48] sm:$0xff]
    %v6019 = vld [vmem:[#allocation3 + $0xe50] sm:$0xff]
    %v6020 = vld [vmem:[#allocation3 + $0xe58] sm:$0xff]
    %v6021 = vld [vmem:[#allocation3 + $0xe60] sm:$0xff]
    %v6022 = vld [vmem:[#allocation3 + $0xe68] sm:$0xff]
    %v6023 = vld [vmem:[#allocation3 + $0xe70] sm:$0xff]
    %v6024 = vld [vmem:[#allocation3 + $0xe78] sm:$0xff]
    %v6025 = vld [vmem:[#allocation3 + $0xe80] sm:$0xff]
    %v6026 = vld [vmem:[#allocation3 + $0xe88] sm:$0xff]
    %v6027 = vld [vmem:[#allocation3 + $0xe90] sm:$0xff]
    %v6028 = vld [vmem:[#allocation3 + $0xe98] sm:$0xff]
    %v6029 = vld [vmem:[#allocation3 + $0xea0] sm:$0xff]
    %v6030 = vld [vmem:[#allocation3 + $0xea8] sm:$0xff]
    %v6031 = vld [vmem:[#allocation3 + $0xeb0] sm:$0xff]
    %v6032 = vld [vmem:[#allocation3 + $0xeb8] sm:$0xff]
    %v6033 = vld [vmem:[#allocation3 + $0xec0] sm:$0xff]
    %v6034 = vld [vmem:[#allocation3 + $0xec8] sm:$0xff]
    %v6035 = vld [vmem:[#allocation3 + $0xed0] sm:$0xff]
    %v6036 = vld [vmem:[#allocation3 + $0xed8] sm:$0xff]
    %v6037 = vld [vmem:[#allocation3 + $0xee0] sm:$0xff]
    %v6038 = vld [vmem:[#allocation3 + $0xee8] sm:$0xff]
    %v6039 = vld [vmem:[#allocation3 + $0xef0] sm:$0xff]
    %v6040 = vld [vmem:[#allocation3 + $0xef8] sm:$0xff]
    %v6041 = vld [vmem:[#allocation3 + $0xf00] sm:$0xff]
    %v6042 = vld [vmem:[#allocation3 + $0xf08] sm:$0xff]
    %v6043 = vld [vmem:[#allocation3 + $0xf10] sm:$0xff]
    %v6044 = vld [vmem:[#allocation3 + $0xf18] sm:$0xff]
    %v6045 = vld [vmem:[#allocation3 + $0xf20] sm:$0xff]
    %v6046 = vld [vmem:[#allocation3 + $0xf28] sm:$0xff]
    %v6047 = vld [vmem:[#allocation3 + $0xf30] sm:$0xff]
    %v6048 = vld [vmem:[#allocation3 + $0xf38] sm:$0xff]
    %v6049 = vld [vmem:[#allocation3 + $0xf40] sm:$0xff]
    %v6050 = vld [vmem:[#allocation3 + $0xf48] sm:$0xff]
    %v6051 = vld [vmem:[#allocation3 + $0xf50] sm:$0xff]
    %v6052 = vld [vmem:[#allocation3 + $0xf58] sm:$0xff]
    %v6053 = vld [vmem:[#allocation3 + $0xf60] sm:$0xff]
    %v6054 = vld [vmem:[#allocation3 + $0xf68] sm:$0xff]
    %v6055 = vld [vmem:[#allocation3 + $0xf70] sm:$0xff]
    %v6056 = vld [vmem:[#allocation3 + $0xf78] sm:$0xff]
    %v6057 = vld [vmem:[#allocation3 + $0xf80] sm:$0xff]
    %v6058 = vld [vmem:[#allocation3 + $0xf88] sm:$0xff]
    %v6059 = vld [vmem:[#allocation3 + $0xf90] sm:$0xff]
    %v6060 = vld [vmem:[#allocation3 + $0xf98] sm:$0xff]
    %v6061 = vld [vmem:[#allocation3 + $0xfa0] sm:$0xff]
    %v6062 = vld [vmem:[#allocation3 + $0xfa8] sm:$0xff]
    %v6063 = vld [vmem:[#allocation3 + $0xfb0] sm:$0xff]
    %v6064 = vld [vmem:[#allocation3 + $0xfb8] sm:$0xff]
    %v6065 = vld [vmem:[#allocation3 + $0xfc0] sm:$0xff]
    %v6066 = vld [vmem:[#allocation3 + $0xfc8] sm:$0xff]
    %v6067 = vld [vmem:[#allocation3 + $0xfd0] sm:$0xff]
    %v6068 = vld [vmem:[#allocation3 + $0xfd8] sm:$0xff]
    %v6069 = vld [vmem:[#allocation3 + $0xfe0] sm:$0xff]
    %v6070 = vld [vmem:[#allocation3 + $0xfe8] sm:$0xff]
    %v6071 = vld [vmem:[#allocation3 + $0xff0] sm:$0xff]
    %v6072 = vld [vmem:[#allocation3 + $0xff8] sm:$0xff]
    %v6073 = vld [vmem:[#allocation3 + $0x1000] sm:$0xff]
    %v6074 = vld [vmem:[#allocation3 + $0x1008] sm:$0xff]
    %v6075 = vld [vmem:[#allocation3 + $0x1010] sm:$0xff]
    %v6076 = vld [vmem:[#allocation3 + $0x1018] sm:$0xff]
    %v6077 = vld [vmem:[#allocation3 + $0x1020] sm:$0xff]
    %v6078 = vld [vmem:[#allocation3 + $0x1028] sm:$0xff]
    %v6079 = vld [vmem:[#allocation3 + $0x1030] sm:$0xff]
    %v6080 = vld [vmem:[#allocation3 + $0x1038] sm:$0xff]
    %v6081 = vld [vmem:[#allocation3 + $0x1040] sm:$0xff]
    %v6082 = vld [vmem:[#allocation3 + $0x1048] sm:$0xff]
    %v6083 = vld [vmem:[#allocation3 + $0x1050] sm:$0xff]
    %v6084 = vld [vmem:[#allocation3 + $0x1058] sm:$0xff]
    %v6085 = vld [vmem:[#allocation3 + $0x1060] sm:$0xff]
    %v6086 = vld [vmem:[#allocation3 + $0x1068] sm:$0xff]
    %v6087 = vld [vmem:[#allocation3 + $0x1070] sm:$0xff]
    %v6088 = vld [vmem:[#allocation3 + $0x1078] sm:$0xff]
    %v6089 = vld [vmem:[#allocation3 + $0x1080] sm:$0xff]
    %v6090 = vld [vmem:[#allocation3 + $0x1088] sm:$0xff]
    %v6091 = vld [vmem:[#allocation3 + $0x1090] sm:$0xff]
    %v6092 = vld [vmem:[#allocation3 + $0x1098] sm:$0xff]
    %v6093 = vld [vmem:[#allocation3 + $0x10a0] sm:$0xff]
    %v6094 = vld [vmem:[#allocation3 + $0x10a8] sm:$0xff]
    %v6095 = vld [vmem:[#allocation3 + $0x10b0] sm:$0xff]
    %v6096 = vld [vmem:[#allocation3 + $0x10b8] sm:$0xff]
    %v6097 = vld [vmem:[#allocation3 + $0x10c0] sm:$0xff]
    %v6098 = vld [vmem:[#allocation3 + $0x10c8] sm:$0xff]
    %v6099 = vld [vmem:[#allocation3 + $0x10d0] sm:$0xff]
    %v6100 = vld [vmem:[#allocation3 + $0x10d8] sm:$0xff]
    %v6101 = vld [vmem:[#allocation3 + $0x10e0] sm:$0xff]
    %v6102 = vld [vmem:[#allocation3 + $0x10e8] sm:$0xff]
    %v6103 = vld [vmem:[#allocation3 + $0x10f0] sm:$0xff]
    %v6104 = vld [vmem:[#allocation3 + $0x10f8] sm:$0xff]
    %v6105 = vld [vmem:[#allocation3 + $0x1100] sm:$0xff]
    %v6106 = vld [vmem:[#allocation3 + $0x1108] sm:$0xff]
    %v6107 = vld [vmem:[#allocation3 + $0x1110] sm:$0xff]
    %v6108 = vld [vmem:[#allocation3 + $0x1118] sm:$0xff]
    %v6109 = vld [vmem:[#allocation3 + $0x1120] sm:$0xff]
    %v6110 = vld [vmem:[#allocation3 + $0x1128] sm:$0xff]
    %v6111 = vld [vmem:[#allocation3 + $0x1130] sm:$0xff]
    %v6112 = vld [vmem:[#allocation3 + $0x1138] sm:$0xff]
    %v6113 = vld [vmem:[#allocation3 + $0x1140] sm:$0xff]
    %v6114 = vld [vmem:[#allocation3 + $0x1148] sm:$0xff]
    %v6115 = vld [vmem:[#allocation3 + $0x1150] sm:$0xff]
    %v6116 = vld [vmem:[#allocation3 + $0x1158] sm:$0xff]
    %v6117 = vld [vmem:[#allocation3 + $0x1160] sm:$0xff]
    %v6118 = vld [vmem:[#allocation3 + $0x1168] sm:$0xff]
    %v6119 = vld [vmem:[#allocation3 + $0x1170] sm:$0xff]
    %v6120 = vld [vmem:[#allocation3 + $0x1178] sm:$0xff]
    %v6121 = vld [vmem:[#allocation3 + $0x1180] sm:$0xff]
    %v6122 = vld [vmem:[#allocation3 + $0x1188] sm:$0xff]
    %v6123 = vld [vmem:[#allocation3 + $0x1190] sm:$0xff]
    %v6124 = vld [vmem:[#allocation3 + $0x1198] sm:$0xff]
    %v6125 = vld [vmem:[#allocation3 + $0x11a0] sm:$0xff]
    %v6126 = vld [vmem:[#allocation3 + $0x11a8] sm:$0xff]
    %v6127 = vld [vmem:[#allocation3 + $0x11b0] sm:$0xff]
    %v6128 = vld [vmem:[#allocation3 + $0x11b8] sm:$0xff]
    %v6129 = vld [vmem:[#allocation3 + $0x11c0] sm:$0xff]
    %v6130 = vld [vmem:[#allocation3 + $0x11c8] sm:$0xff]
    %v6131 = vld [vmem:[#allocation3 + $0x11d0] sm:$0xff]
    %v6132 = vld [vmem:[#allocation3 + $0x11d8] sm:$0xff]
    %v6133 = vld [vmem:[#allocation3 + $0x11e0] sm:$0xff]
    %v6134 = vld [vmem:[#allocation3 + $0x11e8] sm:$0xff]
    %v6135 = vld [vmem:[#allocation3 + $0x11f0] sm:$0xff]
    %v6136 = vld [vmem:[#allocation3 + $0x11f8] sm:$0xff]
    %v6137 = vld [vmem:[#allocation4] sm:$0xff]
    %v6138 = vld [vmem:[#allocation4 + $0x8] sm:$0xff]
    %v6139 = vld [vmem:[#allocation4 + $0x10] sm:$0xff]
    %v6140 = vld [vmem:[#allocation4 + $0x18] sm:$0xff]
    %v6141 = vld [vmem:[#allocation4 + $0x20] sm:$0xff]
    %v6142 = vld [vmem:[#allocation4 + $0x28] sm:$0xff]
    %v6143 = vld [vmem:[#allocation4 + $0x30] sm:$0xff]
    %v6144 = vld [vmem:[#allocation4 + $0x38] sm:$0xff]
    %v6145 = vld [vmem:[#allocation4 + $0x40] sm:$0xff]
    %v6146 = vld [vmem:[#allocation4 + $0x48] sm:$0xff]
    %v6147 = vld [vmem:[#allocation4 + $0x50] sm:$0xff]
    %v6148 = vld [vmem:[#allocation4 + $0x58] sm:$0xff]
    %v6149 = vld [vmem:[#allocation4 + $0x60] sm:$0xff]
    %v6150 = vld [vmem:[#allocation4 + $0x68] sm:$0xff]
    %v6151 = vld [vmem:[#allocation4 + $0x70] sm:$0xff]
    %v6152 = vld [vmem:[#allocation4 + $0x78] sm:$0xff]
    %v6153 = vld [vmem:[#allocation4 + $0x80] sm:$0xff]
    %v6154 = vld [vmem:[#allocation4 + $0x88] sm:$0xff]
    %v6155 = vld [vmem:[#allocation4 + $0x90] sm:$0xff]
    %v6156 = vld [vmem:[#allocation4 + $0x98] sm:$0xff]
    %v6157 = vld [vmem:[#allocation4 + $0xa0] sm:$0xff]
    %v6158 = vld [vmem:[#allocation4 + $0xa8] sm:$0xff]
    %v6159 = vld [vmem:[#allocation4 + $0xb0] sm:$0xff]
    %v6160 = vld [vmem:[#allocation4 + $0xb8] sm:$0xff]
    %v6161 = vld [vmem:[#allocation4 + $0xc0] sm:$0xff]
    %v6162 = vld [vmem:[#allocation4 + $0xc8] sm:$0xff]
    %v6163 = vld [vmem:[#allocation4 + $0xd0] sm:$0xff]
    %v6164 = vld [vmem:[#allocation4 + $0xd8] sm:$0xff]
    %v6165 = vld [vmem:[#allocation4 + $0xe0] sm:$0xff]
    %v6166 = vld [vmem:[#allocation4 + $0xe8] sm:$0xff]
    %v6167 = vld [vmem:[#allocation4 + $0xf0] sm:$0xff]
    %v6168 = vld [vmem:[#allocation4 + $0xf8] sm:$0xff]
    %v6169 = vld [vmem:[#allocation4 + $0x100] sm:$0xff]
    %v6170 = vld [vmem:[#allocation4 + $0x108] sm:$0xff]
    %v6171 = vld [vmem:[#allocation4 + $0x110] sm:$0xff]
    %v6172 = vld [vmem:[#allocation4 + $0x118] sm:$0xff]
    %v6173 = vld [vmem:[#allocation4 + $0x120] sm:$0xff]
    %v6174 = vld [vmem:[#allocation4 + $0x128] sm:$0xff]
    %v6175 = vld [vmem:[#allocation4 + $0x130] sm:$0xff]
    %v6176 = vld [vmem:[#allocation4 + $0x138] sm:$0xff]
    %v6177 = vld [vmem:[#allocation4 + $0x140] sm:$0xff]
    %v6178 = vld [vmem:[#allocation4 + $0x148] sm:$0xff]
    %v6179 = vld [vmem:[#allocation4 + $0x150] sm:$0xff]
    %v6180 = vld [vmem:[#allocation4 + $0x158] sm:$0xff]
    %v6181 = vld [vmem:[#allocation4 + $0x160] sm:$0xff]
    %v6182 = vld [vmem:[#allocation4 + $0x168] sm:$0xff]
    %v6183 = vld [vmem:[#allocation4 + $0x170] sm:$0xff]
    %v6184 = vld [vmem:[#allocation4 + $0x178] sm:$0xff]
    %v6185 = vld [vmem:[#allocation4 + $0x180] sm:$0xff]
    %v6186 = vld [vmem:[#allocation4 + $0x188] sm:$0xff]
    %v6187 = vld [vmem:[#allocation4 + $0x190] sm:$0xff]
    %v6188 = vld [vmem:[#allocation4 + $0x198] sm:$0xff]
    %v6189 = vld [vmem:[#allocation4 + $0x1a0] sm:$0xff]
    %v6190 = vld [vmem:[#allocation4 + $0x1a8] sm:$0xff]
    %v6191 = vld [vmem:[#allocation4 + $0x1b0] sm:$0xff]
    %v6192 = vld [vmem:[#allocation4 + $0x1b8] sm:$0xff]
    %v6193 = vld [vmem:[#allocation4 + $0x1c0] sm:$0xff]
    %v6194 = vld [vmem:[#allocation4 + $0x1c8] sm:$0xff]
    %v6195 = vld [vmem:[#allocation4 + $0x1d0] sm:$0xff]
    %v6196 = vld [vmem:[#allocation4 + $0x1d8] sm:$0xff]
    %v6197 = vld [vmem:[#allocation4 + $0x1e0] sm:$0xff]
    %v6198 = vld [vmem:[#allocation4 + $0x1e8] sm:$0xff]
    %v6199 = vld [vmem:[#allocation4 + $0x1f0] sm:$0xff]
    %v6200 = vld [vmem:[#allocation4 + $0x1f8] sm:$0xff]
    %v6201 = vld [vmem:[#allocation4 + $0x200] sm:$0xff]
    %v6202 = vld [vmem:[#allocation4 + $0x208] sm:$0xff]
    %v6203 = vld [vmem:[#allocation4 + $0x210] sm:$0xff]
    %v6204 = vld [vmem:[#allocation4 + $0x218] sm:$0xff]
    %v6205 = vld [vmem:[#allocation4 + $0x220] sm:$0xff]
    %v6206 = vld [vmem:[#allocation4 + $0x228] sm:$0xff]
    %v6207 = vld [vmem:[#allocation4 + $0x230] sm:$0xff]
    %v6208 = vld [vmem:[#allocation4 + $0x238] sm:$0xff]
    %v6209 = vld [vmem:[#allocation4 + $0x240] sm:$0xff]
    %v6210 = vld [vmem:[#allocation4 + $0x248] sm:$0xff]
    %v6211 = vld [vmem:[#allocation4 + $0x250] sm:$0xff]
    %v6212 = vld [vmem:[#allocation4 + $0x258] sm:$0xff]
    %v6213 = vld [vmem:[#allocation4 + $0x260] sm:$0xff]
    %v6214 = vld [vmem:[#allocation4 + $0x268] sm:$0xff]
    %v6215 = vld [vmem:[#allocation4 + $0x270] sm:$0xff]
    %v6216 = vld [vmem:[#allocation4 + $0x278] sm:$0xff]
    %v6217 = vld [vmem:[#allocation4 + $0x280] sm:$0xff]
    %v6218 = vld [vmem:[#allocation4 + $0x288] sm:$0xff]
    %v6219 = vld [vmem:[#allocation4 + $0x290] sm:$0xff]
    %v6220 = vld [vmem:[#allocation4 + $0x298] sm:$0xff]
    %v6221 = vld [vmem:[#allocation4 + $0x2a0] sm:$0xff]
    %v6222 = vld [vmem:[#allocation4 + $0x2a8] sm:$0xff]
    %v6223 = vld [vmem:[#allocation4 + $0x2b0] sm:$0xff]
    %v6224 = vld [vmem:[#allocation4 + $0x2b8] sm:$0xff]
    %v6225 = vld [vmem:[#allocation4 + $0x2c0] sm:$0xff]
    %v6226 = vld [vmem:[#allocation4 + $0x2c8] sm:$0xff]
    %v6227 = vld [vmem:[#allocation4 + $0x2d0] sm:$0xff]
    %v6228 = vld [vmem:[#allocation4 + $0x2d8] sm:$0xff]
    %v6229 = vld [vmem:[#allocation4 + $0x2e0] sm:$0xff]
    %v6230 = vld [vmem:[#allocation4 + $0x2e8] sm:$0xff]
    %v6231 = vld [vmem:[#allocation4 + $0x2f0] sm:$0xff]
    %v6232 = vld [vmem:[#allocation4 + $0x2f8] sm:$0xff]
    %v6233 = vld [vmem:[#allocation4 + $0x300] sm:$0xff]
    %v6234 = vld [vmem:[#allocation4 + $0x308] sm:$0xff]
    %v6235 = vld [vmem:[#allocation4 + $0x310] sm:$0xff]
    %v6236 = vld [vmem:[#allocation4 + $0x318] sm:$0xff]
    %v6237 = vld [vmem:[#allocation4 + $0x320] sm:$0xff]
    %v6238 = vld [vmem:[#allocation4 + $0x328] sm:$0xff]
    %v6239 = vld [vmem:[#allocation4 + $0x330] sm:$0xff]
    %v6240 = vld [vmem:[#allocation4 + $0x338] sm:$0xff]
    %v6241 = vld [vmem:[#allocation4 + $0x340] sm:$0xff]
    %v6242 = vld [vmem:[#allocation4 + $0x348] sm:$0xff]
    %v6243 = vld [vmem:[#allocation4 + $0x350] sm:$0xff]
    %v6244 = vld [vmem:[#allocation4 + $0x358] sm:$0xff]
    %v6245 = vld [vmem:[#allocation4 + $0x360] sm:$0xff]
    %v6246 = vld [vmem:[#allocation4 + $0x368] sm:$0xff]
    %v6247 = vld [vmem:[#allocation4 + $0x370] sm:$0xff]
    %v6248 = vld [vmem:[#allocation4 + $0x378] sm:$0xff]
    %v6249 = vld [vmem:[#allocation4 + $0x380] sm:$0xff]
    %v6250 = vld [vmem:[#allocation4 + $0x388] sm:$0xff]
    %v6251 = vld [vmem:[#allocation4 + $0x390] sm:$0xff]
    %v6252 = vld [vmem:[#allocation4 + $0x398] sm:$0xff]
    %v6253 = vld [vmem:[#allocation4 + $0x3a0] sm:$0xff]
    %v6254 = vld [vmem:[#allocation4 + $0x3a8] sm:$0xff]
    %v6255 = vld [vmem:[#allocation4 + $0x3b0] sm:$0xff]
    %v6256 = vld [vmem:[#allocation4 + $0x3b8] sm:$0xff]
    %v6257 = vld [vmem:[#allocation4 + $0x3c0] sm:$0xff]
    %v6258 = vld [vmem:[#allocation4 + $0x3c8] sm:$0xff]
    %v6259 = vld [vmem:[#allocation4 + $0x3d0] sm:$0xff]
    %v6260 = vld [vmem:[#allocation4 + $0x3d8] sm:$0xff]
    %v6261 = vld [vmem:[#allocation4 + $0x3e0] sm:$0xff]
    %v6262 = vld [vmem:[#allocation4 + $0x3e8] sm:$0xff]
    %v6263 = vld [vmem:[#allocation4 + $0x3f0] sm:$0xff]
    %v6264 = vld [vmem:[#allocation4 + $0x3f8] sm:$0xff]
    %v6265 = vld [vmem:[#allocation4 + $0x400] sm:$0xff]
    %v6266 = vld [vmem:[#allocation4 + $0x408] sm:$0xff]
    %v6267 = vld [vmem:[#allocation4 + $0x410] sm:$0xff]
    %v6268 = vld [vmem:[#allocation4 + $0x418] sm:$0xff]
    %v6269 = vld [vmem:[#allocation4 + $0x420] sm:$0xff]
    %v6270 = vld [vmem:[#allocation4 + $0x428] sm:$0xff]
    %v6271 = vld [vmem:[#allocation4 + $0x430] sm:$0xff]
    %v6272 = vld [vmem:[#allocation4 + $0x438] sm:$0xff]
    %v6273 = vld [vmem:[#allocation4 + $0x440] sm:$0xff]
    %v6274 = vld [vmem:[#allocation4 + $0x448] sm:$0xff]
    %v6275 = vld [vmem:[#allocation4 + $0x450] sm:$0xff]
    %v6276 = vld [vmem:[#allocation4 + $0x458] sm:$0xff]
    %v6277 = vld [vmem:[#allocation4 + $0x460] sm:$0xff]
    %v6278 = vld [vmem:[#allocation4 + $0x468] sm:$0xff]
    %v6279 = vld [vmem:[#allocation4 + $0x470] sm:$0xff]
    %v6280 = vld [vmem:[#allocation4 + $0x478] sm:$0xff]
    %6281 = vmatprep.subr.mxu0 0.0
    %6282 = vmatpush1.msra.mxu0 %v6152
    %6283 = vmatprep.subr.mxu0 0.0
    %6284 = vmatpush1.msra.mxu0 %v6151
    %6285 = vmatprep.subr.mxu0 0.0
    %6286 = vmatpush1.msra.mxu0 %v6150
    %6287 = vmatprep.subr.mxu0 0.0
    %6288 = vmatpush1.msra.mxu0 %v6149
    %6289 = vmatprep.subr.mxu0 0.0
    %6290 = vmatpush1.msra.mxu0 %v6148
    %6291 = vmatprep.subr.mxu0 0.0
    %6292 = vmatpush1.msra.mxu0 %v6147
    %6293 = vmatprep.subr.mxu0 0.0
    %6294 = vmatpush1.msra.mxu0 %v6146
    %6295 = vmatprep.subr.mxu0 0.0
    %6296 = vmatpush1.msra.mxu0 %v6145
    %6297 = vmatprep.subr.mxu0 0.0
    %6298 = vmatpush1.msra.mxu0 %v6144
    %6299 = vmatprep.subr.mxu0 0.0
    %6300 = vmatpush1.msra.mxu0 %v6143
    %6301 = vmatprep.subr.mxu0 0.0
    %6302 = vmatpush1.msra.mxu0 %v6142
    %6303 = vmatprep.subr.mxu0 0.0
    %6304 = vmatpush1.msra.mxu0 %v6141
    %6305 = vmatprep.subr.mxu0 0.0
    %6306 = vmatpush1.msra.mxu0 %v6140
    %6307 = vmatprep.subr.mxu0 0.0
    %6308 = vmatpush1.msra.mxu0 %v6139
    %6309 = vmatprep.subr.mxu0 0.0
    %6310 = vmatpush1.msra.mxu0 %v6138
    %6311 = vmatprep.subr.mxu0 0.0
    %6312 = vmatpush1.msra.mxu0 %v6137
    %6313 = vmatprep.subr.mxu0 0.0
    %6314 = vmatpush2.msra.mxu0 %v6168
    %6315 = vmatprep.subr.mxu0 0.0
    %6316 = vmatpush2.msra.mxu0 %v6167
    %6317 = vmatprep.subr.mxu0 0.0
    %6318 = vmatpush2.msra.mxu0 %v6166
    %6319 = vmatprep.subr.mxu0 0.0
    %6320 = vmatpush2.msra.mxu0 %v6165
    %6321 = vmatprep.subr.mxu0 0.0
    %6322 = vmatpush2.msra.mxu0 %v6164
    %6323 = vmatprep.subr.mxu0 0.0
    %6324 = vmatpush2.msra.mxu0 %v6163
    %6325 = vmatprep.subr.mxu0 0.0
    %6326 = vmatpush2.msra.mxu0 %v6162
    %6327 = vmatprep.subr.mxu0 0.0
    %6328 = vmatpush2.msra.mxu0 %v6161
    %6329 = vmatprep.subr.mxu0 0.0
    %6330 = vmatpush2.msra.mxu0 %v6160
    %6331 = vmatprep.subr.mxu0 0.0
    %6332 = vmatpush2.msra.mxu0 %v6159
    %6333 = vmatprep.subr.mxu0 0.0
    %6334 = vmatpush2.msra.mxu0 %v6158
    %6335 = vmatprep.subr.mxu0 0.0
    %6336 = vmatpush2.msra.mxu0 %v6157
    %6337 = vmatprep.subr.mxu0 0.0
    %6338 = vmatpush2.msra.mxu0 %v6156
    %6339 = vmatprep.subr.mxu0 0.0
    %6340 = vmatpush2.msra.mxu0 %v6155
    %6341 = vmatprep.subr.mxu0 0.0
    %6342 = vmatpush2.msra.mxu0 %v6154
    %6343 = vmatprep.subr.mxu0 0.0
    %6344 = vmatpush2.msra.mxu0 %v6153
    %6345 = vmatprep.mubr.f32.mxu0 %v5562
    %6346 = vmatmul.mubr.f32.gmra.mxu0 %v5561
    %v6347 = vpop.f32.mrf.mxu0
    %v6348 = vadd.f32 0.0, %v6347
    %v6349 = vpop.f32.mrf.mxu0
    %6350 = vmatprep.mubr.f32.mxu0 %v5571
    %6351 = vmatmul.mubr.f32.gmra.mxu0 %v5570
    %v6352 = vpop.f32.mrf.mxu0
    %v6353 = vadd.f32 0.0, %v6352
    %v6354 = vpop.f32.mrf.mxu0
    %6355 = vmatprep.mubr.f32.mxu0 %v5580
    %6356 = vmatmul.mubr.f32.gmra.mxu0 %v5579
    %v6357 = vpop.f32.mrf.mxu0
    %v6358 = vadd.f32 0.0, %v6357
    %v6359 = vpop.f32.mrf.mxu0
    %6360 = vmatprep.mubr.f32.mxu0 %v5589
    %6361 = vmatmul.mubr.f32.gmra.mxu0 %v5588
    %v6362 = vpop.f32.mrf.mxu0
    %v6363 = vadd.f32 0.0, %v6362
    %v6364 = vpop.f32.mrf.mxu0
    %6365 = vmatprep.mubr.f32.mxu0 %v5598
    %6366 = vmatmul.mubr.f32.gmra.mxu0 %v5597
    %v6367 = vpop.f32.mrf.mxu0
    %v6368 = vadd.f32 0.0, %v6367
    %v6369 = vpop.f32.mrf.mxu0
    %6370 = vmatprep.mubr.f32.mxu0 %v5607
    %6371 = vmatmul.mubr.f32.gmra.mxu0 %v5606
    %v6372 = vpop.f32.mrf.mxu0
    %v6373 = vadd.f32 0.0, %v6372
    %v6374 = vpop.f32.mrf.mxu0
    %6375 = vmatprep.mubr.f32.mxu0 %v5616
    %6376 = vmatmul.mubr.f32.gmra.mxu0 %v5615
    %v6377 = vpop.f32.mrf.mxu0
    %v6378 = vadd.f32 0.0, %v6377
    %v6379 = vpop.f32.mrf.mxu0
    %6380 = vmatprep.mubr.f32.mxu0 %v5625
    %6381 = vmatmul.mubr.f32.gmra.mxu0 %v5624
    %v6382 = vpop.f32.mrf.mxu0
    %v6383 = vadd.f32 0.0, %v6382
    %v6384 = vpop.f32.mrf.mxu0
    %6385 = vmatprep.mubr.f32.mxu0 %v5634
    %6386 = vmatmul.mubr.f32.gmra.mxu0 %v5633
    %v6387 = vpop.f32.mrf.mxu0
    %v6388 = vadd.f32 0.0, %v6387
    %v6389 = vpop.f32.mrf.mxu0
    %6390 = vmatprep.mubr.f32.mxu0 %v5643
    %6391 = vmatmul.mubr.f32.gmra.mxu0 %v5642
    %v6392 = vpop.f32.mrf.mxu0
    %v6393 = vadd.f32 0.0, %v6392
    %v6394 = vpop.f32.mrf.mxu0
    %6395 = vmatprep.mubr.f32.mxu0 %v5652
    %6396 = vmatmul.mubr.f32.gmra.mxu0 %v5651
    %v6397 = vpop.f32.mrf.mxu0
    %v6398 = vadd.f32 0.0, %v6397
    %v6399 = vpop.f32.mrf.mxu0
    %6400 = vmatprep.mubr.f32.mxu0 %v5661
    %6401 = vmatmul.mubr.f32.gmra.mxu0 %v5660
    %v6402 = vpop.f32.mrf.mxu0
    %v6403 = vadd.f32 0.0, %v6402
    %v6404 = vpop.f32.mrf.mxu0
    %6405 = vmatprep.mubr.f32.mxu0 %v5670
    %6406 = vmatmul.mubr.f32.gmra.mxu0 %v5669
    %v6407 = vpop.f32.mrf.mxu0
    %v6408 = vadd.f32 0.0, %v6407
    %v6409 = vpop.f32.mrf.mxu0
    %6410 = vmatprep.mubr.f32.mxu0 %v5679
    %6411 = vmatmul.mubr.f32.gmra.mxu0 %v5678
    %v6412 = vpop.f32.mrf.mxu0
    %v6413 = vadd.f32 0.0, %v6412
    %v6414 = vpop.f32.mrf.mxu0
    %6415 = vmatprep.mubr.f32.mxu0 %v5688
    %6416 = vmatmul.mubr.f32.gmra.mxu0 %v5687
    %v6417 = vpop.f32.mrf.mxu0
    %v6418 = vadd.f32 0.0, %v6417
    %v6419 = vpop.f32.mrf.mxu0
    %6420 = vmatprep.mubr.f32.mxu0 %v5697
    %6421 = vmatmul.mubr.f32.gmra.mxu0 %v5696
    %v6422 = vpop.f32.mrf.mxu0
    %v6423 = vadd.f32 0.0, %v6422
    %v6424 = vpop.f32.mrf.mxu0
    %6425 = vmatprep.mubr.f32.mxu0 %v5706
    %6426 = vmatmul.mubr.f32.gmra.mxu0 %v5705
    %v6427 = vpop.f32.mrf.mxu0
    %v6428 = vadd.f32 0.0, %v6427
    %v6429 = vpop.f32.mrf.mxu0
    %6430 = vmatprep.mubr.f32.mxu0 %v5715
    %6431 = vmatmul.mubr.f32.gmra.mxu0 %v5714
    %v6432 = vpop.f32.mrf.mxu0
    %v6433 = vadd.f32 0.0, %v6432
    %v6434 = vpop.f32.mrf.mxu0
    %6435 = vmatprep.mubr.f32.mxu0 %v5724
    %6436 = vmatmul.mubr.f32.gmra.mxu0 %v5723
    %v6437 = vpop.f32.mrf.mxu0
    %v6438 = vadd.f32 0.0, %v6437
    %v6439 = vpop.f32.mrf.mxu0
    %6440 = vmatprep.mubr.f32.mxu0 %v5733
    %6441 = vmatmul.mubr.f32.gmra.mxu0 %v5732
    %v6442 = vpop.f32.mrf.mxu0
    %v6443 = vadd.f32 0.0, %v6442
    %v6444 = vpop.f32.mrf.mxu0
    %6445 = vmatprep.mubr.f32.mxu0 %v5742
    %6446 = vmatmul.mubr.f32.gmra.mxu0 %v5741
    %v6447 = vpop.f32.mrf.mxu0
    %v6448 = vadd.f32 0.0, %v6447
    %v6449 = vpop.f32.mrf.mxu0
    %6450 = vmatprep.mubr.f32.mxu0 %v5751
    %6451 = vmatmul.mubr.f32.gmra.mxu0 %v5750
    %v6452 = vpop.f32.mrf.mxu0
    %v6453 = vadd.f32 0.0, %v6452
    %v6454 = vpop.f32.mrf.mxu0
    %6455 = vmatprep.mubr.f32.mxu0 %v5760
    %6456 = vmatmul.mubr.f32.gmra.mxu0 %v5759
    %v6457 = vpop.f32.mrf.mxu0
    %v6458 = vadd.f32 0.0, %v6457
    %v6459 = vpop.f32.mrf.mxu0
    %6460 = vmatprep.mubr.f32.mxu0 %v5769
    %6461 = vmatmul.mubr.f32.gmra.mxu0 %v5768
    %v6462 = vpop.f32.mrf.mxu0
    %v6463 = vadd.f32 0.0, %v6462
    %v6464 = vpop.f32.mrf.mxu0
    %6465 = vmatprep.mubr.f32.mxu0 %v5778
    %6466 = vmatmul.mubr.f32.gmra.mxu0 %v5777
    %v6467 = vpop.f32.mrf.mxu0
    %v6468 = vadd.f32 0.0, %v6467
    %v6469 = vpop.f32.mrf.mxu0
    %6470 = vmatprep.mubr.f32.mxu0 %v5787
    %6471 = vmatmul.mubr.f32.gmra.mxu0 %v5786
    %v6472 = vpop.f32.mrf.mxu0
    %v6473 = vadd.f32 0.0, %v6472
    %v6474 = vpop.f32.mrf.mxu0
    %6475 = vmatprep.mubr.f32.mxu0 %v5796
    %6476 = vmatmul.mubr.f32.gmra.mxu0 %v5795
    %v6477 = vpop.f32.mrf.mxu0
    %v6478 = vadd.f32 0.0, %v6477
    %v6479 = vpop.f32.mrf.mxu0
    %6480 = vmatprep.mubr.f32.mxu0 %v5805
    %6481 = vmatmul.mubr.f32.gmra.mxu0 %v5804
    %v6482 = vpop.f32.mrf.mxu0
    %v6483 = vadd.f32 0.0, %v6482
    %v6484 = vpop.f32.mrf.mxu0
    %6485 = vmatprep.mubr.f32.mxu0 %v5814
    %6486 = vmatmul.mubr.f32.gmra.mxu0 %v5813
    %v6487 = vpop.f32.mrf.mxu0
    %v6488 = vadd.f32 0.0, %v6487
    %v6489 = vpop.f32.mrf.mxu0
    %6490 = vmatprep.mubr.f32.mxu0 %v5823
    %6491 = vmatmul.mubr.f32.gmra.mxu0 %v5822
    %v6492 = vpop.f32.mrf.mxu0
    %v6493 = vadd.f32 0.0, %v6492
    %v6494 = vpop.f32.mrf.mxu0
    %6495 = vmatprep.mubr.f32.mxu0 %v5832
    %6496 = vmatmul.mubr.f32.gmra.mxu0 %v5831
    %v6497 = vpop.f32.mrf.mxu0
    %v6498 = vadd.f32 0.0, %v6497
    %v6499 = vpop.f32.mrf.mxu0
    %6500 = vmatprep.mubr.f32.mxu0 %v5841
    %6501 = vmatmul.mubr.f32.gmra.mxu0 %v5840
    %v6502 = vpop.f32.mrf.mxu0
    %v6503 = vadd.f32 0.0, %v6502
    %v6504 = vpop.f32.mrf.mxu0
    %6505 = vmatprep.mubr.f32.mxu0 %v5850
    %6506 = vmatmul.mubr.f32.gmra.mxu0 %v5849
    %v6507 = vpop.f32.mrf.mxu0
    %v6508 = vadd.f32 0.0, %v6507
    %v6509 = vpop.f32.mrf.mxu0
    %6510 = vmatprep.mubr.f32.mxu0 %v5859
    %6511 = vmatmul.mubr.f32.gmra.mxu0 %v5858
    %v6512 = vpop.f32.mrf.mxu0
    %v6513 = vadd.f32 0.0, %v6512
    %v6514 = vpop.f32.mrf.mxu0
    %6515 = vmatprep.mubr.f32.mxu0 %v5868
    %6516 = vmatmul.mubr.f32.gmra.mxu0 %v5867
    %v6517 = vpop.f32.mrf.mxu0
    %v6518 = vadd.f32 0.0, %v6517
    %v6519 = vpop.f32.mrf.mxu0
    %6520 = vmatprep.mubr.f32.mxu0 %v5877
    %6521 = vmatmul.mubr.f32.gmra.mxu0 %v5876
    %v6522 = vpop.f32.mrf.mxu0
    %v6523 = vadd.f32 0.0, %v6522
    %v6524 = vpop.f32.mrf.mxu0
    %6525 = vmatprep.mubr.f32.mxu0 %v5886
    %6526 = vmatmul.mubr.f32.gmra.mxu0 %v5885
    %v6527 = vpop.f32.mrf.mxu0
    %v6528 = vadd.f32 0.0, %v6527
    %v6529 = vpop.f32.mrf.mxu0
    %6530 = vmatprep.mubr.f32.mxu0 %v5895
    %6531 = vmatmul.mubr.f32.gmra.mxu0 %v5894
    %v6532 = vpop.f32.mrf.mxu0
    %v6533 = vadd.f32 0.0, %v6532
    %v6534 = vpop.f32.mrf.mxu0
    %6535 = vmatprep.mubr.f32.mxu0 %v5904
    %6536 = vmatmul.mubr.f32.gmra.mxu0 %v5903
    %v6537 = vpop.f32.mrf.mxu0
    %v6538 = vadd.f32 0.0, %v6537
    %v6539 = vpop.f32.mrf.mxu0
    %6540 = vmatprep.mubr.f32.mxu0 %v5913
    %6541 = vmatmul.mubr.f32.gmra.mxu0 %v5912
    %v6542 = vpop.f32.mrf.mxu0
    %v6543 = vadd.f32 0.0, %v6542
    %v6544 = vpop.f32.mrf.mxu0
    %6545 = vmatprep.mubr.f32.mxu0 %v5922
    %6546 = vmatmul.mubr.f32.gmra.mxu0 %v5921
    %v6547 = vpop.f32.mrf.mxu0
    %v6548 = vadd.f32 0.0, %v6547
    %v6549 = vpop.f32.mrf.mxu0
    %6550 = vmatprep.mubr.f32.mxu0 %v5931
    %6551 = vmatmul.mubr.f32.gmra.mxu0 %v5930
    %v6552 = vpop.f32.mrf.mxu0
    %v6553 = vadd.f32 0.0, %v6552
    %v6554 = vpop.f32.mrf.mxu0
    %6555 = vmatprep.mubr.f32.mxu0 %v5940
    %6556 = vmatmul.mubr.f32.gmra.mxu0 %v5939
    %v6557 = vpop.f32.mrf.mxu0
    %v6558 = vadd.f32 0.0, %v6557
    %v6559 = vpop.f32.mrf.mxu0
    %6560 = vmatprep.mubr.f32.mxu0 %v5949
    %6561 = vmatmul.mubr.f32.gmra.mxu0 %v5948
    %v6562 = vpop.f32.mrf.mxu0
    %v6563 = vadd.f32 0.0, %v6562
    %v6564 = vpop.f32.mrf.mxu0
    %6565 = vmatprep.mubr.f32.mxu0 %v5958
    %6566 = vmatmul.mubr.f32.gmra.mxu0 %v5957
    %v6567 = vpop.f32.mrf.mxu0
    %v6568 = vadd.f32 0.0, %v6567
    %v6569 = vpop.f32.mrf.mxu0
    %6570 = vmatprep.mubr.f32.mxu0 %v5967
    %6571 = vmatmul.mubr.f32.gmra.mxu0 %v5966
    %v6572 = vpop.f32.mrf.mxu0
    %v6573 = vadd.f32 0.0, %v6572
    %v6574 = vpop.f32.mrf.mxu0
    %6575 = vmatprep.mubr.f32.mxu0 %v5976
    %6576 = vmatmul.mubr.f32.gmra.mxu0 %v5975
    %v6577 = vpop.f32.mrf.mxu0
    %v6578 = vadd.f32 0.0, %v6577
    %v6579 = vpop.f32.mrf.mxu0
    %6580 = vmatprep.mubr.f32.mxu0 %v5985
    %6581 = vmatmul.mubr.f32.gmra.mxu0 %v5984
    %v6582 = vpop.f32.mrf.mxu0
    %v6583 = vadd.f32 0.0, %v6582
    %v6584 = vpop.f32.mrf.mxu0
    %6585 = vmatprep.mubr.f32.mxu0 %v5994
    %6586 = vmatmul.mubr.f32.gmra.mxu0 %v5993
    %v6587 = vpop.f32.mrf.mxu0
    %v6588 = vadd.f32 0.0, %v6587
    %v6589 = vpop.f32.mrf.mxu0
    %6590 = vmatprep.mubr.f32.mxu0 %v6003
    %6591 = vmatmul.mubr.f32.gmra.mxu0 %v6002
    %v6592 = vpop.f32.mrf.mxu0
    %v6593 = vadd.f32 0.0, %v6592
    %v6594 = vpop.f32.mrf.mxu0
    %6595 = vmatprep.mubr.f32.mxu0 %v6012
    %6596 = vmatmul.mubr.f32.gmra.mxu0 %v6011
    %v6597 = vpop.f32.mrf.mxu0
    %v6598 = vadd.f32 0.0, %v6597
    %v6599 = vpop.f32.mrf.mxu0
    %6600 = vmatprep.mubr.f32.mxu0 %v6021
    %6601 = vmatmul.mubr.f32.gmra.mxu0 %v6020
    %v6602 = vpop.f32.mrf.mxu0
    %v6603 = vadd.f32 0.0, %v6602
    %v6604 = vpop.f32.mrf.mxu0
    %6605 = vmatprep.mubr.f32.mxu0 %v6030
    %6606 = vmatmul.mubr.f32.gmra.mxu0 %v6029
    %v6607 = vpop.f32.mrf.mxu0
    %v6608 = vadd.f32 0.0, %v6607
    %v6609 = vpop.f32.mrf.mxu0
    %6610 = vmatprep.mubr.f32.mxu0 %v6039
    %6611 = vmatmul.mubr.f32.gmra.mxu0 %v6038
    %v6612 = vpop.f32.mrf.mxu0
    %v6613 = vadd.f32 0.0, %v6612
    %v6614 = vpop.f32.mrf.mxu0
    %6615 = vmatprep.mubr.f32.mxu0 %v6048
    %6616 = vmatmul.mubr.f32.gmra.mxu0 %v6047
    %v6617 = vpop.f32.mrf.mxu0
    %v6618 = vadd.f32 0.0, %v6617
    %v6619 = vpop.f32.mrf.mxu0
    %6620 = vmatprep.mubr.f32.mxu0 %v6057
    %6621 = vmatmul.mubr.f32.gmra.mxu0 %v6056
    %v6622 = vpop.f32.mrf.mxu0
    %v6623 = vadd.f32 0.0, %v6622
    %v6624 = vpop.f32.mrf.mxu0
    %6625 = vmatprep.mubr.f32.mxu0 %v6066
    %6626 = vmatmul.mubr.f32.gmra.mxu0 %v6065
    %v6627 = vpop.f32.mrf.mxu0
    %v6628 = vadd.f32 0.0, %v6627
    %v6629 = vpop.f32.mrf.mxu0
    %6630 = vmatprep.mubr.f32.mxu0 %v6075
    %6631 = vmatmul.mubr.f32.gmra.mxu0 %v6074
    %v6632 = vpop.f32.mrf.mxu0
    %v6633 = vadd.f32 0.0, %v6632
    %v6634 = vpop.f32.mrf.mxu0
    %6635 = vmatprep.mubr.f32.mxu0 %v6084
    %6636 = vmatmul.mubr.f32.gmra.mxu0 %v6083
    %v6637 = vpop.f32.mrf.mxu0
    %v6638 = vadd.f32 0.0, %v6637
    %v6639 = vpop.f32.mrf.mxu0
    %6640 = vmatprep.mubr.f32.mxu0 %v6093
    %6641 = vmatmul.mubr.f32.gmra.mxu0 %v6092
    %v6642 = vpop.f32.mrf.mxu0
    %v6643 = vadd.f32 0.0, %v6642
    %v6644 = vpop.f32.mrf.mxu0
    %6645 = vmatprep.mubr.f32.mxu0 %v6102
    %6646 = vmatmul.mubr.f32.gmra.mxu0 %v6101
    %v6647 = vpop.f32.mrf.mxu0
    %v6648 = vadd.f32 0.0, %v6647
    %v6649 = vpop.f32.mrf.mxu0
    %6650 = vmatprep.mubr.f32.mxu0 %v6111
    %6651 = vmatmul.mubr.f32.gmra.mxu0 %v6110
    %v6652 = vpop.f32.mrf.mxu0
    %v6653 = vadd.f32 0.0, %v6652
    %v6654 = vpop.f32.mrf.mxu0
    %6655 = vmatprep.mubr.f32.mxu0 %v6120
    %6656 = vmatmul.mubr.f32.gmra.mxu0 %v6119
    %v6657 = vpop.f32.mrf.mxu0
    %v6658 = vadd.f32 0.0, %v6657
    %v6659 = vpop.f32.mrf.mxu0
    %6660 = vmatprep.mubr.f32.mxu0 %v6129
    %6661 = vmatmul.mubr.f32.gmra.mxu0 %v6128
    %v6662 = vpop.f32.mrf.mxu0
    %v6663 = vadd.f32 0.0, %v6662
    %v6664 = vpop.f32.mrf.mxu0
    %6665 = vdwg.mxu0
    %6666 = vmatprep.subr.mxu0 0.0
    %6667 = vmatpush1.msra.mxu0 %v6184
    %6668 = vmatprep.subr.mxu0 0.0
    %6669 = vmatpush1.msra.mxu0 %v6183
    %6670 = vmatprep.subr.mxu0 0.0
    %6671 = vmatpush1.msra.mxu0 %v6182
    %6672 = vmatprep.subr.mxu0 0.0
    %6673 = vmatpush1.msra.mxu0 %v6181
    %6674 = vmatprep.subr.mxu0 0.0
    %6675 = vmatpush1.msra.mxu0 %v6180
    %6676 = vmatprep.subr.mxu0 0.0
    %6677 = vmatpush1.msra.mxu0 %v6179
    %6678 = vmatprep.subr.mxu0 0.0
    %6679 = vmatpush1.msra.mxu0 %v6178
    %6680 = vmatprep.subr.mxu0 0.0
    %6681 = vmatpush1.msra.mxu0 %v6177
    %6682 = vmatprep.subr.mxu0 0.0
    %6683 = vmatpush1.msra.mxu0 %v6176
    %6684 = vmatprep.subr.mxu0 0.0
    %6685 = vmatpush1.msra.mxu0 %v6175
    %6686 = vmatprep.subr.mxu0 0.0
    %6687 = vmatpush1.msra.mxu0 %v6174
    %6688 = vmatprep.subr.mxu0 0.0
    %6689 = vmatpush1.msra.mxu0 %v6173
    %6690 = vmatprep.subr.mxu0 0.0
    %6691 = vmatpush1.msra.mxu0 %v6172
    %6692 = vmatprep.subr.mxu0 0.0
    %6693 = vmatpush1.msra.mxu0 %v6171
    %6694 = vmatprep.subr.mxu0 0.0
    %6695 = vmatpush1.msra.mxu0 %v6170
    %6696 = vmatprep.subr.mxu0 0.0
    %6697 = vmatpush1.msra.mxu0 %v6169
    %6698 = vmatprep.subr.mxu0 0.0
    %6699 = vmatpush2.msra.mxu0 %v6200
    %6700 = vmatprep.subr.mxu0 0.0
    %6701 = vmatpush2.msra.mxu0 %v6199
    %6702 = vmatprep.subr.mxu0 0.0
    %6703 = vmatpush2.msra.mxu0 %v6198
    %6704 = vmatprep.subr.mxu0 0.0
    %6705 = vmatpush2.msra.mxu0 %v6197
    %6706 = vmatprep.subr.mxu0 0.0
    %6707 = vmatpush2.msra.mxu0 %v6196
    %6708 = vmatprep.subr.mxu0 0.0
    %6709 = vmatpush2.msra.mxu0 %v6195
    %6710 = vmatprep.subr.mxu0 0.0
    %6711 = vmatpush2.msra.mxu0 %v6194
    %6712 = vmatprep.subr.mxu0 0.0
    %6713 = vmatpush2.msra.mxu0 %v6193
    %6714 = vmatprep.subr.mxu0 0.0
    %6715 = vmatpush2.msra.mxu0 %v6192
    %6716 = vmatprep.subr.mxu0 0.0
    %6717 = vmatpush2.msra.mxu0 %v6191
    %6718 = vmatprep.subr.mxu0 0.0
    %6719 = vmatpush2.msra.mxu0 %v6190
    %6720 = vmatprep.subr.mxu0 0.0
    %6721 = vmatpush2.msra.mxu0 %v6189
    %6722 = vmatprep.subr.mxu0 0.0
    %6723 = vmatpush2.msra.mxu0 %v6188
    %6724 = vmatprep.subr.mxu0 0.0
    %6725 = vmatpush2.msra.mxu0 %v6187
    %6726 = vmatprep.subr.mxu0 0.0
    %6727 = vmatpush2.msra.mxu0 %v6186
    %6728 = vmatprep.subr.mxu0 0.0
    %6729 = vmatpush2.msra.mxu0 %v6185
    %6730 = vmatprep.mubr.f32.mxu0 %v5564
    %6731 = vmatmul.mubr.f32.gmra.mxu0 %v5563
    %v6732 = vpop.f32.mrf.mxu0
    %v6733 = vadd.f32 %v6348, %v6732
    %v6734 = vpop.f32.mrf.mxu0
    %6735 = vmatprep.mubr.f32.mxu0 %v5573
    %6736 = vmatmul.mubr.f32.gmra.mxu0 %v5572
    %v6737 = vpop.f32.mrf.mxu0
    %v6738 = vadd.f32 %v6353, %v6737
    %v6739 = vpop.f32.mrf.mxu0
    %6740 = vmatprep.mubr.f32.mxu0 %v5582
    %6741 = vmatmul.mubr.f32.gmra.mxu0 %v5581
    %v6742 = vpop.f32.mrf.mxu0
    %v6743 = vadd.f32 %v6358, %v6742
    %v6744 = vpop.f32.mrf.mxu0
    %6745 = vmatprep.mubr.f32.mxu0 %v5591
    %6746 = vmatmul.mubr.f32.gmra.mxu0 %v5590
    %v6747 = vpop.f32.mrf.mxu0
    %v6748 = vadd.f32 %v6363, %v6747
    %v6749 = vpop.f32.mrf.mxu0
    %6750 = vmatprep.mubr.f32.mxu0 %v5600
    %6751 = vmatmul.mubr.f32.gmra.mxu0 %v5599
    %v6752 = vpop.f32.mrf.mxu0
    %v6753 = vadd.f32 %v6368, %v6752
    %v6754 = vpop.f32.mrf.mxu0
    %6755 = vmatprep.mubr.f32.mxu0 %v5609
    %6756 = vmatmul.mubr.f32.gmra.mxu0 %v5608
    %v6757 = vpop.f32.mrf.mxu0
    %v6758 = vadd.f32 %v6373, %v6757
    %v6759 = vpop.f32.mrf.mxu0
    %6760 = vmatprep.mubr.f32.mxu0 %v5618
    %6761 = vmatmul.mubr.f32.gmra.mxu0 %v5617
    %v6762 = vpop.f32.mrf.mxu0
    %v6763 = vadd.f32 %v6378, %v6762
    %v6764 = vpop.f32.mrf.mxu0
    %6765 = vmatprep.mubr.f32.mxu0 %v5627
    %6766 = vmatmul.mubr.f32.gmra.mxu0 %v5626
    %v6767 = vpop.f32.mrf.mxu0
    %v6768 = vadd.f32 %v6383, %v6767
    %v6769 = vpop.f32.mrf.mxu0
    %6770 = vmatprep.mubr.f32.mxu0 %v5636
    %6771 = vmatmul.mubr.f32.gmra.mxu0 %v5635
    %v6772 = vpop.f32.mrf.mxu0
    %v6773 = vadd.f32 %v6388, %v6772
    %v6774 = vpop.f32.mrf.mxu0
    %6775 = vmatprep.mubr.f32.mxu0 %v5645
    %6776 = vmatmul.mubr.f32.gmra.mxu0 %v5644
    %v6777 = vpop.f32.mrf.mxu0
    %v6778 = vadd.f32 %v6393, %v6777
    %v6779 = vpop.f32.mrf.mxu0
    %6780 = vmatprep.mubr.f32.mxu0 %v5654
    %6781 = vmatmul.mubr.f32.gmra.mxu0 %v5653
    %v6782 = vpop.f32.mrf.mxu0
    %v6783 = vadd.f32 %v6398, %v6782
    %v6784 = vpop.f32.mrf.mxu0
    %6785 = vmatprep.mubr.f32.mxu0 %v5663
    %6786 = vmatmul.mubr.f32.gmra.mxu0 %v5662
    %v6787 = vpop.f32.mrf.mxu0
    %v6788 = vadd.f32 %v6403, %v6787
    %v6789 = vpop.f32.mrf.mxu0
    %6790 = vmatprep.mubr.f32.mxu0 %v5672
    %6791 = vmatmul.mubr.f32.gmra.mxu0 %v5671
    %v6792 = vpop.f32.mrf.mxu0
    %v6793 = vadd.f32 %v6408, %v6792
    %v6794 = vpop.f32.mrf.mxu0
    %6795 = vmatprep.mubr.f32.mxu0 %v5681
    %6796 = vmatmul.mubr.f32.gmra.mxu0 %v5680
    %v6797 = vpop.f32.mrf.mxu0
    %v6798 = vadd.f32 %v6413, %v6797
    %v6799 = vpop.f32.mrf.mxu0
    %6800 = vmatprep.mubr.f32.mxu0 %v5690
    %6801 = vmatmul.mubr.f32.gmra.mxu0 %v5689
    %v6802 = vpop.f32.mrf.mxu0
    %v6803 = vadd.f32 %v6418, %v6802
    %v6804 = vpop.f32.mrf.mxu0
    %6805 = vmatprep.mubr.f32.mxu0 %v5699
    %6806 = vmatmul.mubr.f32.gmra.mxu0 %v5698
    %v6807 = vpop.f32.mrf.mxu0
    %v6808 = vadd.f32 %v6423, %v6807
    %v6809 = vpop.f32.mrf.mxu0
    %6810 = vmatprep.mubr.f32.mxu0 %v5708
    %6811 = vmatmul.mubr.f32.gmra.mxu0 %v5707
    %v6812 = vpop.f32.mrf.mxu0
    %v6813 = vadd.f32 %v6428, %v6812
    %v6814 = vpop.f32.mrf.mxu0
    %6815 = vmatprep.mubr.f32.mxu0 %v5717
    %6816 = vmatmul.mubr.f32.gmra.mxu0 %v5716
    %v6817 = vpop.f32.mrf.mxu0
    %v6818 = vadd.f32 %v6433, %v6817
    %v6819 = vpop.f32.mrf.mxu0
    %6820 = vmatprep.mubr.f32.mxu0 %v5726
    %6821 = vmatmul.mubr.f32.gmra.mxu0 %v5725
    %v6822 = vpop.f32.mrf.mxu0
    %v6823 = vadd.f32 %v6438, %v6822
    %v6824 = vpop.f32.mrf.mxu0
    %6825 = vmatprep.mubr.f32.mxu0 %v5735
    %6826 = vmatmul.mubr.f32.gmra.mxu0 %v5734
    %v6827 = vpop.f32.mrf.mxu0
    %v6828 = vadd.f32 %v6443, %v6827
    %v6829 = vpop.f32.mrf.mxu0
    %6830 = vmatprep.mubr.f32.mxu0 %v5744
    %6831 = vmatmul.mubr.f32.gmra.mxu0 %v5743
    %v6832 = vpop.f32.mrf.mxu0
    %v6833 = vadd.f32 %v6448, %v6832
    %v6834 = vpop.f32.mrf.mxu0
    %6835 = vmatprep.mubr.f32.mxu0 %v5753
    %6836 = vmatmul.mubr.f32.gmra.mxu0 %v5752
    %v6837 = vpop.f32.mrf.mxu0
    %v6838 = vadd.f32 %v6453, %v6837
    %v6839 = vpop.f32.mrf.mxu0
    %6840 = vmatprep.mubr.f32.mxu0 %v5762
    %6841 = vmatmul.mubr.f32.gmra.mxu0 %v5761
    %v6842 = vpop.f32.mrf.mxu0
    %v6843 = vadd.f32 %v6458, %v6842
    %v6844 = vpop.f32.mrf.mxu0
    %6845 = vmatprep.mubr.f32.mxu0 %v5771
    %6846 = vmatmul.mubr.f32.gmra.mxu0 %v5770
    %v6847 = vpop.f32.mrf.mxu0
    %v6848 = vadd.f32 %v6463, %v6847
    %v6849 = vpop.f32.mrf.mxu0
    %6850 = vmatprep.mubr.f32.mxu0 %v5780
    %6851 = vmatmul.mubr.f32.gmra.mxu0 %v5779
    %v6852 = vpop.f32.mrf.mxu0
    %v6853 = vadd.f32 %v6468, %v6852
    %v6854 = vpop.f32.mrf.mxu0
    %6855 = vmatprep.mubr.f32.mxu0 %v5789
    %6856 = vmatmul.mubr.f32.gmra.mxu0 %v5788
    %v6857 = vpop.f32.mrf.mxu0
    %v6858 = vadd.f32 %v6473, %v6857
    %v6859 = vpop.f32.mrf.mxu0
    %6860 = vmatprep.mubr.f32.mxu0 %v5798
    %6861 = vmatmul.mubr.f32.gmra.mxu0 %v5797
    %v6862 = vpop.f32.mrf.mxu0
    %v6863 = vadd.f32 %v6478, %v6862
    %v6864 = vpop.f32.mrf.mxu0
    %6865 = vmatprep.mubr.f32.mxu0 %v5807
    %6866 = vmatmul.mubr.f32.gmra.mxu0 %v5806
    %v6867 = vpop.f32.mrf.mxu0
    %v6868 = vadd.f32 %v6483, %v6867
    %v6869 = vpop.f32.mrf.mxu0
    %6870 = vmatprep.mubr.f32.mxu0 %v5816
    %6871 = vmatmul.mubr.f32.gmra.mxu0 %v5815
    %v6872 = vpop.f32.mrf.mxu0
    %v6873 = vadd.f32 %v6488, %v6872
    %v6874 = vpop.f32.mrf.mxu0
    %6875 = vmatprep.mubr.f32.mxu0 %v5825
    %6876 = vmatmul.mubr.f32.gmra.mxu0 %v5824
    %v6877 = vpop.f32.mrf.mxu0
    %v6878 = vadd.f32 %v6493, %v6877
    %v6879 = vpop.f32.mrf.mxu0
    %6880 = vmatprep.mubr.f32.mxu0 %v5834
    %6881 = vmatmul.mubr.f32.gmra.mxu0 %v5833
    %v6882 = vpop.f32.mrf.mxu0
    %v6883 = vadd.f32 %v6498, %v6882
    %v6884 = vpop.f32.mrf.mxu0
    %6885 = vmatprep.mubr.f32.mxu0 %v5843
    %6886 = vmatmul.mubr.f32.gmra.mxu0 %v5842
    %v6887 = vpop.f32.mrf.mxu0
    %v6888 = vadd.f32 %v6503, %v6887
    %v6889 = vpop.f32.mrf.mxu0
    %6890 = vmatprep.mubr.f32.mxu0 %v5852
    %6891 = vmatmul.mubr.f32.gmra.mxu0 %v5851
    %v6892 = vpop.f32.mrf.mxu0
    %v6893 = vadd.f32 %v6508, %v6892
    %v6894 = vpop.f32.mrf.mxu0
    %6895 = vmatprep.mubr.f32.mxu0 %v5861
    %6896 = vmatmul.mubr.f32.gmra.mxu0 %v5860
    %v6897 = vpop.f32.mrf.mxu0
    %v6898 = vadd.f32 %v6513, %v6897
    %v6899 = vpop.f32.mrf.mxu0
    %6900 = vmatprep.mubr.f32.mxu0 %v5870
    %6901 = vmatmul.mubr.f32.gmra.mxu0 %v5869
    %v6902 = vpop.f32.mrf.mxu0
    %v6903 = vadd.f32 %v6518, %v6902
    %v6904 = vpop.f32.mrf.mxu0
    %6905 = vmatprep.mubr.f32.mxu0 %v5879
    %6906 = vmatmul.mubr.f32.gmra.mxu0 %v5878
    %v6907 = vpop.f32.mrf.mxu0
    %v6908 = vadd.f32 %v6523, %v6907
    %v6909 = vpop.f32.mrf.mxu0
    %6910 = vmatprep.mubr.f32.mxu0 %v5888
    %6911 = vmatmul.mubr.f32.gmra.mxu0 %v5887
    %v6912 = vpop.f32.mrf.mxu0
    %v6913 = vadd.f32 %v6528, %v6912
    %v6914 = vpop.f32.mrf.mxu0
    %6915 = vmatprep.mubr.f32.mxu0 %v5897
    %6916 = vmatmul.mubr.f32.gmra.mxu0 %v5896
    %v6917 = vpop.f32.mrf.mxu0
    %v6918 = vadd.f32 %v6533, %v6917
    %v6919 = vpop.f32.mrf.mxu0
    %6920 = vmatprep.mubr.f32.mxu0 %v5906
    %6921 = vmatmul.mubr.f32.gmra.mxu0 %v5905
    %v6922 = vpop.f32.mrf.mxu0
    %v6923 = vadd.f32 %v6538, %v6922
    %v6924 = vpop.f32.mrf.mxu0
    %6925 = vmatprep.mubr.f32.mxu0 %v5915
    %6926 = vmatmul.mubr.f32.gmra.mxu0 %v5914
    %v6927 = vpop.f32.mrf.mxu0
    %v6928 = vadd.f32 %v6543, %v6927
    %v6929 = vpop.f32.mrf.mxu0
    %6930 = vmatprep.mubr.f32.mxu0 %v5924
    %6931 = vmatmul.mubr.f32.gmra.mxu0 %v5923
    %v6932 = vpop.f32.mrf.mxu0
    %v6933 = vadd.f32 %v6548, %v6932
    %v6934 = vpop.f32.mrf.mxu0
    %6935 = vmatprep.mubr.f32.mxu0 %v5933
    %6936 = vmatmul.mubr.f32.gmra.mxu0 %v5932
    %v6937 = vpop.f32.mrf.mxu0
    %v6938 = vadd.f32 %v6553, %v6937
    %v6939 = vpop.f32.mrf.mxu0
    %6940 = vmatprep.mubr.f32.mxu0 %v5942
    %6941 = vmatmul.mubr.f32.gmra.mxu0 %v5941
    %v6942 = vpop.f32.mrf.mxu0
    %v6943 = vadd.f32 %v6558, %v6942
    %v6944 = vpop.f32.mrf.mxu0
    %6945 = vmatprep.mubr.f32.mxu0 %v5951
    %6946 = vmatmul.mubr.f32.gmra.mxu0 %v5950
    %v6947 = vpop.f32.mrf.mxu0
    %v6948 = vadd.f32 %v6563, %v6947
    %v6949 = vpop.f32.mrf.mxu0
    %6950 = vmatprep.mubr.f32.mxu0 %v5960
    %6951 = vmatmul.mubr.f32.gmra.mxu0 %v5959
    %v6952 = vpop.f32.mrf.mxu0
    %v6953 = vadd.f32 %v6568, %v6952
    %v6954 = vpop.f32.mrf.mxu0
    %6955 = vmatprep.mubr.f32.mxu0 %v5969
    %6956 = vmatmul.mubr.f32.gmra.mxu0 %v5968
    %v6957 = vpop.f32.mrf.mxu0
    %v6958 = vadd.f32 %v6573, %v6957
    %v6959 = vpop.f32.mrf.mxu0
    %6960 = vmatprep.mubr.f32.mxu0 %v5978
    %6961 = vmatmul.mubr.f32.gmra.mxu0 %v5977
    %v6962 = vpop.f32.mrf.mxu0
    %v6963 = vadd.f32 %v6578, %v6962
    %v6964 = vpop.f32.mrf.mxu0
    %6965 = vmatprep.mubr.f32.mxu0 %v5987
    %6966 = vmatmul.mubr.f32.gmra.mxu0 %v5986
    %v6967 = vpop.f32.mrf.mxu0
    %v6968 = vadd.f32 %v6583, %v6967
    %v6969 = vpop.f32.mrf.mxu0
    %6970 = vmatprep.mubr.f32.mxu0 %v5996
    %6971 = vmatmul.mubr.f32.gmra.mxu0 %v5995
    %v6972 = vpop.f32.mrf.mxu0
    %v6973 = vadd.f32 %v6588, %v6972
    %v6974 = vpop.f32.mrf.mxu0
    %6975 = vmatprep.mubr.f32.mxu0 %v6005
    %6976 = vmatmul.mubr.f32.gmra.mxu0 %v6004
    %v6977 = vpop.f32.mrf.mxu0
    %v6978 = vadd.f32 %v6593, %v6977
    %v6979 = vpop.f32.mrf.mxu0
    %6980 = vmatprep.mubr.f32.mxu0 %v6014
    %6981 = vmatmul.mubr.f32.gmra.mxu0 %v6013
    %v6982 = vpop.f32.mrf.mxu0
    %v6983 = vadd.f32 %v6598, %v6982
    %v6984 = vpop.f32.mrf.mxu0
    %6985 = vmatprep.mubr.f32.mxu0 %v6023
    %6986 = vmatmul.mubr.f32.gmra.mxu0 %v6022
    %v6987 = vpop.f32.mrf.mxu0
    %v6988 = vadd.f32 %v6603, %v6987
    %v6989 = vpop.f32.mrf.mxu0
    %6990 = vmatprep.mubr.f32.mxu0 %v6032
    %6991 = vmatmul.mubr.f32.gmra.mxu0 %v6031
    %v6992 = vpop.f32.mrf.mxu0
    %v6993 = vadd.f32 %v6608, %v6992
    %v6994 = vpop.f32.mrf.mxu0
    %6995 = vmatprep.mubr.f32.mxu0 %v6041
    %6996 = vmatmul.mubr.f32.gmra.mxu0 %v6040
    %v6997 = vpop.f32.mrf.mxu0
    %v6998 = vadd.f32 %v6613, %v6997
    %v6999 = vpop.f32.mrf.mxu0
    %7000 = vmatprep.mubr.f32.mxu0 %v6050
    %7001 = vmatmul.mubr.f32.gmra.mxu0 %v6049
    %v7002 = vpop.f32.mrf.mxu0
    %v7003 = vadd.f32 %v6618, %v7002
    %v7004 = vpop.f32.mrf.mxu0
    %7005 = vmatprep.mubr.f32.mxu0 %v6059
    %7006 = vmatmul.mubr.f32.gmra.mxu0 %v6058
    %v7007 = vpop.f32.mrf.mxu0
    %v7008 = vadd.f32 %v6623, %v7007
    %v7009 = vpop.f32.mrf.mxu0
    %7010 = vmatprep.mubr.f32.mxu0 %v6068
    %7011 = vmatmul.mubr.f32.gmra.mxu0 %v6067
    %v7012 = vpop.f32.mrf.mxu0
    %v7013 = vadd.f32 %v6628, %v7012
    %v7014 = vpop.f32.mrf.mxu0
    %7015 = vmatprep.mubr.f32.mxu0 %v6077
    %7016 = vmatmul.mubr.f32.gmra.mxu0 %v6076
    %v7017 = vpop.f32.mrf.mxu0
    %v7018 = vadd.f32 %v6633, %v7017
    %v7019 = vpop.f32.mrf.mxu0
    %7020 = vmatprep.mubr.f32.mxu0 %v6086
    %7021 = vmatmul.mubr.f32.gmra.mxu0 %v6085
    %v7022 = vpop.f32.mrf.mxu0
    %v7023 = vadd.f32 %v6638, %v7022
    %v7024 = vpop.f32.mrf.mxu0
    %7025 = vmatprep.mubr.f32.mxu0 %v6095
    %7026 = vmatmul.mubr.f32.gmra.mxu0 %v6094
    %v7027 = vpop.f32.mrf.mxu0
    %v7028 = vadd.f32 %v6643, %v7027
    %v7029 = vpop.f32.mrf.mxu0
    %7030 = vmatprep.mubr.f32.mxu0 %v6104
    %7031 = vmatmul.mubr.f32.gmra.mxu0 %v6103
    %v7032 = vpop.f32.mrf.mxu0
    %v7033 = vadd.f32 %v6648, %v7032
    %v7034 = vpop.f32.mrf.mxu0
    %7035 = vmatprep.mubr.f32.mxu0 %v6113
    %7036 = vmatmul.mubr.f32.gmra.mxu0 %v6112
    %v7037 = vpop.f32.mrf.mxu0
    %v7038 = vadd.f32 %v6653, %v7037
    %v7039 = vpop.f32.mrf.mxu0
    %7040 = vmatprep.mubr.f32.mxu0 %v6122
    %7041 = vmatmul.mubr.f32.gmra.mxu0 %v6121
    %v7042 = vpop.f32.mrf.mxu0
    %v7043 = vadd.f32 %v6658, %v7042
    %v7044 = vpop.f32.mrf.mxu0
    %7045 = vmatprep.mubr.f32.mxu0 %v6131
    %7046 = vmatmul.mubr.f32.gmra.mxu0 %v6130
    %v7047 = vpop.f32.mrf.mxu0
    %v7048 = vadd.f32 %v6663, %v7047
    %v7049 = vpop.f32.mrf.mxu0
    %7050 = vdwg.mxu0
    %7051 = vmatprep.subr.mxu0 0.0
    %7052 = vmatpush1.msra.mxu0 %v6216
    %7053 = vmatprep.subr.mxu0 0.0
    %7054 = vmatpush1.msra.mxu0 %v6215
    %7055 = vmatprep.subr.mxu0 0.0
    %7056 = vmatpush1.msra.mxu0 %v6214
    %7057 = vmatprep.subr.mxu0 0.0
    %7058 = vmatpush1.msra.mxu0 %v6213
    %7059 = vmatprep.subr.mxu0 0.0
    %7060 = vmatpush1.msra.mxu0 %v6212
    %7061 = vmatprep.subr.mxu0 0.0
    %7062 = vmatpush1.msra.mxu0 %v6211
    %7063 = vmatprep.subr.mxu0 0.0
    %7064 = vmatpush1.msra.mxu0 %v6210
    %7065 = vmatprep.subr.mxu0 0.0
    %7066 = vmatpush1.msra.mxu0 %v6209
    %7067 = vmatprep.subr.mxu0 0.0
    %7068 = vmatpush1.msra.mxu0 %v6208
    %7069 = vmatprep.subr.mxu0 0.0
    %7070 = vmatpush1.msra.mxu0 %v6207
    %7071 = vmatprep.subr.mxu0 0.0
    %7072 = vmatpush1.msra.mxu0 %v6206
    %7073 = vmatprep.subr.mxu0 0.0
    %7074 = vmatpush1.msra.mxu0 %v6205
    %7075 = vmatprep.subr.mxu0 0.0
    %7076 = vmatpush1.msra.mxu0 %v6204
    %7077 = vmatprep.subr.mxu0 0.0
    %7078 = vmatpush1.msra.mxu0 %v6203
    %7079 = vmatprep.subr.mxu0 0.0
    %7080 = vmatpush1.msra.mxu0 %v6202
    %7081 = vmatprep.subr.mxu0 0.0
    %7082 = vmatpush1.msra.mxu0 %v6201
    %7083 = vmatprep.subr.mxu0 0.0
    %7084 = vmatpush2.msra.mxu0 %v6232
    %7085 = vmatprep.subr.mxu0 0.0
    %7086 = vmatpush2.msra.mxu0 %v6231
    %7087 = vmatprep.subr.mxu0 0.0
    %7088 = vmatpush2.msra.mxu0 %v6230
    %7089 = vmatprep.subr.mxu0 0.0
    %7090 = vmatpush2.msra.mxu0 %v6229
    %7091 = vmatprep.subr.mxu0 0.0
    %7092 = vmatpush2.msra.mxu0 %v6228
    %7093 = vmatprep.subr.mxu0 0.0
    %7094 = vmatpush2.msra.mxu0 %v6227
    %7095 = vmatprep.subr.mxu0 0.0
    %7096 = vmatpush2.msra.mxu0 %v6226
    %7097 = vmatprep.subr.mxu0 0.0
    %7098 = vmatpush2.msra.mxu0 %v6225
    %7099 = vmatprep.subr.mxu0 0.0
    %7100 = vmatpush2.msra.mxu0 %v6224
    %7101 = vmatprep.subr.mxu0 0.0
    %7102 = vmatpush2.msra.mxu0 %v6223
    %7103 = vmatprep.subr.mxu0 0.0
    %7104 = vmatpush2.msra.mxu0 %v6222
    %7105 = vmatprep.subr.mxu0 0.0
    %7106 = vmatpush2.msra.mxu0 %v6221
    %7107 = vmatprep.subr.mxu0 0.0
    %7108 = vmatpush2.msra.mxu0 %v6220
    %7109 = vmatprep.subr.mxu0 0.0
    %7110 = vmatpush2.msra.mxu0 %v6219
    %7111 = vmatprep.subr.mxu0 0.0
    %7112 = vmatpush2.msra.mxu0 %v6218
    %7113 = vmatprep.subr.mxu0 0.0
    %7114 = vmatpush2.msra.mxu0 %v6217
    %7115 = vmatprep.mubr.f32.mxu0 %v5566
    %7116 = vmatmul.mubr.f32.gmra.mxu0 %v5565
    %v7117 = vpop.f32.mrf.mxu0
    %v7118 = vadd.f32 %v6733, %v7117
    %v7119 = vpop.f32.mrf.mxu0
    %7120 = vmatprep.mubr.f32.mxu0 %v5575
    %7121 = vmatmul.mubr.f32.gmra.mxu0 %v5574
    %v7122 = vpop.f32.mrf.mxu0
    %v7123 = vadd.f32 %v6738, %v7122
    %v7124 = vpop.f32.mrf.mxu0
    %7125 = vmatprep.mubr.f32.mxu0 %v5584
    %7126 = vmatmul.mubr.f32.gmra.mxu0 %v5583
    %v7127 = vpop.f32.mrf.mxu0
    %v7128 = vadd.f32 %v6743, %v7127
    %v7129 = vpop.f32.mrf.mxu0
    %7130 = vmatprep.mubr.f32.mxu0 %v5593
    %7131 = vmatmul.mubr.f32.gmra.mxu0 %v5592
    %v7132 = vpop.f32.mrf.mxu0
    %v7133 = vadd.f32 %v6748, %v7132
    %v7134 = vpop.f32.mrf.mxu0
    %7135 = vmatprep.mubr.f32.mxu0 %v5602
    %7136 = vmatmul.mubr.f32.gmra.mxu0 %v5601
    %v7137 = vpop.f32.mrf.mxu0
    %v7138 = vadd.f32 %v6753, %v7137
    %v7139 = vpop.f32.mrf.mxu0
    %7140 = vmatprep.mubr.f32.mxu0 %v5611
    %7141 = vmatmul.mubr.f32.gmra.mxu0 %v5610
    %v7142 = vpop.f32.mrf.mxu0
    %v7143 = vadd.f32 %v6758, %v7142
    %v7144 = vpop.f32.mrf.mxu0
    %7145 = vmatprep.mubr.f32.mxu0 %v5620
    %7146 = vmatmul.mubr.f32.gmra.mxu0 %v5619
    %v7147 = vpop.f32.mrf.mxu0
    %v7148 = vadd.f32 %v6763, %v7147
    %v7149 = vpop.f32.mrf.mxu0
    %7150 = vmatprep.mubr.f32.mxu0 %v5629
    %7151 = vmatmul.mubr.f32.gmra.mxu0 %v5628
    %v7152 = vpop.f32.mrf.mxu0
    %v7153 = vadd.f32 %v6768, %v7152
    %v7154 = vpop.f32.mrf.mxu0
    %7155 = vmatprep.mubr.f32.mxu0 %v5638
    %7156 = vmatmul.mubr.f32.gmra.mxu0 %v5637
    %v7157 = vpop.f32.mrf.mxu0
    %v7158 = vadd.f32 %v6773, %v7157
    %v7159 = vpop.f32.mrf.mxu0
    %7160 = vmatprep.mubr.f32.mxu0 %v5647
    %7161 = vmatmul.mubr.f32.gmra.mxu0 %v5646
    %v7162 = vpop.f32.mrf.mxu0
    %v7163 = vadd.f32 %v6778, %v7162
    %v7164 = vpop.f32.mrf.mxu0
    %7165 = vmatprep.mubr.f32.mxu0 %v5656
    %7166 = vmatmul.mubr.f32.gmra.mxu0 %v5655
    %v7167 = vpop.f32.mrf.mxu0
    %v7168 = vadd.f32 %v6783, %v7167
    %v7169 = vpop.f32.mrf.mxu0
    %7170 = vmatprep.mubr.f32.mxu0 %v5665
    %7171 = vmatmul.mubr.f32.gmra.mxu0 %v5664
    %v7172 = vpop.f32.mrf.mxu0
    %v7173 = vadd.f32 %v6788, %v7172
    %v7174 = vpop.f32.mrf.mxu0
    %7175 = vmatprep.mubr.f32.mxu0 %v5674
    %7176 = vmatmul.mubr.f32.gmra.mxu0 %v5673
    %v7177 = vpop.f32.mrf.mxu0
    %v7178 = vadd.f32 %v6793, %v7177
    %v7179 = vpop.f32.mrf.mxu0
    %7180 = vmatprep.mubr.f32.mxu0 %v5683
    %7181 = vmatmul.mubr.f32.gmra.mxu0 %v5682
    %v7182 = vpop.f32.mrf.mxu0
    %v7183 = vadd.f32 %v6798, %v7182
    %v7184 = vpop.f32.mrf.mxu0
    %7185 = vmatprep.mubr.f32.mxu0 %v5692
    %7186 = vmatmul.mubr.f32.gmra.mxu0 %v5691
    %v7187 = vpop.f32.mrf.mxu0
    %v7188 = vadd.f32 %v6803, %v7187
    %v7189 = vpop.f32.mrf.mxu0
    %7190 = vmatprep.mubr.f32.mxu0 %v5701
    %7191 = vmatmul.mubr.f32.gmra.mxu0 %v5700
    %v7192 = vpop.f32.mrf.mxu0
    %v7193 = vadd.f32 %v6808, %v7192
    %v7194 = vpop.f32.mrf.mxu0
    %7195 = vmatprep.mubr.f32.mxu0 %v5710
    %7196 = vmatmul.mubr.f32.gmra.mxu0 %v5709
    %v7197 = vpop.f32.mrf.mxu0
    %v7198 = vadd.f32 %v6813, %v7197
    %v7199 = vpop.f32.mrf.mxu0
    %7200 = vmatprep.mubr.f32.mxu0 %v5719
    %7201 = vmatmul.mubr.f32.gmra.mxu0 %v5718
    %v7202 = vpop.f32.mrf.mxu0
    %v7203 = vadd.f32 %v6818, %v7202
    %v7204 = vpop.f32.mrf.mxu0
    %7205 = vmatprep.mubr.f32.mxu0 %v5728
    %7206 = vmatmul.mubr.f32.gmra.mxu0 %v5727
    %v7207 = vpop.f32.mrf.mxu0
    %v7208 = vadd.f32 %v6823, %v7207
    %v7209 = vpop.f32.mrf.mxu0
    %7210 = vmatprep.mubr.f32.mxu0 %v5737
    %7211 = vmatmul.mubr.f32.gmra.mxu0 %v5736
    %v7212 = vpop.f32.mrf.mxu0
    %v7213 = vadd.f32 %v6828, %v7212
    %v7214 = vpop.f32.mrf.mxu0
    %7215 = vmatprep.mubr.f32.mxu0 %v5746
    %7216 = vmatmul.mubr.f32.gmra.mxu0 %v5745
    %v7217 = vpop.f32.mrf.mxu0
    %v7218 = vadd.f32 %v6833, %v7217
    %v7219 = vpop.f32.mrf.mxu0
    %7220 = vmatprep.mubr.f32.mxu0 %v5755
    %7221 = vmatmul.mubr.f32.gmra.mxu0 %v5754
    %v7222 = vpop.f32.mrf.mxu0
    %v7223 = vadd.f32 %v6838, %v7222
    %v7224 = vpop.f32.mrf.mxu0
    %7225 = vmatprep.mubr.f32.mxu0 %v5764
    %7226 = vmatmul.mubr.f32.gmra.mxu0 %v5763
    %v7227 = vpop.f32.mrf.mxu0
    %v7228 = vadd.f32 %v6843, %v7227
    %v7229 = vpop.f32.mrf.mxu0
    %7230 = vmatprep.mubr.f32.mxu0 %v5773
    %7231 = vmatmul.mubr.f32.gmra.mxu0 %v5772
    %v7232 = vpop.f32.mrf.mxu0
    %v7233 = vadd.f32 %v6848, %v7232
    %v7234 = vpop.f32.mrf.mxu0
    %7235 = vmatprep.mubr.f32.mxu0 %v5782
    %7236 = vmatmul.mubr.f32.gmra.mxu0 %v5781
    %v7237 = vpop.f32.mrf.mxu0
    %v7238 = vadd.f32 %v6853, %v7237
    %v7239 = vpop.f32.mrf.mxu0
    %7240 = vmatprep.mubr.f32.mxu0 %v5791
    %7241 = vmatmul.mubr.f32.gmra.mxu0 %v5790
    %v7242 = vpop.f32.mrf.mxu0
    %v7243 = vadd.f32 %v6858, %v7242
    %v7244 = vpop.f32.mrf.mxu0
    %7245 = vmatprep.mubr.f32.mxu0 %v5800
    %7246 = vmatmul.mubr.f32.gmra.mxu0 %v5799
    %v7247 = vpop.f32.mrf.mxu0
    %v7248 = vadd.f32 %v6863, %v7247
    %v7249 = vpop.f32.mrf.mxu0
    %7250 = vmatprep.mubr.f32.mxu0 %v5809
    %7251 = vmatmul.mubr.f32.gmra.mxu0 %v5808
    %v7252 = vpop.f32.mrf.mxu0
    %v7253 = vadd.f32 %v6868, %v7252
    %v7254 = vpop.f32.mrf.mxu0
    %7255 = vmatprep.mubr.f32.mxu0 %v5818
    %7256 = vmatmul.mubr.f32.gmra.mxu0 %v5817
    %v7257 = vpop.f32.mrf.mxu0
    %v7258 = vadd.f32 %v6873, %v7257
    %v7259 = vpop.f32.mrf.mxu0
    %7260 = vmatprep.mubr.f32.mxu0 %v5827
    %7261 = vmatmul.mubr.f32.gmra.mxu0 %v5826
    %v7262 = vpop.f32.mrf.mxu0
    %v7263 = vadd.f32 %v6878, %v7262
    %v7264 = vpop.f32.mrf.mxu0
    %7265 = vmatprep.mubr.f32.mxu0 %v5836
    %7266 = vmatmul.mubr.f32.gmra.mxu0 %v5835
    %v7267 = vpop.f32.mrf.mxu0
    %v7268 = vadd.f32 %v6883, %v7267
    %v7269 = vpop.f32.mrf.mxu0
    %7270 = vmatprep.mubr.f32.mxu0 %v5845
    %7271 = vmatmul.mubr.f32.gmra.mxu0 %v5844
    %v7272 = vpop.f32.mrf.mxu0
    %v7273 = vadd.f32 %v6888, %v7272
    %v7274 = vpop.f32.mrf.mxu0
    %7275 = vmatprep.mubr.f32.mxu0 %v5854
    %7276 = vmatmul.mubr.f32.gmra.mxu0 %v5853
    %v7277 = vpop.f32.mrf.mxu0
    %v7278 = vadd.f32 %v6893, %v7277
    %v7279 = vpop.f32.mrf.mxu0
    %7280 = vmatprep.mubr.f32.mxu0 %v5863
    %7281 = vmatmul.mubr.f32.gmra.mxu0 %v5862
    %v7282 = vpop.f32.mrf.mxu0
    %v7283 = vadd.f32 %v6898, %v7282
    %v7284 = vpop.f32.mrf.mxu0
    %7285 = vmatprep.mubr.f32.mxu0 %v5872
    %7286 = vmatmul.mubr.f32.gmra.mxu0 %v5871
    %v7287 = vpop.f32.mrf.mxu0
    %v7288 = vadd.f32 %v6903, %v7287
    %v7289 = vpop.f32.mrf.mxu0
    %7290 = vmatprep.mubr.f32.mxu0 %v5881
    %7291 = vmatmul.mubr.f32.gmra.mxu0 %v5880
    %v7292 = vpop.f32.mrf.mxu0
    %v7293 = vadd.f32 %v6908, %v7292
    %v7294 = vpop.f32.mrf.mxu0
    %7295 = vmatprep.mubr.f32.mxu0 %v5890
    %7296 = vmatmul.mubr.f32.gmra.mxu0 %v5889
    %v7297 = vpop.f32.mrf.mxu0
    %v7298 = vadd.f32 %v6913, %v7297
    %v7299 = vpop.f32.mrf.mxu0
    %7300 = vmatprep.mubr.f32.mxu0 %v5899
    %7301 = vmatmul.mubr.f32.gmra.mxu0 %v5898
    %v7302 = vpop.f32.mrf.mxu0
    %v7303 = vadd.f32 %v6918, %v7302
    %v7304 = vpop.f32.mrf.mxu0
    %7305 = vmatprep.mubr.f32.mxu0 %v5908
    %7306 = vmatmul.mubr.f32.gmra.mxu0 %v5907
    %v7307 = vpop.f32.mrf.mxu0
    %v7308 = vadd.f32 %v6923, %v7307
    %v7309 = vpop.f32.mrf.mxu0
    %7310 = vmatprep.mubr.f32.mxu0 %v5917
    %7311 = vmatmul.mubr.f32.gmra.mxu0 %v5916
    %v7312 = vpop.f32.mrf.mxu0
    %v7313 = vadd.f32 %v6928, %v7312
    %v7314 = vpop.f32.mrf.mxu0
    %7315 = vmatprep.mubr.f32.mxu0 %v5926
    %7316 = vmatmul.mubr.f32.gmra.mxu0 %v5925
    %v7317 = vpop.f32.mrf.mxu0
    %v7318 = vadd.f32 %v6933, %v7317
    %v7319 = vpop.f32.mrf.mxu0
    %7320 = vmatprep.mubr.f32.mxu0 %v5935
    %7321 = vmatmul.mubr.f32.gmra.mxu0 %v5934
    %v7322 = vpop.f32.mrf.mxu0
    %v7323 = vadd.f32 %v6938, %v7322
    %v7324 = vpop.f32.mrf.mxu0
    %7325 = vmatprep.mubr.f32.mxu0 %v5944
    %7326 = vmatmul.mubr.f32.gmra.mxu0 %v5943
    %v7327 = vpop.f32.mrf.mxu0
    %v7328 = vadd.f32 %v6943, %v7327
    %v7329 = vpop.f32.mrf.mxu0
    %7330 = vmatprep.mubr.f32.mxu0 %v5953
    %7331 = vmatmul.mubr.f32.gmra.mxu0 %v5952
    %v7332 = vpop.f32.mrf.mxu0
    %v7333 = vadd.f32 %v6948, %v7332
    %v7334 = vpop.f32.mrf.mxu0
    %7335 = vmatprep.mubr.f32.mxu0 %v5962
    %7336 = vmatmul.mubr.f32.gmra.mxu0 %v5961
    %v7337 = vpop.f32.mrf.mxu0
    %v7338 = vadd.f32 %v6953, %v7337
    %v7339 = vpop.f32.mrf.mxu0
    %7340 = vmatprep.mubr.f32.mxu0 %v5971
    %7341 = vmatmul.mubr.f32.gmra.mxu0 %v5970
    %v7342 = vpop.f32.mrf.mxu0
    %v7343 = vadd.f32 %v6958, %v7342
    %v7344 = vpop.f32.mrf.mxu0
    %7345 = vmatprep.mubr.f32.mxu0 %v5980
    %7346 = vmatmul.mubr.f32.gmra.mxu0 %v5979
    %v7347 = vpop.f32.mrf.mxu0
    %v7348 = vadd.f32 %v6963, %v7347
    %v7349 = vpop.f32.mrf.mxu0
    %7350 = vmatprep.mubr.f32.mxu0 %v5989
    %7351 = vmatmul.mubr.f32.gmra.mxu0 %v5988
    %v7352 = vpop.f32.mrf.mxu0
    %v7353 = vadd.f32 %v6968, %v7352
    %v7354 = vpop.f32.mrf.mxu0
    %7355 = vmatprep.mubr.f32.mxu0 %v5998
    %7356 = vmatmul.mubr.f32.gmra.mxu0 %v5997
    %v7357 = vpop.f32.mrf.mxu0
    %v7358 = vadd.f32 %v6973, %v7357
    %v7359 = vpop.f32.mrf.mxu0
    %7360 = vmatprep.mubr.f32.mxu0 %v6007
    %7361 = vmatmul.mubr.f32.gmra.mxu0 %v6006
    %v7362 = vpop.f32.mrf.mxu0
    %v7363 = vadd.f32 %v6978, %v7362
    %v7364 = vpop.f32.mrf.mxu0
    %7365 = vmatprep.mubr.f32.mxu0 %v6016
    %7366 = vmatmul.mubr.f32.gmra.mxu0 %v6015
    %v7367 = vpop.f32.mrf.mxu0
    %v7368 = vadd.f32 %v6983, %v7367
    %v7369 = vpop.f32.mrf.mxu0
    %7370 = vmatprep.mubr.f32.mxu0 %v6025
    %7371 = vmatmul.mubr.f32.gmra.mxu0 %v6024
    %v7372 = vpop.f32.mrf.mxu0
    %v7373 = vadd.f32 %v6988, %v7372
    %v7374 = vpop.f32.mrf.mxu0
    %7375 = vmatprep.mubr.f32.mxu0 %v6034
    %7376 = vmatmul.mubr.f32.gmra.mxu0 %v6033
    %v7377 = vpop.f32.mrf.mxu0
    %v7378 = vadd.f32 %v6993, %v7377
    %v7379 = vpop.f32.mrf.mxu0
    %7380 = vmatprep.mubr.f32.mxu0 %v6043
    %7381 = vmatmul.mubr.f32.gmra.mxu0 %v6042
    %v7382 = vpop.f32.mrf.mxu0
    %v7383 = vadd.f32 %v6998, %v7382
    %v7384 = vpop.f32.mrf.mxu0
    %7385 = vmatprep.mubr.f32.mxu0 %v6052
    %7386 = vmatmul.mubr.f32.gmra.mxu0 %v6051
    %v7387 = vpop.f32.mrf.mxu0
    %v7388 = vadd.f32 %v7003, %v7387
    %v7389 = vpop.f32.mrf.mxu0
    %7390 = vmatprep.mubr.f32.mxu0 %v6061
    %7391 = vmatmul.mubr.f32.gmra.mxu0 %v6060
    %v7392 = vpop.f32.mrf.mxu0
    %v7393 = vadd.f32 %v7008, %v7392
    %v7394 = vpop.f32.mrf.mxu0
    %7395 = vmatprep.mubr.f32.mxu0 %v6070
    %7396 = vmatmul.mubr.f32.gmra.mxu0 %v6069
    %v7397 = vpop.f32.mrf.mxu0
    %v7398 = vadd.f32 %v7013, %v7397
    %v7399 = vpop.f32.mrf.mxu0
    %7400 = vmatprep.mubr.f32.mxu0 %v6079
    %7401 = vmatmul.mubr.f32.gmra.mxu0 %v6078
    %v7402 = vpop.f32.mrf.mxu0
    %v7403 = vadd.f32 %v7018, %v7402
    %v7404 = vpop.f32.mrf.mxu0
    %7405 = vmatprep.mubr.f32.mxu0 %v6088
    %7406 = vmatmul.mubr.f32.gmra.mxu0 %v6087
    %v7407 = vpop.f32.mrf.mxu0
    %v7408 = vadd.f32 %v7023, %v7407
    %v7409 = vpop.f32.mrf.mxu0
    %7410 = vmatprep.mubr.f32.mxu0 %v6097
    %7411 = vmatmul.mubr.f32.gmra.mxu0 %v6096
    %v7412 = vpop.f32.mrf.mxu0
    %v7413 = vadd.f32 %v7028, %v7412
    %v7414 = vpop.f32.mrf.mxu0
    %7415 = vmatprep.mubr.f32.mxu0 %v6106
    %7416 = vmatmul.mubr.f32.gmra.mxu0 %v6105
    %v7417 = vpop.f32.mrf.mxu0
    %v7418 = vadd.f32 %v7033, %v7417
    %v7419 = vpop.f32.mrf.mxu0
    %7420 = vmatprep.mubr.f32.mxu0 %v6115
    %7421 = vmatmul.mubr.f32.gmra.mxu0 %v6114
    %v7422 = vpop.f32.mrf.mxu0
    %v7423 = vadd.f32 %v7038, %v7422
    %v7424 = vpop.f32.mrf.mxu0
    %7425 = vmatprep.mubr.f32.mxu0 %v6124
    %7426 = vmatmul.mubr.f32.gmra.mxu0 %v6123
    %v7427 = vpop.f32.mrf.mxu0
    %v7428 = vadd.f32 %v7043, %v7427
    %v7429 = vpop.f32.mrf.mxu0
    %7430 = vmatprep.mubr.f32.mxu0 %v6133
    %7431 = vmatmul.mubr.f32.gmra.mxu0 %v6132
    %v7432 = vpop.f32.mrf.mxu0
    %v7433 = vadd.f32 %v7048, %v7432
    %v7434 = vpop.f32.mrf.mxu0
    %7435 = vdwg.mxu0
    %7436 = vmatprep.subr.mxu0 0.0
    %7437 = vmatpush1.msra.mxu0 %v6248
    %7438 = vmatprep.subr.mxu0 0.0
    %7439 = vmatpush1.msra.mxu0 %v6247
    %7440 = vmatprep.subr.mxu0 0.0
    %7441 = vmatpush1.msra.mxu0 %v6246
    %7442 = vmatprep.subr.mxu0 0.0
    %7443 = vmatpush1.msra.mxu0 %v6245
    %7444 = vmatprep.subr.mxu0 0.0
    %7445 = vmatpush1.msra.mxu0 %v6244
    %7446 = vmatprep.subr.mxu0 0.0
    %7447 = vmatpush1.msra.mxu0 %v6243
    %7448 = vmatprep.subr.mxu0 0.0
    %7449 = vmatpush1.msra.mxu0 %v6242
    %7450 = vmatprep.subr.mxu0 0.0
    %7451 = vmatpush1.msra.mxu0 %v6241
    %7452 = vmatprep.subr.mxu0 0.0
    %7453 = vmatpush1.msra.mxu0 %v6240
    %7454 = vmatprep.subr.mxu0 0.0
    %7455 = vmatpush1.msra.mxu0 %v6239
    %7456 = vmatprep.subr.mxu0 0.0
    %7457 = vmatpush1.msra.mxu0 %v6238
    %7458 = vmatprep.subr.mxu0 0.0
    %7459 = vmatpush1.msra.mxu0 %v6237
    %7460 = vmatprep.subr.mxu0 0.0
    %7461 = vmatpush1.msra.mxu0 %v6236
    %7462 = vmatprep.subr.mxu0 0.0
    %7463 = vmatpush1.msra.mxu0 %v6235
    %7464 = vmatprep.subr.mxu0 0.0
    %7465 = vmatpush1.msra.mxu0 %v6234
    %7466 = vmatprep.subr.mxu0 0.0
    %7467 = vmatpush1.msra.mxu0 %v6233
    %7468 = vmatprep.subr.mxu0 0.0
    %7469 = vmatpush2.msra.mxu0 %v6264
    %7470 = vmatprep.subr.mxu0 0.0
    %7471 = vmatpush2.msra.mxu0 %v6263
    %7472 = vmatprep.subr.mxu0 0.0
    %7473 = vmatpush2.msra.mxu0 %v6262
    %7474 = vmatprep.subr.mxu0 0.0
    %7475 = vmatpush2.msra.mxu0 %v6261
    %7476 = vmatprep.subr.mxu0 0.0
    %7477 = vmatpush2.msra.mxu0 %v6260
    %7478 = vmatprep.subr.mxu0 0.0
    %7479 = vmatpush2.msra.mxu0 %v6259
    %7480 = vmatprep.subr.mxu0 0.0
    %7481 = vmatpush2.msra.mxu0 %v6258
    %7482 = vmatprep.subr.mxu0 0.0
    %7483 = vmatpush2.msra.mxu0 %v6257
    %7484 = vmatprep.subr.mxu0 0.0
    %7485 = vmatpush2.msra.mxu0 %v6256
    %7486 = vmatprep.subr.mxu0 0.0
    %7487 = vmatpush2.msra.mxu0 %v6255
    %7488 = vmatprep.subr.mxu0 0.0
    %7489 = vmatpush2.msra.mxu0 %v6254
    %7490 = vmatprep.subr.mxu0 0.0
    %7491 = vmatpush2.msra.mxu0 %v6253
    %7492 = vmatprep.subr.mxu0 0.0
    %7493 = vmatpush2.msra.mxu0 %v6252
    %7494 = vmatprep.subr.mxu0 0.0
    %7495 = vmatpush2.msra.mxu0 %v6251
    %7496 = vmatprep.subr.mxu0 0.0
    %7497 = vmatpush2.msra.mxu0 %v6250
    %7498 = vmatprep.subr.mxu0 0.0
    %7499 = vmatpush2.msra.mxu0 %v6249
    %7500 = vmatprep.mubr.f32.mxu0 %v5568
    %7501 = vmatmul.mubr.f32.gmra.mxu0 %v5567
    %v7502 = vpop.f32.mrf.mxu0
    %v7503 = vadd.f32 %v7118, %v7502
    %v7504 = vpop.f32.mrf.mxu0
    %7505 = vmatprep.mubr.f32.mxu0 %v5577
    %7506 = vmatmul.mubr.f32.gmra.mxu0 %v5576
    %v7507 = vpop.f32.mrf.mxu0
    %v7508 = vadd.f32 %v7123, %v7507
    %v7509 = vpop.f32.mrf.mxu0
    %7510 = vmatprep.mubr.f32.mxu0 %v5586
    %7511 = vmatmul.mubr.f32.gmra.mxu0 %v5585
    %v7512 = vpop.f32.mrf.mxu0
    %v7513 = vadd.f32 %v7128, %v7512
    %v7514 = vpop.f32.mrf.mxu0
    %7515 = vmatprep.mubr.f32.mxu0 %v5595
    %7516 = vmatmul.mubr.f32.gmra.mxu0 %v5594
    %v7517 = vpop.f32.mrf.mxu0
    %v7518 = vadd.f32 %v7133, %v7517
    %v7519 = vpop.f32.mrf.mxu0
    %7520 = vmatprep.mubr.f32.mxu0 %v5604
    %7521 = vmatmul.mubr.f32.gmra.mxu0 %v5603
    %v7522 = vpop.f32.mrf.mxu0
    %v7523 = vadd.f32 %v7138, %v7522
    %v7524 = vpop.f32.mrf.mxu0
    %7525 = vmatprep.mubr.f32.mxu0 %v5613
    %7526 = vmatmul.mubr.f32.gmra.mxu0 %v5612
    %v7527 = vpop.f32.mrf.mxu0
    %v7528 = vadd.f32 %v7143, %v7527
    %v7529 = vpop.f32.mrf.mxu0
    %7530 = vmatprep.mubr.f32.mxu0 %v5622
    %7531 = vmatmul.mubr.f32.gmra.mxu0 %v5621
    %v7532 = vpop.f32.mrf.mxu0
    %v7533 = vadd.f32 %v7148, %v7532
    %v7534 = vpop.f32.mrf.mxu0
    %7535 = vmatprep.mubr.f32.mxu0 %v5631
    %7536 = vmatmul.mubr.f32.gmra.mxu0 %v5630
    %v7537 = vpop.f32.mrf.mxu0
    %v7538 = vadd.f32 %v7153, %v7537
    %v7539 = vpop.f32.mrf.mxu0
    %7540 = vmatprep.mubr.f32.mxu0 %v5640
    %7541 = vmatmul.mubr.f32.gmra.mxu0 %v5639
    %v7542 = vpop.f32.mrf.mxu0
    %v7543 = vadd.f32 %v7158, %v7542
    %v7544 = vpop.f32.mrf.mxu0
    %7545 = vmatprep.mubr.f32.mxu0 %v5649
    %7546 = vmatmul.mubr.f32.gmra.mxu0 %v5648
    %v7547 = vpop.f32.mrf.mxu0
    %v7548 = vadd.f32 %v7163, %v7547
    %v7549 = vpop.f32.mrf.mxu0
    %7550 = vmatprep.mubr.f32.mxu0 %v5658
    %7551 = vmatmul.mubr.f32.gmra.mxu0 %v5657
    %v7552 = vpop.f32.mrf.mxu0
    %v7553 = vadd.f32 %v7168, %v7552
    %v7554 = vpop.f32.mrf.mxu0
    %7555 = vmatprep.mubr.f32.mxu0 %v5667
    %7556 = vmatmul.mubr.f32.gmra.mxu0 %v5666
    %v7557 = vpop.f32.mrf.mxu0
    %v7558 = vadd.f32 %v7173, %v7557
    %v7559 = vpop.f32.mrf.mxu0
    %7560 = vmatprep.mubr.f32.mxu0 %v5676
    %7561 = vmatmul.mubr.f32.gmra.mxu0 %v5675
    %v7562 = vpop.f32.mrf.mxu0
    %v7563 = vadd.f32 %v7178, %v7562
    %v7564 = vpop.f32.mrf.mxu0
    %7565 = vmatprep.mubr.f32.mxu0 %v5685
    %7566 = vmatmul.mubr.f32.gmra.mxu0 %v5684
    %v7567 = vpop.f32.mrf.mxu0
    %v7568 = vadd.f32 %v7183, %v7567
    %v7569 = vpop.f32.mrf.mxu0
    %7570 = vmatprep.mubr.f32.mxu0 %v5694
    %7571 = vmatmul.mubr.f32.gmra.mxu0 %v5693
    %v7572 = vpop.f32.mrf.mxu0
    %v7573 = vadd.f32 %v7188, %v7572
    %v7574 = vpop.f32.mrf.mxu0
    %7575 = vmatprep.mubr.f32.mxu0 %v5703
    %7576 = vmatmul.mubr.f32.gmra.mxu0 %v5702
    %v7577 = vpop.f32.mrf.mxu0
    %v7578 = vadd.f32 %v7193, %v7577
    %v7579 = vpop.f32.mrf.mxu0
    %7580 = vmatprep.mubr.f32.mxu0 %v5712
    %7581 = vmatmul.mubr.f32.gmra.mxu0 %v5711
    %v7582 = vpop.f32.mrf.mxu0
    %v7583 = vadd.f32 %v7198, %v7582
    %v7584 = vpop.f32.mrf.mxu0
    %7585 = vmatprep.mubr.f32.mxu0 %v5721
    %7586 = vmatmul.mubr.f32.gmra.mxu0 %v5720
    %v7587 = vpop.f32.mrf.mxu0
    %v7588 = vadd.f32 %v7203, %v7587
    %v7589 = vpop.f32.mrf.mxu0
    %7590 = vmatprep.mubr.f32.mxu0 %v5730
    %7591 = vmatmul.mubr.f32.gmra.mxu0 %v5729
    %v7592 = vpop.f32.mrf.mxu0
    %v7593 = vadd.f32 %v7208, %v7592
    %v7594 = vpop.f32.mrf.mxu0
    %7595 = vmatprep.mubr.f32.mxu0 %v5739
    %7596 = vmatmul.mubr.f32.gmra.mxu0 %v5738
    %v7597 = vpop.f32.mrf.mxu0
    %v7598 = vadd.f32 %v7213, %v7597
    %v7599 = vpop.f32.mrf.mxu0
    %7600 = vmatprep.mubr.f32.mxu0 %v5748
    %7601 = vmatmul.mubr.f32.gmra.mxu0 %v5747
    %v7602 = vpop.f32.mrf.mxu0
    %v7603 = vadd.f32 %v7218, %v7602
    %v7604 = vpop.f32.mrf.mxu0
    %7605 = vmatprep.mubr.f32.mxu0 %v5757
    %7606 = vmatmul.mubr.f32.gmra.mxu0 %v5756
    %v7607 = vpop.f32.mrf.mxu0
    %v7608 = vadd.f32 %v7223, %v7607
    %v7609 = vpop.f32.mrf.mxu0
    %7610 = vmatprep.mubr.f32.mxu0 %v5766
    %7611 = vmatmul.mubr.f32.gmra.mxu0 %v5765
    %v7612 = vpop.f32.mrf.mxu0
    %v7613 = vadd.f32 %v7228, %v7612
    %v7614 = vpop.f32.mrf.mxu0
    %7615 = vmatprep.mubr.f32.mxu0 %v5775
    %7616 = vmatmul.mubr.f32.gmra.mxu0 %v5774
    %v7617 = vpop.f32.mrf.mxu0
    %v7618 = vadd.f32 %v7233, %v7617
    %v7619 = vpop.f32.mrf.mxu0
    %7620 = vmatprep.mubr.f32.mxu0 %v5784
    %7621 = vmatmul.mubr.f32.gmra.mxu0 %v5783
    %v7622 = vpop.f32.mrf.mxu0
    %v7623 = vadd.f32 %v7238, %v7622
    %v7624 = vpop.f32.mrf.mxu0
    %7625 = vmatprep.mubr.f32.mxu0 %v5793
    %7626 = vmatmul.mubr.f32.gmra.mxu0 %v5792
    %v7627 = vpop.f32.mrf.mxu0
    %v7628 = vadd.f32 %v7243, %v7627
    %v7629 = vpop.f32.mrf.mxu0
    %7630 = vmatprep.mubr.f32.mxu0 %v5802
    %7631 = vmatmul.mubr.f32.gmra.mxu0 %v5801
    %v7632 = vpop.f32.mrf.mxu0
    %v7633 = vadd.f32 %v7248, %v7632
    %v7634 = vpop.f32.mrf.mxu0
    %7635 = vmatprep.mubr.f32.mxu0 %v5811
    %7636 = vmatmul.mubr.f32.gmra.mxu0 %v5810
    %v7637 = vpop.f32.mrf.mxu0
    %v7638 = vadd.f32 %v7253, %v7637
    %v7639 = vpop.f32.mrf.mxu0
    %7640 = vmatprep.mubr.f32.mxu0 %v5820
    %7641 = vmatmul.mubr.f32.gmra.mxu0 %v5819
    %v7642 = vpop.f32.mrf.mxu0
    %v7643 = vadd.f32 %v7258, %v7642
    %v7644 = vpop.f32.mrf.mxu0
    %7645 = vmatprep.mubr.f32.mxu0 %v5829
    %7646 = vmatmul.mubr.f32.gmra.mxu0 %v5828
    %v7647 = vpop.f32.mrf.mxu0
    %v7648 = vadd.f32 %v7263, %v7647
    %v7649 = vpop.f32.mrf.mxu0
    %7650 = vmatprep.mubr.f32.mxu0 %v5838
    %7651 = vmatmul.mubr.f32.gmra.mxu0 %v5837
    %v7652 = vpop.f32.mrf.mxu0
    %v7653 = vadd.f32 %v7268, %v7652
    %v7654 = vpop.f32.mrf.mxu0
    %7655 = vmatprep.mubr.f32.mxu0 %v5847
    %7656 = vmatmul.mubr.f32.gmra.mxu0 %v5846
    %v7657 = vpop.f32.mrf.mxu0
    %v7658 = vadd.f32 %v7273, %v7657
    %v7659 = vpop.f32.mrf.mxu0
    %7660 = vmatprep.mubr.f32.mxu0 %v5856
    %7661 = vmatmul.mubr.f32.gmra.mxu0 %v5855
    %v7662 = vpop.f32.mrf.mxu0
    %v7663 = vadd.f32 %v7278, %v7662
    %v7664 = vpop.f32.mrf.mxu0
    %7665 = vmatprep.mubr.f32.mxu0 %v5865
    %7666 = vmatmul.mubr.f32.gmra.mxu0 %v5864
    %v7667 = vpop.f32.mrf.mxu0
    %v7668 = vadd.f32 %v7283, %v7667
    %v7669 = vpop.f32.mrf.mxu0
    %7670 = vmatprep.mubr.f32.mxu0 %v5874
    %7671 = vmatmul.mubr.f32.gmra.mxu0 %v5873
    %v7672 = vpop.f32.mrf.mxu0
    %v7673 = vadd.f32 %v7288, %v7672
    %v7674 = vpop.f32.mrf.mxu0
    %7675 = vmatprep.mubr.f32.mxu0 %v5883
    %7676 = vmatmul.mubr.f32.gmra.mxu0 %v5882
    %v7677 = vpop.f32.mrf.mxu0
    %v7678 = vadd.f32 %v7293, %v7677
    %v7679 = vpop.f32.mrf.mxu0
    %7680 = vmatprep.mubr.f32.mxu0 %v5892
    %7681 = vmatmul.mubr.f32.gmra.mxu0 %v5891
    %v7682 = vpop.f32.mrf.mxu0
    %v7683 = vadd.f32 %v7298, %v7682
    %v7684 = vpop.f32.mrf.mxu0
    %7685 = vmatprep.mubr.f32.mxu0 %v5901
    %7686 = vmatmul.mubr.f32.gmra.mxu0 %v5900
    %v7687 = vpop.f32.mrf.mxu0
    %v7688 = vadd.f32 %v7303, %v7687
    %v7689 = vpop.f32.mrf.mxu0
    %7690 = vmatprep.mubr.f32.mxu0 %v5910
    %7691 = vmatmul.mubr.f32.gmra.mxu0 %v5909
    %v7692 = vpop.f32.mrf.mxu0
    %v7693 = vadd.f32 %v7308, %v7692
    %v7694 = vpop.f32.mrf.mxu0
    %7695 = vmatprep.mubr.f32.mxu0 %v5919
    %7696 = vmatmul.mubr.f32.gmra.mxu0 %v5918
    %v7697 = vpop.f32.mrf.mxu0
    %v7698 = vadd.f32 %v7313, %v7697
    %v7699 = vpop.f32.mrf.mxu0
    %7700 = vmatprep.mubr.f32.mxu0 %v5928
    %7701 = vmatmul.mubr.f32.gmra.mxu0 %v5927
    %v7702 = vpop.f32.mrf.mxu0
    %v7703 = vadd.f32 %v7318, %v7702
    %v7704 = vpop.f32.mrf.mxu0
    %7705 = vmatprep.mubr.f32.mxu0 %v5937
    %7706 = vmatmul.mubr.f32.gmra.mxu0 %v5936
    %v7707 = vpop.f32.mrf.mxu0
    %v7708 = vadd.f32 %v7323, %v7707
    %v7709 = vpop.f32.mrf.mxu0
    %7710 = vmatprep.mubr.f32.mxu0 %v5946
    %7711 = vmatmul.mubr.f32.gmra.mxu0 %v5945
    %v7712 = vpop.f32.mrf.mxu0
    %v7713 = vadd.f32 %v7328, %v7712
    %v7714 = vpop.f32.mrf.mxu0
    %7715 = vmatprep.mubr.f32.mxu0 %v5955
    %7716 = vmatmul.mubr.f32.gmra.mxu0 %v5954
    %v7717 = vpop.f32.mrf.mxu0
    %v7718 = vadd.f32 %v7333, %v7717
    %v7719 = vpop.f32.mrf.mxu0
    %7720 = vmatprep.mubr.f32.mxu0 %v5964
    %7721 = vmatmul.mubr.f32.gmra.mxu0 %v5963
    %v7722 = vpop.f32.mrf.mxu0
    %v7723 = vadd.f32 %v7338, %v7722
    %v7724 = vpop.f32.mrf.mxu0
    %7725 = vmatprep.mubr.f32.mxu0 %v5973
    %7726 = vmatmul.mubr.f32.gmra.mxu0 %v5972
    %v7727 = vpop.f32.mrf.mxu0
    %v7728 = vadd.f32 %v7343, %v7727
    %v7729 = vpop.f32.mrf.mxu0
    %7730 = vmatprep.mubr.f32.mxu0 %v5982
    %7731 = vmatmul.mubr.f32.gmra.mxu0 %v5981
    %v7732 = vpop.f32.mrf.mxu0
    %v7733 = vadd.f32 %v7348, %v7732
    %v7734 = vpop.f32.mrf.mxu0
    %7735 = vmatprep.mubr.f32.mxu0 %v5991
    %7736 = vmatmul.mubr.f32.gmra.mxu0 %v5990
    %v7737 = vpop.f32.mrf.mxu0
    %v7738 = vadd.f32 %v7353, %v7737
    %v7739 = vpop.f32.mrf.mxu0
    %7740 = vmatprep.mubr.f32.mxu0 %v6000
    %7741 = vmatmul.mubr.f32.gmra.mxu0 %v5999
    %v7742 = vpop.f32.mrf.mxu0
    %v7743 = vadd.f32 %v7358, %v7742
    %v7744 = vpop.f32.mrf.mxu0
    %7745 = vmatprep.mubr.f32.mxu0 %v6009
    %7746 = vmatmul.mubr.f32.gmra.mxu0 %v6008
    %v7747 = vpop.f32.mrf.mxu0
    %v7748 = vadd.f32 %v7363, %v7747
    %v7749 = vpop.f32.mrf.mxu0
    %7750 = vmatprep.mubr.f32.mxu0 %v6018
    %7751 = vmatmul.mubr.f32.gmra.mxu0 %v6017
    %v7752 = vpop.f32.mrf.mxu0
    %v7753 = vadd.f32 %v7368, %v7752
    %v7754 = vpop.f32.mrf.mxu0
    %7755 = vmatprep.mubr.f32.mxu0 %v6027
    %7756 = vmatmul.mubr.f32.gmra.mxu0 %v6026
    %v7757 = vpop.f32.mrf.mxu0
    %v7758 = vadd.f32 %v7373, %v7757
    %v7759 = vpop.f32.mrf.mxu0
    %7760 = vmatprep.mubr.f32.mxu0 %v6036
    %7761 = vmatmul.mubr.f32.gmra.mxu0 %v6035
    %v7762 = vpop.f32.mrf.mxu0
    %v7763 = vadd.f32 %v7378, %v7762
    %v7764 = vpop.f32.mrf.mxu0
    %7765 = vmatprep.mubr.f32.mxu0 %v6045
    %7766 = vmatmul.mubr.f32.gmra.mxu0 %v6044
    %v7767 = vpop.f32.mrf.mxu0
    %v7768 = vadd.f32 %v7383, %v7767
    %v7769 = vpop.f32.mrf.mxu0
    %7770 = vmatprep.mubr.f32.mxu0 %v6054
    %7771 = vmatmul.mubr.f32.gmra.mxu0 %v6053
    %v7772 = vpop.f32.mrf.mxu0
    %v7773 = vadd.f32 %v7388, %v7772
    %v7774 = vpop.f32.mrf.mxu0
    %7775 = vmatprep.mubr.f32.mxu0 %v6063
    %7776 = vmatmul.mubr.f32.gmra.mxu0 %v6062
    %v7777 = vpop.f32.mrf.mxu0
    %v7778 = vadd.f32 %v7393, %v7777
    %v7779 = vpop.f32.mrf.mxu0
    %7780 = vmatprep.mubr.f32.mxu0 %v6072
    %7781 = vmatmul.mubr.f32.gmra.mxu0 %v6071
    %v7782 = vpop.f32.mrf.mxu0
    %v7783 = vadd.f32 %v7398, %v7782
    %v7784 = vpop.f32.mrf.mxu0
    %7785 = vmatprep.mubr.f32.mxu0 %v6081
    %7786 = vmatmul.mubr.f32.gmra.mxu0 %v6080
    %v7787 = vpop.f32.mrf.mxu0
    %v7788 = vadd.f32 %v7403, %v7787
    %v7789 = vpop.f32.mrf.mxu0
    %7790 = vmatprep.mubr.f32.mxu0 %v6090
    %7791 = vmatmul.mubr.f32.gmra.mxu0 %v6089
    %v7792 = vpop.f32.mrf.mxu0
    %v7793 = vadd.f32 %v7408, %v7792
    %v7794 = vpop.f32.mrf.mxu0
    %7795 = vmatprep.mubr.f32.mxu0 %v6099
    %7796 = vmatmul.mubr.f32.gmra.mxu0 %v6098
    %v7797 = vpop.f32.mrf.mxu0
    %v7798 = vadd.f32 %v7413, %v7797
    %v7799 = vpop.f32.mrf.mxu0
    %7800 = vmatprep.mubr.f32.mxu0 %v6108
    %7801 = vmatmul.mubr.f32.gmra.mxu0 %v6107
    %v7802 = vpop.f32.mrf.mxu0
    %v7803 = vadd.f32 %v7418, %v7802
    %v7804 = vpop.f32.mrf.mxu0
    %7805 = vmatprep.mubr.f32.mxu0 %v6117
    %7806 = vmatmul.mubr.f32.gmra.mxu0 %v6116
    %v7807 = vpop.f32.mrf.mxu0
    %v7808 = vadd.f32 %v7423, %v7807
    %v7809 = vpop.f32.mrf.mxu0
    %7810 = vmatprep.mubr.f32.mxu0 %v6126
    %7811 = vmatmul.mubr.f32.gmra.mxu0 %v6125
    %v7812 = vpop.f32.mrf.mxu0
    %v7813 = vadd.f32 %v7428, %v7812
    %v7814 = vpop.f32.mrf.mxu0
    %7815 = vmatprep.mubr.f32.mxu0 %v6135
    %7816 = vmatmul.mubr.f32.gmra.mxu0 %v6134
    %v7817 = vpop.f32.mrf.mxu0
    %v7818 = vadd.f32 %v7433, %v7817
    %v7819 = vpop.f32.mrf.mxu0
    %7820 = vdwg.mxu0
    %7821 = vmatprep.subr.mxu0 0.0
    %7822 = vmatpush1.msra.mxu0 %v6280
    %7823 = vmatprep.subr.mxu0 0.0
    %7824 = vmatpush1.msra.mxu0 %v6279
    %7825 = vmatprep.subr.mxu0 0.0
    %7826 = vmatpush1.msra.mxu0 %v6278
    %7827 = vmatprep.subr.mxu0 0.0
    %7828 = vmatpush1.msra.mxu0 %v6277
    %7829 = vmatprep.subr.mxu0 0.0
    %7830 = vmatpush1.msra.mxu0 %v6276
    %7831 = vmatprep.subr.mxu0 0.0
    %7832 = vmatpush1.msra.mxu0 %v6275
    %7833 = vmatprep.subr.mxu0 0.0
    %7834 = vmatpush1.msra.mxu0 %v6274
    %7835 = vmatprep.subr.mxu0 0.0
    %7836 = vmatpush1.msra.mxu0 %v6273
    %7837 = vmatprep.subr.mxu0 0.0
    %7838 = vmatpush1.msra.mxu0 %v6272
    %7839 = vmatprep.subr.mxu0 0.0
    %7840 = vmatpush1.msra.mxu0 %v6271
    %7841 = vmatprep.subr.mxu0 0.0
    %7842 = vmatpush1.msra.mxu0 %v6270
    %7843 = vmatprep.subr.mxu0 0.0
    %7844 = vmatpush1.msra.mxu0 %v6269
    %7845 = vmatprep.subr.mxu0 0.0
    %7846 = vmatpush1.msra.mxu0 %v6268
    %7847 = vmatprep.subr.mxu0 0.0
    %7848 = vmatpush1.msra.mxu0 %v6267
    %7849 = vmatprep.subr.mxu0 0.0
    %7850 = vmatpush1.msra.mxu0 %v6266
    %7851 = vmatprep.subr.mxu0 0.0
    %7852 = vmatpush1.msra.mxu0 %v6265
    %7853 = vmatprep.subr.mxu0 0.0
    %7854 = vmatpush2.msra.mxu0 0.0
    %7855 = vmatprep.subr.mxu0 0.0
    %7856 = vmatpush2.msra.mxu0 0.0
    %7857 = vmatprep.subr.mxu0 0.0
    %7858 = vmatpush2.msra.mxu0 0.0
    %7859 = vmatprep.subr.mxu0 0.0
    %7860 = vmatpush2.msra.mxu0 0.0
    %7861 = vmatprep.subr.mxu0 0.0
    %7862 = vmatpush2.msra.mxu0 0.0
    %7863 = vmatprep.subr.mxu0 0.0
    %7864 = vmatpush2.msra.mxu0 0.0
    %7865 = vmatprep.subr.mxu0 0.0
    %7866 = vmatpush2.msra.mxu0 0.0
    %7867 = vmatprep.subr.mxu0 0.0
    %7868 = vmatpush2.msra.mxu0 0.0
    %7869 = vmatprep.subr.mxu0 0.0
    %7870 = vmatpush2.msra.mxu0 0.0
    %7871 = vmatprep.subr.mxu0 0.0
    %7872 = vmatpush2.msra.mxu0 0.0
    %7873 = vmatprep.subr.mxu0 0.0
    %7874 = vmatpush2.msra.mxu0 0.0
    %7875 = vmatprep.subr.mxu0 0.0
    %7876 = vmatpush2.msra.mxu0 0.0
    %7877 = vmatprep.subr.mxu0 0.0
    %7878 = vmatpush2.msra.mxu0 0.0
    %7879 = vmatprep.subr.mxu0 0.0
    %7880 = vmatpush2.msra.mxu0 0.0
    %7881 = vmatprep.subr.mxu0 0.0
    %7882 = vmatpush2.msra.mxu0 0.0
    %7883 = vmatprep.subr.mxu0 0.0
    %7884 = vmatpush2.msra.mxu0 0.0
    %7885 = vmatprep.mubr.f32.mxu0 0.0
    %7886 = vmatmul.mubr.f32.gmra.mxu0 %v5569
    %v7887 = vpop.f32.mrf.mxu0
    %v7888 = vadd.f32 %v7503, %v7887
    %v7889 = vpop.f32.mrf.mxu0
    %7890 = vmatprep.mubr.f32.mxu0 0.0
    %7891 = vmatmul.mubr.f32.gmra.mxu0 %v5578
    %v7892 = vpop.f32.mrf.mxu0
    %v7893 = vadd.f32 %v7508, %v7892
    %v7894 = vpop.f32.mrf.mxu0
    %7895 = vmatprep.mubr.f32.mxu0 0.0
    %7896 = vmatmul.mubr.f32.gmra.mxu0 %v5587
    %v7897 = vpop.f32.mrf.mxu0
    %v7898 = vadd.f32 %v7513, %v7897
    %v7899 = vpop.f32.mrf.mxu0
    %7900 = vmatprep.mubr.f32.mxu0 0.0
    %7901 = vmatmul.mubr.f32.gmra.mxu0 %v5596
    %v7902 = vpop.f32.mrf.mxu0
    %v7903 = vadd.f32 %v7518, %v7902
    %v7904 = vpop.f32.mrf.mxu0
    %7905 = vmatprep.mubr.f32.mxu0 0.0
    %7906 = vmatmul.mubr.f32.gmra.mxu0 %v5605
    %v7907 = vpop.f32.mrf.mxu0
    %v7908 = vadd.f32 %v7523, %v7907
    %v7909 = vpop.f32.mrf.mxu0
    %7910 = vmatprep.mubr.f32.mxu0 0.0
    %7911 = vmatmul.mubr.f32.gmra.mxu0 %v5614
    %v7912 = vpop.f32.mrf.mxu0
    %v7913 = vadd.f32 %v7528, %v7912
    %v7914 = vpop.f32.mrf.mxu0
    %7915 = vmatprep.mubr.f32.mxu0 0.0
    %7916 = vmatmul.mubr.f32.gmra.mxu0 %v5623
    %v7917 = vpop.f32.mrf.mxu0
    %v7918 = vadd.f32 %v7533, %v7917
    %v7919 = vpop.f32.mrf.mxu0
    %7920 = vmatprep.mubr.f32.mxu0 0.0
    %7921 = vmatmul.mubr.f32.gmra.mxu0 %v5632
    %v7922 = vpop.f32.mrf.mxu0
    %v7923 = vadd.f32 %v7538, %v7922
    %v7924 = vpop.f32.mrf.mxu0
    %7925 = vmatprep.mubr.f32.mxu0 0.0
    %7926 = vmatmul.mubr.f32.gmra.mxu0 %v5641
    %v7927 = vpop.f32.mrf.mxu0
    %v7928 = vadd.f32 %v7543, %v7927
    %v7929 = vpop.f32.mrf.mxu0
    %7930 = vmatprep.mubr.f32.mxu0 0.0
    %7931 = vmatmul.mubr.f32.gmra.mxu0 %v5650
    %v7932 = vpop.f32.mrf.mxu0
    %v7933 = vadd.f32 %v7548, %v7932
    %v7934 = vpop.f32.mrf.mxu0
    %7935 = vmatprep.mubr.f32.mxu0 0.0
    %7936 = vmatmul.mubr.f32.gmra.mxu0 %v5659
    %v7937 = vpop.f32.mrf.mxu0
    %v7938 = vadd.f32 %v7553, %v7937
    %v7939 = vpop.f32.mrf.mxu0
    %7940 = vmatprep.mubr.f32.mxu0 0.0
    %7941 = vmatmul.mubr.f32.gmra.mxu0 %v5668
    %v7942 = vpop.f32.mrf.mxu0
    %v7943 = vadd.f32 %v7558, %v7942
    %v7944 = vpop.f32.mrf.mxu0
    %7945 = vmatprep.mubr.f32.mxu0 0.0
    %7946 = vmatmul.mubr.f32.gmra.mxu0 %v5677
    %v7947 = vpop.f32.mrf.mxu0
    %v7948 = vadd.f32 %v7563, %v7947
    %v7949 = vpop.f32.mrf.mxu0
    %7950 = vmatprep.mubr.f32.mxu0 0.0
    %7951 = vmatmul.mubr.f32.gmra.mxu0 %v5686
    %v7952 = vpop.f32.mrf.mxu0
    %v7953 = vadd.f32 %v7568, %v7952
    %v7954 = vpop.f32.mrf.mxu0
    %7955 = vmatprep.mubr.f32.mxu0 0.0
    %7956 = vmatmul.mubr.f32.gmra.mxu0 %v5695
    %v7957 = vpop.f32.mrf.mxu0
    %v7958 = vadd.f32 %v7573, %v7957
    %v7959 = vpop.f32.mrf.mxu0
    %7960 = vmatprep.mubr.f32.mxu0 0.0
    %7961 = vmatmul.mubr.f32.gmra.mxu0 %v5704
    %v7962 = vpop.f32.mrf.mxu0
    %v7963 = vadd.f32 %v7578, %v7962
    %v7964 = vpop.f32.mrf.mxu0
    %7965 = vmatprep.mubr.f32.mxu0 0.0
    %7966 = vmatmul.mubr.f32.gmra.mxu0 %v5713
    %v7967 = vpop.f32.mrf.mxu0
    %v7968 = vadd.f32 %v7583, %v7967
    %v7969 = vpop.f32.mrf.mxu0
    %7970 = vmatprep.mubr.f32.mxu0 0.0
    %7971 = vmatmul.mubr.f32.gmra.mxu0 %v5722
    %v7972 = vpop.f32.mrf.mxu0
    %v7973 = vadd.f32 %v7588, %v7972
    %v7974 = vpop.f32.mrf.mxu0
    %7975 = vmatprep.mubr.f32.mxu0 0.0
    %7976 = vmatmul.mubr.f32.gmra.mxu0 %v5731
    %v7977 = vpop.f32.mrf.mxu0
    %v7978 = vadd.f32 %v7593, %v7977
    %v7979 = vpop.f32.mrf.mxu0
    %7980 = vmatprep.mubr.f32.mxu0 0.0
    %7981 = vmatmul.mubr.f32.gmra.mxu0 %v5740
    %v7982 = vpop.f32.mrf.mxu0
    %v7983 = vadd.f32 %v7598, %v7982
    %v7984 = vpop.f32.mrf.mxu0
    %7985 = vmatprep.mubr.f32.mxu0 0.0
    %7986 = vmatmul.mubr.f32.gmra.mxu0 %v5749
    %v7987 = vpop.f32.mrf.mxu0
    %v7988 = vadd.f32 %v7603, %v7987
    %v7989 = vpop.f32.mrf.mxu0
    %7990 = vmatprep.mubr.f32.mxu0 0.0
    %7991 = vmatmul.mubr.f32.gmra.mxu0 %v5758
    %v7992 = vpop.f32.mrf.mxu0
    %v7993 = vadd.f32 %v7608, %v7992
    %v7994 = vpop.f32.mrf.mxu0
    %7995 = vmatprep.mubr.f32.mxu0 0.0
    %7996 = vmatmul.mubr.f32.gmra.mxu0 %v5767
    %v7997 = vpop.f32.mrf.mxu0
    %v7998 = vadd.f32 %v7613, %v7997
    %v7999 = vpop.f32.mrf.mxu0
    %8000 = vmatprep.mubr.f32.mxu0 0.0
    %8001 = vmatmul.mubr.f32.gmra.mxu0 %v5776
    %v8002 = vpop.f32.mrf.mxu0
    %v8003 = vadd.f32 %v7618, %v8002
    %v8004 = vpop.f32.mrf.mxu0
    %8005 = vmatprep.mubr.f32.mxu0 0.0
    %8006 = vmatmul.mubr.f32.gmra.mxu0 %v5785
    %v8007 = vpop.f32.mrf.mxu0
    %v8008 = vadd.f32 %v7623, %v8007
    %v8009 = vpop.f32.mrf.mxu0
    %8010 = vmatprep.mubr.f32.mxu0 0.0
    %8011 = vmatmul.mubr.f32.gmra.mxu0 %v5794
    %v8012 = vpop.f32.mrf.mxu0
    %v8013 = vadd.f32 %v7628, %v8012
    %v8014 = vpop.f32.mrf.mxu0
    %8015 = vmatprep.mubr.f32.mxu0 0.0
    %8016 = vmatmul.mubr.f32.gmra.mxu0 %v5803
    %v8017 = vpop.f32.mrf.mxu0
    %v8018 = vadd.f32 %v7633, %v8017
    %v8019 = vpop.f32.mrf.mxu0
    %8020 = vmatprep.mubr.f32.mxu0 0.0
    %8021 = vmatmul.mubr.f32.gmra.mxu0 %v5812
    %v8022 = vpop.f32.mrf.mxu0
    %v8023 = vadd.f32 %v7638, %v8022
    %v8024 = vpop.f32.mrf.mxu0
    %8025 = vmatprep.mubr.f32.mxu0 0.0
    %8026 = vmatmul.mubr.f32.gmra.mxu0 %v5821
    %v8027 = vpop.f32.mrf.mxu0
    %v8028 = vadd.f32 %v7643, %v8027
    %v8029 = vpop.f32.mrf.mxu0
    %8030 = vmatprep.mubr.f32.mxu0 0.0
    %8031 = vmatmul.mubr.f32.gmra.mxu0 %v5830
    %v8032 = vpop.f32.mrf.mxu0
    %v8033 = vadd.f32 %v7648, %v8032
    %v8034 = vpop.f32.mrf.mxu0
    %8035 = vmatprep.mubr.f32.mxu0 0.0
    %8036 = vmatmul.mubr.f32.gmra.mxu0 %v5839
    %v8037 = vpop.f32.mrf.mxu0
    %v8038 = vadd.f32 %v7653, %v8037
    %v8039 = vpop.f32.mrf.mxu0
    %8040 = vmatprep.mubr.f32.mxu0 0.0
    %8041 = vmatmul.mubr.f32.gmra.mxu0 %v5848
    %v8042 = vpop.f32.mrf.mxu0
    %v8043 = vadd.f32 %v7658, %v8042
    %v8044 = vpop.f32.mrf.mxu0
    %8045 = vmatprep.mubr.f32.mxu0 0.0
    %8046 = vmatmul.mubr.f32.gmra.mxu0 %v5857
    %v8047 = vpop.f32.mrf.mxu0
    %v8048 = vadd.f32 %v7663, %v8047
    %v8049 = vpop.f32.mrf.mxu0
    %8050 = vmatprep.mubr.f32.mxu0 0.0
    %8051 = vmatmul.mubr.f32.gmra.mxu0 %v5866
    %v8052 = vpop.f32.mrf.mxu0
    %v8053 = vadd.f32 %v7668, %v8052
    %v8054 = vpop.f32.mrf.mxu0
    %8055 = vmatprep.mubr.f32.mxu0 0.0
    %8056 = vmatmul.mubr.f32.gmra.mxu0 %v5875
    %v8057 = vpop.f32.mrf.mxu0
    %v8058 = vadd.f32 %v7673, %v8057
    %v8059 = vpop.f32.mrf.mxu0
    %8060 = vmatprep.mubr.f32.mxu0 0.0
    %8061 = vmatmul.mubr.f32.gmra.mxu0 %v5884
    %v8062 = vpop.f32.mrf.mxu0
    %v8063 = vadd.f32 %v7678, %v8062
    %v8064 = vpop.f32.mrf.mxu0
    %8065 = vmatprep.mubr.f32.mxu0 0.0
    %8066 = vmatmul.mubr.f32.gmra.mxu0 %v5893
    %v8067 = vpop.f32.mrf.mxu0
    %v8068 = vadd.f32 %v7683, %v8067
    %v8069 = vpop.f32.mrf.mxu0
    %8070 = vmatprep.mubr.f32.mxu0 0.0
    %8071 = vmatmul.mubr.f32.gmra.mxu0 %v5902
    %v8072 = vpop.f32.mrf.mxu0
    %v8073 = vadd.f32 %v7688, %v8072
    %v8074 = vpop.f32.mrf.mxu0
    %8075 = vmatprep.mubr.f32.mxu0 0.0
    %8076 = vmatmul.mubr.f32.gmra.mxu0 %v5911
    %v8077 = vpop.f32.mrf.mxu0
    %v8078 = vadd.f32 %v7693, %v8077
    %v8079 = vpop.f32.mrf.mxu0
    %8080 = vmatprep.mubr.f32.mxu0 0.0
    %8081 = vmatmul.mubr.f32.gmra.mxu0 %v5920
    %v8082 = vpop.f32.mrf.mxu0
    %v8083 = vadd.f32 %v7698, %v8082
    %v8084 = vpop.f32.mrf.mxu0
    %8085 = vmatprep.mubr.f32.mxu0 0.0
    %8086 = vmatmul.mubr.f32.gmra.mxu0 %v5929
    %v8087 = vpop.f32.mrf.mxu0
    %v8088 = vadd.f32 %v7703, %v8087
    %v8089 = vpop.f32.mrf.mxu0
    %8090 = vmatprep.mubr.f32.mxu0 0.0
    %8091 = vmatmul.mubr.f32.gmra.mxu0 %v5938
    %v8092 = vpop.f32.mrf.mxu0
    %v8093 = vadd.f32 %v7708, %v8092
    %v8094 = vpop.f32.mrf.mxu0
    %8095 = vmatprep.mubr.f32.mxu0 0.0
    %8096 = vmatmul.mubr.f32.gmra.mxu0 %v5947
    %v8097 = vpop.f32.mrf.mxu0
    %v8098 = vadd.f32 %v7713, %v8097
    %v8099 = vpop.f32.mrf.mxu0
    %8100 = vmatprep.mubr.f32.mxu0 0.0
    %8101 = vmatmul.mubr.f32.gmra.mxu0 %v5956
    %v8102 = vpop.f32.mrf.mxu0
    %v8103 = vadd.f32 %v7718, %v8102
    %v8104 = vpop.f32.mrf.mxu0
    %8105 = vmatprep.mubr.f32.mxu0 0.0
    %8106 = vmatmul.mubr.f32.gmra.mxu0 %v5965
    %v8107 = vpop.f32.mrf.mxu0
    %v8108 = vadd.f32 %v7723, %v8107
    %v8109 = vpop.f32.mrf.mxu0
    %8110 = vmatprep.mubr.f32.mxu0 0.0
    %8111 = vmatmul.mubr.f32.gmra.mxu0 %v5974
    %v8112 = vpop.f32.mrf.mxu0
    %v8113 = vadd.f32 %v7728, %v8112
    %v8114 = vpop.f32.mrf.mxu0
    %8115 = vmatprep.mubr.f32.mxu0 0.0
    %8116 = vmatmul.mubr.f32.gmra.mxu0 %v5983
    %v8117 = vpop.f32.mrf.mxu0
    %v8118 = vadd.f32 %v7733, %v8117
    %v8119 = vpop.f32.mrf.mxu0
    %8120 = vmatprep.mubr.f32.mxu0 0.0
    %8121 = vmatmul.mubr.f32.gmra.mxu0 %v5992
    %v8122 = vpop.f32.mrf.mxu0
    %v8123 = vadd.f32 %v7738, %v8122
    %v8124 = vpop.f32.mrf.mxu0
    %8125 = vmatprep.mubr.f32.mxu0 0.0
    %8126 = vmatmul.mubr.f32.gmra.mxu0 %v6001
    %v8127 = vpop.f32.mrf.mxu0
    %v8128 = vadd.f32 %v7743, %v8127
    %v8129 = vpop.f32.mrf.mxu0
    %8130 = vmatprep.mubr.f32.mxu0 0.0
    %8131 = vmatmul.mubr.f32.gmra.mxu0 %v6010
    %v8132 = vpop.f32.mrf.mxu0
    %v8133 = vadd.f32 %v7748, %v8132
    %v8134 = vpop.f32.mrf.mxu0
    %8135 = vmatprep.mubr.f32.mxu0 0.0
    %8136 = vmatmul.mubr.f32.gmra.mxu0 %v6019
    %v8137 = vpop.f32.mrf.mxu0
    %v8138 = vadd.f32 %v7753, %v8137
    %v8139 = vpop.f32.mrf.mxu0
    %8140 = vmatprep.mubr.f32.mxu0 0.0
    %8141 = vmatmul.mubr.f32.gmra.mxu0 %v6028
    %v8142 = vpop.f32.mrf.mxu0
    %v8143 = vadd.f32 %v7758, %v8142
    %v8144 = vpop.f32.mrf.mxu0
    %8145 = vmatprep.mubr.f32.mxu0 0.0
    %8146 = vmatmul.mubr.f32.gmra.mxu0 %v6037
    %v8147 = vpop.f32.mrf.mxu0
    %v8148 = vadd.f32 %v7763, %v8147
    %v8149 = vpop.f32.mrf.mxu0
    %8150 = vmatprep.mubr.f32.mxu0 0.0
    %8151 = vmatmul.mubr.f32.gmra.mxu0 %v6046
    %v8152 = vpop.f32.mrf.mxu0
    %v8153 = vadd.f32 %v7768, %v8152
    %v8154 = vpop.f32.mrf.mxu0
    %8155 = vmatprep.mubr.f32.mxu0 0.0
    %8156 = vmatmul.mubr.f32.gmra.mxu0 %v6055
    %v8157 = vpop.f32.mrf.mxu0
    %v8158 = vadd.f32 %v7773, %v8157
    %v8159 = vpop.f32.mrf.mxu0
    %8160 = vmatprep.mubr.f32.mxu0 0.0
    %8161 = vmatmul.mubr.f32.gmra.mxu0 %v6064
    %v8162 = vpop.f32.mrf.mxu0
    %v8163 = vadd.f32 %v7778, %v8162
    %v8164 = vpop.f32.mrf.mxu0
    %8165 = vmatprep.mubr.f32.mxu0 0.0
    %8166 = vmatmul.mubr.f32.gmra.mxu0 %v6073
    %v8167 = vpop.f32.mrf.mxu0
    %v8168 = vadd.f32 %v7783, %v8167
    %v8169 = vpop.f32.mrf.mxu0
    %8170 = vmatprep.mubr.f32.mxu0 0.0
    %8171 = vmatmul.mubr.f32.gmra.mxu0 %v6082
    %v8172 = vpop.f32.mrf.mxu0
    %v8173 = vadd.f32 %v7788, %v8172
    %v8174 = vpop.f32.mrf.mxu0
    %8175 = vmatprep.mubr.f32.mxu0 0.0
    %8176 = vmatmul.mubr.f32.gmra.mxu0 %v6091
    %v8177 = vpop.f32.mrf.mxu0
    %v8178 = vadd.f32 %v7793, %v8177
    %v8179 = vpop.f32.mrf.mxu0
    %8180 = vmatprep.mubr.f32.mxu0 0.0
    %8181 = vmatmul.mubr.f32.gmra.mxu0 %v6100
    %v8182 = vpop.f32.mrf.mxu0
    %v8183 = vadd.f32 %v7798, %v8182
    %v8184 = vpop.f32.mrf.mxu0
    %8185 = vmatprep.mubr.f32.mxu0 0.0
    %8186 = vmatmul.mubr.f32.gmra.mxu0 %v6109
    %v8187 = vpop.f32.mrf.mxu0
    %v8188 = vadd.f32 %v7803, %v8187
    %v8189 = vpop.f32.mrf.mxu0
    %8190 = vmatprep.mubr.f32.mxu0 0.0
    %8191 = vmatmul.mubr.f32.gmra.mxu0 %v6118
    %v8192 = vpop.f32.mrf.mxu0
    %v8193 = vadd.f32 %v7808, %v8192
    %v8194 = vpop.f32.mrf.mxu0
    %8195 = vmatprep.mubr.f32.mxu0 0.0
    %8196 = vmatmul.mubr.f32.gmra.mxu0 %v6127
    %v8197 = vpop.f32.mrf.mxu0
    %v8198 = vadd.f32 %v7813, %v8197
    %v8199 = vpop.f32.mrf.mxu0
    %8200 = vmatprep.mubr.f32.mxu0 0.0
    %8201 = vmatmul.mubr.f32.gmra.mxu0 %v6136
    %v8202 = vpop.f32.mrf.mxu0
    %v8203 = vadd.f32 %v7818, %v8202
    %v8204 = vpop.f32.mrf.mxu0
    %8205 = vdwg.mxu0
    %v8206 = vadd.f32 %v7888, %v7893
    %v8207 = vadd.f32 %v8206, %v7898
    %v8208 = vadd.f32 %v8207, %v7903
    %v8209 = vadd.f32 %v8208, %v7908
    %v8210 = vadd.f32 %v8209, %v7913
    %v8211 = vadd.f32 %v8210, %v7918
    %v8212 = vadd.f32 %v8211, %v7923
    %v8213 = vadd.f32 %v8212, %v7928
    %v8214 = vadd.f32 %v8213, %v7933
    %v8215 = vadd.f32 %v8214, %v7938
    %v8216 = vadd.f32 %v8215, %v7943
    %v8217 = vadd.f32 %v8216, %v7948
    %v8218 = vadd.f32 %v8217, %v7953
    %v8219 = vadd.f32 %v8218, %v7958
    %v8220 = vadd.f32 %v8219, %v7963
    %v8221 = vadd.f32 %v8220, %v7968
    %v8222 = vadd.f32 %v8221, %v7973
    %v8223 = vadd.f32 %v8222, %v7978
    %v8224 = vadd.f32 %v8223, %v7983
    %v8225 = vadd.f32 %v8224, %v7988
    %v8226 = vadd.f32 %v8225, %v7993
    %v8227 = vadd.f32 %v8226, %v7998
    %v8228 = vadd.f32 %v8227, %v8003
    %v8229 = vadd.f32 %v8228, %v8008
    %v8230 = vadd.f32 %v8229, %v8013
    %v8231 = vadd.f32 %v8230, %v8018
    %v8232 = vadd.f32 %v8231, %v8023
    %v8233 = vadd.f32 %v8232, %v8028
    %v8234 = vadd.f32 %v8233, %v8033
    %v8235 = vadd.f32 %v8234, %v8038
    %v8236 = vadd.f32 %v8235, %v8043
    %v8237 = vadd.f32 %v8236, %v8048
    %v8238 = vadd.f32 %v8237, %v8053
    %v8239 = vadd.f32 %v8238, %v8058
    %v8240 = vadd.f32 %v8239, %v8063
    %v8241 = vadd.f32 %v8240, %v8068
    %v8242 = vadd.f32 %v8241, %v8073
    %v8243 = vadd.f32 %v8242, %v8078
    %v8244 = vadd.f32 %v8243, %v8083
    %v8245 = vadd.f32 %v8244, %v8088
    %v8246 = vadd.f32 %v8245, %v8093
    %v8247 = vadd.f32 %v8246, %v8098
    %v8248 = vadd.f32 %v8247, %v8103
    %v8249 = vadd.f32 %v8248, %v8108
    %v8250 = vadd.f32 %v8249, %v8113
    %v8251 = vadd.f32 %v8250, %v8118
    %v8252 = vadd.f32 %v8251, %v8123
    %v8253 = vadd.f32 %v8252, %v8128
    %v8254 = vadd.f32 %v8253, %v8133
    %v8255 = vadd.f32 %v8254, %v8138
    %v8256 = vadd.f32 %v8255, %v8143
    %v8257 = vadd.f32 %v8256, %v8148
    %v8258 = vadd.f32 %v8257, %v8153
    %v8259 = vadd.f32 %v8258, %v8158
    %v8260 = vadd.f32 %v8259, %v8163
    %v8261 = vadd.f32 %v8260, %v8168
    %v8262 = vadd.f32 %v8261, %v8173
    %v8263 = vadd.f32 %v8262, %v8178
    %v8264 = vadd.f32 %v8263, %v8183
    %v8265 = vadd.f32 %v8264, %v8188
    %v8266 = vadd.f32 %v8265, %v8193
    %v8267 = vadd.f32 %v8266, %v8198
    %v8268 = vadd.f32 %v8267, %v8203
    %v8269 = vrot.slane %v8268, 4
    %v8270 = vadd.f32 %v8268, %v8269
    %v8271 = vrot.slane %v8270, 2
    %v8272 = vadd.f32 %v8270, %v8271
    %v8273 = vrot.slane %v8272, 1
    %v8274 = vadd.f32 %v8272, %v8273
    %v8275 = vmul.f32 %v7888, %v7888
    %v8276 = vmul.f32 %v7893, %v7893
    %v8277 = vmul.f32 %v7898, %v7898
    %v8278 = vmul.f32 %v7903, %v7903
    %v8279 = vmul.f32 %v7908, %v7908
    %v8280 = vmul.f32 %v7913, %v7913
    %v8281 = vmul.f32 %v7918, %v7918
    %v8282 = vmul.f32 %v7923, %v7923
    %v8283 = vmul.f32 %v7928, %v7928
    %v8284 = vmul.f32 %v7933, %v7933
    %v8285 = vmul.f32 %v7938, %v7938
    %v8286 = vmul.f32 %v7943, %v7943
    %v8287 = vmul.f32 %v7948, %v7948
    %v8288 = vmul.f32 %v7953, %v7953
    %v8289 = vmul.f32 %v7958, %v7958
    %v8290 = vmul.f32 %v7963, %v7963
    %v8291 = vmul.f32 %v7968, %v7968
    %v8292 = vmul.f32 %v7973, %v7973
    %v8293 = vmul.f32 %v7978, %v7978
    %v8294 = vmul.f32 %v7983, %v7983
    %v8295 = vmul.f32 %v7988, %v7988
    %v8296 = vmul.f32 %v7993, %v7993
    %v8297 = vmul.f32 %v7998, %v7998
    %v8298 = vmul.f32 %v8003, %v8003
    %v8299 = vmul.f32 %v8008, %v8008
    %v8300 = vmul.f32 %v8013, %v8013
    %v8301 = vmul.f32 %v8018, %v8018
    %v8302 = vmul.f32 %v8023, %v8023
    %v8303 = vmul.f32 %v8028, %v8028
    %v8304 = vmul.f32 %v8033, %v8033
    %v8305 = vmul.f32 %v8038, %v8038
    %v8306 = vmul.f32 %v8043, %v8043
    %v8307 = vmul.f32 %v8048, %v8048
    %v8308 = vmul.f32 %v8053, %v8053
    %v8309 = vmul.f32 %v8058, %v8058
    %v8310 = vmul.f32 %v8063, %v8063
    %v8311 = vmul.f32 %v8068, %v8068
    %v8312 = vmul.f32 %v8073, %v8073
    %v8313 = vmul.f32 %v8078, %v8078
    %v8314 = vmul.f32 %v8083, %v8083
    %v8315 = vmul.f32 %v8088, %v8088
    %v8316 = vmul.f32 %v8093, %v8093
    %v8317 = vmul.f32 %v8098, %v8098
    %v8318 = vmul.f32 %v8103, %v8103
    %v8319 = vmul.f32 %v8108, %v8108
    %v8320 = vmul.f32 %v8113, %v8113
    %v8321 = vmul.f32 %v8118, %v8118
    %v8322 = vmul.f32 %v8123, %v8123
    %v8323 = vmul.f32 %v8128, %v8128
    %v8324 = vmul.f32 %v8133, %v8133
    %v8325 = vmul.f32 %v8138, %v8138
    %v8326 = vmul.f32 %v8143, %v8143
    %v8327 = vmul.f32 %v8148, %v8148
    %v8328 = vmul.f32 %v8153, %v8153
    %v8329 = vmul.f32 %v8158, %v8158
    %v8330 = vmul.f32 %v8163, %v8163
    %v8331 = vmul.f32 %v8168, %v8168
    %v8332 = vmul.f32 %v8173, %v8173
    %v8333 = vmul.f32 %v8178, %v8178
    %v8334 = vmul.f32 %v8183, %v8183
    %v8335 = vmul.f32 %v8188, %v8188
    %v8336 = vmul.f32 %v8193, %v8193
    %v8337 = vmul.f32 %v8198, %v8198
    %v8338 = vmul.f32 %v8203, %v8203
    %v8339 = vadd.f32 %v8275, %v8276
    %v8340 = vadd.f32 %v8339, %v8277
    %v8341 = vadd.f32 %v8340, %v8278
    %v8342 = vadd.f32 %v8341, %v8279
    %v8343 = vadd.f32 %v8342, %v8280
    %v8344 = vadd.f32 %v8343, %v8281
    %v8345 = vadd.f32 %v8344, %v8282
    %v8346 = vadd.f32 %v8345, %v8283
    %v8347 = vadd.f32 %v8346, %v8284
    %v8348 = vadd.f32 %v8347, %v8285
    %v8349 = vadd.f32 %v8348, %v8286
    %v8350 = vadd.f32 %v8349, %v8287
    %v8351 = vadd.f32 %v8350, %v8288
    %v8352 = vadd.f32 %v8351, %v8289
    %v8353 = vadd.f32 %v8352, %v8290
    %v8354 = vadd.f32 %v8353, %v8291
    %v8355 = vadd.f32 %v8354, %v8292
    %v8356 = vadd.f32 %v8355, %v8293
    %v8357 = vadd.f32 %v8356, %v8294
    %v8358 = vadd.f32 %v8357, %v8295
    %v8359 = vadd.f32 %v8358, %v8296
    %v8360 = vadd.f32 %v8359, %v8297
    %v8361 = vadd.f32 %v8360, %v8298
    %v8362 = vadd.f32 %v8361, %v8299
    %v8363 = vadd.f32 %v8362, %v8300
    %v8364 = vadd.f32 %v8363, %v8301
    %v8365 = vadd.f32 %v8364, %v8302
    %v8366 = vadd.f32 %v8365, %v8303
    %v8367 = vadd.f32 %v8366, %v8304
    %v8368 = vadd.f32 %v8367, %v8305
    %v8369 = vadd.f32 %v8368, %v8306
    %v8370 = vadd.f32 %v8369, %v8307
    %v8371 = vadd.f32 %v8370, %v8308
    %v8372 = vadd.f32 %v8371, %v8309
    %v8373 = vadd.f32 %v8372, %v8310
    %v8374 = vadd.f32 %v8373, %v8311
    %v8375 = vadd.f32 %v8374, %v8312
    %v8376 = vadd.f32 %v8375, %v8313
    %v8377 = vadd.f32 %v8376, %v8314
    %v8378 = vadd.f32 %v8377, %v8315
    %v8379 = vadd.f32 %v8378, %v8316
    %v8380 = vadd.f32 %v8379, %v8317
    %v8381 = vadd.f32 %v8380, %v8318
    %v8382 = vadd.f32 %v8381, %v8319
    %v8383 = vadd.f32 %v8382, %v8320
    %v8384 = vadd.f32 %v8383, %v8321
    %v8385 = vadd.f32 %v8384, %v8322
    %v8386 = vadd.f32 %v8385, %v8323
    %v8387 = vadd.f32 %v8386, %v8324
    %v8388 = vadd.f32 %v8387, %v8325
    %v8389 = vadd.f32 %v8388, %v8326
    %v8390 = vadd.f32 %v8389, %v8327
    %v8391 = vadd.f32 %v8390, %v8328
    %v8392 = vadd.f32 %v8391, %v8329
    %v8393 = vadd.f32 %v8392, %v8330
    %v8394 = vadd.f32 %v8393, %v8331
    %v8395 = vadd.f32 %v8394, %v8332
    %v8396 = vadd.f32 %v8395, %v8333
    %v8397 = vadd.f32 %v8396, %v8334
    %v8398 = vadd.f32 %v8397, %v8335
    %v8399 = vadd.f32 %v8398, %v8336
    %v8400 = vadd.f32 %v8399, %v8337
    %v8401 = vadd.f32 %v8400, %v8338
    %v8402 = vrot.slane %v8401, 4
    %v8403 = vadd.f32 %v8401, %v8402
    %v8404 = vrot.slane %v8403, 2
    %v8405 = vadd.f32 %v8403, %v8404
    %v8406 = vrot.slane %v8405, 1
    %v8407 = vadd.f32 %v8405, %v8406
    %v8408 = vmul.f32 %v8274, 0.001953125
    %v8409 = vmul.f32 %v8407, 0.001953125
    %v8410 = vmul.f32 %v8408, %v8408
    %v8411 = vsub.f32 %v8409, %v8410
    %v8412 = vmax.f32 %v8411, 0.0
    %v8413 = vld [vmem:[%s5] sm:$0x1]
    %v8414 = vadd.f32 %v8412, 1e-05
    %v8415 = vrsqrt.pop %v8414
    %v8416 = vmul.f32 %v8413, %v8415
    %v8417 = vld [vmem:[%s6] sm:$0x1]
    %v8418 = vmul.f32 %v8408, %v8416
    %v8419 = vsub.f32 %v8417, %v8418
    %v8421 = vlaneseq
    %v8422 = vshrl.u32 %v8421, 7
    %v8423 = vsub.s32 0, %v8422
    %v8424 = vrot.slane %v8416, %v8423
    %v8426 = vmul.f32 %v7888, %v8424
    %v8427 = vmul.f32 %v7893, %v8424
    %v8428 = vmul.f32 %v7898, %v8424
    %v8429 = vmul.f32 %v7903, %v8424
    %v8430 = vmul.f32 %v7908, %v8424
    %v8431 = vmul.f32 %v7913, %v8424
    %v8432 = vmul.f32 %v7918, %v8424
    %v8433 = vmul.f32 %v7923, %v8424
    %v8434 = vmul.f32 %v7928, %v8424
    %v8435 = vmul.f32 %v7933, %v8424
    %v8436 = vmul.f32 %v7938, %v8424
    %v8437 = vmul.f32 %v7943, %v8424
    %v8438 = vmul.f32 %v7948, %v8424
    %v8439 = vmul.f32 %v7953, %v8424
    %v8440 = vmul.f32 %v7958, %v8424
    %v8441 = vmul.f32 %v7963, %v8424
    %v8442 = vmul.f32 %v7968, %v8424
    %v8443 = vmul.f32 %v7973, %v8424
    %v8444 = vmul.f32 %v7978, %v8424
    %v8445 = vmul.f32 %v7983, %v8424
    %v8446 = vmul.f32 %v7988, %v8424
    %v8447 = vmul.f32 %v7993, %v8424
    %v8448 = vmul.f32 %v7998, %v8424
    %v8449 = vmul.f32 %v8003, %v8424
    %v8450 = vmul.f32 %v8008, %v8424
    %v8451 = vmul.f32 %v8013, %v8424
    %v8452 = vmul.f32 %v8018, %v8424
    %v8453 = vmul.f32 %v8023, %v8424
    %v8454 = vmul.f32 %v8028, %v8424
    %v8455 = vmul.f32 %v8033, %v8424
    %v8456 = vmul.f32 %v8038, %v8424
    %v8457 = vmul.f32 %v8043, %v8424
    %v8458 = vmul.f32 %v8048, %v8424
    %v8459 = vmul.f32 %v8053, %v8424
    %v8460 = vmul.f32 %v8058, %v8424
    %v8461 = vmul.f32 %v8063, %v8424
    %v8462 = vmul.f32 %v8068, %v8424
    %v8463 = vmul.f32 %v8073, %v8424
    %v8464 = vmul.f32 %v8078, %v8424
    %v8465 = vmul.f32 %v8083, %v8424
    %v8466 = vmul.f32 %v8088, %v8424
    %v8467 = vmul.f32 %v8093, %v8424
    %v8468 = vmul.f32 %v8098, %v8424
    %v8469 = vmul.f32 %v8103, %v8424
    %v8470 = vmul.f32 %v8108, %v8424
    %v8471 = vmul.f32 %v8113, %v8424
    %v8472 = vmul.f32 %v8118, %v8424
    %v8473 = vmul.f32 %v8123, %v8424
    %v8474 = vmul.f32 %v8128, %v8424
    %v8475 = vmul.f32 %v8133, %v8424
    %v8476 = vmul.f32 %v8138, %v8424
    %v8477 = vmul.f32 %v8143, %v8424
    %v8478 = vmul.f32 %v8148, %v8424
    %v8479 = vmul.f32 %v8153, %v8424
    %v8480 = vmul.f32 %v8158, %v8424
    %v8481 = vmul.f32 %v8163, %v8424
    %v8482 = vmul.f32 %v8168, %v8424
    %v8483 = vmul.f32 %v8173, %v8424
    %v8484 = vmul.f32 %v8178, %v8424
    %v8485 = vmul.f32 %v8183, %v8424
    %v8486 = vmul.f32 %v8188, %v8424
    %v8487 = vmul.f32 %v8193, %v8424
    %v8488 = vmul.f32 %v8198, %v8424
    %v8489 = vmul.f32 %v8203, %v8424
    %v8491 = vlaneseq
    %v8492 = vshrl.u32 %v8491, 7
    %v8493 = vsub.s32 0, %v8492
    %v8494 = vrot.slane %v8419, %v8493
    %v8496 = vadd.f32 %v8426, %v8494
    %v8497 = vadd.f32 %v8427, %v8494
    %v8498 = vadd.f32 %v8428, %v8494
    %v8499 = vadd.f32 %v8429, %v8494
    %v8500 = vadd.f32 %v8430, %v8494
    %v8501 = vadd.f32 %v8431, %v8494
    %v8502 = vadd.f32 %v8432, %v8494
    %v8503 = vadd.f32 %v8433, %v8494
    %v8504 = vadd.f32 %v8434, %v8494
    %v8505 = vadd.f32 %v8435, %v8494
    %v8506 = vadd.f32 %v8436, %v8494
    %v8507 = vadd.f32 %v8437, %v8494
    %v8508 = vadd.f32 %v8438, %v8494
    %v8509 = vadd.f32 %v8439, %v8494
    %v8510 = vadd.f32 %v8440, %v8494
    %v8511 = vadd.f32 %v8441, %v8494
    %v8512 = vadd.f32 %v8442, %v8494
    %v8513 = vadd.f32 %v8443, %v8494
    %v8514 = vadd.f32 %v8444, %v8494
    %v8515 = vadd.f32 %v8445, %v8494
    %v8516 = vadd.f32 %v8446, %v8494
    %v8517 = vadd.f32 %v8447, %v8494
    %v8518 = vadd.f32 %v8448, %v8494
    %v8519 = vadd.f32 %v8449, %v8494
    %v8520 = vadd.f32 %v8450, %v8494
    %v8521 = vadd.f32 %v8451, %v8494
    %v8522 = vadd.f32 %v8452, %v8494
    %v8523 = vadd.f32 %v8453, %v8494
    %v8524 = vadd.f32 %v8454, %v8494
    %v8525 = vadd.f32 %v8455, %v8494
    %v8526 = vadd.f32 %v8456, %v8494
    %v8527 = vadd.f32 %v8457, %v8494
    %v8528 = vadd.f32 %v8458, %v8494
    %v8529 = vadd.f32 %v8459, %v8494
    %v8530 = vadd.f32 %v8460, %v8494
    %v8531 = vadd.f32 %v8461, %v8494
    %v8532 = vadd.f32 %v8462, %v8494
    %v8533 = vadd.f32 %v8463, %v8494
    %v8534 = vadd.f32 %v8464, %v8494
    %v8535 = vadd.f32 %v8465, %v8494
    %v8536 = vadd.f32 %v8466, %v8494
    %v8537 = vadd.f32 %v8467, %v8494
    %v8538 = vadd.f32 %v8468, %v8494
    %v8539 = vadd.f32 %v8469, %v8494
    %v8540 = vadd.f32 %v8470, %v8494
    %v8541 = vadd.f32 %v8471, %v8494
    %v8542 = vadd.f32 %v8472, %v8494
    %v8543 = vadd.f32 %v8473, %v8494
    %v8544 = vadd.f32 %v8474, %v8494
    %v8545 = vadd.f32 %v8475, %v8494
    %v8546 = vadd.f32 %v8476, %v8494
    %v8547 = vadd.f32 %v8477, %v8494
    %v8548 = vadd.f32 %v8478, %v8494
    %v8549 = vadd.f32 %v8479, %v8494
    %v8550 = vadd.f32 %v8480, %v8494
    %v8551 = vadd.f32 %v8481, %v8494
    %v8552 = vadd.f32 %v8482, %v8494
    %v8553 = vadd.f32 %v8483, %v8494
    %v8554 = vadd.f32 %v8484, %v8494
    %v8555 = vadd.f32 %v8485, %v8494
    %v8556 = vadd.f32 %v8486, %v8494
    %v8557 = vadd.f32 %v8487, %v8494
    %v8558 = vadd.f32 %v8488, %v8494
    %v8559 = vadd.f32 %v8489, %v8494
    %v8560 = vmax.f32 %v8496, 0.0
    %v8561 = vmax.f32 %v8497, 0.0
    %v8562 = vmax.f32 %v8498, 0.0
    %v8563 = vmax.f32 %v8499, 0.0
    %v8564 = vmax.f32 %v8500, 0.0
    %v8565 = vmax.f32 %v8501, 0.0
    %v8566 = vmax.f32 %v8502, 0.0
    %v8567 = vmax.f32 %v8503, 0.0
    %v8568 = vmax.f32 %v8504, 0.0
    %v8569 = vmax.f32 %v8505, 0.0
    %v8570 = vmax.f32 %v8506, 0.0
    %v8571 = vmax.f32 %v8507, 0.0
    %v8572 = vmax.f32 %v8508, 0.0
    %v8573 = vmax.f32 %v8509, 0.0
    %v8574 = vmax.f32 %v8510, 0.0
    %v8575 = vmax.f32 %v8511, 0.0
    %v8576 = vmax.f32 %v8512, 0.0
    %v8577 = vmax.f32 %v8513, 0.0
    %v8578 = vmax.f32 %v8514, 0.0
    %v8579 = vmax.f32 %v8515, 0.0
    %v8580 = vmax.f32 %v8516, 0.0
    %v8581 = vmax.f32 %v8517, 0.0
    %v8582 = vmax.f32 %v8518, 0.0
    %v8583 = vmax.f32 %v8519, 0.0
    %v8584 = vmax.f32 %v8520, 0.0
    %v8585 = vmax.f32 %v8521, 0.0
    %v8586 = vmax.f32 %v8522, 0.0
    %v8587 = vmax.f32 %v8523, 0.0
    %v8588 = vmax.f32 %v8524, 0.0
    %v8589 = vmax.f32 %v8525, 0.0
    %v8590 = vmax.f32 %v8526, 0.0
    %v8591 = vmax.f32 %v8527, 0.0
    %v8592 = vmax.f32 %v8528, 0.0
    %v8593 = vmax.f32 %v8529, 0.0
    %v8594 = vmax.f32 %v8530, 0.0
    %v8595 = vmax.f32 %v8531, 0.0
    %v8596 = vmax.f32 %v8532, 0.0
    %v8597 = vmax.f32 %v8533, 0.0
    %v8598 = vmax.f32 %v8534, 0.0
    %v8599 = vmax.f32 %v8535, 0.0
    %v8600 = vmax.f32 %v8536, 0.0
    %v8601 = vmax.f32 %v8537, 0.0
    %v8602 = vmax.f32 %v8538, 0.0
    %v8603 = vmax.f32 %v8539, 0.0
    %v8604 = vmax.f32 %v8540, 0.0
    %v8605 = vmax.f32 %v8541, 0.0
    %v8606 = vmax.f32 %v8542, 0.0
    %v8607 = vmax.f32 %v8543, 0.0
    %v8608 = vmax.f32 %v8544, 0.0
    %v8609 = vmax.f32 %v8545, 0.0
    %v8610 = vmax.f32 %v8546, 0.0
    %v8611 = vmax.f32 %v8547, 0.0
    %v8612 = vmax.f32 %v8548, 0.0
    %v8613 = vmax.f32 %v8549, 0.0
    %v8614 = vmax.f32 %v8550, 0.0
    %v8615 = vmax.f32 %v8551, 0.0
    %v8616 = vmax.f32 %v8552, 0.0
    %v8617 = vmax.f32 %v8553, 0.0
    %v8618 = vmax.f32 %v8554, 0.0
    %v8619 = vmax.f32 %v8555, 0.0
    %v8620 = vmax.f32 %v8556, 0.0
    %v8621 = vmax.f32 %v8557, 0.0
    %v8622 = vmax.f32 %v8558, 0.0
    %v8623 = vmax.f32 %v8559, 0.0
    %8624 = vst [vmem:[#allocation7] sm:$0xff] %v8560
    %8625 = vst [vmem:[#allocation7 + $0x8] sm:$0xff] %v8561
    %8626 = vst [vmem:[#allocation7 + $0x10] sm:$0xff] %v8562
    %8627 = vst [vmem:[#allocation7 + $0x18] sm:$0xff] %v8563
    %8628 = vst [vmem:[#allocation7 + $0x20] sm:$0xff] %v8564
    %8629 = vst [vmem:[#allocation7 + $0x28] sm:$0xff] %v8565
    %8630 = vst [vmem:[#allocation7 + $0x30] sm:$0xff] %v8566
    %8631 = vst [vmem:[#allocation7 + $0x38] sm:$0xff] %v8567
    %8632 = vst [vmem:[#allocation7 + $0x40] sm:$0xff] %v8568
    %8633 = vst [vmem:[#allocation7 + $0x48] sm:$0xff] %v8569
    %8634 = vst [vmem:[#allocation7 + $0x50] sm:$0xff] %v8570
    %8635 = vst [vmem:[#allocation7 + $0x58] sm:$0xff] %v8571
    %8636 = vst [vmem:[#allocation7 + $0x60] sm:$0xff] %v8572
    %8637 = vst [vmem:[#allocation7 + $0x68] sm:$0xff] %v8573
    %8638 = vst [vmem:[#allocation7 + $0x70] sm:$0xff] %v8574
    %8639 = vst [vmem:[#allocation7 + $0x78] sm:$0xff] %v8575
    %8640 = vst [vmem:[#allocation7 + $0x80] sm:$0xff] %v8576
    %8641 = vst [vmem:[#allocation7 + $0x88] sm:$0xff] %v8577
    %8642 = vst [vmem:[#allocation7 + $0x90] sm:$0xff] %v8578
    %8643 = vst [vmem:[#allocation7 + $0x98] sm:$0xff] %v8579
    %8644 = vst [vmem:[#allocation7 + $0xa0] sm:$0xff] %v8580
    %8645 = vst [vmem:[#allocation7 + $0xa8] sm:$0xff] %v8581
    %8646 = vst [vmem:[#allocation7 + $0xb0] sm:$0xff] %v8582
    %8647 = vst [vmem:[#allocation7 + $0xb8] sm:$0xff] %v8583
    %8648 = vst [vmem:[#allocation7 + $0xc0] sm:$0xff] %v8584
    %8649 = vst [vmem:[#allocation7 + $0xc8] sm:$0xff] %v8585
    %8650 = vst [vmem:[#allocation7 + $0xd0] sm:$0xff] %v8586
    %8651 = vst [vmem:[#allocation7 + $0xd8] sm:$0xff] %v8587
    %8652 = vst [vmem:[#allocation7 + $0xe0] sm:$0xff] %v8588
    %8653 = vst [vmem:[#allocation7 + $0xe8] sm:$0xff] %v8589
    %8654 = vst [vmem:[#allocation7 + $0xf0] sm:$0xff] %v8590
    %8655 = vst [vmem:[#allocation7 + $0xf8] sm:$0xff] %v8591
    %8656 = vst [vmem:[#allocation7 + $0x100] sm:$0xff] %v8592
    %8657 = vst [vmem:[#allocation7 + $0x108] sm:$0xff] %v8593
    %8658 = vst [vmem:[#allocation7 + $0x110] sm:$0xff] %v8594
    %8659 = vst [vmem:[#allocation7 + $0x118] sm:$0xff] %v8595
    %8660 = vst [vmem:[#allocation7 + $0x120] sm:$0xff] %v8596
    %8661 = vst [vmem:[#allocation7 + $0x128] sm:$0xff] %v8597
    %8662 = vst [vmem:[#allocation7 + $0x130] sm:$0xff] %v8598
    %8663 = vst [vmem:[#allocation7 + $0x138] sm:$0xff] %v8599
    %8664 = vst [vmem:[#allocation7 + $0x140] sm:$0xff] %v8600
    %8665 = vst [vmem:[#allocation7 + $0x148] sm:$0xff] %v8601
    %8666 = vst [vmem:[#allocation7 + $0x150] sm:$0xff] %v8602
    %8667 = vst [vmem:[#allocation7 + $0x158] sm:$0xff] %v8603
    %8668 = vst [vmem:[#allocation7 + $0x160] sm:$0xff] %v8604
    %8669 = vst [vmem:[#allocation7 + $0x168] sm:$0xff] %v8605
    %8670 = vst [vmem:[#allocation7 + $0x170] sm:$0xff] %v8606
    %8671 = vst [vmem:[#allocation7 + $0x178] sm:$0xff] %v8607
    %8672 = vst [vmem:[#allocation7 + $0x180] sm:$0xff] %v8608
    %8673 = vst [vmem:[#allocation7 + $0x188] sm:$0xff] %v8609
    %8674 = vst [vmem:[#allocation7 + $0x190] sm:$0xff] %v8610
    %8675 = vst [vmem:[#allocation7 + $0x198] sm:$0xff] %v8611
    %8676 = vst [vmem:[#allocation7 + $0x1a0] sm:$0xff] %v8612
    %8677 = vst [vmem:[#allocation7 + $0x1a8] sm:$0xff] %v8613
    %8678 = vst [vmem:[#allocation7 + $0x1b0] sm:$0xff] %v8614
    %8679 = vst [vmem:[#allocation7 + $0x1b8] sm:$0xff] %v8615
    %8680 = vst [vmem:[#allocation7 + $0x1c0] sm:$0xff] %v8616
    %8681 = vst [vmem:[#allocation7 + $0x1c8] sm:$0xff] %v8617
    %8682 = vst [vmem:[#allocation7 + $0x1d0] sm:$0xff] %v8618
    %8683 = vst [vmem:[#allocation7 + $0x1d8] sm:$0xff] %v8619
    %8684 = vst [vmem:[#allocation7 + $0x1e0] sm:$0xff] %v8620
    %8685 = vst [vmem:[#allocation7 + $0x1e8] sm:$0xff] %v8621
    %8686 = vst [vmem:[#allocation7 + $0x1f0] sm:$0xff] %v8622
    %8687 = vst [vmem:[#allocation7 + $0x1f8] sm:$0xff] %v8623
    // Predicated region
    $region34: #{tpu_custom_call.1} parent=1 // pred_check
      _
    $region35: #{tpu_custom_call.1} parent=1 // pred_check_branch
      %8689 = sbr.rel (0) target = $region37
    $region36: #{tpu_custom_call.1} parent=1 // pred_region
      %s8691 = ssub.s32 8192, 8192
      %8692 = vsyncadd [#allocation6], %s8691
      %s8693 = sshll.u32 [#allocation7], 4
      %s8694 = int_to_ptr.vmem [resolvable:$true] %s8693
      %8699 = dma.vmem_to_hbm [thread:$0]  %s8694, 8192, %s7, [#allocation6], 128, 128, 8
    $region37: #{tpu_custom_call.1} parent=1 // pred_fallthru
      _
    // Predicated region
    $region38: #{tpu_custom_call.1} parent=1 // pred_check
      _
    $region39: #{tpu_custom_call.1} parent=1 // pred_check_branch
      %8701 = sbr.rel (0) target = $region41
    $region40: #{tpu_custom_call.1} parent=1 // pred_region
      %8702 = dma.done [#allocation6], 8192
    $region41: #{tpu_custom_call.1} parent=1 // pred_fallthru
      _
    %8703 = vsyncpa [#allocation5], 1
    %8704 = vsyncpa [#allocation6], 1

</llo_original>
